<compile_context>
chip_gen: v6e
topology: v6e:2x2x1
jax: 0.10.0
libtpu: 0.0.40
codegen_flags: <defaults>
</compile_context>

<pallas_src>
import functools

import jax
import jax.numpy as jnp
from jax.experimental import pallas as pl
from jax.experimental.pallas import tpu as pltpu

EPS = 1e-5


def _sigmoid(x):
    return 1.0 / (1.0 + jnp.exp(-x))


def _bn_rows(y, gamma, beta, n_rows):
    # PyTorch training-mode BatchNorm over rows (batch*spatial), two-pass stats
    # (robust against cancellation; data is VMEM-resident so the 2nd pass is cheap).
    inv_n = 1.0 / float(n_rows)
    mean = jnp.sum(y, axis=0, keepdims=True) * inv_n
    d = y - mean
    var = jnp.sum(d * d, axis=0, keepdims=True) * inv_n
    return d * jax.lax.rsqrt(var + EPS) * gamma + beta


def _sl(start, size, stride):
    if stride == 1:
        return slice(start, start + size)
    return pl.ds(start, size, stride)


# ----------------------------- fused YBlock kernel ----------------------------
def yblock_kernel(x_ref, w1_ref, g1_ref, b1_ref,
                  w2_ref, g2_ref, b2_ref,
                  wfc1_ref, bfc1_ref, wfc2_ref, bfc2_ref,
                  w3_ref, g3_ref, b3_ref,
                  *rest, stride, has_shortcut, fuse_shortcut):
    if has_shortcut:
        if fuse_shortcut:
            gs_ref, bs_ref, o_ref, pad_ref = rest
            ws_ref = None
        else:
            ws_ref, gs_ref, bs_ref, o_ref, pad_ref = rest
    else:
        o_ref, pad_ref = rest

    N, H, W, Cin = x_ref.shape
    inter = g1_ref.shape[1]
    Ho = (H - 1) // stride + 1
    Wo = (W - 1) // stride + 1
    M1 = N * H * W
    M2 = N * Ho * Wo
    bf16 = jnp.bfloat16
    f32 = jnp.float32

    x2d = x_ref[...].reshape(M1, Cin)                      # bf16 [M1, Cin]

    # ---- conv1 (1x1) [+ fused shortcut 1x1 when stride==1] + bn1 + relu -----
    y01 = jnp.dot(x2d, w1_ref[...], preferred_element_type=f32)
    if fuse_shortcut:
        y1 = y01[:, :inter]                                # [M1, inter]
        sc_pre = y01[:, inter:]                            # [M1(=M2), Cout]
    else:
        y1 = y01
        sc_pre = None
    y1 = jnp.maximum(_bn_rows(y1, g1_ref[...], b1_ref[...], M1), 0.0)

    # ---- conv2 (3x3 grouped-as-blockdiag, stride, pad=1) ---------------------
    # Padded y1 lives only in bf16 VMEM scratch.  Only the two halo rows are
    # zero-stored; interior rows are written once with the left/right zero
    # columns baked into the value.
    zrow = jnp.zeros((N, 1, W + 2, inter), bf16)
    pad_ref[:, 0:1, :, :] = zrow
    pad_ref[:, H + 1:H + 2, :, :] = zrow
    zcol = jnp.zeros((N, H, 1, inter), bf16)
    interior = jnp.concatenate(
        [zcol, y1.reshape(N, H, W, inter).astype(bf16), zcol], axis=2)
    pad_ref[:, 1:H + 1, :, :] = interior

    # im2col in VMEM -> single long-K matmul (K = 9*inter).
    wins = []
    for t in range(9):
        di, dj = t // 3, t % 3
        win = pad_ref[:, _sl(di, Ho, stride), _sl(dj, Wo, stride), :]
        wins.append(win.reshape(M2, inter))
    patches = jnp.concatenate(wins, axis=-1)               # [M2, 9*inter] bf16
    y2 = jnp.dot(patches, w2_ref[...], preferred_element_type=f32)
    y2 = jnp.maximum(_bn_rows(y2, g2_ref[...], b2_ref[...], M2), 0.0)

    # ---- SE: global average pool + 2-layer MLP gate --------------------------
    y2_3d = y2.reshape(N, Ho * Wo, inter)
    pooled = jnp.mean(y2_3d, axis=1)                       # [N, inter]
    h = jnp.dot(pooled.astype(bf16), wfc1_ref[...],
                preferred_element_type=f32) + bfc1_ref[...]
    h = jnp.maximum(h, 0.0)
    gate = _sigmoid(jnp.dot(h.astype(bf16), wfc2_ref[...],
                            preferred_element_type=f32) + bfc2_ref[...])
    y = (y2_3d * gate[:, None, :]).reshape(M2, inter)

    # ---- conv3 (1x1) + bn3 ----------------------------------------------------
    y = jnp.dot(y.astype(bf16), w3_ref[...], preferred_element_type=f32)
    y = _bn_rows(y, g3_ref[...], b3_ref[...], M2)

    # ---- shortcut (1x1, stride) + bn ------------------------------------------
    if has_shortcut:
        if fuse_shortcut:
            sc = sc_pre
        else:
            if stride == 1:
                xs2d = x2d
            else:
                xs2d = x_ref[:, _sl(0, Ho, stride), _sl(0, Wo, stride),
                             :].reshape(M2, Cin)
            sc = jnp.dot(xs2d, ws_ref[...], preferred_element_type=f32)
        y = y + _bn_rows(sc, gs_ref[...], bs_ref[...], M2)

    o_ref[...] = jnp.maximum(y, 0.0).astype(o_ref.dtype)


# --------------------------------- glue ----------------------------------------
def grouped_to_dense(w2g, groups):
    # HWIO grouped weight [3, 3, gw_in, Cm] -> dense block-diagonal [3, 3, Cm, Cm]
    kh, kw, gw_in, cm = w2g.shape
    gw_out = cm // groups
    dense = jnp.zeros((kh, kw, cm, cm), jnp.float32)
    for g in range(groups):
        dense = dense.at[:, :, g * gw_in:(g + 1) * gw_in,
                         g * gw_out:(g + 1) * gw_out].set(
            w2g[:, :, :, g * gw_out:(g + 1) * gw_out])
    return dense


def yblock_forward(x, p, stride, groups, has_shortcut):
    N, H, W, Cin = x.shape
    inter = p["w1"].shape[1]
    Cout = p["w3"].shape[1]
    Ho = (H - 1) // stride + 1
    Wo = (W - 1) // stride + 1
    M2 = N * Ho * Wo
    fuse_shortcut = has_shortcut and (stride == 1)

    bf = jnp.bfloat16
    r = lambda a: a.reshape(1, -1)

    # Grouped 3x3 -> dense block-diag -> [9*inter, inter] for the long-K matmul.
    w2d = grouped_to_dense(p["w2g"], groups).reshape(9 * inter, inter).astype(bf)

    if fuse_shortcut:
        # One matmul for conv1 + shortcut: same x operand, wider output-N.
        w1 = jnp.concatenate([p["w1"], p["ws"]], axis=1).astype(bf)  # [Cin, inter+Cout]
    else:
        w1 = p["w1"].astype(bf)

    args = [x.astype(bf),
            w1, r(p["g1"]), r(p["b1"]),
            w2d, r(p["g2"]), r(p["b2"]),
            p["wfc1"].astype(bf), r(p["bfc1"]),
            p["wfc2"].astype(bf), r(p["bfc2"]),
            p["w3"].astype(bf), r(p["g3"]), r(p["b3"])]
    if has_shortcut:
        if not fuse_shortcut:
            args += [p["ws"].astype(bf)]
        args += [r(p["gs"]), r(p["bs"])]

    def full(shape):
        n = len(shape)
        return pl.BlockSpec(shape, lambda i: (0,) * n)

    kernel = functools.partial(yblock_kernel, stride=stride,
                               has_shortcut=has_shortcut,
                               fuse_shortcut=fuse_shortcut)
    out2d = pl.pallas_call(
        kernel,
        out_shape=jax.ShapeDtypeStruct((M2, Cout), jnp.float32),
        grid=(1,),
        in_specs=[full(a.shape) for a in args],
        out_specs=full((M2, Cout)),
        scratch_shapes=[pltpu.VMEM((N, H + 2, W + 2, inter), jnp.bfloat16)],
        compiler_params=pltpu.CompilerParams(
            dimension_semantics=("arbitrary",),
            vmem_limit_bytes=64 * 1024 * 1024),
    )(*args)
    return out2d.reshape(N, Ho, Wo, Cout)


# --------------------------- plain-JAX reference --------------------------------
# Matches the kernel's matmul precision (bf16 operands, f32 accumulation) so the
# comparison isolates implementation error rather than bf16 rounding.
def ref_forward(x, p, stride, groups, has_shortcut):
    dn = ("NHWC", "HWIO", "NHWC")
    bf = jnp.bfloat16

    def conv(z, w, s=1, g=1, pad="VALID"):
        return jax.lax.conv_general_dilated(
            z.astype(bf), w.astype(bf), (s, s), pad, dimension_numbers=dn,
            feature_group_count=g, preferred_element_type=jnp.float32)

    def bn(z, gamma, beta):
        mean = jnp.mean(z, axis=(0, 1, 2), keepdims=True)
        var = jnp.mean((z - mean) ** 2, axis=(0, 1, 2), keepdims=True)
        return (z - mean) * jax.lax.rsqrt(var + EPS) * gamma + beta

    y = conv(x, p["w1"].reshape(1, 1, *p["w1"].shape))
    y = jnp.maximum(bn(y, p["g1"], p["b1"]), 0.0)
    y = conv(y, p["w2g"], s=stride, g=groups, pad=((1, 1), (1, 1)))
    y = jnp.maximum(bn(y, p["g2"], p["b2"]), 0.0)
    pooled = jnp.mean(y, axis=(1, 2))
    h = jnp.maximum(jnp.dot(pooled.astype(bf), p["wfc1"].astype(bf),
                            preferred_element_type=jnp.float32) + p["bfc1"], 0.0)
    gate = _sigmoid(jnp.dot(h.astype(bf), p["wfc2"].astype(bf),
                            preferred_element_type=jnp.float32) + p["bfc2"])
    y = y * gate[:, None, None, :]
    y = conv(y, p["w3"].reshape(1, 1, *p["w3"].shape))
    y = bn(y, p["g3"], p["b3"])
    if has_shortcut:
        sc = conv(x, p["ws"].reshape(1, 1, *p["ws"].shape), s=stride)
        sc = bn(sc, p["gs"], p["bs"])
        y = y + sc
    return jnp.maximum(y, 0.0)


# --------------------------- parameter init --------------------------------------
def init_params(key, in_channels, out_channels, group_width,
                bottleneck_ratio, se_ratio):
    inter = int(round(out_channels * bottleneck_ratio))
    groups = inter // group_width
    se_ch = int(round(inter * se_ratio))
    ks = jax.random.split(key, 16)

    def w(k, shape, scale=0.1):
        return scale * jax.random.normal(k, shape, jnp.float32)

    p = {
        "w1": w(ks[0], (in_channels, inter)),
        "g1": 1.0 + 0.1 * jax.random.normal(ks[1], (inter,), jnp.float32),
        "b1": 0.1 * jax.random.normal(ks[2], (inter,), jnp.float32),
        "w2g": w(ks[3], (3, 3, group_width, inter)),     # HWIO grouped weight
        "g2": 1.0 + 0.1 * jax.random.normal(ks[4], (inter,), jnp.float32),
        "b2": 0.1 * jax.random.normal(ks[5], (inter,), jnp.float32),
        "wfc1": w(ks[6], (inter, se_ch)),
        "bfc1": 0.1 * jax.random.normal(ks[7], (se_ch,), jnp.float32),
        "wfc2": w(ks[8], (se_ch, inter)),
        "bfc2": 0.1 * jax.random.normal(ks[9], (inter,), jnp.float32),
        "w3": w(ks[10], (inter, out_channels)),
        "g3": 1.0 + 0.1 * jax.random.normal(ks[11], (out_channels,), jnp.float32),
        "b3": 0.1 * jax.random.normal(ks[12], (out_channels,), jnp.float32),
        "ws": w(ks[13], (in_channels, out_channels)),
        "gs": 1.0 + 0.1 * jax.random.normal(ks[14], (out_channels,), jnp.float32),
        "bs": 0.1 * jax.random.normal(ks[15], (out_channels,), jnp.float32),
    }
    return p, inter, groups, se_ch


if __name__ == "__main__":
    key = jax.random.PRNGKey(0)
    kx, kp = jax.random.split(key)

    # YBlock(in_channels=16, out_channels=32, stride=1, group_width=8,
    #        bottleneck_ratio=1, se_ratio=1/4)
    N, H, W = 2, 16, 16
    in_channels, out_channels = 16, 32
    stride, group_width, bottleneck_ratio, se_ratio = 1, 8, 1.0, 0.25

    p, inter, groups, se_ch = init_params(
        kp, in_channels, out_channels, group_width, bottleneck_ratio, se_ratio)
    has_shortcut = (in_channels != out_channels) or (stride != 1)

    x = jax.random.normal(kx, (N, H, W, in_channels), jnp.float32)

    out = jax.block_until_ready(yblock_forward(x, p, stride, groups, has_shortcut))
    ref = jax.block_until_ready(ref_forward(x, p, stride, groups, has_shortcut))

    assert out.shape == ref.shape, (out.shape, ref.shape)
    # bf16 matmul operands on both sides; residual diff comes only from
    # accumulation order / decomposition, comfortably inside 1e-2.
    if not bool(jnp.allclose(out, ref, rtol=1e-2, atol=1e-2)):
        raise AssertionError(
            f"mismatch vs reference, max abs err = {float(jnp.max(jnp.abs(out - ref)))}")
    print("KERNEL_OK")
</pallas_src>

<mosaic_0001>
module attributes {stable_mosaic.version = 11 : i64} {
  func.func @yblock_kernel(%arg0: i32, %arg1: memref<2x16x16x16xbf16, #tpu.memory_space<vmem>>, %arg2: memref<16x64xbf16, #tpu.memory_space<vmem>>, %arg3: memref<1x32xf32, #tpu.memory_space<vmem>>, %arg4: memref<1x32xf32, #tpu.memory_space<vmem>>, %arg5: memref<288x32xbf16, #tpu.memory_space<vmem>>, %arg6: memref<1x32xf32, #tpu.memory_space<vmem>>, %arg7: memref<1x32xf32, #tpu.memory_space<vmem>>, %arg8: memref<32x8xbf16, #tpu.memory_space<vmem>>, %arg9: memref<1x8xf32, #tpu.memory_space<vmem>>, %arg10: memref<8x32xbf16, #tpu.memory_space<vmem>>, %arg11: memref<1x32xf32, #tpu.memory_space<vmem>>, %arg12: memref<32x32xbf16, #tpu.memory_space<vmem>>, %arg13: memref<1x32xf32, #tpu.memory_space<vmem>>, %arg14: memref<1x32xf32, #tpu.memory_space<vmem>>, %arg15: memref<1x32xf32, #tpu.memory_space<vmem>>, %arg16: memref<1x32xf32, #tpu.memory_space<vmem>>, %arg17: memref<512x32xf32, #tpu.memory_space<vmem>>, %arg18: memref<2x18x18x32xbf16, #tpu.memory_space<vmem>>) attributes {dimension_semantics = [#tpu.dimension_semantics<arbitrary>], iteration_bounds = array<i64: 1>, scalar_prefetch = 0 : i64, scratch_operands = 1 : i64, tpu.core_type = #tpu.core_type<tc>, window_params = [{pipeline_mode = #tpu.pipeline_mode<synchronous>, transform_indices = @transform_0, window_bounds = array<i64: 2, 16, 16, 16>}, {pipeline_mode = #tpu.pipeline_mode<synchronous>, transform_indices = @transform_1, window_bounds = array<i64: 16, 64>}, {pipeline_mode = #tpu.pipeline_mode<synchronous>, transform_indices = @transform_2, window_bounds = array<i64: 1, 32>}, {pipeline_mode = #tpu.pipeline_mode<synchronous>, transform_indices = @transform_3, window_bounds = array<i64: 1, 32>}, {pipeline_mode = #tpu.pipeline_mode<synchronous>, transform_indices = @transform_4, window_bounds = array<i64: 288, 32>}, {pipeline_mode = #tpu.pipeline_mode<synchronous>, transform_indices = @transform_5, window_bounds = array<i64: 1, 32>}, {pipeline_mode = #tpu.pipeline_mode<synchronous>, transform_indices = @transform_6, window_bounds = array<i64: 1, 32>}, {pipeline_mode = #tpu.pipeline_mode<synchronous>, transform_indices = @transform_7, window_bounds = array<i64: 32, 8>}, {pipeline_mode = #tpu.pipeline_mode<synchronous>, transform_indices = @transform_8, window_bounds = array<i64: 1, 8>}, {pipeline_mode = #tpu.pipeline_mode<synchronous>, transform_indices = @transform_9, window_bounds = array<i64: 8, 32>}, {pipeline_mode = #tpu.pipeline_mode<synchronous>, transform_indices = @transform_10, window_bounds = array<i64: 1, 32>}, {pipeline_mode = #tpu.pipeline_mode<synchronous>, transform_indices = @transform_11, window_bounds = array<i64: 32, 32>}, {pipeline_mode = #tpu.pipeline_mode<synchronous>, transform_indices = @transform_12, window_bounds = array<i64: 1, 32>}, {pipeline_mode = #tpu.pipeline_mode<synchronous>, transform_indices = @transform_13, window_bounds = array<i64: 1, 32>}, {pipeline_mode = #tpu.pipeline_mode<synchronous>, transform_indices = @transform_14, window_bounds = array<i64: 1, 32>}, {pipeline_mode = #tpu.pipeline_mode<synchronous>, transform_indices = @transform_15, window_bounds = array<i64: 1, 32>}, {pipeline_mode = #tpu.pipeline_mode<synchronous>, transform_indices = @transform_16, window_bounds = array<i64: 512, 32>}]} {
    %c0 = arith.constant 0 : index
    %c0_0 = arith.constant 0 : index
    %c0_1 = arith.constant 0 : index
    %c0_2 = arith.constant 0 : index
    %0 = vector.load %arg1[%c0, %c0_0, %c0_1, %c0_2] : memref<2x16x16x16xbf16, #tpu.memory_space<vmem>>, vector<2x16x16x16xbf16>
    %1 = vector.shape_cast %0 : vector<2x16x16x16xbf16> to vector<512x16xbf16>
    %c0_3 = arith.constant 0 : index
    %c0_4 = arith.constant 0 : index
    %2 = vector.load %arg2[%c0_3, %c0_4] : memref<16x64xbf16, #tpu.memory_space<vmem>>, vector<16x64xbf16>
    %cst = arith.constant dense<0.000000e+00> : vector<512x64xf32>
    %3 = tpu.matmul %1, %2, %cst {dimension_numbers = #tpu.dot_dimension_numbers<[1], [0], [0], [1], [0, 0, 1, 1], [], []>} : vector<512x16xbf16>, vector<16x64xbf16>, vector<512x64xf32> -> vector<512x64xf32>
    %4 = vector.extract_strided_slice %3 {offsets = [0, 0], sizes = [512, 32], strides = [1, 1]} : vector<512x64xf32> to vector<512x32xf32>
    %5 = vector.extract_strided_slice %3 {offsets = [0, 32], sizes = [512, 32], strides = [1, 1]} : vector<512x64xf32> to vector<512x32xf32>
    %c0_5 = arith.constant 0 : index
    %c0_6 = arith.constant 0 : index
    %6 = vector.load %arg3[%c0_5, %c0_6] : memref<1x32xf32, #tpu.memory_space<vmem>>, vector<1x32xf32>
    %c0_7 = arith.constant 0 : index
    %c0_8 = arith.constant 0 : index
    %7 = vector.load %arg4[%c0_7, %c0_8] : memref<1x32xf32, #tpu.memory_space<vmem>>, vector<1x32xf32>
    %cst_9 = arith.constant dense<0.000000e+00> : vector<32xf32>
    %8 = vector.multi_reduction <add>, %4, %cst_9 [0] : vector<512x32xf32> to vector<32xf32>
    %9 = vector.shape_cast %8 : vector<32xf32> to vector<1x32xf32>
    %cst_10 = arith.constant 0.001953125 : f32
    %10 = vector.broadcast %cst_10 : f32 to vector<1x32xf32>
    %11 = arith.mulf %9, %10 : vector<1x32xf32>
    %12 = vector.broadcast %11 : vector<1x32xf32> to vector<512x32xf32>
    %13 = arith.subf %4, %12 : vector<512x32xf32>
    %14 = arith.mulf %13, %13 : vector<512x32xf32>
    %cst_11 = arith.constant dense<0.000000e+00> : vector<32xf32>
    %15 = vector.multi_reduction <add>, %14, %cst_11 [0] : vector<512x32xf32> to vector<32xf32>
    %16 = vector.shape_cast %15 : vector<32xf32> to vector<1x32xf32>
    %cst_12 = arith.constant 0.001953125 : f32
    %17 = vector.broadcast %cst_12 : f32 to vector<1x32xf32>
    %18 = arith.mulf %16, %17 : vector<1x32xf32>
    %cst_13 = arith.constant 9.99999974E-6 : f32
    %19 = vector.broadcast %cst_13 : f32 to vector<1x32xf32>
    %20 = arith.addf %18, %19 : vector<1x32xf32>
    %21 = math.rsqrt %20 : vector<1x32xf32>
    %22 = vector.broadcast %21 : vector<1x32xf32> to vector<512x32xf32>
    %23 = arith.mulf %13, %22 : vector<512x32xf32>
    %24 = vector.broadcast %6 : vector<1x32xf32> to vector<512x32xf32>
    %25 = arith.mulf %23, %24 : vector<512x32xf32>
    %26 = vector.broadcast %7 : vector<1x32xf32> to vector<512x32xf32>
    %27 = arith.addf %25, %26 : vector<512x32xf32>
    %cst_14 = arith.constant 0.000000e+00 : f32
    %28 = vector.broadcast %cst_14 : f32 to vector<512x32xf32>
    %29 = arith.maximumf %27, %28 : vector<512x32xf32>
    %cst_15 = arith.constant 0.000000e+00 : bf16
    %30 = vector.broadcast %cst_15 : bf16 to vector<2x1x18x32xbf16>
    %c0_16 = arith.constant 0 : index
    %c0_17 = arith.constant 0 : index
    %c0_18 = arith.constant 0 : index
    %c0_19 = arith.constant 0 : index
    %31 = vector.load %arg18[%c0_16, %c0_17, %c0_18, %c0_19] : memref<2x18x18x32xbf16, #tpu.memory_space<vmem>>, vector<2x1x18x32xbf16>
    tpu.vector_store %arg18[%c0_16, %c0_17, %c0_18, %c0_19], %30 {strides = array<i32>} : memref<2x18x18x32xbf16, #tpu.memory_space<vmem>>, vector<2x1x18x32xbf16>,
    %c0_20 = arith.constant 0 : index
    %c17 = arith.constant 17 : index
    %c0_21 = arith.constant 0 : index
    %c0_22 = arith.constant 0 : index
    %32 = vector.load %arg18[%c0_20, %c17, %c0_21, %c0_22] : memref<2x18x18x32xbf16, #tpu.memory_space<vmem>>, vector<2x1x18x32xbf16>
    tpu.vector_store %arg18[%c0_20, %c17, %c0_21, %c0_22], %30 {strides = array<i32>} : memref<2x18x18x32xbf16, #tpu.memory_space<vmem>>, vector<2x1x18x32xbf16>,
    %cst_23 = arith.constant 0.000000e+00 : bf16
    %33 = vector.broadcast %cst_23 : bf16 to vector<2x16x1x32xbf16>
    %34 = vector.shape_cast %29 : vector<512x32xf32> to vector<2x16x16x32xf32>
    %35 = arith.truncf %34 : vector<2x16x16x32xf32> to vector<2x16x16x32xbf16>
    %36 = tpu.concatenate %33, %35, %33 in 2 : vector<2x16x1x32xbf16>, vector<2x16x16x32xbf16>, vector<2x16x1x32xbf16> -> vector<2x16x18x32xbf16>
    %c0_24 = arith.constant 0 : index
    %c1 = arith.constant 1 : index
    %c0_25 = arith.constant 0 : index
    %c0_26 = arith.constant 0 : index
    %37 = vector.load %arg18[%c0_24, %c1, %c0_25, %c0_26] : memref<2x18x18x32xbf16, #tpu.memory_space<vmem>>, vector<2x16x18x32xbf16>
    tpu.vector_store %arg18[%c0_24, %c1, %c0_25, %c0_26], %36 {strides = array<i32>} : memref<2x18x18x32xbf16, #tpu.memory_space<vmem>>, vector<2x16x18x32xbf16>,
    %c0_27 = arith.constant 0 : index
    %c0_28 = arith.constant 0 : index
    %c0_29 = arith.constant 0 : index
    %c0_30 = arith.constant 0 : index
    %38 = vector.load %arg18[%c0_27, %c0_28, %c0_29, %c0_30] : memref<2x18x18x32xbf16, #tpu.memory_space<vmem>>, vector<2x16x16x32xbf16>
    %39 = vector.shape_cast %38 : vector<2x16x16x32xbf16> to vector<512x32xbf16>
    %c0_31 = arith.constant 0 : index
    %c0_32 = arith.constant 0 : index
    %c1_33 = arith.constant 1 : index
    %c0_34 = arith.constant 0 : index
    %40 = vector.load %arg18[%c0_31, %c0_32, %c1_33, %c0_34] : memref<2x18x18x32xbf16, #tpu.memory_space<vmem>>, vector<2x16x16x32xbf16>
    %41 = vector.shape_cast %40 : vector<2x16x16x32xbf16> to vector<512x32xbf16>
    %c0_35 = arith.constant 0 : index
    %c0_36 = arith.constant 0 : index
    %c2 = arith.constant 2 : index
    %c0_37 = arith.constant 0 : index
    %42 = vector.load %arg18[%c0_35, %c0_36, %c2, %c0_37] : memref<2x18x18x32xbf16, #tpu.memory_space<vmem>>, vector<2x16x16x32xbf16>
    %43 = vector.shape_cast %42 : vector<2x16x16x32xbf16> to vector<512x32xbf16>
    %c0_38 = arith.constant 0 : index
    %c1_39 = arith.constant 1 : index
    %c0_40 = arith.constant 0 : index
    %c0_41 = arith.constant 0 : index
    %44 = vector.load %arg18[%c0_38, %c1_39, %c0_40, %c0_41] : memref<2x18x18x32xbf16, #tpu.memory_space<vmem>>, vector<2x16x16x32xbf16>
    %45 = vector.shape_cast %44 : vector<2x16x16x32xbf16> to vector<512x32xbf16>
    %c0_42 = arith.constant 0 : index
    %c1_43 = arith.constant 1 : index
    %c1_44 = arith.constant 1 : index
    %c0_45 = arith.constant 0 : index
    %46 = vector.load %arg18[%c0_42, %c1_43, %c1_44, %c0_45] : memref<2x18x18x32xbf16, #tpu.memory_space<vmem>>, vector<2x16x16x32xbf16>
    %47 = vector.shape_cast %46 : vector<2x16x16x32xbf16> to vector<512x32xbf16>
    %c0_46 = arith.constant 0 : index
    %c1_47 = arith.constant 1 : index
    %c2_48 = arith.constant 2 : index
    %c0_49 = arith.constant 0 : index
    %48 = vector.load %arg18[%c0_46, %c1_47, %c2_48, %c0_49] : memref<2x18x18x32xbf16, #tpu.memory_space<vmem>>, vector<2x16x16x32xbf16>
    %49 = vector.shape_cast %48 : vector<2x16x16x32xbf16> to vector<512x32xbf16>
    %c0_50 = arith.constant 0 : index
    %c2_51 = arith.constant 2 : index
    %c0_52 = arith.constant 0 : index
    %c0_53 = arith.constant 0 : index
    %50 = vector.load %arg18[%c0_50, %c2_51, %c0_52, %c0_53] : memref<2x18x18x32xbf16, #tpu.memory_space<vmem>>, vector<2x16x16x32xbf16>
    %51 = vector.shape_cast %50 : vector<2x16x16x32xbf16> to vector<512x32xbf16>
    %c0_54 = arith.constant 0 : index
    %c2_55 = arith.constant 2 : index
    %c1_56 = arith.constant 1 : index
    %c0_57 = arith.constant 0 : index
    %52 = vector.load %arg18[%c0_54, %c2_55, %c1_56, %c0_57] : memref<2x18x18x32xbf16, #tpu.memory_space<vmem>>, vector<2x16x16x32xbf16>
    %53 = vector.shape_cast %52 : vector<2x16x16x32xbf16> to vector<512x32xbf16>
    %c0_58 = arith.constant 0 : index
    %c2_59 = arith.constant 2 : index
    %c2_60 = arith.constant 2 : index
    %c0_61 = arith.constant 0 : index
    %54 = vector.load %arg18[%c0_58, %c2_59, %c2_60, %c0_61] : memref<2x18x18x32xbf16, #tpu.memory_space<vmem>>, vector<2x16x16x32xbf16>
    %55 = vector.shape_cast %54 : vector<2x16x16x32xbf16> to vector<512x32xbf16>
    %56 = tpu.concatenate %39, %41, %43, %45, %47, %49, %51, %53, %55 in 1 : vector<512x32xbf16>, vector<512x32xbf16>, vector<512x32xbf16>, vector<512x32xbf16>, vector<512x32xbf16>, vector<512x32xbf16>, vector<512x32xbf16>, vector<512x32xbf16>, vector<512x32xbf16> -> vector<512x288xbf16>
    %c0_62 = arith.constant 0 : index
    %c0_63 = arith.constant 0 : index
    %57 = vector.load %arg5[%c0_62, %c0_63] : memref<288x32xbf16, #tpu.memory_space<vmem>>, vector<288x32xbf16>
    %cst_64 = arith.constant dense<0.000000e+00> : vector<512x32xf32>
    %58 = tpu.matmul %56, %57, %cst_64 {dimension_numbers = #tpu.dot_dimension_numbers<[1], [0], [0], [1], [0, 0, 1, 1], [], []>} : vector<512x288xbf16>, vector<288x32xbf16>, vector<512x32xf32> -> vector<512x32xf32>
    %c0_65 = arith.constant 0 : index
    %c0_66 = arith.constant 0 : index
    %59 = vector.load %arg6[%c0_65, %c0_66] : memref<1x32xf32, #tpu.memory_space<vmem>>, vector<1x32xf32>
    %c0_67 = arith.constant 0 : index
    %c0_68 = arith.constant 0 : index
    %60 = vector.load %arg7[%c0_67, %c0_68] : memref<1x32xf32, #tpu.memory_space<vmem>>, vector<1x32xf32>
    %cst_69 = arith.constant dense<0.000000e+00> : vector<32xf32>
    %61 = vector.multi_reduction <add>, %58, %cst_69 [0] : vector<512x32xf32> to vector<32xf32>
    %62 = vector.shape_cast %61 : vector<32xf32> to vector<1x32xf32>
    %cst_70 = arith.constant 0.001953125 : f32
    %63 = vector.broadcast %cst_70 : f32 to vector<1x32xf32>
    %64 = arith.mulf %62, %63 : vector<1x32xf32>
    %65 = vector.broadcast %64 : vector<1x32xf32> to vector<512x32xf32>
    %66 = arith.subf %58, %65 : vector<512x32xf32>
    %67 = arith.mulf %66, %66 : vector<512x32xf32>
    %cst_71 = arith.constant dense<0.000000e+00> : vector<32xf32>
    %68 = vector.multi_reduction <add>, %67, %cst_71 [0] : vector<512x32xf32> to vector<32xf32>
    %69 = vector.shape_cast %68 : vector<32xf32> to vector<1x32xf32>
    %cst_72 = arith.constant 0.001953125 : f32
    %70 = vector.broadcast %cst_72 : f32 to vector<1x32xf32>
    %71 = arith.mulf %69, %70 : vector<1x32xf32>
    %cst_73 = arith.constant 9.99999974E-6 : f32
    %72 = vector.broadcast %cst_73 : f32 to vector<1x32xf32>
    %73 = arith.addf %71, %72 : vector<1x32xf32>
    %74 = math.rsqrt %73 : vector<1x32xf32>
    %75 = vector.broadcast %74 : vector<1x32xf32> to vector<512x32xf32>
    %76 = arith.mulf %66, %75 : vector<512x32xf32>
    %77 = vector.broadcast %59 : vector<1x32xf32> to vector<512x32xf32>
    %78 = arith.mulf %76, %77 : vector<512x32xf32>
    %79 = vector.broadcast %60 : vector<1x32xf32> to vector<512x32xf32>
    %80 = arith.addf %78, %79 : vector<512x32xf32>
    %cst_74 = arith.constant 0.000000e+00 : f32
    %81 = vector.broadcast %cst_74 : f32 to vector<512x32xf32>
    %82 = arith.maximumf %80, %81 : vector<512x32xf32>
    %83 = vector.shape_cast %82 : vector<512x32xf32> to vector<2x256x32xf32>
    %cst_75 = arith.constant dense<0.000000e+00> : vector<2x32xf32>
    %84 = vector.multi_reduction <add>, %83, %cst_75 [1] : vector<2x256x32xf32> to vector<2x32xf32>
    %cst_76 = arith.constant 2.560000e+02 : f32
    %85 = vector.broadcast %cst_76 : f32 to vector<2x32xf32>
    %86 = arith.divf %84, %85 : vector<2x32xf32>
    %87 = arith.truncf %86 : vector<2x32xf32> to vector<2x32xbf16>
    %c0_77 = arith.constant 0 : index
    %c0_78 = arith.constant 0 : index
    %88 = vector.load %arg8[%c0_77, %c0_78] : memref<32x8xbf16, #tpu.memory_space<vmem>>, vector<32x8xbf16>
    %cst_79 = arith.constant dense<0.000000e+00> : vector<2x8xf32>
    %89 = tpu.matmul %87, %88, %cst_79 {dimension_numbers = #tpu.dot_dimension_numbers<[1], [0], [0], [1], [0, 0, 1, 1], [], []>} : vector<2x32xbf16>, vector<32x8xbf16>, vector<2x8xf32> -> vector<2x8xf32>
    %c0_80 = arith.constant 0 : index
    %c0_81 = arith.constant 0 : index
    %90 = vector.load %arg9[%c0_80, %c0_81] : memref<1x8xf32, #tpu.memory_space<vmem>>, vector<1x8xf32>
    %91 = vector.broadcast %90 : vector<1x8xf32> to vector<2x8xf32>
    %92 = arith.addf %89, %91 : vector<2x8xf32>
    %cst_82 = arith.constant 0.000000e+00 : f32
    %93 = vector.broadcast %cst_82 : f32 to vector<2x8xf32>
    %94 = arith.maximumf %92, %93 : vector<2x8xf32>
    %95 = arith.truncf %94 : vector<2x8xf32> to vector<2x8xbf16>
    %c0_83 = arith.constant 0 : index
    %c0_84 = arith.constant 0 : index
    %96 = vector.load %arg10[%c0_83, %c0_84] : memref<8x32xbf16, #tpu.memory_space<vmem>>, vector<8x32xbf16>
    %cst_85 = arith.constant dense<0.000000e+00> : vector<2x32xf32>
    %97 = tpu.matmul %95, %96, %cst_85 {dimension_numbers = #tpu.dot_dimension_numbers<[1], [0], [0], [1], [0, 0, 1, 1], [], []>} : vector<2x8xbf16>, vector<8x32xbf16>, vector<2x32xf32> -> vector<2x32xf32>
    %c0_86 = arith.constant 0 : index
    %c0_87 = arith.constant 0 : index
    %98 = vector.load %arg11[%c0_86, %c0_87] : memref<1x32xf32, #tpu.memory_space<vmem>>, vector<1x32xf32>
    %99 = vector.broadcast %98 : vector<1x32xf32> to vector<2x32xf32>
    %100 = arith.addf %97, %99 : vector<2x32xf32>
    %cst_88 = arith.constant 0.000000e+00 : f32
    %101 = vector.broadcast %cst_88 : f32 to vector<2x32xf32>
    %102 = arith.subf %101, %100 : vector<2x32xf32>
    %103 = math.exp %102 : vector<2x32xf32>
    %cst_89 = arith.constant 1.000000e+00 : f32
    %104 = vector.broadcast %cst_89 : f32 to vector<2x32xf32>
    %105 = arith.addf %104, %103 : vector<2x32xf32>
    %cst_90 = arith.constant 1.000000e+00 : f32
    %106 = vector.broadcast %cst_90 : f32 to vector<2x32xf32>
    %107 = arith.divf %106, %105 : vector<2x32xf32>
    %108 = vector.shape_cast %107 : vector<2x32xf32> to vector<2x1x32xf32>
    %109 = vector.broadcast %108 : vector<2x1x32xf32> to vector<2x256x32xf32>
    %110 = arith.mulf %83, %109 : vector<2x256x32xf32>
    %111 = vector.shape_cast %110 : vector<2x256x32xf32> to vector<512x32xf32>
    %112 = arith.truncf %111 : vector<512x32xf32> to vector<512x32xbf16>
    %c0_91 = arith.constant 0 : index
    %c0_92 = arith.constant 0 : index
    %113 = vector.load %arg12[%c0_91, %c0_92] : memref<32x32xbf16, #tpu.memory_space<vmem>>, vector<32x32xbf16>
    %cst_93 = arith.constant dense<0.000000e+00> : vector<512x32xf32>
    %114 = tpu.matmul %112, %113, %cst_93 {dimension_numbers = #tpu.dot_dimension_numbers<[1], [0], [0], [1], [0, 0, 1, 1], [], []>} : vector<512x32xbf16>, vector<32x32xbf16>, vector<512x32xf32> -> vector<512x32xf32>
    %c0_94 = arith.constant 0 : index
    %c0_95 = arith.constant 0 : index
    %115 = vector.load %arg13[%c0_94, %c0_95] : memref<1x32xf32, #tpu.memory_space<vmem>>, vector<1x32xf32>
    %c0_96 = arith.constant 0 : index
    %c0_97 = arith.constant 0 : index
    %116 = vector.load %arg14[%c0_96, %c0_97] : memref<1x32xf32, #tpu.memory_space<vmem>>, vector<1x32xf32>
    %cst_98 = arith.constant dense<0.000000e+00> : vector<32xf32>
    %117 = vector.multi_reduction <add>, %114, %cst_98 [0] : vector<512x32xf32> to vector<32xf32>
    %118 = vector.shape_cast %117 : vector<32xf32> to vector<1x32xf32>
    %cst_99 = arith.constant 0.001953125 : f32
    %119 = vector.broadcast %cst_99 : f32 to vector<1x32xf32>
    %120 = arith.mulf %118, %119 : vector<1x32xf32>
    %121 = vector.broadcast %120 : vector<1x32xf32> to vector<512x32xf32>
    %122 = arith.subf %114, %121 : vector<512x32xf32>
    %123 = arith.mulf %122, %122 : vector<512x32xf32>
    %cst_100 = arith.constant dense<0.000000e+00> : vector<32xf32>
    %124 = vector.multi_reduction <add>, %123, %cst_100 [0] : vector<512x32xf32> to vector<32xf32>
    %125 = vector.shape_cast %124 : vector<32xf32> to vector<1x32xf32>
    %cst_101 = arith.constant 0.001953125 : f32
    %126 = vector.broadcast %cst_101 : f32 to vector<1x32xf32>
    %127 = arith.mulf %125, %126 : vector<1x32xf32>
    %cst_102 = arith.constant 9.99999974E-6 : f32
    %128 = vector.broadcast %cst_102 : f32 to vector<1x32xf32>
    %129 = arith.addf %127, %128 : vector<1x32xf32>
    %130 = math.rsqrt %129 : vector<1x32xf32>
    %131 = vector.broadcast %130 : vector<1x32xf32> to vector<512x32xf32>
    %132 = arith.mulf %122, %131 : vector<512x32xf32>
    %133 = vector.broadcast %115 : vector<1x32xf32> to vector<512x32xf32>
    %134 = arith.mulf %132, %133 : vector<512x32xf32>
    %135 = vector.broadcast %116 : vector<1x32xf32> to vector<512x32xf32>
    %136 = arith.addf %134, %135 : vector<512x32xf32>
    %c0_103 = arith.constant 0 : index
    %c0_104 = arith.constant 0 : index
    %137 = vector.load %arg15[%c0_103, %c0_104] : memref<1x32xf32, #tpu.memory_space<vmem>>, vector<1x32xf32>
    %c0_105 = arith.constant 0 : index
    %c0_106 = arith.constant 0 : index
    %138 = vector.load %arg16[%c0_105, %c0_106] : memref<1x32xf32, #tpu.memory_space<vmem>>, vector<1x32xf32>
    %cst_107 = arith.constant dense<0.000000e+00> : vector<32xf32>
    %139 = vector.multi_reduction <add>, %5, %cst_107 [0] : vector<512x32xf32> to vector<32xf32>
    %140 = vector.shape_cast %139 : vector<32xf32> to vector<1x32xf32>
    %cst_108 = arith.constant 0.001953125 : f32
    %141 = vector.broadcast %cst_108 : f32 to vector<1x32xf32>
    %142 = arith.mulf %140, %141 : vector<1x32xf32>
    %143 = vector.broadcast %142 : vector<1x32xf32> to vector<512x32xf32>
    %144 = arith.subf %5, %143 : vector<512x32xf32>
    %145 = arith.mulf %144, %144 : vector<512x32xf32>
    %cst_109 = arith.constant dense<0.000000e+00> : vector<32xf32>
    %146 = vector.multi_reduction <add>, %145, %cst_109 [0] : vector<512x32xf32> to vector<32xf32>
    %147 = vector.shape_cast %146 : vector<32xf32> to vector<1x32xf32>
    %cst_110 = arith.constant 0.001953125 : f32
    %148 = vector.broadcast %cst_110 : f32 to vector<1x32xf32>
    %149 = arith.mulf %147, %148 : vector<1x32xf32>
    %cst_111 = arith.constant 9.99999974E-6 : f32
    %150 = vector.broadcast %cst_111 : f32 to vector<1x32xf32>
    %151 = arith.addf %149, %150 : vector<1x32xf32>
    %152 = math.rsqrt %151 : vector<1x32xf32>
    %153 = vector.broadcast %152 : vector<1x32xf32> to vector<512x32xf32>
    %154 = arith.mulf %144, %153 : vector<512x32xf32>
    %155 = vector.broadcast %137 : vector<1x32xf32> to vector<512x32xf32>
    %156 = arith.mulf %154, %155 : vector<512x32xf32>
    %157 = vector.broadcast %138 : vector<1x32xf32> to vector<512x32xf32>
    %158 = arith.addf %156, %157 : vector<512x32xf32>
    %159 = arith.addf %136, %158 : vector<512x32xf32>
    %cst_112 = arith.constant 0.000000e+00 : f32
    %160 = vector.broadcast %cst_112 : f32 to vector<512x32xf32>
    %161 = arith.maximumf %159, %160 : vector<512x32xf32>
    %c0_113 = arith.constant 0 : index
    %c0_114 = arith.constant 0 : index
    %162 = vector.load %arg17[%c0_113, %c0_114] : memref<512x32xf32, #tpu.memory_space<vmem>>, vector<512x32xf32>
    tpu.vector_store %arg17[%c0_113, %c0_114], %161 {strides = array<i32>} : memref<512x32xf32, #tpu.memory_space<vmem>>, vector<512x32xf32>,
    return
  }
  func.func @transform_0(%arg0: i32) -> (i32, i32, i32, i32) {
    %c0_i32 = arith.constant 0 : i32
    %c0_i32_0 = arith.constant 0 : i32
    %c0_i32_1 = arith.constant 0 : i32
    %c0_i32_2 = arith.constant 0 : i32
    %c0_i32_3 = arith.constant 0 : i32
    return %c0_i32, %c0_i32_0, %c0_i32_1, %c0_i32_2 : i32, i32, i32, i32
  }
  func.func @transform_1(%arg0: i32) -> (i32, i32) {
    %c0_i32 = arith.constant 0 : i32
    %c0_i32_0 = arith.constant 0 : i32
    %c0_i32_1 = arith.constant 0 : i32
    return %c0_i32, %c0_i32_0 : i32, i32
  }
  func.func @transform_2(%arg0: i32) -> (i32, i32) {
    %c0_i32 = arith.constant 0 : i32
    %c0_i32_0 = arith.constant 0 : i32
    %c0_i32_1 = arith.constant 0 : i32
    return %c0_i32, %c0_i32_0 : i32, i32
  }
  func.func @transform_3(%arg0: i32) -> (i32, i32) {
    %c0_i32 = arith.constant 0 : i32
    %c0_i32_0 = arith.constant 0 : i32
    %c0_i32_1 = arith.constant 0 : i32
    return %c0_i32, %c0_i32_0 : i32, i32
  }
  func.func @transform_4(%arg0: i32) -> (i32, i32) {
    %c0_i32 = arith.constant 0 : i32
    %c0_i32_0 = arith.constant 0 : i32
    %c0_i32_1 = arith.constant 0 : i32
    return %c0_i32, %c0_i32_0 : i32, i32
  }
  func.func @transform_5(%arg0: i32) -> (i32, i32) {
    %c0_i32 = arith.constant 0 : i32
    %c0_i32_0 = arith.constant 0 : i32
    %c0_i32_1 = arith.constant 0 : i32
    return %c0_i32, %c0_i32_0 : i32, i32
  }
  func.func @transform_6(%arg0: i32) -> (i32, i32) {
    %c0_i32 = arith.constant 0 : i32
    %c0_i32_0 = arith.constant 0 : i32
    %c0_i32_1 = arith.constant 0 : i32
    return %c0_i32, %c0_i32_0 : i32, i32
  }
  func.func @transform_7(%arg0: i32) -> (i32, i32) {
    %c0_i32 = arith.constant 0 : i32
    %c0_i32_0 = arith.constant 0 : i32
    %c0_i32_1 = arith.constant 0 : i32
    return %c0_i32, %c0_i32_0 : i32, i32
  }
  func.func @transform_8(%arg0: i32) -> (i32, i32) {
    %c0_i32 = arith.constant 0 : i32
    %c0_i32_0 = arith.constant 0 : i32
    %c0_i32_1 = arith.constant 0 : i32
    return %c0_i32, %c0_i32_0 : i32, i32
  }
  func.func @transform_9(%arg0: i32) -> (i32, i32) {
    %c0_i32 = arith.constant 0 : i32
    %c0_i32_0 = arith.constant 0 : i32
    %c0_i32_1 = arith.constant 0 : i32
    return %c0_i32, %c0_i32_0 : i32, i32
  }
  func.func @transform_10(%arg0: i32) -> (i32, i32) {
    %c0_i32 = arith.constant 0 : i32
    %c0_i32_0 = arith.constant 0 : i32
    %c0_i32_1 = arith.constant 0 : i32
    return %c0_i32, %c0_i32_0 : i32, i32
  }
  func.func @transform_11(%arg0: i32) -> (i32, i32) {
    %c0_i32 = arith.constant 0 : i32
    %c0_i32_0 = arith.constant 0 : i32
    %c0_i32_1 = arith.constant 0 : i32
    return %c0_i32, %c0_i32_0 : i32, i32
  }
  func.func @transform_12(%arg0: i32) -> (i32, i32) {
    %c0_i32 = arith.constant 0 : i32
    %c0_i32_0 = arith.constant 0 : i32
    %c0_i32_1 = arith.constant 0 : i32
    return %c0_i32, %c0_i32_0 : i32, i32
  }
  func.func @transform_13(%arg0: i32) -> (i32, i32) {
    %c0_i32 = arith.constant 0 : i32
    %c0_i32_0 = arith.constant 0 : i32
    %c0_i32_1 = arith.constant 0 : i32
    return %c0_i32, %c0_i32_0 : i32, i32
  }
  func.func @transform_14(%arg0: i32) -> (i32, i32) {
    %c0_i32 = arith.constant 0 : i32
    %c0_i32_0 = arith.constant 0 : i32
    %c0_i32_1 = arith.constant 0 : i32
    return %c0_i32, %c0_i32_0 : i32, i32
  }
  func.func @transform_15(%arg0: i32) -> (i32, i32) {
    %c0_i32 = arith.constant 0 : i32
    %c0_i32_0 = arith.constant 0 : i32
    %c0_i32_1 = arith.constant 0 : i32
    return %c0_i32, %c0_i32_0 : i32, i32
  }
  func.func @transform_16(%arg0: i32) -> (i32, i32) {
    %c0_i32 = arith.constant 0 : i32
    %c0_i32_0 = arith.constant 0 : i32
    %c0_i32_1 = arith.constant 0 : i32
    return %c0_i32, %c0_i32_0 : i32, i32
  }
}

</mosaic_0001>

<llo_original>
// kernel: tpu_custom_call.1
$region0: #{tpu_custom_call.1}
  #allocation0 [shape = 'u32[]', space=smem, size = 0x4, offset = 0x4, fixed_abs, tag = 'smem constant byte address 0x4 - core index']
  #allocation1 [shape = 'u32[144,128]{1,0:T(1,128)}', space=vmem, size = 0x12000, scoped, tag = 'internal scratch']
  #allocation2 [shape = 'bf16[2,18,18,32]{3,2,1,0:T(8,128)(2,1)}', space=vmem, size = 0x36000, scoped, tag = 'scratch operand']
  %s0 = inlined_call_operand.hbm [shape: bf16[2,16,16,16], index: 0, kind: input, shape index: {}]
  %s1 = inlined_call_operand.vmem [shape: bf16[16,64], index: 1, kind: input, shape index: {}]
  %s2 = inlined_call_operand.vmem [shape: f32[1,32], index: 2, kind: input, shape index: {}]
  %s3 = inlined_call_operand.vmem [shape: f32[1,32], index: 3, kind: input, shape index: {}]
  %s4 = inlined_call_operand.vmem [shape: bf16[288,32], index: 4, kind: input, shape index: {}]
  %s5 = inlined_call_operand.vmem [shape: f32[1,32], index: 5, kind: input, shape index: {}]
  %s6 = inlined_call_operand.vmem [shape: f32[1,32], index: 6, kind: input, shape index: {}]
  %s7 = inlined_call_operand.vmem [shape: bf16[32,8], index: 7, kind: input, shape index: {}]
  %s8 = inlined_call_operand.vmem [shape: f32[1,8], index: 8, kind: input, shape index: {}]
  %s9 = inlined_call_operand.vmem [shape: bf16[8,32], index: 9, kind: input, shape index: {}]
  %s10 = inlined_call_operand.vmem [shape: f32[1,32], index: 10, kind: input, shape index: {}]
  %s11 = inlined_call_operand.vmem [shape: bf16[32,32], index: 11, kind: input, shape index: {}]
  %s12 = inlined_call_operand.vmem [shape: f32[1,32], index: 12, kind: input, shape index: {}]
  %s13 = inlined_call_operand.vmem [shape: f32[1,32], index: 13, kind: input, shape index: {}]
  %s14 = inlined_call_operand.vmem [shape: f32[1,32], index: 14, kind: input, shape index: {}]
  %s15 = inlined_call_operand.vmem [shape: f32[1,32], index: 15, kind: input, shape index: {}]
  %s16 = inlined_call_operand.vmem [shape: f32[512,32], index: 16, kind: output, shape index: {}]
  %s17 = sld [smem:[#allocation0]]
  $region78: #{tpu_custom_call.1} parent=0
    _
  %s19 = ssub.s32 1, %s17
  %s20 = scalar_select 0, %s19, %s17
  $region1: #{tpu_custom_call.1} parent=0
    #allocation3 [shape = 'u8[131072]{0}', space=vmem, size = 0x20000, scoped, tag = 'input window, operand 0, single buffered']
    #allocation4 [shape = 's32[1]{0}', space=sflag, size = 0x4, scoped, tag = 'scoped memory for tpu_custom_call.1']
    %21 = vsyncpa [#allocation4], 0
    // Predicated region
    $region2: #{tpu_custom_call.1} parent=1 // pred_check
      _
    $region3: #{tpu_custom_call.1} parent=1 // pred_check_branch
      %23 = sbr.rel (0) target = $region5
    $region4: #{tpu_custom_call.1} parent=1 // pred_region
      %s25 = ssub.s32 4096, 4096
      %26 = vsyncadd [#allocation4], %s25
      %s27 = sshll.u32 [#allocation3], 4
      %s28 = int_to_ptr.vmem [resolvable:$true] %s27
      %33 = dma.hbm_to_vmem [thread:$0]  %s0, 4096, %s28, [#allocation4], 64, 64, 4
    $region5: #{tpu_custom_call.1} parent=1 // pred_fallthru
      _
    // Predicated region
    $region6: #{tpu_custom_call.1} parent=1 // pred_check
      _
    $region7: #{tpu_custom_call.1} parent=1 // pred_check_branch
      %35 = sbr.rel (0) target = $region9
    $region8: #{tpu_custom_call.1} parent=1 // pred_region
      _
    $region9: #{tpu_custom_call.1} parent=1 // pred_fallthru
      _
    // Predicated region
    $region10: #{tpu_custom_call.1} parent=1 // pred_check
      _
    $region11: #{tpu_custom_call.1} parent=1 // pred_check_branch
      %37 = sbr.rel (0) target = $region13
    $region12: #{tpu_custom_call.1} parent=1 // pred_region
      _
    $region13: #{tpu_custom_call.1} parent=1 // pred_fallthru
      _
    // Predicated region
    $region14: #{tpu_custom_call.1} parent=1 // pred_check
      _
    $region15: #{tpu_custom_call.1} parent=1 // pred_check_branch
      %39 = sbr.rel (0) target = $region17
    $region16: #{tpu_custom_call.1} parent=1 // pred_region
      _
    $region17: #{tpu_custom_call.1} parent=1 // pred_fallthru
      _
    // Predicated region
    $region18: #{tpu_custom_call.1} parent=1 // pred_check
      _
    $region19: #{tpu_custom_call.1} parent=1 // pred_check_branch
      %41 = sbr.rel (0) target = $region21
    $region20: #{tpu_custom_call.1} parent=1 // pred_region
      _
    $region21: #{tpu_custom_call.1} parent=1 // pred_fallthru
      _
    // Predicated region
    $region22: #{tpu_custom_call.1} parent=1 // pred_check
      _
    $region23: #{tpu_custom_call.1} parent=1 // pred_check_branch
      %43 = sbr.rel (0) target = $region25
    $region24: #{tpu_custom_call.1} parent=1 // pred_region
      _
    $region25: #{tpu_custom_call.1} parent=1 // pred_fallthru
      _
    // Predicated region
    $region26: #{tpu_custom_call.1} parent=1 // pred_check
      _
    $region27: #{tpu_custom_call.1} parent=1 // pred_check_branch
      %45 = sbr.rel (0) target = $region29
    $region28: #{tpu_custom_call.1} parent=1 // pred_region
      _
    $region29: #{tpu_custom_call.1} parent=1 // pred_fallthru
      _
    // Predicated region
    $region30: #{tpu_custom_call.1} parent=1 // pred_check
      _
    $region31: #{tpu_custom_call.1} parent=1 // pred_check_branch
      %47 = sbr.rel (0) target = $region33
    $region32: #{tpu_custom_call.1} parent=1 // pred_region
      _
    $region33: #{tpu_custom_call.1} parent=1 // pred_fallthru
      _
    // Predicated region
    $region34: #{tpu_custom_call.1} parent=1 // pred_check
      _
    $region35: #{tpu_custom_call.1} parent=1 // pred_check_branch
      %49 = sbr.rel (0) target = $region37
    $region36: #{tpu_custom_call.1} parent=1 // pred_region
      _
    $region37: #{tpu_custom_call.1} parent=1 // pred_fallthru
      _
    // Predicated region
    $region38: #{tpu_custom_call.1} parent=1 // pred_check
      _
    $region39: #{tpu_custom_call.1} parent=1 // pred_check_branch
      %51 = sbr.rel (0) target = $region41
    $region40: #{tpu_custom_call.1} parent=1 // pred_region
      _
    $region41: #{tpu_custom_call.1} parent=1 // pred_fallthru
      _
    // Predicated region
    $region42: #{tpu_custom_call.1} parent=1 // pred_check
      _
    $region43: #{tpu_custom_call.1} parent=1 // pred_check_branch
      %53 = sbr.rel (0) target = $region45
    $region44: #{tpu_custom_call.1} parent=1 // pred_region
      _
    $region45: #{tpu_custom_call.1} parent=1 // pred_fallthru
      _
    // Predicated region
    $region46: #{tpu_custom_call.1} parent=1 // pred_check
      _
    $region47: #{tpu_custom_call.1} parent=1 // pred_check_branch
      %55 = sbr.rel (0) target = $region49
    $region48: #{tpu_custom_call.1} parent=1 // pred_region
      _
    $region49: #{tpu_custom_call.1} parent=1 // pred_fallthru
      _
    // Predicated region
    $region50: #{tpu_custom_call.1} parent=1 // pred_check
      _
    $region51: #{tpu_custom_call.1} parent=1 // pred_check_branch
      %57 = sbr.rel (0) target = $region53
    $region52: #{tpu_custom_call.1} parent=1 // pred_region
      _
    $region53: #{tpu_custom_call.1} parent=1 // pred_fallthru
      _
    // Predicated region
    $region54: #{tpu_custom_call.1} parent=1 // pred_check
      _
    $region55: #{tpu_custom_call.1} parent=1 // pred_check_branch
      %59 = sbr.rel (0) target = $region57
    $region56: #{tpu_custom_call.1} parent=1 // pred_region
      _
    $region57: #{tpu_custom_call.1} parent=1 // pred_fallthru
      _
    // Predicated region
    $region58: #{tpu_custom_call.1} parent=1 // pred_check
      _
    $region59: #{tpu_custom_call.1} parent=1 // pred_check_branch
      %61 = sbr.rel (0) target = $region61
    $region60: #{tpu_custom_call.1} parent=1 // pred_region
      _
    $region61: #{tpu_custom_call.1} parent=1 // pred_fallthru
      _
    // Predicated region
    $region62: #{tpu_custom_call.1} parent=1 // pred_check
      _
    $region63: #{tpu_custom_call.1} parent=1 // pred_check_branch
      %63 = sbr.rel (0) target = $region65
    $region64: #{tpu_custom_call.1} parent=1 // pred_region
      _
    $region65: #{tpu_custom_call.1} parent=1 // pred_fallthru
      _
    // Predicated region
    $region66: #{tpu_custom_call.1} parent=1 // pred_check
      _
    $region67: #{tpu_custom_call.1} parent=1 // pred_check_branch
      %65 = sbr.rel (0) target = $region69
    $region68: #{tpu_custom_call.1} parent=1 // pred_region
      %66 = dma.done [#allocation4], 4096
    $region69: #{tpu_custom_call.1} parent=1 // pred_fallthru
      _
    %v68 = vld [vmem:[#allocation3] sm:$0xf]
    %v69 = vld [vmem:[#allocation3 + $0x4] sm:$0xf]
    %v70 = vld [vmem:[#allocation3 + $0x8] sm:$0xf]
    %v71 = vld [vmem:[#allocation3 + $0xc] sm:$0xf]
    %v72 = vld [vmem:[#allocation3 + $0x10] sm:$0xf]
    %v73 = vld [vmem:[#allocation3 + $0x14] sm:$0xf]
    %v74 = vld [vmem:[#allocation3 + $0x18] sm:$0xf]
    %v75 = vld [vmem:[#allocation3 + $0x1c] sm:$0xf]
    %v76 = vld [vmem:[#allocation3 + $0x20] sm:$0xf]
    %v77 = vld [vmem:[#allocation3 + $0x24] sm:$0xf]
    %v78 = vld [vmem:[#allocation3 + $0x28] sm:$0xf]
    %v79 = vld [vmem:[#allocation3 + $0x2c] sm:$0xf]
    %v80 = vld [vmem:[#allocation3 + $0x30] sm:$0xf]
    %v81 = vld [vmem:[#allocation3 + $0x34] sm:$0xf]
    %v82 = vld [vmem:[#allocation3 + $0x38] sm:$0xf]
    %v83 = vld [vmem:[#allocation3 + $0x3c] sm:$0xf]
    %v84 = vld [vmem:[#allocation3 + $0x40] sm:$0xf]
    %v85 = vld [vmem:[#allocation3 + $0x44] sm:$0xf]
    %v86 = vld [vmem:[#allocation3 + $0x48] sm:$0xf]
    %v87 = vld [vmem:[#allocation3 + $0x4c] sm:$0xf]
    %v88 = vld [vmem:[#allocation3 + $0x50] sm:$0xf]
    %v89 = vld [vmem:[#allocation3 + $0x54] sm:$0xf]
    %v90 = vld [vmem:[#allocation3 + $0x58] sm:$0xf]
    %v91 = vld [vmem:[#allocation3 + $0x5c] sm:$0xf]
    %v92 = vld [vmem:[#allocation3 + $0x60] sm:$0xf]
    %v93 = vld [vmem:[#allocation3 + $0x64] sm:$0xf]
    %v94 = vld [vmem:[#allocation3 + $0x68] sm:$0xf]
    %v95 = vld [vmem:[#allocation3 + $0x6c] sm:$0xf]
    %v96 = vld [vmem:[#allocation3 + $0x70] sm:$0xf]
    %v97 = vld [vmem:[#allocation3 + $0x74] sm:$0xf]
    %v98 = vld [vmem:[#allocation3 + $0x78] sm:$0xf]
    %v99 = vld [vmem:[#allocation3 + $0x7c] sm:$0xf]
    %v100 = vld [vmem:[#allocation3 + $0x80] sm:$0xf]
    %v101 = vld [vmem:[#allocation3 + $0x84] sm:$0xf]
    %v102 = vld [vmem:[#allocation3 + $0x88] sm:$0xf]
    %v103 = vld [vmem:[#allocation3 + $0x8c] sm:$0xf]
    %v104 = vld [vmem:[#allocation3 + $0x90] sm:$0xf]
    %v105 = vld [vmem:[#allocation3 + $0x94] sm:$0xf]
    %v106 = vld [vmem:[#allocation3 + $0x98] sm:$0xf]
    %v107 = vld [vmem:[#allocation3 + $0x9c] sm:$0xf]
    %v108 = vld [vmem:[#allocation3 + $0xa0] sm:$0xf]
    %v109 = vld [vmem:[#allocation3 + $0xa4] sm:$0xf]
    %v110 = vld [vmem:[#allocation3 + $0xa8] sm:$0xf]
    %v111 = vld [vmem:[#allocation3 + $0xac] sm:$0xf]
    %v112 = vld [vmem:[#allocation3 + $0xb0] sm:$0xf]
    %v113 = vld [vmem:[#allocation3 + $0xb4] sm:$0xf]
    %v114 = vld [vmem:[#allocation3 + $0xb8] sm:$0xf]
    %v115 = vld [vmem:[#allocation3 + $0xbc] sm:$0xf]
    %v116 = vld [vmem:[#allocation3 + $0xc0] sm:$0xf]
    %v117 = vld [vmem:[#allocation3 + $0xc4] sm:$0xf]
    %v118 = vld [vmem:[#allocation3 + $0xc8] sm:$0xf]
    %v119 = vld [vmem:[#allocation3 + $0xcc] sm:$0xf]
    %v120 = vld [vmem:[#allocation3 + $0xd0] sm:$0xf]
    %v121 = vld [vmem:[#allocation3 + $0xd4] sm:$0xf]
    %v122 = vld [vmem:[#allocation3 + $0xd8] sm:$0xf]
    %v123 = vld [vmem:[#allocation3 + $0xdc] sm:$0xf]
    %v124 = vld [vmem:[#allocation3 + $0xe0] sm:$0xf]
    %v125 = vld [vmem:[#allocation3 + $0xe4] sm:$0xf]
    %v126 = vld [vmem:[#allocation3 + $0xe8] sm:$0xf]
    %v127 = vld [vmem:[#allocation3 + $0xec] sm:$0xf]
    %v128 = vld [vmem:[#allocation3 + $0xf0] sm:$0xf]
    %v129 = vld [vmem:[#allocation3 + $0xf4] sm:$0xf]
    %v130 = vld [vmem:[#allocation3 + $0xf8] sm:$0xf]
    %v131 = vld [vmem:[#allocation3 + $0xfc] sm:$0xf]
    %v132 = vld [vmem:[%s1] sm:$0xf]
    %v133 = vld [vmem:[%s1 + $0x4] sm:$0xf]
    %v198 = vunpack.c.l.b16 %v68
    %v199 = vunpack.c.l.b16 %v69
    %v200 = vunpack.c.l.b16 %v70
    %v201 = vunpack.c.l.b16 %v71
    %v202 = vunpack.c.l.b16 %v72
    %v203 = vunpack.c.l.b16 %v73
    %v204 = vunpack.c.l.b16 %v74
    %v205 = vunpack.c.l.b16 %v75
    %v206 = vunpack.c.l.b16 %v76
    %v207 = vunpack.c.l.b16 %v77
    %v208 = vunpack.c.l.b16 %v78
    %v209 = vunpack.c.l.b16 %v79
    %v210 = vunpack.c.l.b16 %v80
    %v211 = vunpack.c.l.b16 %v81
    %v212 = vunpack.c.l.b16 %v82
    %v213 = vunpack.c.l.b16 %v83
    %v214 = vunpack.c.l.b16 %v84
    %v215 = vunpack.c.l.b16 %v85
    %v216 = vunpack.c.l.b16 %v86
    %v217 = vunpack.c.l.b16 %v87
    %v218 = vunpack.c.l.b16 %v88
    %v219 = vunpack.c.l.b16 %v89
    %v220 = vunpack.c.l.b16 %v90
    %v221 = vunpack.c.l.b16 %v91
    %v222 = vunpack.c.l.b16 %v92
    %v223 = vunpack.c.l.b16 %v93
    %v224 = vunpack.c.l.b16 %v94
    %v225 = vunpack.c.l.b16 %v95
    %v226 = vunpack.c.l.b16 %v96
    %v227 = vunpack.c.l.b16 %v97
    %v228 = vunpack.c.l.b16 %v98
    %v229 = vunpack.c.l.b16 %v99
    %v230 = vunpack.c.l.b16 %v100
    %v231 = vunpack.c.l.b16 %v101
    %v232 = vunpack.c.l.b16 %v102
    %v233 = vunpack.c.l.b16 %v103
    %v234 = vunpack.c.l.b16 %v104
    %v235 = vunpack.c.l.b16 %v105
    %v236 = vunpack.c.l.b16 %v106
    %v237 = vunpack.c.l.b16 %v107
    %v238 = vunpack.c.l.b16 %v108
    %v239 = vunpack.c.l.b16 %v109
    %v240 = vunpack.c.l.b16 %v110
    %v241 = vunpack.c.l.b16 %v111
    %v242 = vunpack.c.l.b16 %v112
    %v243 = vunpack.c.l.b16 %v113
    %v244 = vunpack.c.l.b16 %v114
    %v245 = vunpack.c.l.b16 %v115
    %v246 = vunpack.c.l.b16 %v116
    %v247 = vunpack.c.l.b16 %v117
    %v248 = vunpack.c.l.b16 %v118
    %v249 = vunpack.c.l.b16 %v119
    %v250 = vunpack.c.l.b16 %v120
    %v251 = vunpack.c.l.b16 %v121
    %v252 = vunpack.c.l.b16 %v122
    %v253 = vunpack.c.l.b16 %v123
    %v254 = vunpack.c.l.b16 %v124
    %v255 = vunpack.c.l.b16 %v125
    %v256 = vunpack.c.l.b16 %v126
    %v257 = vunpack.c.l.b16 %v127
    %v258 = vunpack.c.l.b16 %v128
    %v259 = vunpack.c.l.b16 %v129
    %v260 = vunpack.c.l.b16 %v130
    %v261 = vunpack.c.l.b16 %v131
    %v262 = vpack.c.b16 %v199, %v198
    %v263 = vpack.c.b16 %v201, %v200
    %v264 = vpack.c.b16 %v203, %v202
    %v265 = vpack.c.b16 %v205, %v204
    %v266 = vpack.c.b16 %v207, %v206
    %v267 = vpack.c.b16 %v209, %v208
    %v268 = vpack.c.b16 %v211, %v210
    %v269 = vpack.c.b16 %v213, %v212
    %v270 = vpack.c.b16 %v215, %v214
    %v271 = vpack.c.b16 %v217, %v216
    %v272 = vpack.c.b16 %v219, %v218
    %v273 = vpack.c.b16 %v221, %v220
    %v274 = vpack.c.b16 %v223, %v222
    %v275 = vpack.c.b16 %v225, %v224
    %v276 = vpack.c.b16 %v227, %v226
    %v277 = vpack.c.b16 %v229, %v228
    %v278 = vpack.c.b16 %v231, %v230
    %v279 = vpack.c.b16 %v233, %v232
    %v280 = vpack.c.b16 %v235, %v234
    %v281 = vpack.c.b16 %v237, %v236
    %v282 = vpack.c.b16 %v239, %v238
    %v283 = vpack.c.b16 %v241, %v240
    %v284 = vpack.c.b16 %v243, %v242
    %v285 = vpack.c.b16 %v245, %v244
    %v286 = vpack.c.b16 %v247, %v246
    %v287 = vpack.c.b16 %v249, %v248
    %v288 = vpack.c.b16 %v251, %v250
    %v289 = vpack.c.b16 %v253, %v252
    %v290 = vpack.c.b16 %v255, %v254
    %v291 = vpack.c.b16 %v257, %v256
    %v292 = vpack.c.b16 %v259, %v258
    %v293 = vpack.c.b16 %v261, %v260
    %v296 = vunpack.c.l.b16 %v132
    %v297 = vunpack.c.l.b16 %v133
    %v298 = vpack.c.b16 %v297, %v296
    %vm300 = vcmask 130048
    %v302 = vsel %vm300, %v262, 0
    %v305 = vsel %vm300, %v263, 0
    %v308 = vsel %vm300, %v264, 0
    %v311 = vsel %vm300, %v265, 0
    %v314 = vsel %vm300, %v266, 0
    %v317 = vsel %vm300, %v267, 0
    %v320 = vsel %vm300, %v268, 0
    %v323 = vsel %vm300, %v269, 0
    %v326 = vsel %vm300, %v270, 0
    %v329 = vsel %vm300, %v271, 0
    %v332 = vsel %vm300, %v272, 0
    %v335 = vsel %vm300, %v273, 0
    %v338 = vsel %vm300, %v274, 0
    %v341 = vsel %vm300, %v275, 0
    %v344 = vsel %vm300, %v276, 0
    %v347 = vsel %vm300, %v277, 0
    %v350 = vsel %vm300, %v278, 0
    %v353 = vsel %vm300, %v279, 0
    %v356 = vsel %vm300, %v280, 0
    %v359 = vsel %vm300, %v281, 0
    %v362 = vsel %vm300, %v282, 0
    %v365 = vsel %vm300, %v283, 0
    %v368 = vsel %vm300, %v284, 0
    %v371 = vsel %vm300, %v285, 0
    %v374 = vsel %vm300, %v286, 0
    %v377 = vsel %vm300, %v287, 0
    %v380 = vsel %vm300, %v288, 0
    %v383 = vsel %vm300, %v289, 0
    %v386 = vsel %vm300, %v290, 0
    %v389 = vsel %vm300, %v291, 0
    %v392 = vsel %vm300, %v292, 0
    %v395 = vsel %vm300, %v293, 0
    %397 = vmatprep.subr.bf16.mxu0 0
    %398 = vmatpush1.bf16.msra.mxu0 0
    %399 = vmatprep.subr.bf16.mxu0 0
    %400 = vmatpush1.bf16.msra.mxu0 0
    %401 = vmatprep.subr.bf16.mxu0 0
    %402 = vmatpush1.bf16.msra.mxu0 0
    %403 = vmatprep.subr.bf16.mxu0 0
    %404 = vmatpush1.bf16.msra.mxu0 0
    %405 = vmatprep.subr.bf16.mxu0 0
    %406 = vmatpush1.bf16.msra.mxu0 0
    %407 = vmatprep.subr.bf16.mxu0 0
    %408 = vmatpush1.bf16.msra.mxu0 0
    %409 = vmatprep.subr.bf16.mxu0 0
    %410 = vmatpush1.bf16.msra.mxu0 0
    %411 = vmatprep.subr.bf16.mxu0 0
    %412 = vmatpush1.bf16.msra.mxu0 %v298
    %413 = vmatprep.subr.bf16.mxu0 0
    %414 = vmatpush2.bf16.msra.mxu0 0
    %415 = vmatprep.subr.bf16.mxu0 0
    %416 = vmatpush2.bf16.msra.mxu0 0
    %417 = vmatprep.subr.bf16.mxu0 0
    %418 = vmatpush2.bf16.msra.mxu0 0
    %419 = vmatprep.subr.bf16.mxu0 0
    %420 = vmatpush2.bf16.msra.mxu0 0
    %421 = vmatprep.subr.bf16.mxu0 0
    %422 = vmatpush2.bf16.msra.mxu0 0
    %423 = vmatprep.subr.bf16.mxu0 0
    %424 = vmatpush2.bf16.msra.mxu0 0
    %425 = vmatprep.subr.bf16.mxu0 0
    %426 = vmatpush2.bf16.msra.mxu0 0
    %427 = vmatprep.subr.bf16.mxu0 0
    %428 = vmatpush2.bf16.msra.mxu0 0
    %429 = vmatprep.mubr.bf16.mxu0 0
    %430 = vmatmul.mubr.bf16.gmra.mxu0 %v302
    %v431 = vpop.f32.mrf.mxu0
    %v432 = vadd.f32 0.0, %v431
    %v433 = vpop.f32.mrf.mxu0
    %v434 = vpop.f32.mrf.mxu0
    %v435 = vadd.f32 0.0, %v434
    %v436 = vpop.f32.mrf.mxu0
    %437 = vmatprep.mubr.bf16.mxu0 0
    %438 = vmatmul.mubr.bf16.gmra.mxu0 %v305
    %v439 = vpop.f32.mrf.mxu0
    %v440 = vadd.f32 0.0, %v439
    %v441 = vpop.f32.mrf.mxu0
    %v442 = vpop.f32.mrf.mxu0
    %v443 = vadd.f32 0.0, %v442
    %v444 = vpop.f32.mrf.mxu0
    %445 = vmatprep.mubr.bf16.mxu0 0
    %446 = vmatmul.mubr.bf16.gmra.mxu0 %v308
    %v447 = vpop.f32.mrf.mxu0
    %v448 = vadd.f32 0.0, %v447
    %v449 = vpop.f32.mrf.mxu0
    %v450 = vpop.f32.mrf.mxu0
    %v451 = vadd.f32 0.0, %v450
    %v452 = vpop.f32.mrf.mxu0
    %453 = vmatprep.mubr.bf16.mxu0 0
    %454 = vmatmul.mubr.bf16.gmra.mxu0 %v311
    %v455 = vpop.f32.mrf.mxu0
    %v456 = vadd.f32 0.0, %v455
    %v457 = vpop.f32.mrf.mxu0
    %v458 = vpop.f32.mrf.mxu0
    %v459 = vadd.f32 0.0, %v458
    %v460 = vpop.f32.mrf.mxu0
    %461 = vmatprep.mubr.bf16.mxu0 0
    %462 = vmatmul.mubr.bf16.gmra.mxu0 %v314
    %v463 = vpop.f32.mrf.mxu0
    %v464 = vadd.f32 0.0, %v463
    %v465 = vpop.f32.mrf.mxu0
    %v466 = vpop.f32.mrf.mxu0
    %v467 = vadd.f32 0.0, %v466
    %v468 = vpop.f32.mrf.mxu0
    %469 = vmatprep.mubr.bf16.mxu0 0
    %470 = vmatmul.mubr.bf16.gmra.mxu0 %v317
    %v471 = vpop.f32.mrf.mxu0
    %v472 = vadd.f32 0.0, %v471
    %v473 = vpop.f32.mrf.mxu0
    %v474 = vpop.f32.mrf.mxu0
    %v475 = vadd.f32 0.0, %v474
    %v476 = vpop.f32.mrf.mxu0
    %477 = vmatprep.mubr.bf16.mxu0 0
    %478 = vmatmul.mubr.bf16.gmra.mxu0 %v320
    %v479 = vpop.f32.mrf.mxu0
    %v480 = vadd.f32 0.0, %v479
    %v481 = vpop.f32.mrf.mxu0
    %v482 = vpop.f32.mrf.mxu0
    %v483 = vadd.f32 0.0, %v482
    %v484 = vpop.f32.mrf.mxu0
    %485 = vmatprep.mubr.bf16.mxu0 0
    %486 = vmatmul.mubr.bf16.gmra.mxu0 %v323
    %v487 = vpop.f32.mrf.mxu0
    %v488 = vadd.f32 0.0, %v487
    %v489 = vpop.f32.mrf.mxu0
    %v490 = vpop.f32.mrf.mxu0
    %v491 = vadd.f32 0.0, %v490
    %v492 = vpop.f32.mrf.mxu0
    %493 = vmatprep.mubr.bf16.mxu0 0
    %494 = vmatmul.mubr.bf16.gmra.mxu0 %v326
    %v495 = vpop.f32.mrf.mxu0
    %v496 = vadd.f32 0.0, %v495
    %v497 = vpop.f32.mrf.mxu0
    %v498 = vpop.f32.mrf.mxu0
    %v499 = vadd.f32 0.0, %v498
    %v500 = vpop.f32.mrf.mxu0
    %501 = vmatprep.mubr.bf16.mxu0 0
    %502 = vmatmul.mubr.bf16.gmra.mxu0 %v329
    %v503 = vpop.f32.mrf.mxu0
    %v504 = vadd.f32 0.0, %v503
    %v505 = vpop.f32.mrf.mxu0
    %v506 = vpop.f32.mrf.mxu0
    %v507 = vadd.f32 0.0, %v506
    %v508 = vpop.f32.mrf.mxu0
    %509 = vmatprep.mubr.bf16.mxu0 0
    %510 = vmatmul.mubr.bf16.gmra.mxu0 %v332
    %v511 = vpop.f32.mrf.mxu0
    %v512 = vadd.f32 0.0, %v511
    %v513 = vpop.f32.mrf.mxu0
    %v514 = vpop.f32.mrf.mxu0
    %v515 = vadd.f32 0.0, %v514
    %v516 = vpop.f32.mrf.mxu0
    %517 = vmatprep.mubr.bf16.mxu0 0
    %518 = vmatmul.mubr.bf16.gmra.mxu0 %v335
    %v519 = vpop.f32.mrf.mxu0
    %v520 = vadd.f32 0.0, %v519
    %v521 = vpop.f32.mrf.mxu0
    %v522 = vpop.f32.mrf.mxu0
    %v523 = vadd.f32 0.0, %v522
    %v524 = vpop.f32.mrf.mxu0
    %525 = vmatprep.mubr.bf16.mxu0 0
    %526 = vmatmul.mubr.bf16.gmra.mxu0 %v338
    %v527 = vpop.f32.mrf.mxu0
    %v528 = vadd.f32 0.0, %v527
    %v529 = vpop.f32.mrf.mxu0
    %v530 = vpop.f32.mrf.mxu0
    %v531 = vadd.f32 0.0, %v530
    %v532 = vpop.f32.mrf.mxu0
    %533 = vmatprep.mubr.bf16.mxu0 0
    %534 = vmatmul.mubr.bf16.gmra.mxu0 %v341
    %v535 = vpop.f32.mrf.mxu0
    %v536 = vadd.f32 0.0, %v535
    %v537 = vpop.f32.mrf.mxu0
    %v538 = vpop.f32.mrf.mxu0
    %v539 = vadd.f32 0.0, %v538
    %v540 = vpop.f32.mrf.mxu0
    %541 = vmatprep.mubr.bf16.mxu0 0
    %542 = vmatmul.mubr.bf16.gmra.mxu0 %v344
    %v543 = vpop.f32.mrf.mxu0
    %v544 = vadd.f32 0.0, %v543
    %v545 = vpop.f32.mrf.mxu0
    %v546 = vpop.f32.mrf.mxu0
    %v547 = vadd.f32 0.0, %v546
    %v548 = vpop.f32.mrf.mxu0
    %549 = vmatprep.mubr.bf16.mxu0 0
    %550 = vmatmul.mubr.bf16.gmra.mxu0 %v347
    %v551 = vpop.f32.mrf.mxu0
    %v552 = vadd.f32 0.0, %v551
    %v553 = vpop.f32.mrf.mxu0
    %v554 = vpop.f32.mrf.mxu0
    %v555 = vadd.f32 0.0, %v554
    %v556 = vpop.f32.mrf.mxu0
    %557 = vmatprep.mubr.bf16.mxu0 0
    %558 = vmatmul.mubr.bf16.gmra.mxu0 %v350
    %v559 = vpop.f32.mrf.mxu0
    %v560 = vadd.f32 0.0, %v559
    %v561 = vpop.f32.mrf.mxu0
    %v562 = vpop.f32.mrf.mxu0
    %v563 = vadd.f32 0.0, %v562
    %v564 = vpop.f32.mrf.mxu0
    %565 = vmatprep.mubr.bf16.mxu0 0
    %566 = vmatmul.mubr.bf16.gmra.mxu0 %v353
    %v567 = vpop.f32.mrf.mxu0
    %v568 = vadd.f32 0.0, %v567
    %v569 = vpop.f32.mrf.mxu0
    %v570 = vpop.f32.mrf.mxu0
    %v571 = vadd.f32 0.0, %v570
    %v572 = vpop.f32.mrf.mxu0
    %573 = vmatprep.mubr.bf16.mxu0 0
    %574 = vmatmul.mubr.bf16.gmra.mxu0 %v356
    %v575 = vpop.f32.mrf.mxu0
    %v576 = vadd.f32 0.0, %v575
    %v577 = vpop.f32.mrf.mxu0
    %v578 = vpop.f32.mrf.mxu0
    %v579 = vadd.f32 0.0, %v578
    %v580 = vpop.f32.mrf.mxu0
    %581 = vmatprep.mubr.bf16.mxu0 0
    %582 = vmatmul.mubr.bf16.gmra.mxu0 %v359
    %v583 = vpop.f32.mrf.mxu0
    %v584 = vadd.f32 0.0, %v583
    %v585 = vpop.f32.mrf.mxu0
    %v586 = vpop.f32.mrf.mxu0
    %v587 = vadd.f32 0.0, %v586
    %v588 = vpop.f32.mrf.mxu0
    %589 = vmatprep.mubr.bf16.mxu0 0
    %590 = vmatmul.mubr.bf16.gmra.mxu0 %v362
    %v591 = vpop.f32.mrf.mxu0
    %v592 = vadd.f32 0.0, %v591
    %v593 = vpop.f32.mrf.mxu0
    %v594 = vpop.f32.mrf.mxu0
    %v595 = vadd.f32 0.0, %v594
    %v596 = vpop.f32.mrf.mxu0
    %597 = vmatprep.mubr.bf16.mxu0 0
    %598 = vmatmul.mubr.bf16.gmra.mxu0 %v365
    %v599 = vpop.f32.mrf.mxu0
    %v600 = vadd.f32 0.0, %v599
    %v601 = vpop.f32.mrf.mxu0
    %v602 = vpop.f32.mrf.mxu0
    %v603 = vadd.f32 0.0, %v602
    %v604 = vpop.f32.mrf.mxu0
    %605 = vmatprep.mubr.bf16.mxu0 0
    %606 = vmatmul.mubr.bf16.gmra.mxu0 %v368
    %v607 = vpop.f32.mrf.mxu0
    %v608 = vadd.f32 0.0, %v607
    %v609 = vpop.f32.mrf.mxu0
    %v610 = vpop.f32.mrf.mxu0
    %v611 = vadd.f32 0.0, %v610
    %v612 = vpop.f32.mrf.mxu0
    %613 = vmatprep.mubr.bf16.mxu0 0
    %614 = vmatmul.mubr.bf16.gmra.mxu0 %v371
    %v615 = vpop.f32.mrf.mxu0
    %v616 = vadd.f32 0.0, %v615
    %v617 = vpop.f32.mrf.mxu0
    %v618 = vpop.f32.mrf.mxu0
    %v619 = vadd.f32 0.0, %v618
    %v620 = vpop.f32.mrf.mxu0
    %621 = vmatprep.mubr.bf16.mxu0 0
    %622 = vmatmul.mubr.bf16.gmra.mxu0 %v374
    %v623 = vpop.f32.mrf.mxu0
    %v624 = vadd.f32 0.0, %v623
    %v625 = vpop.f32.mrf.mxu0
    %v626 = vpop.f32.mrf.mxu0
    %v627 = vadd.f32 0.0, %v626
    %v628 = vpop.f32.mrf.mxu0
    %629 = vmatprep.mubr.bf16.mxu0 0
    %630 = vmatmul.mubr.bf16.gmra.mxu0 %v377
    %v631 = vpop.f32.mrf.mxu0
    %v632 = vadd.f32 0.0, %v631
    %v633 = vpop.f32.mrf.mxu0
    %v634 = vpop.f32.mrf.mxu0
    %v635 = vadd.f32 0.0, %v634
    %v636 = vpop.f32.mrf.mxu0
    %637 = vmatprep.mubr.bf16.mxu0 0
    %638 = vmatmul.mubr.bf16.gmra.mxu0 %v380
    %v639 = vpop.f32.mrf.mxu0
    %v640 = vadd.f32 0.0, %v639
    %v641 = vpop.f32.mrf.mxu0
    %v642 = vpop.f32.mrf.mxu0
    %v643 = vadd.f32 0.0, %v642
    %v644 = vpop.f32.mrf.mxu0
    %645 = vmatprep.mubr.bf16.mxu0 0
    %646 = vmatmul.mubr.bf16.gmra.mxu0 %v383
    %v647 = vpop.f32.mrf.mxu0
    %v648 = vadd.f32 0.0, %v647
    %v649 = vpop.f32.mrf.mxu0
    %v650 = vpop.f32.mrf.mxu0
    %v651 = vadd.f32 0.0, %v650
    %v652 = vpop.f32.mrf.mxu0
    %653 = vmatprep.mubr.bf16.mxu0 0
    %654 = vmatmul.mubr.bf16.gmra.mxu0 %v386
    %v655 = vpop.f32.mrf.mxu0
    %v656 = vadd.f32 0.0, %v655
    %v657 = vpop.f32.mrf.mxu0
    %v658 = vpop.f32.mrf.mxu0
    %v659 = vadd.f32 0.0, %v658
    %v660 = vpop.f32.mrf.mxu0
    %661 = vmatprep.mubr.bf16.mxu0 0
    %662 = vmatmul.mubr.bf16.gmra.mxu0 %v389
    %v663 = vpop.f32.mrf.mxu0
    %v664 = vadd.f32 0.0, %v663
    %v665 = vpop.f32.mrf.mxu0
    %v666 = vpop.f32.mrf.mxu0
    %v667 = vadd.f32 0.0, %v666
    %v668 = vpop.f32.mrf.mxu0
    %669 = vmatprep.mubr.bf16.mxu0 0
    %670 = vmatmul.mubr.bf16.gmra.mxu0 %v392
    %v671 = vpop.f32.mrf.mxu0
    %v672 = vadd.f32 0.0, %v671
    %v673 = vpop.f32.mrf.mxu0
    %v674 = vpop.f32.mrf.mxu0
    %v675 = vadd.f32 0.0, %v674
    %v676 = vpop.f32.mrf.mxu0
    %677 = vmatprep.mubr.bf16.mxu0 0
    %678 = vmatmul.mubr.bf16.gmra.mxu0 %v395
    %v679 = vpop.f32.mrf.mxu0
    %v680 = vadd.f32 0.0, %v679
    %v681 = vpop.f32.mrf.mxu0
    %v682 = vpop.f32.mrf.mxu0
    %v683 = vadd.f32 0.0, %v682
    %v684 = vpop.f32.mrf.mxu0
    %685 = vdwg.mxu0
    %v686 = vld [vmem:[%s2] sm:$0x1]
    %v687 = vld [vmem:[%s3] sm:$0x1]
    %vm688 = vcmask 261120
    %v689 = vsel %vm688, %v432, 0.0
    %v690 = vsel %vm688, %v435, 0.0
    %v691 = vadd.f32 %v689, %v690
    %v692 = vsel %vm688, %v440, 0.0
    %v693 = vadd.f32 %v691, %v692
    %v694 = vsel %vm688, %v443, 0.0
    %v695 = vadd.f32 %v693, %v694
    %v696 = vsel %vm688, %v448, 0.0
    %v697 = vadd.f32 %v695, %v696
    %v698 = vsel %vm688, %v451, 0.0
    %v699 = vadd.f32 %v697, %v698
    %v700 = vsel %vm688, %v456, 0.0
    %v701 = vadd.f32 %v699, %v700
    %v702 = vsel %vm688, %v459, 0.0
    %v703 = vadd.f32 %v701, %v702
    %v704 = vsel %vm688, %v464, 0.0
    %v705 = vadd.f32 %v703, %v704
    %v706 = vsel %vm688, %v467, 0.0
    %v707 = vadd.f32 %v705, %v706
    %v708 = vsel %vm688, %v472, 0.0
    %v709 = vadd.f32 %v707, %v708
    %v710 = vsel %vm688, %v475, 0.0
    %v711 = vadd.f32 %v709, %v710
    %v712 = vsel %vm688, %v480, 0.0
    %v713 = vadd.f32 %v711, %v712
    %v714 = vsel %vm688, %v483, 0.0
    %v715 = vadd.f32 %v713, %v714
    %v716 = vsel %vm688, %v488, 0.0
    %v717 = vadd.f32 %v715, %v716
    %v718 = vsel %vm688, %v491, 0.0
    %v719 = vadd.f32 %v717, %v718
    %v720 = vsel %vm688, %v496, 0.0
    %v721 = vadd.f32 %v719, %v720
    %v722 = vsel %vm688, %v499, 0.0
    %v723 = vadd.f32 %v721, %v722
    %v724 = vsel %vm688, %v504, 0.0
    %v725 = vadd.f32 %v723, %v724
    %v726 = vsel %vm688, %v507, 0.0
    %v727 = vadd.f32 %v725, %v726
    %v728 = vsel %vm688, %v512, 0.0
    %v729 = vadd.f32 %v727, %v728
    %v730 = vsel %vm688, %v515, 0.0
    %v731 = vadd.f32 %v729, %v730
    %v732 = vsel %vm688, %v520, 0.0
    %v733 = vadd.f32 %v731, %v732
    %v734 = vsel %vm688, %v523, 0.0
    %v735 = vadd.f32 %v733, %v734
    %v736 = vsel %vm688, %v528, 0.0
    %v737 = vadd.f32 %v735, %v736
    %v738 = vsel %vm688, %v531, 0.0
    %v739 = vadd.f32 %v737, %v738
    %v740 = vsel %vm688, %v536, 0.0
    %v741 = vadd.f32 %v739, %v740
    %v742 = vsel %vm688, %v539, 0.0
    %v743 = vadd.f32 %v741, %v742
    %v744 = vsel %vm688, %v544, 0.0
    %v745 = vadd.f32 %v743, %v744
    %v746 = vsel %vm688, %v547, 0.0
    %v747 = vadd.f32 %v745, %v746
    %v748 = vsel %vm688, %v552, 0.0
    %v749 = vadd.f32 %v747, %v748
    %v750 = vsel %vm688, %v555, 0.0
    %v751 = vadd.f32 %v749, %v750
    %v752 = vsel %vm688, %v560, 0.0
    %v753 = vadd.f32 %v751, %v752
    %v754 = vsel %vm688, %v563, 0.0
    %v755 = vadd.f32 %v753, %v754
    %v756 = vsel %vm688, %v568, 0.0
    %v757 = vadd.f32 %v755, %v756
    %v758 = vsel %vm688, %v571, 0.0
    %v759 = vadd.f32 %v757, %v758
    %v760 = vsel %vm688, %v576, 0.0
    %v761 = vadd.f32 %v759, %v760
    %v762 = vsel %vm688, %v579, 0.0
    %v763 = vadd.f32 %v761, %v762
    %v764 = vsel %vm688, %v584, 0.0
    %v765 = vadd.f32 %v763, %v764
    %v766 = vsel %vm688, %v587, 0.0
    %v767 = vadd.f32 %v765, %v766
    %v768 = vsel %vm688, %v592, 0.0
    %v769 = vadd.f32 %v767, %v768
    %v770 = vsel %vm688, %v595, 0.0
    %v771 = vadd.f32 %v769, %v770
    %v772 = vsel %vm688, %v600, 0.0
    %v773 = vadd.f32 %v771, %v772
    %v774 = vsel %vm688, %v603, 0.0
    %v775 = vadd.f32 %v773, %v774
    %v776 = vsel %vm688, %v608, 0.0
    %v777 = vadd.f32 %v775, %v776
    %v778 = vsel %vm688, %v611, 0.0
    %v779 = vadd.f32 %v777, %v778
    %v780 = vsel %vm688, %v616, 0.0
    %v781 = vadd.f32 %v779, %v780
    %v782 = vsel %vm688, %v619, 0.0
    %v783 = vadd.f32 %v781, %v782
    %v784 = vsel %vm688, %v624, 0.0
    %v785 = vadd.f32 %v783, %v784
    %v786 = vsel %vm688, %v627, 0.0
    %v787 = vadd.f32 %v785, %v786
    %v788 = vsel %vm688, %v632, 0.0
    %v789 = vadd.f32 %v787, %v788
    %v790 = vsel %vm688, %v635, 0.0
    %v791 = vadd.f32 %v789, %v790
    %v792 = vsel %vm688, %v640, 0.0
    %v793 = vadd.f32 %v791, %v792
    %v794 = vsel %vm688, %v643, 0.0
    %v795 = vadd.f32 %v793, %v794
    %v796 = vsel %vm688, %v648, 0.0
    %v797 = vadd.f32 %v795, %v796
    %v798 = vsel %vm688, %v651, 0.0
    %v799 = vadd.f32 %v797, %v798
    %v800 = vsel %vm688, %v656, 0.0
    %v801 = vadd.f32 %v799, %v800
    %v802 = vsel %vm688, %v659, 0.0
    %v803 = vadd.f32 %v801, %v802
    %v804 = vsel %vm688, %v664, 0.0
    %v805 = vadd.f32 %v803, %v804
    %v806 = vsel %vm688, %v667, 0.0
    %v807 = vadd.f32 %v805, %v806
    %v808 = vsel %vm688, %v672, 0.0
    %v809 = vadd.f32 %v807, %v808
    %v810 = vsel %vm688, %v675, 0.0
    %v811 = vadd.f32 %v809, %v810
    %v812 = vsel %vm688, %v680, 0.0
    %v813 = vadd.f32 %v811, %v812
    %v814 = vsel %vm688, %v683, 0.0
    %v815 = vadd.f32 %v813, %v814
    %v816 = vrot.slane %v815, 4
    %v817 = vadd.f32 %v815, %v816
    %v818 = vrot.slane %v817, 2
    %v819 = vadd.f32 %v817, %v818
    %v820 = vrot.slane %v819, 1
    %v821 = vadd.f32 %v819, %v820
    %v822 = vmul.f32 %v821, 0.001953125
    %v823 = vsub.f32 %v432, %v822
    %v824 = vsub.f32 %v435, %v822
    %v825 = vsub.f32 %v440, %v822
    %v826 = vsub.f32 %v443, %v822
    %v827 = vsub.f32 %v448, %v822
    %v828 = vsub.f32 %v451, %v822
    %v829 = vsub.f32 %v456, %v822
    %v830 = vsub.f32 %v459, %v822
    %v831 = vsub.f32 %v464, %v822
    %v832 = vsub.f32 %v467, %v822
    %v833 = vsub.f32 %v472, %v822
    %v834 = vsub.f32 %v475, %v822
    %v835 = vsub.f32 %v480, %v822
    %v836 = vsub.f32 %v483, %v822
    %v837 = vsub.f32 %v488, %v822
    %v838 = vsub.f32 %v491, %v822
    %v839 = vsub.f32 %v496, %v822
    %v840 = vsub.f32 %v499, %v822
    %v841 = vsub.f32 %v504, %v822
    %v842 = vsub.f32 %v507, %v822
    %v843 = vsub.f32 %v512, %v822
    %v844 = vsub.f32 %v515, %v822
    %v845 = vsub.f32 %v520, %v822
    %v846 = vsub.f32 %v523, %v822
    %v847 = vsub.f32 %v528, %v822
    %v848 = vsub.f32 %v531, %v822
    %v849 = vsub.f32 %v536, %v822
    %v850 = vsub.f32 %v539, %v822
    %v851 = vsub.f32 %v544, %v822
    %v852 = vsub.f32 %v547, %v822
    %v853 = vsub.f32 %v552, %v822
    %v854 = vsub.f32 %v555, %v822
    %v855 = vsub.f32 %v560, %v822
    %v856 = vsub.f32 %v563, %v822
    %v857 = vsub.f32 %v568, %v822
    %v858 = vsub.f32 %v571, %v822
    %v859 = vsub.f32 %v576, %v822
    %v860 = vsub.f32 %v579, %v822
    %v861 = vsub.f32 %v584, %v822
    %v862 = vsub.f32 %v587, %v822
    %v863 = vsub.f32 %v592, %v822
    %v864 = vsub.f32 %v595, %v822
    %v865 = vsub.f32 %v600, %v822
    %v866 = vsub.f32 %v603, %v822
    %v867 = vsub.f32 %v608, %v822
    %v868 = vsub.f32 %v611, %v822
    %v869 = vsub.f32 %v616, %v822
    %v870 = vsub.f32 %v619, %v822
    %v871 = vsub.f32 %v624, %v822
    %v872 = vsub.f32 %v627, %v822
    %v873 = vsub.f32 %v632, %v822
    %v874 = vsub.f32 %v635, %v822
    %v875 = vsub.f32 %v640, %v822
    %v876 = vsub.f32 %v643, %v822
    %v877 = vsub.f32 %v648, %v822
    %v878 = vsub.f32 %v651, %v822
    %v879 = vsub.f32 %v656, %v822
    %v880 = vsub.f32 %v659, %v822
    %v881 = vsub.f32 %v664, %v822
    %v882 = vsub.f32 %v667, %v822
    %v883 = vsub.f32 %v672, %v822
    %v884 = vsub.f32 %v675, %v822
    %v885 = vsub.f32 %v680, %v822
    %v886 = vsub.f32 %v683, %v822
    %v887 = vmul.f32 %v823, %v823
    %v888 = vmul.f32 %v824, %v824
    %v889 = vmul.f32 %v825, %v825
    %v890 = vmul.f32 %v826, %v826
    %v891 = vmul.f32 %v827, %v827
    %v892 = vmul.f32 %v828, %v828
    %v893 = vmul.f32 %v829, %v829
    %v894 = vmul.f32 %v830, %v830
    %v895 = vmul.f32 %v831, %v831
    %v896 = vmul.f32 %v832, %v832
    %v897 = vmul.f32 %v833, %v833
    %v898 = vmul.f32 %v834, %v834
    %v899 = vmul.f32 %v835, %v835
    %v900 = vmul.f32 %v836, %v836
    %v901 = vmul.f32 %v837, %v837
    %v902 = vmul.f32 %v838, %v838
    %v903 = vmul.f32 %v839, %v839
    %v904 = vmul.f32 %v840, %v840
    %v905 = vmul.f32 %v841, %v841
    %v906 = vmul.f32 %v842, %v842
    %v907 = vmul.f32 %v843, %v843
    %v908 = vmul.f32 %v844, %v844
    %v909 = vmul.f32 %v845, %v845
    %v910 = vmul.f32 %v846, %v846
    %v911 = vmul.f32 %v847, %v847
    %v912 = vmul.f32 %v848, %v848
    %v913 = vmul.f32 %v849, %v849
    %v914 = vmul.f32 %v850, %v850
    %v915 = vmul.f32 %v851, %v851
    %v916 = vmul.f32 %v852, %v852
    %v917 = vmul.f32 %v853, %v853
    %v918 = vmul.f32 %v854, %v854
    %v919 = vmul.f32 %v855, %v855
    %v920 = vmul.f32 %v856, %v856
    %v921 = vmul.f32 %v857, %v857
    %v922 = vmul.f32 %v858, %v858
    %v923 = vmul.f32 %v859, %v859
    %v924 = vmul.f32 %v860, %v860
    %v925 = vmul.f32 %v861, %v861
    %v926 = vmul.f32 %v862, %v862
    %v927 = vmul.f32 %v863, %v863
    %v928 = vmul.f32 %v864, %v864
    %v929 = vmul.f32 %v865, %v865
    %v930 = vmul.f32 %v866, %v866
    %v931 = vmul.f32 %v867, %v867
    %v932 = vmul.f32 %v868, %v868
    %v933 = vmul.f32 %v869, %v869
    %v934 = vmul.f32 %v870, %v870
    %v935 = vmul.f32 %v871, %v871
    %v936 = vmul.f32 %v872, %v872
    %v937 = vmul.f32 %v873, %v873
    %v938 = vmul.f32 %v874, %v874
    %v939 = vmul.f32 %v875, %v875
    %v940 = vmul.f32 %v876, %v876
    %v941 = vmul.f32 %v877, %v877
    %v942 = vmul.f32 %v878, %v878
    %v943 = vmul.f32 %v879, %v879
    %v944 = vmul.f32 %v880, %v880
    %v945 = vmul.f32 %v881, %v881
    %v946 = vmul.f32 %v882, %v882
    %v947 = vmul.f32 %v883, %v883
    %v948 = vmul.f32 %v884, %v884
    %v949 = vmul.f32 %v885, %v885
    %v950 = vmul.f32 %v886, %v886
    %v951 = vsel %vm688, %v887, 0.0
    %v952 = vsel %vm688, %v888, 0.0
    %v953 = vadd.f32 %v951, %v952
    %v954 = vsel %vm688, %v889, 0.0
    %v955 = vadd.f32 %v953, %v954
    %v956 = vsel %vm688, %v890, 0.0
    %v957 = vadd.f32 %v955, %v956
    %v958 = vsel %vm688, %v891, 0.0
    %v959 = vadd.f32 %v957, %v958
    %v960 = vsel %vm688, %v892, 0.0
    %v961 = vadd.f32 %v959, %v960
    %v962 = vsel %vm688, %v893, 0.0
    %v963 = vadd.f32 %v961, %v962
    %v964 = vsel %vm688, %v894, 0.0
    %v965 = vadd.f32 %v963, %v964
    %v966 = vsel %vm688, %v895, 0.0
    %v967 = vadd.f32 %v965, %v966
    %v968 = vsel %vm688, %v896, 0.0
    %v969 = vadd.f32 %v967, %v968
    %v970 = vsel %vm688, %v897, 0.0
    %v971 = vadd.f32 %v969, %v970
    %v972 = vsel %vm688, %v898, 0.0
    %v973 = vadd.f32 %v971, %v972
    %v974 = vsel %vm688, %v899, 0.0
    %v975 = vadd.f32 %v973, %v974
    %v976 = vsel %vm688, %v900, 0.0
    %v977 = vadd.f32 %v975, %v976
    %v978 = vsel %vm688, %v901, 0.0
    %v979 = vadd.f32 %v977, %v978
    %v980 = vsel %vm688, %v902, 0.0
    %v981 = vadd.f32 %v979, %v980
    %v982 = vsel %vm688, %v903, 0.0
    %v983 = vadd.f32 %v981, %v982
    %v984 = vsel %vm688, %v904, 0.0
    %v985 = vadd.f32 %v983, %v984
    %v986 = vsel %vm688, %v905, 0.0
    %v987 = vadd.f32 %v985, %v986
    %v988 = vsel %vm688, %v906, 0.0
    %v989 = vadd.f32 %v987, %v988
    %v990 = vsel %vm688, %v907, 0.0
    %v991 = vadd.f32 %v989, %v990
    %v992 = vsel %vm688, %v908, 0.0
    %v993 = vadd.f32 %v991, %v992
    %v994 = vsel %vm688, %v909, 0.0
    %v995 = vadd.f32 %v993, %v994
    %v996 = vsel %vm688, %v910, 0.0
    %v997 = vadd.f32 %v995, %v996
    %v998 = vsel %vm688, %v911, 0.0
    %v999 = vadd.f32 %v997, %v998
    %v1000 = vsel %vm688, %v912, 0.0
    %v1001 = vadd.f32 %v999, %v1000
    %v1002 = vsel %vm688, %v913, 0.0
    %v1003 = vadd.f32 %v1001, %v1002
    %v1004 = vsel %vm688, %v914, 0.0
    %v1005 = vadd.f32 %v1003, %v1004
    %v1006 = vsel %vm688, %v915, 0.0
    %v1007 = vadd.f32 %v1005, %v1006
    %v1008 = vsel %vm688, %v916, 0.0
    %v1009 = vadd.f32 %v1007, %v1008
    %v1010 = vsel %vm688, %v917, 0.0
    %v1011 = vadd.f32 %v1009, %v1010
    %v1012 = vsel %vm688, %v918, 0.0
    %v1013 = vadd.f32 %v1011, %v1012
    %v1014 = vsel %vm688, %v919, 0.0
    %v1015 = vadd.f32 %v1013, %v1014
    %v1016 = vsel %vm688, %v920, 0.0
    %v1017 = vadd.f32 %v1015, %v1016
    %v1018 = vsel %vm688, %v921, 0.0
    %v1019 = vadd.f32 %v1017, %v1018
    %v1020 = vsel %vm688, %v922, 0.0
    %v1021 = vadd.f32 %v1019, %v1020
    %v1022 = vsel %vm688, %v923, 0.0
    %v1023 = vadd.f32 %v1021, %v1022
    %v1024 = vsel %vm688, %v924, 0.0
    %v1025 = vadd.f32 %v1023, %v1024
    %v1026 = vsel %vm688, %v925, 0.0
    %v1027 = vadd.f32 %v1025, %v1026
    %v1028 = vsel %vm688, %v926, 0.0
    %v1029 = vadd.f32 %v1027, %v1028
    %v1030 = vsel %vm688, %v927, 0.0
    %v1031 = vadd.f32 %v1029, %v1030
    %v1032 = vsel %vm688, %v928, 0.0
    %v1033 = vadd.f32 %v1031, %v1032
    %v1034 = vsel %vm688, %v929, 0.0
    %v1035 = vadd.f32 %v1033, %v1034
    %v1036 = vsel %vm688, %v930, 0.0
    %v1037 = vadd.f32 %v1035, %v1036
    %v1038 = vsel %vm688, %v931, 0.0
    %v1039 = vadd.f32 %v1037, %v1038
    %v1040 = vsel %vm688, %v932, 0.0
    %v1041 = vadd.f32 %v1039, %v1040
    %v1042 = vsel %vm688, %v933, 0.0
    %v1043 = vadd.f32 %v1041, %v1042
    %v1044 = vsel %vm688, %v934, 0.0
    %v1045 = vadd.f32 %v1043, %v1044
    %v1046 = vsel %vm688, %v935, 0.0
    %v1047 = vadd.f32 %v1045, %v1046
    %v1048 = vsel %vm688, %v936, 0.0
    %v1049 = vadd.f32 %v1047, %v1048
    %v1050 = vsel %vm688, %v937, 0.0
    %v1051 = vadd.f32 %v1049, %v1050
    %v1052 = vsel %vm688, %v938, 0.0
    %v1053 = vadd.f32 %v1051, %v1052
    %v1054 = vsel %vm688, %v939, 0.0
    %v1055 = vadd.f32 %v1053, %v1054
    %v1056 = vsel %vm688, %v940, 0.0
    %v1057 = vadd.f32 %v1055, %v1056
    %v1058 = vsel %vm688, %v941, 0.0
    %v1059 = vadd.f32 %v1057, %v1058
    %v1060 = vsel %vm688, %v942, 0.0
    %v1061 = vadd.f32 %v1059, %v1060
    %v1062 = vsel %vm688, %v943, 0.0
    %v1063 = vadd.f32 %v1061, %v1062
    %v1064 = vsel %vm688, %v944, 0.0
    %v1065 = vadd.f32 %v1063, %v1064
    %v1066 = vsel %vm688, %v945, 0.0
    %v1067 = vadd.f32 %v1065, %v1066
    %v1068 = vsel %vm688, %v946, 0.0
    %v1069 = vadd.f32 %v1067, %v1068
    %v1070 = vsel %vm688, %v947, 0.0
    %v1071 = vadd.f32 %v1069, %v1070
    %v1072 = vsel %vm688, %v948, 0.0
    %v1073 = vadd.f32 %v1071, %v1072
    %v1074 = vsel %vm688, %v949, 0.0
    %v1075 = vadd.f32 %v1073, %v1074
    %v1076 = vsel %vm688, %v950, 0.0
    %v1077 = vadd.f32 %v1075, %v1076
    %v1078 = vrot.slane %v1077, 4
    %v1079 = vadd.f32 %v1077, %v1078
    %v1080 = vrot.slane %v1079, 2
    %v1081 = vadd.f32 %v1079, %v1080
    %v1082 = vrot.slane %v1081, 1
    %v1083 = vadd.f32 %v1081, %v1082
    %v1084 = vmul.f32 %v1083, 0.001953125
    %v1085 = vadd.f32 %v1084, 1e-05
    %v1086 = vrsqrt.pop %v1085
    %v1087 = vmul.f32 %v823, %v1086
    %v1088 = vmul.f32 %v824, %v1086
    %v1089 = vmul.f32 %v825, %v1086
    %v1090 = vmul.f32 %v826, %v1086
    %v1091 = vmul.f32 %v827, %v1086
    %v1092 = vmul.f32 %v828, %v1086
    %v1093 = vmul.f32 %v829, %v1086
    %v1094 = vmul.f32 %v830, %v1086
    %v1095 = vmul.f32 %v831, %v1086
    %v1096 = vmul.f32 %v832, %v1086
    %v1097 = vmul.f32 %v833, %v1086
    %v1098 = vmul.f32 %v834, %v1086
    %v1099 = vmul.f32 %v835, %v1086
    %v1100 = vmul.f32 %v836, %v1086
    %v1101 = vmul.f32 %v837, %v1086
    %v1102 = vmul.f32 %v838, %v1086
    %v1103 = vmul.f32 %v839, %v1086
    %v1104 = vmul.f32 %v840, %v1086
    %v1105 = vmul.f32 %v841, %v1086
    %v1106 = vmul.f32 %v842, %v1086
    %v1107 = vmul.f32 %v843, %v1086
    %v1108 = vmul.f32 %v844, %v1086
    %v1109 = vmul.f32 %v845, %v1086
    %v1110 = vmul.f32 %v846, %v1086
    %v1111 = vmul.f32 %v847, %v1086
    %v1112 = vmul.f32 %v848, %v1086
    %v1113 = vmul.f32 %v849, %v1086
    %v1114 = vmul.f32 %v850, %v1086
    %v1115 = vmul.f32 %v851, %v1086
    %v1116 = vmul.f32 %v852, %v1086
    %v1117 = vmul.f32 %v853, %v1086
    %v1118 = vmul.f32 %v854, %v1086
    %v1119 = vmul.f32 %v855, %v1086
    %v1120 = vmul.f32 %v856, %v1086
    %v1121 = vmul.f32 %v857, %v1086
    %v1122 = vmul.f32 %v858, %v1086
    %v1123 = vmul.f32 %v859, %v1086
    %v1124 = vmul.f32 %v860, %v1086
    %v1125 = vmul.f32 %v861, %v1086
    %v1126 = vmul.f32 %v862, %v1086
    %v1127 = vmul.f32 %v863, %v1086
    %v1128 = vmul.f32 %v864, %v1086
    %v1129 = vmul.f32 %v865, %v1086
    %v1130 = vmul.f32 %v866, %v1086
    %v1131 = vmul.f32 %v867, %v1086
    %v1132 = vmul.f32 %v868, %v1086
    %v1133 = vmul.f32 %v869, %v1086
    %v1134 = vmul.f32 %v870, %v1086
    %v1135 = vmul.f32 %v871, %v1086
    %v1136 = vmul.f32 %v872, %v1086
    %v1137 = vmul.f32 %v873, %v1086
    %v1138 = vmul.f32 %v874, %v1086
    %v1139 = vmul.f32 %v875, %v1086
    %v1140 = vmul.f32 %v876, %v1086
    %v1141 = vmul.f32 %v877, %v1086
    %v1142 = vmul.f32 %v878, %v1086
    %v1143 = vmul.f32 %v879, %v1086
    %v1144 = vmul.f32 %v880, %v1086
    %v1145 = vmul.f32 %v881, %v1086
    %v1146 = vmul.f32 %v882, %v1086
    %v1147 = vmul.f32 %v883, %v1086
    %v1148 = vmul.f32 %v884, %v1086
    %v1149 = vmul.f32 %v885, %v1086
    %v1150 = vmul.f32 %v886, %v1086
    %v1152 = vlaneseq
    %v1153 = vshrl.u32 %v1152, 7
    %v1154 = vsub.s32 0, %v1153
    %v1155 = vrot.slane %v686, %v1154
    %v1157 = vmul.f32 %v1087, %v1155
    %v1158 = vmul.f32 %v1088, %v1155
    %v1159 = vmul.f32 %v1089, %v1155
    %v1160 = vmul.f32 %v1090, %v1155
    %v1161 = vmul.f32 %v1091, %v1155
    %v1162 = vmul.f32 %v1092, %v1155
    %v1163 = vmul.f32 %v1093, %v1155
    %v1164 = vmul.f32 %v1094, %v1155
    %v1165 = vmul.f32 %v1095, %v1155
    %v1166 = vmul.f32 %v1096, %v1155
    %v1167 = vmul.f32 %v1097, %v1155
    %v1168 = vmul.f32 %v1098, %v1155
    %v1169 = vmul.f32 %v1099, %v1155
    %v1170 = vmul.f32 %v1100, %v1155
    %v1171 = vmul.f32 %v1101, %v1155
    %v1172 = vmul.f32 %v1102, %v1155
    %v1173 = vmul.f32 %v1103, %v1155
    %v1174 = vmul.f32 %v1104, %v1155
    %v1175 = vmul.f32 %v1105, %v1155
    %v1176 = vmul.f32 %v1106, %v1155
    %v1177 = vmul.f32 %v1107, %v1155
    %v1178 = vmul.f32 %v1108, %v1155
    %v1179 = vmul.f32 %v1109, %v1155
    %v1180 = vmul.f32 %v1110, %v1155
    %v1181 = vmul.f32 %v1111, %v1155
    %v1182 = vmul.f32 %v1112, %v1155
    %v1183 = vmul.f32 %v1113, %v1155
    %v1184 = vmul.f32 %v1114, %v1155
    %v1185 = vmul.f32 %v1115, %v1155
    %v1186 = vmul.f32 %v1116, %v1155
    %v1187 = vmul.f32 %v1117, %v1155
    %v1188 = vmul.f32 %v1118, %v1155
    %v1189 = vmul.f32 %v1119, %v1155
    %v1190 = vmul.f32 %v1120, %v1155
    %v1191 = vmul.f32 %v1121, %v1155
    %v1192 = vmul.f32 %v1122, %v1155
    %v1193 = vmul.f32 %v1123, %v1155
    %v1194 = vmul.f32 %v1124, %v1155
    %v1195 = vmul.f32 %v1125, %v1155
    %v1196 = vmul.f32 %v1126, %v1155
    %v1197 = vmul.f32 %v1127, %v1155
    %v1198 = vmul.f32 %v1128, %v1155
    %v1199 = vmul.f32 %v1129, %v1155
    %v1200 = vmul.f32 %v1130, %v1155
    %v1201 = vmul.f32 %v1131, %v1155
    %v1202 = vmul.f32 %v1132, %v1155
    %v1203 = vmul.f32 %v1133, %v1155
    %v1204 = vmul.f32 %v1134, %v1155
    %v1205 = vmul.f32 %v1135, %v1155
    %v1206 = vmul.f32 %v1136, %v1155
    %v1207 = vmul.f32 %v1137, %v1155
    %v1208 = vmul.f32 %v1138, %v1155
    %v1209 = vmul.f32 %v1139, %v1155
    %v1210 = vmul.f32 %v1140, %v1155
    %v1211 = vmul.f32 %v1141, %v1155
    %v1212 = vmul.f32 %v1142, %v1155
    %v1213 = vmul.f32 %v1143, %v1155
    %v1214 = vmul.f32 %v1144, %v1155
    %v1215 = vmul.f32 %v1145, %v1155
    %v1216 = vmul.f32 %v1146, %v1155
    %v1217 = vmul.f32 %v1147, %v1155
    %v1218 = vmul.f32 %v1148, %v1155
    %v1219 = vmul.f32 %v1149, %v1155
    %v1220 = vmul.f32 %v1150, %v1155
    %v1222 = vlaneseq
    %v1223 = vshrl.u32 %v1222, 7
    %v1224 = vsub.s32 0, %v1223
    %v1225 = vrot.slane %v687, %v1224
    %v1227 = vadd.f32 %v1157, %v1225
    %v1228 = vadd.f32 %v1158, %v1225
    %v1229 = vadd.f32 %v1159, %v1225
    %v1230 = vadd.f32 %v1160, %v1225
    %v1231 = vadd.f32 %v1161, %v1225
    %v1232 = vadd.f32 %v1162, %v1225
    %v1233 = vadd.f32 %v1163, %v1225
    %v1234 = vadd.f32 %v1164, %v1225
    %v1235 = vadd.f32 %v1165, %v1225
    %v1236 = vadd.f32 %v1166, %v1225
    %v1237 = vadd.f32 %v1167, %v1225
    %v1238 = vadd.f32 %v1168, %v1225
    %v1239 = vadd.f32 %v1169, %v1225
    %v1240 = vadd.f32 %v1170, %v1225
    %v1241 = vadd.f32 %v1171, %v1225
    %v1242 = vadd.f32 %v1172, %v1225
    %v1243 = vadd.f32 %v1173, %v1225
    %v1244 = vadd.f32 %v1174, %v1225
    %v1245 = vadd.f32 %v1175, %v1225
    %v1246 = vadd.f32 %v1176, %v1225
    %v1247 = vadd.f32 %v1177, %v1225
    %v1248 = vadd.f32 %v1178, %v1225
    %v1249 = vadd.f32 %v1179, %v1225
    %v1250 = vadd.f32 %v1180, %v1225
    %v1251 = vadd.f32 %v1181, %v1225
    %v1252 = vadd.f32 %v1182, %v1225
    %v1253 = vadd.f32 %v1183, %v1225
    %v1254 = vadd.f32 %v1184, %v1225
    %v1255 = vadd.f32 %v1185, %v1225
    %v1256 = vadd.f32 %v1186, %v1225
    %v1257 = vadd.f32 %v1187, %v1225
    %v1258 = vadd.f32 %v1188, %v1225
    %v1259 = vadd.f32 %v1189, %v1225
    %v1260 = vadd.f32 %v1190, %v1225
    %v1261 = vadd.f32 %v1191, %v1225
    %v1262 = vadd.f32 %v1192, %v1225
    %v1263 = vadd.f32 %v1193, %v1225
    %v1264 = vadd.f32 %v1194, %v1225
    %v1265 = vadd.f32 %v1195, %v1225
    %v1266 = vadd.f32 %v1196, %v1225
    %v1267 = vadd.f32 %v1197, %v1225
    %v1268 = vadd.f32 %v1198, %v1225
    %v1269 = vadd.f32 %v1199, %v1225
    %v1270 = vadd.f32 %v1200, %v1225
    %v1271 = vadd.f32 %v1201, %v1225
    %v1272 = vadd.f32 %v1202, %v1225
    %v1273 = vadd.f32 %v1203, %v1225
    %v1274 = vadd.f32 %v1204, %v1225
    %v1275 = vadd.f32 %v1205, %v1225
    %v1276 = vadd.f32 %v1206, %v1225
    %v1277 = vadd.f32 %v1207, %v1225
    %v1278 = vadd.f32 %v1208, %v1225
    %v1279 = vadd.f32 %v1209, %v1225
    %v1280 = vadd.f32 %v1210, %v1225
    %v1281 = vadd.f32 %v1211, %v1225
    %v1282 = vadd.f32 %v1212, %v1225
    %v1283 = vadd.f32 %v1213, %v1225
    %v1284 = vadd.f32 %v1214, %v1225
    %v1285 = vadd.f32 %v1215, %v1225
    %v1286 = vadd.f32 %v1216, %v1225
    %v1287 = vadd.f32 %v1217, %v1225
    %v1288 = vadd.f32 %v1218, %v1225
    %v1289 = vadd.f32 %v1219, %v1225
    %v1290 = vadd.f32 %v1220, %v1225
    %v1291 = vmax.f32 %v1227, 0.0
    %v1292 = vmax.f32 %v1228, 0.0
    %v1293 = vmax.f32 %v1229, 0.0
    %v1294 = vmax.f32 %v1230, 0.0
    %v1295 = vmax.f32 %v1231, 0.0
    %v1296 = vmax.f32 %v1232, 0.0
    %v1297 = vmax.f32 %v1233, 0.0
    %v1298 = vmax.f32 %v1234, 0.0
    %v1299 = vmax.f32 %v1235, 0.0
    %v1300 = vmax.f32 %v1236, 0.0
    %v1301 = vmax.f32 %v1237, 0.0
    %v1302 = vmax.f32 %v1238, 0.0
    %v1303 = vmax.f32 %v1239, 0.0
    %v1304 = vmax.f32 %v1240, 0.0
    %v1305 = vmax.f32 %v1241, 0.0
    %v1306 = vmax.f32 %v1242, 0.0
    %v1307 = vmax.f32 %v1243, 0.0
    %v1308 = vmax.f32 %v1244, 0.0
    %v1309 = vmax.f32 %v1245, 0.0
    %v1310 = vmax.f32 %v1246, 0.0
    %v1311 = vmax.f32 %v1247, 0.0
    %v1312 = vmax.f32 %v1248, 0.0
    %v1313 = vmax.f32 %v1249, 0.0
    %v1314 = vmax.f32 %v1250, 0.0
    %v1315 = vmax.f32 %v1251, 0.0
    %v1316 = vmax.f32 %v1252, 0.0
    %v1317 = vmax.f32 %v1253, 0.0
    %v1318 = vmax.f32 %v1254, 0.0
    %v1319 = vmax.f32 %v1255, 0.0
    %v1320 = vmax.f32 %v1256, 0.0
    %v1321 = vmax.f32 %v1257, 0.0
    %v1322 = vmax.f32 %v1258, 0.0
    %v1323 = vmax.f32 %v1259, 0.0
    %v1324 = vmax.f32 %v1260, 0.0
    %v1325 = vmax.f32 %v1261, 0.0
    %v1326 = vmax.f32 %v1262, 0.0
    %v1327 = vmax.f32 %v1263, 0.0
    %v1328 = vmax.f32 %v1264, 0.0
    %v1329 = vmax.f32 %v1265, 0.0
    %v1330 = vmax.f32 %v1266, 0.0
    %v1331 = vmax.f32 %v1267, 0.0
    %v1332 = vmax.f32 %v1268, 0.0
    %v1333 = vmax.f32 %v1269, 0.0
    %v1334 = vmax.f32 %v1270, 0.0
    %v1335 = vmax.f32 %v1271, 0.0
    %v1336 = vmax.f32 %v1272, 0.0
    %v1337 = vmax.f32 %v1273, 0.0
    %v1338 = vmax.f32 %v1274, 0.0
    %v1339 = vmax.f32 %v1275, 0.0
    %v1340 = vmax.f32 %v1276, 0.0
    %v1341 = vmax.f32 %v1277, 0.0
    %v1342 = vmax.f32 %v1278, 0.0
    %v1343 = vmax.f32 %v1279, 0.0
    %v1344 = vmax.f32 %v1280, 0.0
    %v1345 = vmax.f32 %v1281, 0.0
    %v1346 = vmax.f32 %v1282, 0.0
    %v1347 = vmax.f32 %v1283, 0.0
    %v1348 = vmax.f32 %v1284, 0.0
    %v1349 = vmax.f32 %v1285, 0.0
    %v1350 = vmax.f32 %v1286, 0.0
    %v1351 = vmax.f32 %v1287, 0.0
    %v1352 = vmax.f32 %v1288, 0.0
    %v1353 = vmax.f32 %v1289, 0.0
    %v1354 = vmax.f32 %v1290, 0.0
    %vm1355 = vcmask 257024
    %1356 = vst.msk [vmem:[#allocation2] sm:$0xf] %vm1355, 0
    %1357 = vst.msk [vmem:[#allocation2 + $0x4] sm:$0xf] %vm1355, 0
    %vm1358 = vcmask 253952
    %1359 = vst.msk [vmem:[#allocation2 + $0x8] sm:$0x1] %vm1358, 0
    %1360 = vst.msk [vmem:[#allocation2 + $0xd8] sm:$0xf] %vm1355, 0
    %1361 = vst.msk [vmem:[#allocation2 + $0xdc] sm:$0xf] %vm1355, 0
    %1362 = vst.msk [vmem:[#allocation2 + $0xe0] sm:$0x1] %vm1358, 0
    %s1363 = scalar_lea.vmem [#allocation2], 204
    %1364 = vst.msk [vmem:[%s1363] sm:$0xf] %vm1355, 0
    %1365 = vst.msk [vmem:[%s1363 + $0x4] sm:$0xf] %vm1355, 0
    %1366 = vst.msk [vmem:[%s1363 + $0x8] sm:$0x1] %vm1358, 0
    %1367 = vst.msk [vmem:[%s1363 + $0xd8] sm:$0xf] %vm1355, 0
    %1368 = vst.msk [vmem:[%s1363 + $0xdc] sm:$0xf] %vm1355, 0
    %1369 = vst.msk [vmem:[%s1363 + $0xe0] sm:$0x1] %vm1358, 0
    %v1370 = vpack.c.bf16 %v1292, %v1291
    %v1371 = vpack.c.bf16 %v1294, %v1293
    %v1372 = vpack.c.bf16 %v1296, %v1295
    %v1373 = vpack.c.bf16 %v1298, %v1297
    %v1374 = vpack.c.bf16 %v1300, %v1299
    %v1375 = vpack.c.bf16 %v1302, %v1301
    %v1376 = vpack.c.bf16 %v1304, %v1303
    %v1377 = vpack.c.bf16 %v1306, %v1305
    %v1378 = vpack.c.bf16 %v1308, %v1307
    %v1379 = vpack.c.bf16 %v1310, %v1309
    %v1380 = vpack.c.bf16 %v1312, %v1311
    %v1381 = vpack.c.bf16 %v1314, %v1313
    %v1382 = vpack.c.bf16 %v1316, %v1315
    %v1383 = vpack.c.bf16 %v1318, %v1317
    %v1384 = vpack.c.bf16 %v1320, %v1319
    %v1385 = vpack.c.bf16 %v1322, %v1321
    %v1386 = vpack.c.bf16 %v1324, %v1323
    %v1387 = vpack.c.bf16 %v1326, %v1325
    %v1388 = vpack.c.bf16 %v1328, %v1327
    %v1389 = vpack.c.bf16 %v1330, %v1329
    %v1390 = vpack.c.bf16 %v1332, %v1331
    %v1391 = vpack.c.bf16 %v1334, %v1333
    %v1392 = vpack.c.bf16 %v1336, %v1335
    %v1393 = vpack.c.bf16 %v1338, %v1337
    %v1394 = vpack.c.bf16 %v1340, %v1339
    %v1395 = vpack.c.bf16 %v1342, %v1341
    %v1396 = vpack.c.bf16 %v1344, %v1343
    %v1397 = vpack.c.bf16 %v1346, %v1345
    %v1398 = vpack.c.bf16 %v1348, %v1347
    %v1399 = vpack.c.bf16 %v1350, %v1349
    %v1400 = vpack.c.bf16 %v1352, %v1351
    %v1401 = vpack.c.bf16 %v1354, %v1353
    %v1403 = vshrl.u32 %v1370, 16
    %v1405 = vrot.slane %v1403, 7
    %v1406 = vshll.u32 %v1370, 16
    %v1408 = vor.u32 %v1405, %v1406
    %v1410 = vshrl.u32 %v1371, 16
    %v1412 = vrot.slane %v1410, 7
    %v1413 = vshll.u32 %v1371, 16
    %v1415 = vor.u32 %v1412, %v1413
    %v1417 = vshrl.u32 %v1372, 16
    %v1419 = vrot.slane %v1417, 7
    %v1420 = vshll.u32 %v1372, 16
    %v1422 = vor.u32 %v1419, %v1420
    %v1424 = vshrl.u32 %v1373, 16
    %v1426 = vrot.slane %v1424, 7
    %v1427 = vshll.u32 %v1373, 16
    %v1429 = vor.u32 %v1426, %v1427
    %v1431 = vshrl.u32 %v1374, 16
    %v1433 = vrot.slane %v1431, 7
    %v1434 = vshll.u32 %v1374, 16
    %v1436 = vor.u32 %v1433, %v1434
    %v1438 = vshrl.u32 %v1375, 16
    %v1440 = vrot.slane %v1438, 7
    %v1441 = vshll.u32 %v1375, 16
    %v1443 = vor.u32 %v1440, %v1441
    %v1445 = vshrl.u32 %v1376, 16
    %v1447 = vrot.slane %v1445, 7
    %v1448 = vshll.u32 %v1376, 16
    %v1450 = vor.u32 %v1447, %v1448
    %v1452 = vshrl.u32 %v1377, 16
    %v1454 = vrot.slane %v1452, 7
    %v1455 = vshll.u32 %v1377, 16
    %v1457 = vor.u32 %v1454, %v1455
    %v1459 = vshrl.u32 %v1378, 16
    %v1461 = vrot.slane %v1459, 7
    %v1462 = vshll.u32 %v1378, 16
    %v1464 = vor.u32 %v1461, %v1462
    %v1466 = vshrl.u32 %v1379, 16
    %v1468 = vrot.slane %v1466, 7
    %v1469 = vshll.u32 %v1379, 16
    %v1471 = vor.u32 %v1468, %v1469
    %v1473 = vshrl.u32 %v1380, 16
    %v1475 = vrot.slane %v1473, 7
    %v1476 = vshll.u32 %v1380, 16
    %v1478 = vor.u32 %v1475, %v1476
    %v1480 = vshrl.u32 %v1381, 16
    %v1482 = vrot.slane %v1480, 7
    %v1483 = vshll.u32 %v1381, 16
    %v1485 = vor.u32 %v1482, %v1483
    %v1487 = vshrl.u32 %v1382, 16
    %v1489 = vrot.slane %v1487, 7
    %v1490 = vshll.u32 %v1382, 16
    %v1492 = vor.u32 %v1489, %v1490
    %v1494 = vshrl.u32 %v1383, 16
    %v1496 = vrot.slane %v1494, 7
    %v1497 = vshll.u32 %v1383, 16
    %v1499 = vor.u32 %v1496, %v1497
    %v1501 = vshrl.u32 %v1384, 16
    %v1503 = vrot.slane %v1501, 7
    %v1504 = vshll.u32 %v1384, 16
    %v1506 = vor.u32 %v1503, %v1504
    %v1508 = vshrl.u32 %v1385, 16
    %v1510 = vrot.slane %v1508, 7
    %v1511 = vshll.u32 %v1385, 16
    %v1513 = vor.u32 %v1510, %v1511
    %v1515 = vshrl.u32 %v1386, 16
    %v1517 = vrot.slane %v1515, 7
    %v1518 = vshll.u32 %v1386, 16
    %v1520 = vor.u32 %v1517, %v1518
    %v1522 = vshrl.u32 %v1387, 16
    %v1524 = vrot.slane %v1522, 7
    %v1525 = vshll.u32 %v1387, 16
    %v1527 = vor.u32 %v1524, %v1525
    %v1529 = vshrl.u32 %v1388, 16
    %v1531 = vrot.slane %v1529, 7
    %v1532 = vshll.u32 %v1388, 16
    %v1534 = vor.u32 %v1531, %v1532
    %v1536 = vshrl.u32 %v1389, 16
    %v1538 = vrot.slane %v1536, 7
    %v1539 = vshll.u32 %v1389, 16
    %v1541 = vor.u32 %v1538, %v1539
    %v1543 = vshrl.u32 %v1390, 16
    %v1545 = vrot.slane %v1543, 7
    %v1546 = vshll.u32 %v1390, 16
    %v1548 = vor.u32 %v1545, %v1546
    %v1550 = vshrl.u32 %v1391, 16
    %v1552 = vrot.slane %v1550, 7
    %v1553 = vshll.u32 %v1391, 16
    %v1555 = vor.u32 %v1552, %v1553
    %v1557 = vshrl.u32 %v1392, 16
    %v1559 = vrot.slane %v1557, 7
    %v1560 = vshll.u32 %v1392, 16
    %v1562 = vor.u32 %v1559, %v1560
    %v1564 = vshrl.u32 %v1393, 16
    %v1566 = vrot.slane %v1564, 7
    %v1567 = vshll.u32 %v1393, 16
    %v1569 = vor.u32 %v1566, %v1567
    %v1571 = vshrl.u32 %v1394, 16
    %v1573 = vrot.slane %v1571, 7
    %v1574 = vshll.u32 %v1394, 16
    %v1576 = vor.u32 %v1573, %v1574
    %v1578 = vshrl.u32 %v1395, 16
    %v1580 = vrot.slane %v1578, 7
    %v1581 = vshll.u32 %v1395, 16
    %v1583 = vor.u32 %v1580, %v1581
    %v1585 = vshrl.u32 %v1396, 16
    %v1587 = vrot.slane %v1585, 7
    %v1588 = vshll.u32 %v1396, 16
    %v1590 = vor.u32 %v1587, %v1588
    %v1592 = vshrl.u32 %v1397, 16
    %v1594 = vrot.slane %v1592, 7
    %v1595 = vshll.u32 %v1397, 16
    %v1597 = vor.u32 %v1594, %v1595
    %v1599 = vshrl.u32 %v1398, 16
    %v1601 = vrot.slane %v1599, 7
    %v1602 = vshll.u32 %v1398, 16
    %v1604 = vor.u32 %v1601, %v1602
    %v1606 = vshrl.u32 %v1399, 16
    %v1608 = vrot.slane %v1606, 7
    %v1609 = vshll.u32 %v1399, 16
    %v1611 = vor.u32 %v1608, %v1609
    %v1613 = vshrl.u32 %v1400, 16
    %v1615 = vrot.slane %v1613, 7
    %v1616 = vshll.u32 %v1400, 16
    %v1618 = vor.u32 %v1615, %v1616
    %v1620 = vshrl.u32 %v1401, 16
    %v1622 = vrot.slane %v1620, 7
    %v1623 = vshll.u32 %v1401, 16
    %v1625 = vor.u32 %v1622, %v1623
    %vm1690 = vcmask 1040384
    %vm1691 = vsmask.f32 256
    %vm1692 = vmand %vm1690, %vm1691
    %v1693 = vsel %vm1692, 0, %v1408
    %v1694 = vsel %vm1692, 0, %v1415
    %v1695 = vsel %vm1692, 0, %v1422
    %v1696 = vsel %vm1692, 0, %v1429
    %v1697 = vsel %vm1692, 0, %v1436
    %v1698 = vsel %vm1692, 0, %v1443
    %v1699 = vsel %vm1692, 0, %v1450
    %v1700 = vsel %vm1692, 0, %v1457
    %v1701 = vsel %vm1692, 0, %v1464
    %v1702 = vsel %vm1692, 0, %v1471
    %v1703 = vsel %vm1692, 0, %v1478
    %v1704 = vsel %vm1692, 0, %v1485
    %v1705 = vsel %vm1692, 0, %v1492
    %v1706 = vsel %vm1692, 0, %v1499
    %v1707 = vsel %vm1692, 0, %v1506
    %v1708 = vsel %vm1692, 0, %v1513
    %v1709 = vsel %vm1692, 0, %v1520
    %v1710 = vsel %vm1692, 0, %v1527
    %v1711 = vsel %vm1692, 0, %v1534
    %v1712 = vsel %vm1692, 0, %v1541
    %v1713 = vsel %vm1692, 0, %v1548
    %v1714 = vsel %vm1692, 0, %v1555
    %v1715 = vsel %vm1692, 0, %v1562
    %v1716 = vsel %vm1692, 0, %v1569
    %v1717 = vsel %vm1692, 0, %v1576
    %v1718 = vsel %vm1692, 0, %v1583
    %v1719 = vsel %vm1692, 0, %v1590
    %v1720 = vsel %vm1692, 0, %v1597
    %v1721 = vsel %vm1692, 0, %v1604
    %v1722 = vsel %vm1692, 0, %v1611
    %v1723 = vsel %vm1692, 0, %v1618
    %v1724 = vsel %vm1692, 0, %v1625
    %v1725 = vsel %vm1692, %v1405, 0
    %v1726 = vsel %vm1692, %v1412, 0
    %v1727 = vsel %vm1692, %v1419, 0
    %v1728 = vsel %vm1692, %v1426, 0
    %v1729 = vsel %vm1692, %v1433, 0
    %v1730 = vsel %vm1692, %v1440, 0
    %v1731 = vsel %vm1692, %v1447, 0
    %v1732 = vsel %vm1692, %v1454, 0
    %v1733 = vsel %vm1692, %v1461, 0
    %v1734 = vsel %vm1692, %v1468, 0
    %v1735 = vsel %vm1692, %v1475, 0
    %v1736 = vsel %vm1692, %v1482, 0
    %v1737 = vsel %vm1692, %v1489, 0
    %v1738 = vsel %vm1692, %v1496, 0
    %v1739 = vsel %vm1692, %v1503, 0
    %v1740 = vsel %vm1692, %v1510, 0
    %v1741 = vsel %vm1692, %v1517, 0
    %v1742 = vsel %vm1692, %v1524, 0
    %v1743 = vsel %vm1692, %v1531, 0
    %v1744 = vsel %vm1692, %v1538, 0
    %v1745 = vsel %vm1692, %v1545, 0
    %v1746 = vsel %vm1692, %v1552, 0
    %v1747 = vsel %vm1692, %v1559, 0
    %v1748 = vsel %vm1692, %v1566, 0
    %v1749 = vsel %vm1692, %v1573, 0
    %v1750 = vsel %vm1692, %v1580, 0
    %v1751 = vsel %vm1692, %v1587, 0
    %v1752 = vsel %vm1692, %v1594, 0
    %v1753 = vsel %vm1692, %v1601, 0
    %v1754 = vsel %vm1692, %v1608, 0
    %v1755 = vsel %vm1692, %v1615, 0
    %v1756 = vsel %vm1692, %v1622, 0
    %v1821 = vunpack.c.l.b16 %v1693
    %v1822 = vunpack.c.h.b16 %v1693
    %v1823 = vunpack.c.l.b16 %v1725
    %v1824 = vunpack.c.l.b16 %v1694
    %v1825 = vunpack.c.h.b16 %v1694
    %v1826 = vunpack.c.l.b16 %v1726
    %v1827 = vunpack.c.l.b16 %v1695
    %v1828 = vunpack.c.h.b16 %v1695
    %v1829 = vunpack.c.l.b16 %v1727
    %v1830 = vunpack.c.l.b16 %v1696
    %v1831 = vunpack.c.h.b16 %v1696
    %v1832 = vunpack.c.l.b16 %v1728
    %v1833 = vunpack.c.l.b16 %v1697
    %v1834 = vunpack.c.h.b16 %v1697
    %v1835 = vunpack.c.l.b16 %v1729
    %v1836 = vunpack.c.l.b16 %v1698
    %v1837 = vunpack.c.h.b16 %v1698
    %v1838 = vunpack.c.l.b16 %v1730
    %v1839 = vunpack.c.l.b16 %v1699
    %v1840 = vunpack.c.h.b16 %v1699
    %v1841 = vunpack.c.l.b16 %v1731
    %v1842 = vunpack.c.l.b16 %v1700
    %v1843 = vunpack.c.h.b16 %v1700
    %v1844 = vunpack.c.l.b16 %v1732
    %v1845 = vunpack.c.l.b16 %v1701
    %v1846 = vunpack.c.h.b16 %v1701
    %v1847 = vunpack.c.l.b16 %v1733
    %v1848 = vunpack.c.l.b16 %v1702
    %v1849 = vunpack.c.h.b16 %v1702
    %v1850 = vunpack.c.l.b16 %v1734
    %v1851 = vunpack.c.l.b16 %v1703
    %v1852 = vunpack.c.h.b16 %v1703
    %v1853 = vunpack.c.l.b16 %v1735
    %v1854 = vunpack.c.l.b16 %v1704
    %v1855 = vunpack.c.h.b16 %v1704
    %v1856 = vunpack.c.l.b16 %v1736
    %v1857 = vunpack.c.l.b16 %v1705
    %v1858 = vunpack.c.h.b16 %v1705
    %v1859 = vunpack.c.l.b16 %v1737
    %v1860 = vunpack.c.l.b16 %v1706
    %v1861 = vunpack.c.h.b16 %v1706
    %v1862 = vunpack.c.l.b16 %v1738
    %v1863 = vunpack.c.l.b16 %v1707
    %v1864 = vunpack.c.h.b16 %v1707
    %v1865 = vunpack.c.l.b16 %v1739
    %v1866 = vunpack.c.l.b16 %v1708
    %v1867 = vunpack.c.h.b16 %v1708
    %v1868 = vunpack.c.l.b16 %v1740
    %v1869 = vunpack.c.l.b16 %v1709
    %v1870 = vunpack.c.h.b16 %v1709
    %v1871 = vunpack.c.l.b16 %v1741
    %v1872 = vunpack.c.l.b16 %v1710
    %v1873 = vunpack.c.h.b16 %v1710
    %v1874 = vunpack.c.l.b16 %v1742
    %v1875 = vunpack.c.l.b16 %v1711
    %v1876 = vunpack.c.h.b16 %v1711
    %v1877 = vunpack.c.l.b16 %v1743
    %v1878 = vunpack.c.l.b16 %v1712
    %v1879 = vunpack.c.h.b16 %v1712
    %v1880 = vunpack.c.l.b16 %v1744
    %v1881 = vunpack.c.l.b16 %v1713
    %v1882 = vunpack.c.h.b16 %v1713
    %v1883 = vunpack.c.l.b16 %v1745
    %v1884 = vunpack.c.l.b16 %v1714
    %v1885 = vunpack.c.h.b16 %v1714
    %v1886 = vunpack.c.l.b16 %v1746
    %v1887 = vunpack.c.l.b16 %v1715
    %v1888 = vunpack.c.h.b16 %v1715
    %v1889 = vunpack.c.l.b16 %v1747
    %v1890 = vunpack.c.l.b16 %v1716
    %v1891 = vunpack.c.h.b16 %v1716
    %v1892 = vunpack.c.l.b16 %v1748
    %v1893 = vunpack.c.l.b16 %v1717
    %v1894 = vunpack.c.h.b16 %v1717
    %v1895 = vunpack.c.l.b16 %v1749
    %v1896 = vunpack.c.l.b16 %v1718
    %v1897 = vunpack.c.h.b16 %v1718
    %v1898 = vunpack.c.l.b16 %v1750
    %v1899 = vunpack.c.l.b16 %v1719
    %v1900 = vunpack.c.h.b16 %v1719
    %v1901 = vunpack.c.l.b16 %v1751
    %v1902 = vunpack.c.l.b16 %v1720
    %v1903 = vunpack.c.h.b16 %v1720
    %v1904 = vunpack.c.l.b16 %v1752
    %v1905 = vunpack.c.l.b16 %v1721
    %v1906 = vunpack.c.h.b16 %v1721
    %v1907 = vunpack.c.l.b16 %v1753
    %v1908 = vunpack.c.l.b16 %v1722
    %v1909 = vunpack.c.h.b16 %v1722
    %v1910 = vunpack.c.l.b16 %v1754
    %v1911 = vunpack.c.l.b16 %v1723
    %v1912 = vunpack.c.h.b16 %v1723
    %v1913 = vunpack.c.l.b16 %v1755
    %v1914 = vunpack.c.l.b16 %v1724
    %v1915 = vunpack.c.h.b16 %v1724
    %v1916 = vunpack.c.l.b16 %v1756
    %v1917 = vpack.c.b16 %v1821, %v1821
    %v1918 = vpack.c.b16 %v1822, %v1822
    %v1919 = vpack.c.b16 %v1823, %v1823
    %v1920 = vpack.c.b16 %v1824, %v1824
    %v1921 = vpack.c.b16 %v1825, %v1825
    %v1922 = vpack.c.b16 %v1826, %v1826
    %v1923 = vpack.c.b16 %v1827, %v1827
    %v1924 = vpack.c.b16 %v1828, %v1828
    %v1925 = vpack.c.b16 %v1829, %v1829
    %v1926 = vpack.c.b16 %v1830, %v1830
    %v1927 = vpack.c.b16 %v1831, %v1831
    %v1928 = vpack.c.b16 %v1832, %v1832
    %v1929 = vpack.c.b16 %v1833, %v1833
    %v1930 = vpack.c.b16 %v1834, %v1834
    %v1931 = vpack.c.b16 %v1835, %v1835
    %v1932 = vpack.c.b16 %v1836, %v1836
    %v1933 = vpack.c.b16 %v1837, %v1837
    %v1934 = vpack.c.b16 %v1838, %v1838
    %v1935 = vpack.c.b16 %v1839, %v1839
    %v1936 = vpack.c.b16 %v1840, %v1840
    %v1937 = vpack.c.b16 %v1841, %v1841
    %v1938 = vpack.c.b16 %v1842, %v1842
    %v1939 = vpack.c.b16 %v1843, %v1843
    %v1940 = vpack.c.b16 %v1844, %v1844
    %v1941 = vpack.c.b16 %v1845, %v1845
    %v1942 = vpack.c.b16 %v1846, %v1846
    %v1943 = vpack.c.b16 %v1847, %v1847
    %v1944 = vpack.c.b16 %v1848, %v1848
    %v1945 = vpack.c.b16 %v1849, %v1849
    %v1946 = vpack.c.b16 %v1850, %v1850
    %v1947 = vpack.c.b16 %v1851, %v1851
    %v1948 = vpack.c.b16 %v1852, %v1852
    %v1949 = vpack.c.b16 %v1853, %v1853
    %v1950 = vpack.c.b16 %v1854, %v1854
    %v1951 = vpack.c.b16 %v1855, %v1855
    %v1952 = vpack.c.b16 %v1856, %v1856
    %v1953 = vpack.c.b16 %v1857, %v1857
    %v1954 = vpack.c.b16 %v1858, %v1858
    %v1955 = vpack.c.b16 %v1859, %v1859
    %v1956 = vpack.c.b16 %v1860, %v1860
    %v1957 = vpack.c.b16 %v1861, %v1861
    %v1958 = vpack.c.b16 %v1862, %v1862
    %v1959 = vpack.c.b16 %v1863, %v1863
    %v1960 = vpack.c.b16 %v1864, %v1864
    %v1961 = vpack.c.b16 %v1865, %v1865
    %v1962 = vpack.c.b16 %v1866, %v1866
    %v1963 = vpack.c.b16 %v1867, %v1867
    %v1964 = vpack.c.b16 %v1868, %v1868
    %v1965 = vpack.c.b16 %v1869, %v1869
    %v1966 = vpack.c.b16 %v1870, %v1870
    %v1967 = vpack.c.b16 %v1871, %v1871
    %v1968 = vpack.c.b16 %v1872, %v1872
    %v1969 = vpack.c.b16 %v1873, %v1873
    %v1970 = vpack.c.b16 %v1874, %v1874
    %v1971 = vpack.c.b16 %v1875, %v1875
    %v1972 = vpack.c.b16 %v1876, %v1876
    %v1973 = vpack.c.b16 %v1877, %v1877
    %v1974 = vpack.c.b16 %v1878, %v1878
    %v1975 = vpack.c.b16 %v1879, %v1879
    %v1976 = vpack.c.b16 %v1880, %v1880
    %v1977 = vpack.c.b16 %v1881, %v1881
    %v1978 = vpack.c.b16 %v1882, %v1882
    %v1979 = vpack.c.b16 %v1883, %v1883
    %v1980 = vpack.c.b16 %v1884, %v1884
    %v1981 = vpack.c.b16 %v1885, %v1885
    %v1982 = vpack.c.b16 %v1886, %v1886
    %v1983 = vpack.c.b16 %v1887, %v1887
    %v1984 = vpack.c.b16 %v1888, %v1888
    %v1985 = vpack.c.b16 %v1889, %v1889
    %v1986 = vpack.c.b16 %v1890, %v1890
    %v1987 = vpack.c.b16 %v1891, %v1891
    %v1988 = vpack.c.b16 %v1892, %v1892
    %v1989 = vpack.c.b16 %v1893, %v1893
    %v1990 = vpack.c.b16 %v1894, %v1894
    %v1991 = vpack.c.b16 %v1895, %v1895
    %v1992 = vpack.c.b16 %v1896, %v1896
    %v1993 = vpack.c.b16 %v1897, %v1897
    %v1994 = vpack.c.b16 %v1898, %v1898
    %v1995 = vpack.c.b16 %v1899, %v1899
    %v1996 = vpack.c.b16 %v1900, %v1900
    %v1997 = vpack.c.b16 %v1901, %v1901
    %v1998 = vpack.c.b16 %v1902, %v1902
    %v1999 = vpack.c.b16 %v1903, %v1903
    %v2000 = vpack.c.b16 %v1904, %v1904
    %v2001 = vpack.c.b16 %v1905, %v1905
    %v2002 = vpack.c.b16 %v1906, %v1906
    %v2003 = vpack.c.b16 %v1907, %v1907
    %v2004 = vpack.c.b16 %v1908, %v1908
    %v2005 = vpack.c.b16 %v1909, %v1909
    %v2006 = vpack.c.b16 %v1910, %v1910
    %v2007 = vpack.c.b16 %v1911, %v1911
    %v2008 = vpack.c.b16 %v1912, %v1912
    %v2009 = vpack.c.b16 %v1913, %v1913
    %v2010 = vpack.c.b16 %v1914, %v1914
    %v2011 = vpack.c.b16 %v1915, %v1915
    %v2012 = vpack.c.b16 %v1916, %v1916
    %s2109 = scalar_lea.vmem [#allocation2], 12
    %2110 = vst.msk [vmem:[%s2109] sm:$0xf] %vm1355, %v1917
    %2111 = vst.msk [vmem:[%s2109 + $0x4] sm:$0xf] %vm1355, %v1918
    %2112 = vst.msk [vmem:[%s2109 + $0x8] sm:$0x1] %vm1358, %v1919
    %2113 = vst.msk [vmem:[%s2109 + $0xc] sm:$0xf] %vm1355, %v1920
    %2114 = vst.msk [vmem:[%s2109 + $0x10] sm:$0xf] %vm1355, %v1921
    %2115 = vst.msk [vmem:[%s2109 + $0x14] sm:$0x1] %vm1358, %v1922
    %2116 = vst.msk [vmem:[%s2109 + $0x18] sm:$0xf] %vm1355, %v1923
    %2117 = vst.msk [vmem:[%s2109 + $0x1c] sm:$0xf] %vm1355, %v1924
    %2118 = vst.msk [vmem:[%s2109 + $0x20] sm:$0x1] %vm1358, %v1925
    %2119 = vst.msk [vmem:[%s2109 + $0x24] sm:$0xf] %vm1355, %v1926
    %2120 = vst.msk [vmem:[%s2109 + $0x28] sm:$0xf] %vm1355, %v1927
    %2121 = vst.msk [vmem:[%s2109 + $0x2c] sm:$0x1] %vm1358, %v1928
    %2122 = vst.msk [vmem:[%s2109 + $0x30] sm:$0xf] %vm1355, %v1929
    %2123 = vst.msk [vmem:[%s2109 + $0x34] sm:$0xf] %vm1355, %v1930
    %2124 = vst.msk [vmem:[%s2109 + $0x38] sm:$0x1] %vm1358, %v1931
    %2125 = vst.msk [vmem:[%s2109 + $0x3c] sm:$0xf] %vm1355, %v1932
    %2126 = vst.msk [vmem:[%s2109 + $0x40] sm:$0xf] %vm1355, %v1933
    %2127 = vst.msk [vmem:[%s2109 + $0x44] sm:$0x1] %vm1358, %v1934
    %2128 = vst.msk [vmem:[%s2109 + $0x48] sm:$0xf] %vm1355, %v1935
    %2129 = vst.msk [vmem:[%s2109 + $0x4c] sm:$0xf] %vm1355, %v1936
    %2130 = vst.msk [vmem:[%s2109 + $0x50] sm:$0x1] %vm1358, %v1937
    %2131 = vst.msk [vmem:[%s2109 + $0x54] sm:$0xf] %vm1355, %v1938
    %2132 = vst.msk [vmem:[%s2109 + $0x58] sm:$0xf] %vm1355, %v1939
    %2133 = vst.msk [vmem:[%s2109 + $0x5c] sm:$0x1] %vm1358, %v1940
    %2134 = vst.msk [vmem:[%s2109 + $0x60] sm:$0xf] %vm1355, %v1941
    %2135 = vst.msk [vmem:[%s2109 + $0x64] sm:$0xf] %vm1355, %v1942
    %2136 = vst.msk [vmem:[%s2109 + $0x68] sm:$0x1] %vm1358, %v1943
    %2137 = vst.msk [vmem:[%s2109 + $0x6c] sm:$0xf] %vm1355, %v1944
    %2138 = vst.msk [vmem:[%s2109 + $0x70] sm:$0xf] %vm1355, %v1945
    %2139 = vst.msk [vmem:[%s2109 + $0x74] sm:$0x1] %vm1358, %v1946
    %2140 = vst.msk [vmem:[%s2109 + $0x78] sm:$0xf] %vm1355, %v1947
    %2141 = vst.msk [vmem:[%s2109 + $0x7c] sm:$0xf] %vm1355, %v1948
    %2142 = vst.msk [vmem:[%s2109 + $0x80] sm:$0x1] %vm1358, %v1949
    %2143 = vst.msk [vmem:[%s2109 + $0x84] sm:$0xf] %vm1355, %v1950
    %2144 = vst.msk [vmem:[%s2109 + $0x88] sm:$0xf] %vm1355, %v1951
    %2145 = vst.msk [vmem:[%s2109 + $0x8c] sm:$0x1] %vm1358, %v1952
    %2146 = vst.msk [vmem:[%s2109 + $0x90] sm:$0xf] %vm1355, %v1953
    %2147 = vst.msk [vmem:[%s2109 + $0x94] sm:$0xf] %vm1355, %v1954
    %2148 = vst.msk [vmem:[%s2109 + $0x98] sm:$0x1] %vm1358, %v1955
    %2149 = vst.msk [vmem:[%s2109 + $0x9c] sm:$0xf] %vm1355, %v1956
    %2150 = vst.msk [vmem:[%s2109 + $0xa0] sm:$0xf] %vm1355, %v1957
    %2151 = vst.msk [vmem:[%s2109 + $0xa4] sm:$0x1] %vm1358, %v1958
    %2152 = vst.msk [vmem:[%s2109 + $0xa8] sm:$0xf] %vm1355, %v1959
    %2153 = vst.msk [vmem:[%s2109 + $0xac] sm:$0xf] %vm1355, %v1960
    %2154 = vst.msk [vmem:[%s2109 + $0xb0] sm:$0x1] %vm1358, %v1961
    %2155 = vst.msk [vmem:[%s2109 + $0xb4] sm:$0xf] %vm1355, %v1962
    %2156 = vst.msk [vmem:[%s2109 + $0xb8] sm:$0xf] %vm1355, %v1963
    %2157 = vst.msk [vmem:[%s2109 + $0xbc] sm:$0x1] %vm1358, %v1964
    %2158 = vst.msk [vmem:[%s2109 + $0xd8] sm:$0xf] %vm1355, %v1965
    %2159 = vst.msk [vmem:[%s2109 + $0xdc] sm:$0xf] %vm1355, %v1966
    %2160 = vst.msk [vmem:[%s2109 + $0xe0] sm:$0x1] %vm1358, %v1967
    %2161 = vst.msk [vmem:[%s2109 + $0xe4] sm:$0xf] %vm1355, %v1968
    %2162 = vst.msk [vmem:[%s2109 + $0xe8] sm:$0xf] %vm1355, %v1969
    %2163 = vst.msk [vmem:[%s2109 + $0xec] sm:$0x1] %vm1358, %v1970
    %2164 = vst.msk [vmem:[%s2109 + $0xf0] sm:$0xf] %vm1355, %v1971
    %2165 = vst.msk [vmem:[%s2109 + $0xf4] sm:$0xf] %vm1355, %v1972
    %2166 = vst.msk [vmem:[%s2109 + $0xf8] sm:$0x1] %vm1358, %v1973
    %2167 = vst.msk [vmem:[%s2109 + $0xfc] sm:$0xf] %vm1355, %v1974
    %2168 = vst.msk [vmem:[%s2109 + $0x100] sm:$0xf] %vm1355, %v1975
    %2169 = vst.msk [vmem:[%s2109 + $0x104] sm:$0x1] %vm1358, %v1976
    %2170 = vst.msk [vmem:[%s2109 + $0x108] sm:$0xf] %vm1355, %v1977
    %2171 = vst.msk [vmem:[%s2109 + $0x10c] sm:$0xf] %vm1355, %v1978
    %2172 = vst.msk [vmem:[%s2109 + $0x110] sm:$0x1] %vm1358, %v1979
    %2173 = vst.msk [vmem:[%s2109 + $0x114] sm:$0xf] %vm1355, %v1980
    %2174 = vst.msk [vmem:[%s2109 + $0x118] sm:$0xf] %vm1355, %v1981
    %2175 = vst.msk [vmem:[%s2109 + $0x11c] sm:$0x1] %vm1358, %v1982
    %2176 = vst.msk [vmem:[%s2109 + $0x120] sm:$0xf] %vm1355, %v1983
    %2177 = vst.msk [vmem:[%s2109 + $0x124] sm:$0xf] %vm1355, %v1984
    %2178 = vst.msk [vmem:[%s2109 + $0x128] sm:$0x1] %vm1358, %v1985
    %2179 = vst.msk [vmem:[%s2109 + $0x12c] sm:$0xf] %vm1355, %v1986
    %2180 = vst.msk [vmem:[%s2109 + $0x130] sm:$0xf] %vm1355, %v1987
    %2181 = vst.msk [vmem:[%s2109 + $0x134] sm:$0x1] %vm1358, %v1988
    %2182 = vst.msk [vmem:[%s2109 + $0x138] sm:$0xf] %vm1355, %v1989
    %2183 = vst.msk [vmem:[%s2109 + $0x13c] sm:$0xf] %vm1355, %v1990
    %2184 = vst.msk [vmem:[%s2109 + $0x140] sm:$0x1] %vm1358, %v1991
    %2185 = vst.msk [vmem:[%s2109 + $0x144] sm:$0xf] %vm1355, %v1992
    %2186 = vst.msk [vmem:[%s2109 + $0x148] sm:$0xf] %vm1355, %v1993
    %2187 = vst.msk [vmem:[%s2109 + $0x14c] sm:$0x1] %vm1358, %v1994
    %2188 = vst.msk [vmem:[%s2109 + $0x150] sm:$0xf] %vm1355, %v1995
    %2189 = vst.msk [vmem:[%s2109 + $0x154] sm:$0xf] %vm1355, %v1996
    %2190 = vst.msk [vmem:[%s2109 + $0x158] sm:$0x1] %vm1358, %v1997
    %2191 = vst.msk [vmem:[%s2109 + $0x15c] sm:$0xf] %vm1355, %v1998
    %2192 = vst.msk [vmem:[%s2109 + $0x160] sm:$0xf] %vm1355, %v1999
    %2193 = vst.msk [vmem:[%s2109 + $0x164] sm:$0x1] %vm1358, %v2000
    %2194 = vst.msk [vmem:[%s2109 + $0x168] sm:$0xf] %vm1355, %v2001
    %2195 = vst.msk [vmem:[%s2109 + $0x16c] sm:$0xf] %vm1355, %v2002
    %2196 = vst.msk [vmem:[%s2109 + $0x170] sm:$0x1] %vm1358, %v2003
    %2197 = vst.msk [vmem:[%s2109 + $0x174] sm:$0xf] %vm1355, %v2004
    %2198 = vst.msk [vmem:[%s2109 + $0x178] sm:$0xf] %vm1355, %v2005
    %2199 = vst.msk [vmem:[%s2109 + $0x17c] sm:$0x1] %vm1358, %v2006
    %2200 = vst.msk [vmem:[%s2109 + $0x180] sm:$0xf] %vm1355, %v2007
    %2201 = vst.msk [vmem:[%s2109 + $0x184] sm:$0xf] %vm1355, %v2008
    %2202 = vst.msk [vmem:[%s2109 + $0x188] sm:$0x1] %vm1358, %v2009
    %2203 = vst.msk [vmem:[%s2109 + $0x18c] sm:$0xf] %vm1355, %v2010
    %2204 = vst.msk [vmem:[%s2109 + $0x190] sm:$0xf] %vm1355, %v2011
    %2205 = vst.msk [vmem:[%s2109 + $0x194] sm:$0x1] %vm1358, %v2012
    %v2206 = vld [vmem:[#allocation2] sm:$0xf]
    %v2207 = vld [vmem:[#allocation2 + $0x4] sm:$0xf]
    %v2208 = vld [vmem:[#allocation2 + $0xc] sm:$0xf]
    %v2209 = vld [vmem:[#allocation2 + $0x10] sm:$0xf]
    %v2210 = vld [vmem:[#allocation2 + $0x18] sm:$0xf]
    %v2211 = vld [vmem:[#allocation2 + $0x1c] sm:$0xf]
    %v2212 = vld [vmem:[#allocation2 + $0x24] sm:$0xf]
    %v2213 = vld [vmem:[#allocation2 + $0x28] sm:$0xf]
    %v2214 = vld [vmem:[#allocation2 + $0x30] sm:$0xf]
    %v2215 = vld [vmem:[#allocation2 + $0x34] sm:$0xf]
    %v2216 = vld [vmem:[#allocation2 + $0x3c] sm:$0xf]
    %v2217 = vld [vmem:[#allocation2 + $0x40] sm:$0xf]
    %v2218 = vld [vmem:[#allocation2 + $0x48] sm:$0xf]
    %v2219 = vld [vmem:[#allocation2 + $0x4c] sm:$0xf]
    %v2220 = vld [vmem:[#allocation2 + $0x54] sm:$0xf]
    %v2221 = vld [vmem:[#allocation2 + $0x58] sm:$0xf]
    %v2222 = vld [vmem:[#allocation2 + $0x60] sm:$0xf]
    %v2223 = vld [vmem:[#allocation2 + $0x64] sm:$0xf]
    %v2224 = vld [vmem:[#allocation2 + $0x6c] sm:$0xf]
    %v2225 = vld [vmem:[#allocation2 + $0x70] sm:$0xf]
    %v2226 = vld [vmem:[#allocation2 + $0x78] sm:$0xf]
    %v2227 = vld [vmem:[#allocation2 + $0x7c] sm:$0xf]
    %v2228 = vld [vmem:[#allocation2 + $0x84] sm:$0xf]
    %v2229 = vld [vmem:[#allocation2 + $0x88] sm:$0xf]
    %v2230 = vld [vmem:[#allocation2 + $0x90] sm:$0xf]
    %v2231 = vld [vmem:[#allocation2 + $0x94] sm:$0xf]
    %v2232 = vld [vmem:[#allocation2 + $0x9c] sm:$0xf]
    %v2233 = vld [vmem:[#allocation2 + $0xa0] sm:$0xf]
    %v2234 = vld [vmem:[#allocation2 + $0xa8] sm:$0xf]
    %v2235 = vld [vmem:[#allocation2 + $0xac] sm:$0xf]
    %v2236 = vld [vmem:[#allocation2 + $0xb4] sm:$0xf]
    %v2237 = vld [vmem:[#allocation2 + $0xb8] sm:$0xf]
    %v2238 = vld [vmem:[#allocation2 + $0xd8] sm:$0xf]
    %v2239 = vld [vmem:[#allocation2 + $0xdc] sm:$0xf]
    %v2240 = vld [vmem:[#allocation2 + $0xe4] sm:$0xf]
    %v2241 = vld [vmem:[#allocation2 + $0xe8] sm:$0xf]
    %v2242 = vld [vmem:[#allocation2 + $0xf0] sm:$0xf]
    %v2243 = vld [vmem:[#allocation2 + $0xf4] sm:$0xf]
    %v2244 = vld [vmem:[#allocation2 + $0xfc] sm:$0xf]
    %v2245 = vld [vmem:[#allocation2 + $0x100] sm:$0xf]
    %v2246 = vld [vmem:[#allocation2 + $0x108] sm:$0xf]
    %v2247 = vld [vmem:[#allocation2 + $0x10c] sm:$0xf]
    %v2248 = vld [vmem:[#allocation2 + $0x114] sm:$0xf]
    %v2249 = vld [vmem:[#allocation2 + $0x118] sm:$0xf]
    %v2250 = vld [vmem:[#allocation2 + $0x120] sm:$0xf]
    %v2251 = vld [vmem:[#allocation2 + $0x124] sm:$0xf]
    %v2252 = vld [vmem:[#allocation2 + $0x12c] sm:$0xf]
    %v2253 = vld [vmem:[#allocation2 + $0x130] sm:$0xf]
    %v2254 = vld [vmem:[#allocation2 + $0x138] sm:$0xf]
    %v2255 = vld [vmem:[#allocation2 + $0x13c] sm:$0xf]
    %v2256 = vld [vmem:[#allocation2 + $0x144] sm:$0xf]
    %v2257 = vld [vmem:[#allocation2 + $0x148] sm:$0xf]
    %v2258 = vld [vmem:[#allocation2 + $0x150] sm:$0xf]
    %v2259 = vld [vmem:[#allocation2 + $0x154] sm:$0xf]
    %v2260 = vld [vmem:[#allocation2 + $0x15c] sm:$0xf]
    %v2261 = vld [vmem:[#allocation2 + $0x160] sm:$0xf]
    %v2262 = vld [vmem:[#allocation2 + $0x168] sm:$0xf]
    %v2263 = vld [vmem:[#allocation2 + $0x16c] sm:$0xf]
    %v2264 = vld [vmem:[#allocation2 + $0x174] sm:$0xf]
    %v2265 = vld [vmem:[#allocation2 + $0x178] sm:$0xf]
    %v2266 = vld [vmem:[#allocation2 + $0x180] sm:$0xf]
    %v2267 = vld [vmem:[#allocation2 + $0x184] sm:$0xf]
    %v2268 = vld [vmem:[#allocation2 + $0x18c] sm:$0xf]
    %v2269 = vld [vmem:[#allocation2 + $0x190] sm:$0xf]
    %v2270 = vld [vmem:[#allocation2 + $0x8] sm:$0x1]
    %v2271 = vld [vmem:[#allocation2 + $0x14] sm:$0x1]
    %v2272 = vld [vmem:[#allocation2 + $0x20] sm:$0x1]
    %v2273 = vld [vmem:[#allocation2 + $0x2c] sm:$0x1]
    %v2274 = vld [vmem:[#allocation2 + $0x38] sm:$0x1]
    %v2275 = vld [vmem:[#allocation2 + $0x44] sm:$0x1]
    %v2276 = vld [vmem:[#allocation2 + $0x50] sm:$0x1]
    %v2277 = vld [vmem:[#allocation2 + $0x5c] sm:$0x1]
    %v2278 = vld [vmem:[#allocation2 + $0x68] sm:$0x1]
    %v2279 = vld [vmem:[#allocation2 + $0x74] sm:$0x1]
    %v2280 = vld [vmem:[#allocation2 + $0x80] sm:$0x1]
    %v2281 = vld [vmem:[#allocation2 + $0x8c] sm:$0x1]
    %v2282 = vld [vmem:[#allocation2 + $0x98] sm:$0x1]
    %v2283 = vld [vmem:[#allocation2 + $0xa4] sm:$0x1]
    %v2284 = vld [vmem:[#allocation2 + $0xb0] sm:$0x1]
    %v2285 = vld [vmem:[#allocation2 + $0xbc] sm:$0x1]
    %v2286 = vld [vmem:[#allocation2 + $0xe0] sm:$0x1]
    %v2287 = vld [vmem:[#allocation2 + $0xec] sm:$0x1]
    %v2288 = vld [vmem:[#allocation2 + $0xf8] sm:$0x1]
    %v2289 = vld [vmem:[#allocation2 + $0x104] sm:$0x1]
    %v2290 = vld [vmem:[#allocation2 + $0x110] sm:$0x1]
    %v2291 = vld [vmem:[#allocation2 + $0x11c] sm:$0x1]
    %v2292 = vld [vmem:[#allocation2 + $0x128] sm:$0x1]
    %v2293 = vld [vmem:[#allocation2 + $0x134] sm:$0x1]
    %v2294 = vld [vmem:[#allocation2 + $0x140] sm:$0x1]
    %v2295 = vld [vmem:[#allocation2 + $0x14c] sm:$0x1]
    %v2296 = vld [vmem:[#allocation2 + $0x158] sm:$0x1]
    %v2297 = vld [vmem:[#allocation2 + $0x164] sm:$0x1]
    %v2298 = vld [vmem:[#allocation2 + $0x170] sm:$0x1]
    %v2299 = vld [vmem:[#allocation2 + $0x17c] sm:$0x1]
    %v2300 = vld [vmem:[#allocation2 + $0x188] sm:$0x1]
    %v2301 = vld [vmem:[#allocation2 + $0x194] sm:$0x1]
    %vm2302 = vsmask.f32 3328
    %vm2303 = vsmask.f32 7440
    %vm2304 = vmor %vm2302, %vm2303
    %v2306 = vshrl.u32 %v2206, 16
    %v2308 = vrot.slane %v2306, 4
    %v2309 = vshll.u32 %v2206, 16
    %v2311 = vrot.slane %v2309, 5
    %v2312 = vor.u32 %v2308, %v2311
    %v2313 = vrot.slane %v2312, 4
    %v2315 = vshll.u32 %v2207, 16
    %v2317 = vrot.slane %v2315, 5
    %v2318 = vsel %vm2304, %v2313, %v2317
    %v2319 = vshrl.u32 %v2207, 16
    %v2321 = vrot.slane %v2319, 4
    %v2322 = vor.u32 %v2321, %v2317
    %v2323 = vrot.slane %v2322, 4
    %v2325 = vshll.u32 %v2270, 16
    %v2327 = vrot.slane %v2325, 5
    %v2328 = vsel %vm2304, %v2323, %v2327
    %v2330 = vshrl.u32 %v2208, 16
    %v2332 = vrot.slane %v2330, 4
    %v2333 = vshll.u32 %v2208, 16
    %v2335 = vrot.slane %v2333, 5
    %v2336 = vor.u32 %v2332, %v2335
    %v2337 = vrot.slane %v2336, 4
    %v2339 = vshll.u32 %v2209, 16
    %v2341 = vrot.slane %v2339, 5
    %v2342 = vsel %vm2304, %v2337, %v2341
    %v2343 = vshrl.u32 %v2209, 16
    %v2345 = vrot.slane %v2343, 4
    %v2346 = vor.u32 %v2345, %v2341
    %v2347 = vrot.slane %v2346, 4
    %v2349 = vshll.u32 %v2271, 16
    %v2351 = vrot.slane %v2349, 5
    %v2352 = vsel %vm2304, %v2347, %v2351
    %v2354 = vshrl.u32 %v2210, 16
    %v2356 = vrot.slane %v2354, 4
    %v2357 = vshll.u32 %v2210, 16
    %v2359 = vrot.slane %v2357, 5
    %v2360 = vor.u32 %v2356, %v2359
    %v2361 = vrot.slane %v2360, 4
    %v2363 = vshll.u32 %v2211, 16
    %v2365 = vrot.slane %v2363, 5
    %v2366 = vsel %vm2304, %v2361, %v2365
    %v2367 = vshrl.u32 %v2211, 16
    %v2369 = vrot.slane %v2367, 4
    %v2370 = vor.u32 %v2369, %v2365
    %v2371 = vrot.slane %v2370, 4
    %v2373 = vshll.u32 %v2272, 16
    %v2375 = vrot.slane %v2373, 5
    %v2376 = vsel %vm2304, %v2371, %v2375
    %v2378 = vshrl.u32 %v2212, 16
    %v2380 = vrot.slane %v2378, 4
    %v2381 = vshll.u32 %v2212, 16
    %v2383 = vrot.slane %v2381, 5
    %v2384 = vor.u32 %v2380, %v2383
    %v2385 = vrot.slane %v2384, 4
    %v2387 = vshll.u32 %v2213, 16
    %v2389 = vrot.slane %v2387, 5
    %v2390 = vsel %vm2304, %v2385, %v2389
    %v2391 = vshrl.u32 %v2213, 16
    %v2393 = vrot.slane %v2391, 4
    %v2394 = vor.u32 %v2393, %v2389
    %v2395 = vrot.slane %v2394, 4
    %v2397 = vshll.u32 %v2273, 16
    %v2399 = vrot.slane %v2397, 5
    %v2400 = vsel %vm2304, %v2395, %v2399
    %v2402 = vshrl.u32 %v2214, 16
    %v2404 = vrot.slane %v2402, 4
    %v2405 = vshll.u32 %v2214, 16
    %v2407 = vrot.slane %v2405, 5
    %v2408 = vor.u32 %v2404, %v2407
    %v2409 = vrot.slane %v2408, 4
    %v2411 = vshll.u32 %v2215, 16
    %v2413 = vrot.slane %v2411, 5
    %v2414 = vsel %vm2304, %v2409, %v2413
    %v2415 = vshrl.u32 %v2215, 16
    %v2417 = vrot.slane %v2415, 4
    %v2418 = vor.u32 %v2417, %v2413
    %v2419 = vrot.slane %v2418, 4
    %v2421 = vshll.u32 %v2274, 16
    %v2423 = vrot.slane %v2421, 5
    %v2424 = vsel %vm2304, %v2419, %v2423
    %v2426 = vshrl.u32 %v2216, 16
    %v2428 = vrot.slane %v2426, 4
    %v2429 = vshll.u32 %v2216, 16
    %v2431 = vrot.slane %v2429, 5
    %v2432 = vor.u32 %v2428, %v2431
    %v2433 = vrot.slane %v2432, 4
    %v2435 = vshll.u32 %v2217, 16
    %v2437 = vrot.slane %v2435, 5
    %v2438 = vsel %vm2304, %v2433, %v2437
    %v2439 = vshrl.u32 %v2217, 16
    %v2441 = vrot.slane %v2439, 4
    %v2442 = vor.u32 %v2441, %v2437
    %v2443 = vrot.slane %v2442, 4
    %v2445 = vshll.u32 %v2275, 16
    %v2447 = vrot.slane %v2445, 5
    %v2448 = vsel %vm2304, %v2443, %v2447
    %v2450 = vshrl.u32 %v2218, 16
    %v2452 = vrot.slane %v2450, 4
    %v2453 = vshll.u32 %v2218, 16
    %v2455 = vrot.slane %v2453, 5
    %v2456 = vor.u32 %v2452, %v2455
    %v2457 = vrot.slane %v2456, 4
    %v2459 = vshll.u32 %v2219, 16
    %v2461 = vrot.slane %v2459, 5
    %v2462 = vsel %vm2304, %v2457, %v2461
    %v2463 = vshrl.u32 %v2219, 16
    %v2465 = vrot.slane %v2463, 4
    %v2466 = vor.u32 %v2465, %v2461
    %v2467 = vrot.slane %v2466, 4
    %v2469 = vshll.u32 %v2276, 16
    %v2471 = vrot.slane %v2469, 5
    %v2472 = vsel %vm2304, %v2467, %v2471
    %v2474 = vshrl.u32 %v2220, 16
    %v2476 = vrot.slane %v2474, 4
    %v2477 = vshll.u32 %v2220, 16
    %v2479 = vrot.slane %v2477, 5
    %v2480 = vor.u32 %v2476, %v2479
    %v2481 = vrot.slane %v2480, 4
    %v2483 = vshll.u32 %v2221, 16
    %v2485 = vrot.slane %v2483, 5
    %v2486 = vsel %vm2304, %v2481, %v2485
    %v2487 = vshrl.u32 %v2221, 16
    %v2489 = vrot.slane %v2487, 4
    %v2490 = vor.u32 %v2489, %v2485
    %v2491 = vrot.slane %v2490, 4
    %v2493 = vshll.u32 %v2277, 16
    %v2495 = vrot.slane %v2493, 5
    %v2496 = vsel %vm2304, %v2491, %v2495
    %v2498 = vshrl.u32 %v2222, 16
    %v2500 = vrot.slane %v2498, 4
    %v2501 = vshll.u32 %v2222, 16
    %v2503 = vrot.slane %v2501, 5
    %v2504 = vor.u32 %v2500, %v2503
    %v2505 = vrot.slane %v2504, 4
    %v2507 = vshll.u32 %v2223, 16
    %v2509 = vrot.slane %v2507, 5
    %v2510 = vsel %vm2304, %v2505, %v2509
    %v2511 = vshrl.u32 %v2223, 16
    %v2513 = vrot.slane %v2511, 4
    %v2514 = vor.u32 %v2513, %v2509
    %v2515 = vrot.slane %v2514, 4
    %v2517 = vshll.u32 %v2278, 16
    %v2519 = vrot.slane %v2517, 5
    %v2520 = vsel %vm2304, %v2515, %v2519
    %v2522 = vshrl.u32 %v2224, 16
    %v2524 = vrot.slane %v2522, 4
    %v2525 = vshll.u32 %v2224, 16
    %v2527 = vrot.slane %v2525, 5
    %v2528 = vor.u32 %v2524, %v2527
    %v2529 = vrot.slane %v2528, 4
    %v2531 = vshll.u32 %v2225, 16
    %v2533 = vrot.slane %v2531, 5
    %v2534 = vsel %vm2304, %v2529, %v2533
    %v2535 = vshrl.u32 %v2225, 16
    %v2537 = vrot.slane %v2535, 4
    %v2538 = vor.u32 %v2537, %v2533
    %v2539 = vrot.slane %v2538, 4
    %v2541 = vshll.u32 %v2279, 16
    %v2543 = vrot.slane %v2541, 5
    %v2544 = vsel %vm2304, %v2539, %v2543
    %v2546 = vshrl.u32 %v2226, 16
    %v2548 = vrot.slane %v2546, 4
    %v2549 = vshll.u32 %v2226, 16
    %v2551 = vrot.slane %v2549, 5
    %v2552 = vor.u32 %v2548, %v2551
    %v2553 = vrot.slane %v2552, 4
    %v2555 = vshll.u32 %v2227, 16
    %v2557 = vrot.slane %v2555, 5
    %v2558 = vsel %vm2304, %v2553, %v2557
    %v2559 = vshrl.u32 %v2227, 16
    %v2561 = vrot.slane %v2559, 4
    %v2562 = vor.u32 %v2561, %v2557
    %v2563 = vrot.slane %v2562, 4
    %v2565 = vshll.u32 %v2280, 16
    %v2567 = vrot.slane %v2565, 5
    %v2568 = vsel %vm2304, %v2563, %v2567
    %v2570 = vshrl.u32 %v2228, 16
    %v2572 = vrot.slane %v2570, 4
    %v2573 = vshll.u32 %v2228, 16
    %v2575 = vrot.slane %v2573, 5
    %v2576 = vor.u32 %v2572, %v2575
    %v2577 = vrot.slane %v2576, 4
    %v2579 = vshll.u32 %v2229, 16
    %v2581 = vrot.slane %v2579, 5
    %v2582 = vsel %vm2304, %v2577, %v2581
    %v2583 = vshrl.u32 %v2229, 16
    %v2585 = vrot.slane %v2583, 4
    %v2586 = vor.u32 %v2585, %v2581
    %v2587 = vrot.slane %v2586, 4
    %v2589 = vshll.u32 %v2281, 16
    %v2591 = vrot.slane %v2589, 5
    %v2592 = vsel %vm2304, %v2587, %v2591
    %v2594 = vshrl.u32 %v2230, 16
    %v2596 = vrot.slane %v2594, 4
    %v2597 = vshll.u32 %v2230, 16
    %v2599 = vrot.slane %v2597, 5
    %v2600 = vor.u32 %v2596, %v2599
    %v2601 = vrot.slane %v2600, 4
    %v2603 = vshll.u32 %v2231, 16
    %v2605 = vrot.slane %v2603, 5
    %v2606 = vsel %vm2304, %v2601, %v2605
    %v2607 = vshrl.u32 %v2231, 16
    %v2609 = vrot.slane %v2607, 4
    %v2610 = vor.u32 %v2609, %v2605
    %v2611 = vrot.slane %v2610, 4
    %v2613 = vshll.u32 %v2282, 16
    %v2615 = vrot.slane %v2613, 5
    %v2616 = vsel %vm2304, %v2611, %v2615
    %v2618 = vshrl.u32 %v2232, 16
    %v2620 = vrot.slane %v2618, 4
    %v2621 = vshll.u32 %v2232, 16
    %v2623 = vrot.slane %v2621, 5
    %v2624 = vor.u32 %v2620, %v2623
    %v2625 = vrot.slane %v2624, 4
    %v2627 = vshll.u32 %v2233, 16
    %v2629 = vrot.slane %v2627, 5
    %v2630 = vsel %vm2304, %v2625, %v2629
    %v2631 = vshrl.u32 %v2233, 16
    %v2633 = vrot.slane %v2631, 4
    %v2634 = vor.u32 %v2633, %v2629
    %v2635 = vrot.slane %v2634, 4
    %v2637 = vshll.u32 %v2283, 16
    %v2639 = vrot.slane %v2637, 5
    %v2640 = vsel %vm2304, %v2635, %v2639
    %v2642 = vshrl.u32 %v2234, 16
    %v2644 = vrot.slane %v2642, 4
    %v2645 = vshll.u32 %v2234, 16
    %v2647 = vrot.slane %v2645, 5
    %v2648 = vor.u32 %v2644, %v2647
    %v2649 = vrot.slane %v2648, 4
    %v2651 = vshll.u32 %v2235, 16
    %v2653 = vrot.slane %v2651, 5
    %v2654 = vsel %vm2304, %v2649, %v2653
    %v2655 = vshrl.u32 %v2235, 16
    %v2657 = vrot.slane %v2655, 4
    %v2658 = vor.u32 %v2657, %v2653
    %v2659 = vrot.slane %v2658, 4
    %v2661 = vshll.u32 %v2284, 16
    %v2663 = vrot.slane %v2661, 5
    %v2664 = vsel %vm2304, %v2659, %v2663
    %v2666 = vshrl.u32 %v2236, 16
    %v2668 = vrot.slane %v2666, 4
    %v2669 = vshll.u32 %v2236, 16
    %v2671 = vrot.slane %v2669, 5
    %v2672 = vor.u32 %v2668, %v2671
    %v2673 = vrot.slane %v2672, 4
    %v2675 = vshll.u32 %v2237, 16
    %v2677 = vrot.slane %v2675, 5
    %v2678 = vsel %vm2304, %v2673, %v2677
    %v2679 = vshrl.u32 %v2237, 16
    %v2681 = vrot.slane %v2679, 4
    %v2682 = vor.u32 %v2681, %v2677
    %v2683 = vrot.slane %v2682, 4
    %v2685 = vshll.u32 %v2285, 16
    %v2687 = vrot.slane %v2685, 5
    %v2688 = vsel %vm2304, %v2683, %v2687
    %v2690 = vshrl.u32 %v2238, 16
    %v2692 = vrot.slane %v2690, 4
    %v2693 = vshll.u32 %v2238, 16
    %v2695 = vrot.slane %v2693, 5
    %v2696 = vor.u32 %v2692, %v2695
    %v2697 = vrot.slane %v2696, 4
    %v2699 = vshll.u32 %v2239, 16
    %v2701 = vrot.slane %v2699, 5
    %v2702 = vsel %vm2304, %v2697, %v2701
    %v2703 = vshrl.u32 %v2239, 16
    %v2705 = vrot.slane %v2703, 4
    %v2706 = vor.u32 %v2705, %v2701
    %v2707 = vrot.slane %v2706, 4
    %v2709 = vshll.u32 %v2286, 16
    %v2711 = vrot.slane %v2709, 5
    %v2712 = vsel %vm2304, %v2707, %v2711
    %v2714 = vshrl.u32 %v2240, 16
    %v2716 = vrot.slane %v2714, 4
    %v2717 = vshll.u32 %v2240, 16
    %v2719 = vrot.slane %v2717, 5
    %v2720 = vor.u32 %v2716, %v2719
    %v2721 = vrot.slane %v2720, 4
    %v2723 = vshll.u32 %v2241, 16
    %v2725 = vrot.slane %v2723, 5
    %v2726 = vsel %vm2304, %v2721, %v2725
    %v2727 = vshrl.u32 %v2241, 16
    %v2729 = vrot.slane %v2727, 4
    %v2730 = vor.u32 %v2729, %v2725
    %v2731 = vrot.slane %v2730, 4
    %v2733 = vshll.u32 %v2287, 16
    %v2735 = vrot.slane %v2733, 5
    %v2736 = vsel %vm2304, %v2731, %v2735
    %v2738 = vshrl.u32 %v2242, 16
    %v2740 = vrot.slane %v2738, 4
    %v2741 = vshll.u32 %v2242, 16
    %v2743 = vrot.slane %v2741, 5
    %v2744 = vor.u32 %v2740, %v2743
    %v2745 = vrot.slane %v2744, 4
    %v2747 = vshll.u32 %v2243, 16
    %v2749 = vrot.slane %v2747, 5
    %v2750 = vsel %vm2304, %v2745, %v2749
    %v2751 = vshrl.u32 %v2243, 16
    %v2753 = vrot.slane %v2751, 4
    %v2754 = vor.u32 %v2753, %v2749
    %v2755 = vrot.slane %v2754, 4
    %v2757 = vshll.u32 %v2288, 16
    %v2759 = vrot.slane %v2757, 5
    %v2760 = vsel %vm2304, %v2755, %v2759
    %v2762 = vshrl.u32 %v2244, 16
    %v2764 = vrot.slane %v2762, 4
    %v2765 = vshll.u32 %v2244, 16
    %v2767 = vrot.slane %v2765, 5
    %v2768 = vor.u32 %v2764, %v2767
    %v2769 = vrot.slane %v2768, 4
    %v2771 = vshll.u32 %v2245, 16
    %v2773 = vrot.slane %v2771, 5
    %v2774 = vsel %vm2304, %v2769, %v2773
    %v2775 = vshrl.u32 %v2245, 16
    %v2777 = vrot.slane %v2775, 4
    %v2778 = vor.u32 %v2777, %v2773
    %v2779 = vrot.slane %v2778, 4
    %v2781 = vshll.u32 %v2289, 16
    %v2783 = vrot.slane %v2781, 5
    %v2784 = vsel %vm2304, %v2779, %v2783
    %v2786 = vshrl.u32 %v2246, 16
    %v2788 = vrot.slane %v2786, 4
    %v2789 = vshll.u32 %v2246, 16
    %v2791 = vrot.slane %v2789, 5
    %v2792 = vor.u32 %v2788, %v2791
    %v2793 = vrot.slane %v2792, 4
    %v2795 = vshll.u32 %v2247, 16
    %v2797 = vrot.slane %v2795, 5
    %v2798 = vsel %vm2304, %v2793, %v2797
    %v2799 = vshrl.u32 %v2247, 16
    %v2801 = vrot.slane %v2799, 4
    %v2802 = vor.u32 %v2801, %v2797
    %v2803 = vrot.slane %v2802, 4
    %v2805 = vshll.u32 %v2290, 16
    %v2807 = vrot.slane %v2805, 5
    %v2808 = vsel %vm2304, %v2803, %v2807
    %v2810 = vshrl.u32 %v2248, 16
    %v2812 = vrot.slane %v2810, 4
    %v2813 = vshll.u32 %v2248, 16
    %v2815 = vrot.slane %v2813, 5
    %v2816 = vor.u32 %v2812, %v2815
    %v2817 = vrot.slane %v2816, 4
    %v2819 = vshll.u32 %v2249, 16
    %v2821 = vrot.slane %v2819, 5
    %v2822 = vsel %vm2304, %v2817, %v2821
    %v2823 = vshrl.u32 %v2249, 16
    %v2825 = vrot.slane %v2823, 4
    %v2826 = vor.u32 %v2825, %v2821
    %v2827 = vrot.slane %v2826, 4
    %v2829 = vshll.u32 %v2291, 16
    %v2831 = vrot.slane %v2829, 5
    %v2832 = vsel %vm2304, %v2827, %v2831
    %v2834 = vshrl.u32 %v2250, 16
    %v2836 = vrot.slane %v2834, 4
    %v2837 = vshll.u32 %v2250, 16
    %v2839 = vrot.slane %v2837, 5
    %v2840 = vor.u32 %v2836, %v2839
    %v2841 = vrot.slane %v2840, 4
    %v2843 = vshll.u32 %v2251, 16
    %v2845 = vrot.slane %v2843, 5
    %v2846 = vsel %vm2304, %v2841, %v2845
    %v2847 = vshrl.u32 %v2251, 16
    %v2849 = vrot.slane %v2847, 4
    %v2850 = vor.u32 %v2849, %v2845
    %v2851 = vrot.slane %v2850, 4
    %v2853 = vshll.u32 %v2292, 16
    %v2855 = vrot.slane %v2853, 5
    %v2856 = vsel %vm2304, %v2851, %v2855
    %v2858 = vshrl.u32 %v2252, 16
    %v2860 = vrot.slane %v2858, 4
    %v2861 = vshll.u32 %v2252, 16
    %v2863 = vrot.slane %v2861, 5
    %v2864 = vor.u32 %v2860, %v2863
    %v2865 = vrot.slane %v2864, 4
    %v2867 = vshll.u32 %v2253, 16
    %v2869 = vrot.slane %v2867, 5
    %v2870 = vsel %vm2304, %v2865, %v2869
    %v2871 = vshrl.u32 %v2253, 16
    %v2873 = vrot.slane %v2871, 4
    %v2874 = vor.u32 %v2873, %v2869
    %v2875 = vrot.slane %v2874, 4
    %v2877 = vshll.u32 %v2293, 16
    %v2879 = vrot.slane %v2877, 5
    %v2880 = vsel %vm2304, %v2875, %v2879
    %v2882 = vshrl.u32 %v2254, 16
    %v2884 = vrot.slane %v2882, 4
    %v2885 = vshll.u32 %v2254, 16
    %v2887 = vrot.slane %v2885, 5
    %v2888 = vor.u32 %v2884, %v2887
    %v2889 = vrot.slane %v2888, 4
    %v2891 = vshll.u32 %v2255, 16
    %v2893 = vrot.slane %v2891, 5
    %v2894 = vsel %vm2304, %v2889, %v2893
    %v2895 = vshrl.u32 %v2255, 16
    %v2897 = vrot.slane %v2895, 4
    %v2898 = vor.u32 %v2897, %v2893
    %v2899 = vrot.slane %v2898, 4
    %v2901 = vshll.u32 %v2294, 16
    %v2903 = vrot.slane %v2901, 5
    %v2904 = vsel %vm2304, %v2899, %v2903
    %v2906 = vshrl.u32 %v2256, 16
    %v2908 = vrot.slane %v2906, 4
    %v2909 = vshll.u32 %v2256, 16
    %v2911 = vrot.slane %v2909, 5
    %v2912 = vor.u32 %v2908, %v2911
    %v2913 = vrot.slane %v2912, 4
    %v2915 = vshll.u32 %v2257, 16
    %v2917 = vrot.slane %v2915, 5
    %v2918 = vsel %vm2304, %v2913, %v2917
    %v2919 = vshrl.u32 %v2257, 16
    %v2921 = vrot.slane %v2919, 4
    %v2922 = vor.u32 %v2921, %v2917
    %v2923 = vrot.slane %v2922, 4
    %v2925 = vshll.u32 %v2295, 16
    %v2927 = vrot.slane %v2925, 5
    %v2928 = vsel %vm2304, %v2923, %v2927
    %v2930 = vshrl.u32 %v2258, 16
    %v2932 = vrot.slane %v2930, 4
    %v2933 = vshll.u32 %v2258, 16
    %v2935 = vrot.slane %v2933, 5
    %v2936 = vor.u32 %v2932, %v2935
    %v2937 = vrot.slane %v2936, 4
    %v2939 = vshll.u32 %v2259, 16
    %v2941 = vrot.slane %v2939, 5
    %v2942 = vsel %vm2304, %v2937, %v2941
    %v2943 = vshrl.u32 %v2259, 16
    %v2945 = vrot.slane %v2943, 4
    %v2946 = vor.u32 %v2945, %v2941
    %v2947 = vrot.slane %v2946, 4
    %v2949 = vshll.u32 %v2296, 16
    %v2951 = vrot.slane %v2949, 5
    %v2952 = vsel %vm2304, %v2947, %v2951
    %v2954 = vshrl.u32 %v2260, 16
    %v2956 = vrot.slane %v2954, 4
    %v2957 = vshll.u32 %v2260, 16
    %v2959 = vrot.slane %v2957, 5
    %v2960 = vor.u32 %v2956, %v2959
    %v2961 = vrot.slane %v2960, 4
    %v2963 = vshll.u32 %v2261, 16
    %v2965 = vrot.slane %v2963, 5
    %v2966 = vsel %vm2304, %v2961, %v2965
    %v2967 = vshrl.u32 %v2261, 16
    %v2969 = vrot.slane %v2967, 4
    %v2970 = vor.u32 %v2969, %v2965
    %v2971 = vrot.slane %v2970, 4
    %v2973 = vshll.u32 %v2297, 16
    %v2975 = vrot.slane %v2973, 5
    %v2976 = vsel %vm2304, %v2971, %v2975
    %v2978 = vshrl.u32 %v2262, 16
    %v2980 = vrot.slane %v2978, 4
    %v2981 = vshll.u32 %v2262, 16
    %v2983 = vrot.slane %v2981, 5
    %v2984 = vor.u32 %v2980, %v2983
    %v2985 = vrot.slane %v2984, 4
    %v2987 = vshll.u32 %v2263, 16
    %v2989 = vrot.slane %v2987, 5
    %v2990 = vsel %vm2304, %v2985, %v2989
    %v2991 = vshrl.u32 %v2263, 16
    %v2993 = vrot.slane %v2991, 4
    %v2994 = vor.u32 %v2993, %v2989
    %v2995 = vrot.slane %v2994, 4
    %v2997 = vshll.u32 %v2298, 16
    %v2999 = vrot.slane %v2997, 5
    %v3000 = vsel %vm2304, %v2995, %v2999
    %v3002 = vshrl.u32 %v2264, 16
    %v3004 = vrot.slane %v3002, 4
    %v3005 = vshll.u32 %v2264, 16
    %v3007 = vrot.slane %v3005, 5
    %v3008 = vor.u32 %v3004, %v3007
    %v3009 = vrot.slane %v3008, 4
    %v3011 = vshll.u32 %v2265, 16
    %v3013 = vrot.slane %v3011, 5
    %v3014 = vsel %vm2304, %v3009, %v3013
    %v3015 = vshrl.u32 %v2265, 16
    %v3017 = vrot.slane %v3015, 4
    %v3018 = vor.u32 %v3017, %v3013
    %v3019 = vrot.slane %v3018, 4
    %v3021 = vshll.u32 %v2299, 16
    %v3023 = vrot.slane %v3021, 5
    %v3024 = vsel %vm2304, %v3019, %v3023
    %v3026 = vshrl.u32 %v2266, 16
    %v3028 = vrot.slane %v3026, 4
    %v3029 = vshll.u32 %v2266, 16
    %v3031 = vrot.slane %v3029, 5
    %v3032 = vor.u32 %v3028, %v3031
    %v3033 = vrot.slane %v3032, 4
    %v3035 = vshll.u32 %v2267, 16
    %v3037 = vrot.slane %v3035, 5
    %v3038 = vsel %vm2304, %v3033, %v3037
    %v3039 = vshrl.u32 %v2267, 16
    %v3041 = vrot.slane %v3039, 4
    %v3042 = vor.u32 %v3041, %v3037
    %v3043 = vrot.slane %v3042, 4
    %v3045 = vshll.u32 %v2300, 16
    %v3047 = vrot.slane %v3045, 5
    %v3048 = vsel %vm2304, %v3043, %v3047
    %v3050 = vshrl.u32 %v2268, 16
    %v3052 = vrot.slane %v3050, 4
    %v3053 = vshll.u32 %v2268, 16
    %v3055 = vrot.slane %v3053, 5
    %v3056 = vor.u32 %v3052, %v3055
    %v3057 = vrot.slane %v3056, 4
    %v3059 = vshll.u32 %v2269, 16
    %v3061 = vrot.slane %v3059, 5
    %v3062 = vsel %vm2304, %v3057, %v3061
    %v3063 = vshrl.u32 %v2269, 16
    %v3065 = vrot.slane %v3063, 4
    %v3066 = vor.u32 %v3065, %v3061
    %v3067 = vrot.slane %v3066, 4
    %v3069 = vshll.u32 %v2301, 16
    %v3071 = vrot.slane %v3069, 5
    %v3072 = vsel %vm2304, %v3067, %v3071
    %v3073 = vld [vmem:[#allocation2] sm:$0xe]
    %v3074 = vld [vmem:[#allocation2 + $0xc] sm:$0xe]
    %v3075 = vld [vmem:[#allocation2 + $0x18] sm:$0xe]
    %v3076 = vld [vmem:[#allocation2 + $0x24] sm:$0xe]
    %v3077 = vld [vmem:[#allocation2 + $0x30] sm:$0xe]
    %v3078 = vld [vmem:[#allocation2 + $0x3c] sm:$0xe]
    %v3079 = vld [vmem:[#allocation2 + $0x48] sm:$0xe]
    %v3080 = vld [vmem:[#allocation2 + $0x54] sm:$0xe]
    %v3081 = vld [vmem:[#allocation2 + $0x60] sm:$0xe]
    %v3082 = vld [vmem:[#allocation2 + $0x6c] sm:$0xe]
    %v3083 = vld [vmem:[#allocation2 + $0x78] sm:$0xe]
    %v3084 = vld [vmem:[#allocation2 + $0x84] sm:$0xe]
    %v3085 = vld [vmem:[#allocation2 + $0x90] sm:$0xe]
    %v3086 = vld [vmem:[#allocation2 + $0x9c] sm:$0xe]
    %v3087 = vld [vmem:[#allocation2 + $0xa8] sm:$0xe]
    %v3088 = vld [vmem:[#allocation2 + $0xb4] sm:$0xe]
    %v3089 = vld [vmem:[#allocation2 + $0xd8] sm:$0xe]
    %v3090 = vld [vmem:[#allocation2 + $0xe4] sm:$0xe]
    %v3091 = vld [vmem:[#allocation2 + $0xf0] sm:$0xe]
    %v3092 = vld [vmem:[#allocation2 + $0xfc] sm:$0xe]
    %v3093 = vld [vmem:[#allocation2 + $0x108] sm:$0xe]
    %v3094 = vld [vmem:[#allocation2 + $0x114] sm:$0xe]
    %v3095 = vld [vmem:[#allocation2 + $0x120] sm:$0xe]
    %v3096 = vld [vmem:[#allocation2 + $0x12c] sm:$0xe]
    %v3097 = vld [vmem:[#allocation2 + $0x138] sm:$0xe]
    %v3098 = vld [vmem:[#allocation2 + $0x144] sm:$0xe]
    %v3099 = vld [vmem:[#allocation2 + $0x150] sm:$0xe]
    %v3100 = vld [vmem:[#allocation2 + $0x15c] sm:$0xe]
    %v3101 = vld [vmem:[#allocation2 + $0x168] sm:$0xe]
    %v3102 = vld [vmem:[#allocation2 + $0x174] sm:$0xe]
    %v3103 = vld [vmem:[#allocation2 + $0x180] sm:$0xe]
    %v3104 = vld [vmem:[#allocation2 + $0x18c] sm:$0xe]
    %vm3201 = vcmask 1042432
    %vm3202 = vcmask 1046532
    %vm3203 = vmor %vm3201, %vm3202
    %v3204 = vrot.slane %v3073, 5
    %v3205 = vrot.slane %v3204, 4
    %v3206 = vrot.slane %v2207, 5
    %v3207 = vsel %vm3203, %v3205, %v3206
    %v3208 = vrot.slane %v3206, 4
    %v3209 = vrot.slane %v2270, 5
    %v3210 = vsel %vm3203, %v3208, %v3209
    %v3211 = vrot.slane %v3074, 5
    %v3212 = vrot.slane %v3211, 4
    %v3213 = vrot.slane %v2209, 5
    %v3214 = vsel %vm3203, %v3212, %v3213
    %v3215 = vrot.slane %v3213, 4
    %v3216 = vrot.slane %v2271, 5
    %v3217 = vsel %vm3203, %v3215, %v3216
    %v3218 = vrot.slane %v3075, 5
    %v3219 = vrot.slane %v3218, 4
    %v3220 = vrot.slane %v2211, 5
    %v3221 = vsel %vm3203, %v3219, %v3220
    %v3222 = vrot.slane %v3220, 4
    %v3223 = vrot.slane %v2272, 5
    %v3224 = vsel %vm3203, %v3222, %v3223
    %v3225 = vrot.slane %v3076, 5
    %v3226 = vrot.slane %v3225, 4
    %v3227 = vrot.slane %v2213, 5
    %v3228 = vsel %vm3203, %v3226, %v3227
    %v3229 = vrot.slane %v3227, 4
    %v3230 = vrot.slane %v2273, 5
    %v3231 = vsel %vm3203, %v3229, %v3230
    %v3232 = vrot.slane %v3077, 5
    %v3233 = vrot.slane %v3232, 4
    %v3234 = vrot.slane %v2215, 5
    %v3235 = vsel %vm3203, %v3233, %v3234
    %v3236 = vrot.slane %v3234, 4
    %v3237 = vrot.slane %v2274, 5
    %v3238 = vsel %vm3203, %v3236, %v3237
    %v3239 = vrot.slane %v3078, 5
    %v3240 = vrot.slane %v3239, 4
    %v3241 = vrot.slane %v2217, 5
    %v3242 = vsel %vm3203, %v3240, %v3241
    %v3243 = vrot.slane %v3241, 4
    %v3244 = vrot.slane %v2275, 5
    %v3245 = vsel %vm3203, %v3243, %v3244
    %v3246 = vrot.slane %v3079, 5
    %v3247 = vrot.slane %v3246, 4
    %v3248 = vrot.slane %v2219, 5
    %v3249 = vsel %vm3203, %v3247, %v3248
    %v3250 = vrot.slane %v3248, 4
    %v3251 = vrot.slane %v2276, 5
    %v3252 = vsel %vm3203, %v3250, %v3251
    %v3253 = vrot.slane %v3080, 5
    %v3254 = vrot.slane %v3253, 4
    %v3255 = vrot.slane %v2221, 5
    %v3256 = vsel %vm3203, %v3254, %v3255
    %v3257 = vrot.slane %v3255, 4
    %v3258 = vrot.slane %v2277, 5
    %v3259 = vsel %vm3203, %v3257, %v3258
    %v3260 = vrot.slane %v3081, 5
    %v3261 = vrot.slane %v3260, 4
    %v3262 = vrot.slane %v2223, 5
    %v3263 = vsel %vm3203, %v3261, %v3262
    %v3264 = vrot.slane %v3262, 4
    %v3265 = vrot.slane %v2278, 5
    %v3266 = vsel %vm3203, %v3264, %v3265
    %v3267 = vrot.slane %v3082, 5
    %v3268 = vrot.slane %v3267, 4
    %v3269 = vrot.slane %v2225, 5
    %v3270 = vsel %vm3203, %v3268, %v3269
    %v3271 = vrot.slane %v3269, 4
    %v3272 = vrot.slane %v2279, 5
    %v3273 = vsel %vm3203, %v3271, %v3272
    %v3274 = vrot.slane %v3083, 5
    %v3275 = vrot.slane %v3274, 4
    %v3276 = vrot.slane %v2227, 5
    %v3277 = vsel %vm3203, %v3275, %v3276
    %v3278 = vrot.slane %v3276, 4
    %v3279 = vrot.slane %v2280, 5
    %v3280 = vsel %vm3203, %v3278, %v3279
    %v3281 = vrot.slane %v3084, 5
    %v3282 = vrot.slane %v3281, 4
    %v3283 = vrot.slane %v2229, 5
    %v3284 = vsel %vm3203, %v3282, %v3283
    %v3285 = vrot.slane %v3283, 4
    %v3286 = vrot.slane %v2281, 5
    %v3287 = vsel %vm3203, %v3285, %v3286
    %v3288 = vrot.slane %v3085, 5
    %v3289 = vrot.slane %v3288, 4
    %v3290 = vrot.slane %v2231, 5
    %v3291 = vsel %vm3203, %v3289, %v3290
    %v3292 = vrot.slane %v3290, 4
    %v3293 = vrot.slane %v2282, 5
    %v3294 = vsel %vm3203, %v3292, %v3293
    %v3295 = vrot.slane %v3086, 5
    %v3296 = vrot.slane %v3295, 4
    %v3297 = vrot.slane %v2233, 5
    %v3298 = vsel %vm3203, %v3296, %v3297
    %v3299 = vrot.slane %v3297, 4
    %v3300 = vrot.slane %v2283, 5
    %v3301 = vsel %vm3203, %v3299, %v3300
    %v3302 = vrot.slane %v3087, 5
    %v3303 = vrot.slane %v3302, 4
    %v3304 = vrot.slane %v2235, 5
    %v3305 = vsel %vm3203, %v3303, %v3304
    %v3306 = vrot.slane %v3304, 4
    %v3307 = vrot.slane %v2284, 5
    %v3308 = vsel %vm3203, %v3306, %v3307
    %v3309 = vrot.slane %v3088, 5
    %v3310 = vrot.slane %v3309, 4
    %v3311 = vrot.slane %v2237, 5
    %v3312 = vsel %vm3203, %v3310, %v3311
    %v3313 = vrot.slane %v3311, 4
    %v3314 = vrot.slane %v2285, 5
    %v3315 = vsel %vm3203, %v3313, %v3314
    %v3316 = vrot.slane %v3089, 5
    %v3317 = vrot.slane %v3316, 4
    %v3318 = vrot.slane %v2239, 5
    %v3319 = vsel %vm3203, %v3317, %v3318
    %v3320 = vrot.slane %v3318, 4
    %v3321 = vrot.slane %v2286, 5
    %v3322 = vsel %vm3203, %v3320, %v3321
    %v3323 = vrot.slane %v3090, 5
    %v3324 = vrot.slane %v3323, 4
    %v3325 = vrot.slane %v2241, 5
    %v3326 = vsel %vm3203, %v3324, %v3325
    %v3327 = vrot.slane %v3325, 4
    %v3328 = vrot.slane %v2287, 5
    %v3329 = vsel %vm3203, %v3327, %v3328
    %v3330 = vrot.slane %v3091, 5
    %v3331 = vrot.slane %v3330, 4
    %v3332 = vrot.slane %v2243, 5
    %v3333 = vsel %vm3203, %v3331, %v3332
    %v3334 = vrot.slane %v3332, 4
    %v3335 = vrot.slane %v2288, 5
    %v3336 = vsel %vm3203, %v3334, %v3335
    %v3337 = vrot.slane %v3092, 5
    %v3338 = vrot.slane %v3337, 4
    %v3339 = vrot.slane %v2245, 5
    %v3340 = vsel %vm3203, %v3338, %v3339
    %v3341 = vrot.slane %v3339, 4
    %v3342 = vrot.slane %v2289, 5
    %v3343 = vsel %vm3203, %v3341, %v3342
    %v3344 = vrot.slane %v3093, 5
    %v3345 = vrot.slane %v3344, 4
    %v3346 = vrot.slane %v2247, 5
    %v3347 = vsel %vm3203, %v3345, %v3346
    %v3348 = vrot.slane %v3346, 4
    %v3349 = vrot.slane %v2290, 5
    %v3350 = vsel %vm3203, %v3348, %v3349
    %v3351 = vrot.slane %v3094, 5
    %v3352 = vrot.slane %v3351, 4
    %v3353 = vrot.slane %v2249, 5
    %v3354 = vsel %vm3203, %v3352, %v3353
    %v3355 = vrot.slane %v3353, 4
    %v3356 = vrot.slane %v2291, 5
    %v3357 = vsel %vm3203, %v3355, %v3356
    %v3358 = vrot.slane %v3095, 5
    %v3359 = vrot.slane %v3358, 4
    %v3360 = vrot.slane %v2251, 5
    %v3361 = vsel %vm3203, %v3359, %v3360
    %v3362 = vrot.slane %v3360, 4
    %v3363 = vrot.slane %v2292, 5
    %v3364 = vsel %vm3203, %v3362, %v3363
    %v3365 = vrot.slane %v3096, 5
    %v3366 = vrot.slane %v3365, 4
    %v3367 = vrot.slane %v2253, 5
    %v3368 = vsel %vm3203, %v3366, %v3367
    %v3369 = vrot.slane %v3367, 4
    %v3370 = vrot.slane %v2293, 5
    %v3371 = vsel %vm3203, %v3369, %v3370
    %v3372 = vrot.slane %v3097, 5
    %v3373 = vrot.slane %v3372, 4
    %v3374 = vrot.slane %v2255, 5
    %v3375 = vsel %vm3203, %v3373, %v3374
    %v3376 = vrot.slane %v3374, 4
    %v3377 = vrot.slane %v2294, 5
    %v3378 = vsel %vm3203, %v3376, %v3377
    %v3379 = vrot.slane %v3098, 5
    %v3380 = vrot.slane %v3379, 4
    %v3381 = vrot.slane %v2257, 5
    %v3382 = vsel %vm3203, %v3380, %v3381
    %v3383 = vrot.slane %v3381, 4
    %v3384 = vrot.slane %v2295, 5
    %v3385 = vsel %vm3203, %v3383, %v3384
    %v3386 = vrot.slane %v3099, 5
    %v3387 = vrot.slane %v3386, 4
    %v3388 = vrot.slane %v2259, 5
    %v3389 = vsel %vm3203, %v3387, %v3388
    %v3390 = vrot.slane %v3388, 4
    %v3391 = vrot.slane %v2296, 5
    %v3392 = vsel %vm3203, %v3390, %v3391
    %v3393 = vrot.slane %v3100, 5
    %v3394 = vrot.slane %v3393, 4
    %v3395 = vrot.slane %v2261, 5
    %v3396 = vsel %vm3203, %v3394, %v3395
    %v3397 = vrot.slane %v3395, 4
    %v3398 = vrot.slane %v2297, 5
    %v3399 = vsel %vm3203, %v3397, %v3398
    %v3400 = vrot.slane %v3101, 5
    %v3401 = vrot.slane %v3400, 4
    %v3402 = vrot.slane %v2263, 5
    %v3403 = vsel %vm3203, %v3401, %v3402
    %v3404 = vrot.slane %v3402, 4
    %v3405 = vrot.slane %v2298, 5
    %v3406 = vsel %vm3203, %v3404, %v3405
    %v3407 = vrot.slane %v3102, 5
    %v3408 = vrot.slane %v3407, 4
    %v3409 = vrot.slane %v2265, 5
    %v3410 = vsel %vm3203, %v3408, %v3409
    %v3411 = vrot.slane %v3409, 4
    %v3412 = vrot.slane %v2299, 5
    %v3413 = vsel %vm3203, %v3411, %v3412
    %v3414 = vrot.slane %v3103, 5
    %v3415 = vrot.slane %v3414, 4
    %v3416 = vrot.slane %v2267, 5
    %v3417 = vsel %vm3203, %v3415, %v3416
    %v3418 = vrot.slane %v3416, 4
    %v3419 = vrot.slane %v2300, 5
    %v3420 = vsel %vm3203, %v3418, %v3419
    %v3421 = vrot.slane %v3104, 5
    %v3422 = vrot.slane %v3421, 4
    %v3423 = vrot.slane %v2269, 5
    %v3424 = vsel %vm3203, %v3422, %v3423
    %v3425 = vrot.slane %v3423, 4
    %v3426 = vrot.slane %v2301, 5
    %v3427 = vsel %vm3203, %v3425, %v3426
    %v3428 = vld [vmem:[%s2109] sm:$0xf]
    %v3429 = vld [vmem:[%s2109 + $0x4] sm:$0xf]
    %v3430 = vld [vmem:[%s2109 + $0xc] sm:$0xf]
    %v3431 = vld [vmem:[%s2109 + $0x10] sm:$0xf]
    %v3432 = vld [vmem:[%s2109 + $0x18] sm:$0xf]
    %v3433 = vld [vmem:[%s2109 + $0x1c] sm:$0xf]
    %v3434 = vld [vmem:[%s2109 + $0x24] sm:$0xf]
    %v3435 = vld [vmem:[%s2109 + $0x28] sm:$0xf]
    %v3436 = vld [vmem:[%s2109 + $0x30] sm:$0xf]
    %v3437 = vld [vmem:[%s2109 + $0x34] sm:$0xf]
    %v3438 = vld [vmem:[%s2109 + $0x3c] sm:$0xf]
    %v3439 = vld [vmem:[%s2109 + $0x40] sm:$0xf]
    %v3440 = vld [vmem:[%s2109 + $0x48] sm:$0xf]
    %v3441 = vld [vmem:[%s2109 + $0x4c] sm:$0xf]
    %v3442 = vld [vmem:[%s2109 + $0x54] sm:$0xf]
    %v3443 = vld [vmem:[%s2109 + $0x58] sm:$0xf]
    %v3444 = vld [vmem:[%s2109 + $0x60] sm:$0xf]
    %v3445 = vld [vmem:[%s2109 + $0x64] sm:$0xf]
    %v3446 = vld [vmem:[%s2109 + $0x6c] sm:$0xf]
    %v3447 = vld [vmem:[%s2109 + $0x70] sm:$0xf]
    %v3448 = vld [vmem:[%s2109 + $0x78] sm:$0xf]
    %v3449 = vld [vmem:[%s2109 + $0x7c] sm:$0xf]
    %v3450 = vld [vmem:[%s2109 + $0x84] sm:$0xf]
    %v3451 = vld [vmem:[%s2109 + $0x88] sm:$0xf]
    %v3452 = vld [vmem:[%s2109 + $0x90] sm:$0xf]
    %v3453 = vld [vmem:[%s2109 + $0x94] sm:$0xf]
    %v3454 = vld [vmem:[%s2109 + $0x9c] sm:$0xf]
    %v3455 = vld [vmem:[%s2109 + $0xa0] sm:$0xf]
    %v3456 = vld [vmem:[%s2109 + $0xa8] sm:$0xf]
    %v3457 = vld [vmem:[%s2109 + $0xac] sm:$0xf]
    %v3458 = vld [vmem:[%s2109 + $0xb4] sm:$0xf]
    %v3459 = vld [vmem:[%s2109 + $0xb8] sm:$0xf]
    %v3460 = vld [vmem:[%s2109 + $0xd8] sm:$0xf]
    %v3461 = vld [vmem:[%s2109 + $0xdc] sm:$0xf]
    %v3462 = vld [vmem:[%s2109 + $0xe4] sm:$0xf]
    %v3463 = vld [vmem:[%s2109 + $0xe8] sm:$0xf]
    %v3464 = vld [vmem:[%s2109 + $0xf0] sm:$0xf]
    %v3465 = vld [vmem:[%s2109 + $0xf4] sm:$0xf]
    %v3466 = vld [vmem:[%s2109 + $0xfc] sm:$0xf]
    %v3467 = vld [vmem:[%s2109 + $0x100] sm:$0xf]
    %v3468 = vld [vmem:[%s2109 + $0x108] sm:$0xf]
    %v3469 = vld [vmem:[%s2109 + $0x10c] sm:$0xf]
    %v3470 = vld [vmem:[%s2109 + $0x114] sm:$0xf]
    %v3471 = vld [vmem:[%s2109 + $0x118] sm:$0xf]
    %v3472 = vld [vmem:[%s2109 + $0x120] sm:$0xf]
    %v3473 = vld [vmem:[%s2109 + $0x124] sm:$0xf]
    %v3474 = vld [vmem:[%s2109 + $0x12c] sm:$0xf]
    %v3475 = vld [vmem:[%s2109 + $0x130] sm:$0xf]
    %v3476 = vld [vmem:[%s2109 + $0x138] sm:$0xf]
    %v3477 = vld [vmem:[%s2109 + $0x13c] sm:$0xf]
    %v3478 = vld [vmem:[%s2109 + $0x144] sm:$0xf]
    %v3479 = vld [vmem:[%s2109 + $0x148] sm:$0xf]
    %v3480 = vld [vmem:[%s2109 + $0x150] sm:$0xf]
    %v3481 = vld [vmem:[%s2109 + $0x154] sm:$0xf]
    %v3482 = vld [vmem:[%s2109 + $0x15c] sm:$0xf]
    %v3483 = vld [vmem:[%s2109 + $0x160] sm:$0xf]
    %v3484 = vld [vmem:[%s2109 + $0x168] sm:$0xf]
    %v3485 = vld [vmem:[%s2109 + $0x16c] sm:$0xf]
    %v3486 = vld [vmem:[%s2109 + $0x174] sm:$0xf]
    %v3487 = vld [vmem:[%s2109 + $0x178] sm:$0xf]
    %v3488 = vld [vmem:[%s2109 + $0x180] sm:$0xf]
    %v3489 = vld [vmem:[%s2109 + $0x184] sm:$0xf]
    %v3490 = vld [vmem:[%s2109 + $0x18c] sm:$0xf]
    %v3491 = vld [vmem:[%s2109 + $0x190] sm:$0xf]
    %v3492 = vld [vmem:[%s2109 + $0x8] sm:$0x1]
    %v3493 = vld [vmem:[%s2109 + $0x14] sm:$0x1]
    %v3494 = vld [vmem:[%s2109 + $0x20] sm:$0x1]
    %v3495 = vld [vmem:[%s2109 + $0x2c] sm:$0x1]
    %v3496 = vld [vmem:[%s2109 + $0x38] sm:$0x1]
    %v3497 = vld [vmem:[%s2109 + $0x44] sm:$0x1]
    %v3498 = vld [vmem:[%s2109 + $0x50] sm:$0x1]
    %v3499 = vld [vmem:[%s2109 + $0x5c] sm:$0x1]
    %v3500 = vld [vmem:[%s2109 + $0x68] sm:$0x1]
    %v3501 = vld [vmem:[%s2109 + $0x74] sm:$0x1]
    %v3502 = vld [vmem:[%s2109 + $0x80] sm:$0x1]
    %v3503 = vld [vmem:[%s2109 + $0x8c] sm:$0x1]
    %v3504 = vld [vmem:[%s2109 + $0x98] sm:$0x1]
    %v3505 = vld [vmem:[%s2109 + $0xa4] sm:$0x1]
    %v3506 = vld [vmem:[%s2109 + $0xb0] sm:$0x1]
    %v3507 = vld [vmem:[%s2109 + $0xbc] sm:$0x1]
    %v3508 = vld [vmem:[%s2109 + $0xe0] sm:$0x1]
    %v3509 = vld [vmem:[%s2109 + $0xec] sm:$0x1]
    %v3510 = vld [vmem:[%s2109 + $0xf8] sm:$0x1]
    %v3511 = vld [vmem:[%s2109 + $0x104] sm:$0x1]
    %v3512 = vld [vmem:[%s2109 + $0x110] sm:$0x1]
    %v3513 = vld [vmem:[%s2109 + $0x11c] sm:$0x1]
    %v3514 = vld [vmem:[%s2109 + $0x128] sm:$0x1]
    %v3515 = vld [vmem:[%s2109 + $0x134] sm:$0x1]
    %v3516 = vld [vmem:[%s2109 + $0x140] sm:$0x1]
    %v3517 = vld [vmem:[%s2109 + $0x14c] sm:$0x1]
    %v3518 = vld [vmem:[%s2109 + $0x158] sm:$0x1]
    %v3519 = vld [vmem:[%s2109 + $0x164] sm:$0x1]
    %v3520 = vld [vmem:[%s2109 + $0x170] sm:$0x1]
    %v3521 = vld [vmem:[%s2109 + $0x17c] sm:$0x1]
    %v3522 = vld [vmem:[%s2109 + $0x188] sm:$0x1]
    %v3523 = vld [vmem:[%s2109 + $0x194] sm:$0x1]
    %v3525 = vshrl.u32 %v3428, 16
    %v3527 = vrot.slane %v3525, 4
    %v3528 = vshll.u32 %v3428, 16
    %v3530 = vrot.slane %v3528, 5
    %v3531 = vor.u32 %v3527, %v3530
    %v3532 = vrot.slane %v3531, 4
    %v3534 = vshll.u32 %v3429, 16
    %v3536 = vrot.slane %v3534, 5
    %v3537 = vsel %vm2304, %v3532, %v3536
    %v3538 = vshrl.u32 %v3429, 16
    %v3540 = vrot.slane %v3538, 4
    %v3541 = vor.u32 %v3540, %v3536
    %v3542 = vrot.slane %v3541, 4
    %v3544 = vshll.u32 %v3492, 16
    %v3546 = vrot.slane %v3544, 5
    %v3547 = vsel %vm2304, %v3542, %v3546
    %v3549 = vshrl.u32 %v3430, 16
    %v3551 = vrot.slane %v3549, 4
    %v3552 = vshll.u32 %v3430, 16
    %v3554 = vrot.slane %v3552, 5
    %v3555 = vor.u32 %v3551, %v3554
    %v3556 = vrot.slane %v3555, 4
    %v3558 = vshll.u32 %v3431, 16
    %v3560 = vrot.slane %v3558, 5
    %v3561 = vsel %vm2304, %v3556, %v3560
    %v3562 = vshrl.u32 %v3431, 16
    %v3564 = vrot.slane %v3562, 4
    %v3565 = vor.u32 %v3564, %v3560
    %v3566 = vrot.slane %v3565, 4
    %v3568 = vshll.u32 %v3493, 16
    %v3570 = vrot.slane %v3568, 5
    %v3571 = vsel %vm2304, %v3566, %v3570
    %v3573 = vshrl.u32 %v3432, 16
    %v3575 = vrot.slane %v3573, 4
    %v3576 = vshll.u32 %v3432, 16
    %v3578 = vrot.slane %v3576, 5
    %v3579 = vor.u32 %v3575, %v3578
    %v3580 = vrot.slane %v3579, 4
    %v3582 = vshll.u32 %v3433, 16
    %v3584 = vrot.slane %v3582, 5
    %v3585 = vsel %vm2304, %v3580, %v3584
    %v3586 = vshrl.u32 %v3433, 16
    %v3588 = vrot.slane %v3586, 4
    %v3589 = vor.u32 %v3588, %v3584
    %v3590 = vrot.slane %v3589, 4
    %v3592 = vshll.u32 %v3494, 16
    %v3594 = vrot.slane %v3592, 5
    %v3595 = vsel %vm2304, %v3590, %v3594
    %v3597 = vshrl.u32 %v3434, 16
    %v3599 = vrot.slane %v3597, 4
    %v3600 = vshll.u32 %v3434, 16
    %v3602 = vrot.slane %v3600, 5
    %v3603 = vor.u32 %v3599, %v3602
    %v3604 = vrot.slane %v3603, 4
    %v3606 = vshll.u32 %v3435, 16
    %v3608 = vrot.slane %v3606, 5
    %v3609 = vsel %vm2304, %v3604, %v3608
    %v3610 = vshrl.u32 %v3435, 16
    %v3612 = vrot.slane %v3610, 4
    %v3613 = vor.u32 %v3612, %v3608
    %v3614 = vrot.slane %v3613, 4
    %v3616 = vshll.u32 %v3495, 16
    %v3618 = vrot.slane %v3616, 5
    %v3619 = vsel %vm2304, %v3614, %v3618
    %v3621 = vshrl.u32 %v3436, 16
    %v3623 = vrot.slane %v3621, 4
    %v3624 = vshll.u32 %v3436, 16
    %v3626 = vrot.slane %v3624, 5
    %v3627 = vor.u32 %v3623, %v3626
    %v3628 = vrot.slane %v3627, 4
    %v3630 = vshll.u32 %v3437, 16
    %v3632 = vrot.slane %v3630, 5
    %v3633 = vsel %vm2304, %v3628, %v3632
    %v3634 = vshrl.u32 %v3437, 16
    %v3636 = vrot.slane %v3634, 4
    %v3637 = vor.u32 %v3636, %v3632
    %v3638 = vrot.slane %v3637, 4
    %v3640 = vshll.u32 %v3496, 16
    %v3642 = vrot.slane %v3640, 5
    %v3643 = vsel %vm2304, %v3638, %v3642
    %v3645 = vshrl.u32 %v3438, 16
    %v3647 = vrot.slane %v3645, 4
    %v3648 = vshll.u32 %v3438, 16
    %v3650 = vrot.slane %v3648, 5
    %v3651 = vor.u32 %v3647, %v3650
    %v3652 = vrot.slane %v3651, 4
    %v3654 = vshll.u32 %v3439, 16
    %v3656 = vrot.slane %v3654, 5
    %v3657 = vsel %vm2304, %v3652, %v3656
    %v3658 = vshrl.u32 %v3439, 16
    %v3660 = vrot.slane %v3658, 4
    %v3661 = vor.u32 %v3660, %v3656
    %v3662 = vrot.slane %v3661, 4
    %v3664 = vshll.u32 %v3497, 16
    %v3666 = vrot.slane %v3664, 5
    %v3667 = vsel %vm2304, %v3662, %v3666
    %v3669 = vshrl.u32 %v3440, 16
    %v3671 = vrot.slane %v3669, 4
    %v3672 = vshll.u32 %v3440, 16
    %v3674 = vrot.slane %v3672, 5
    %v3675 = vor.u32 %v3671, %v3674
    %v3676 = vrot.slane %v3675, 4
    %v3678 = vshll.u32 %v3441, 16
    %v3680 = vrot.slane %v3678, 5
    %v3681 = vsel %vm2304, %v3676, %v3680
    %v3682 = vshrl.u32 %v3441, 16
    %v3684 = vrot.slane %v3682, 4
    %v3685 = vor.u32 %v3684, %v3680
    %v3686 = vrot.slane %v3685, 4
    %v3688 = vshll.u32 %v3498, 16
    %v3690 = vrot.slane %v3688, 5
    %v3691 = vsel %vm2304, %v3686, %v3690
    %v3693 = vshrl.u32 %v3442, 16
    %v3695 = vrot.slane %v3693, 4
    %v3696 = vshll.u32 %v3442, 16
    %v3698 = vrot.slane %v3696, 5
    %v3699 = vor.u32 %v3695, %v3698
    %v3700 = vrot.slane %v3699, 4
    %v3702 = vshll.u32 %v3443, 16
    %v3704 = vrot.slane %v3702, 5
    %v3705 = vsel %vm2304, %v3700, %v3704
    %v3706 = vshrl.u32 %v3443, 16
    %v3708 = vrot.slane %v3706, 4
    %v3709 = vor.u32 %v3708, %v3704
    %v3710 = vrot.slane %v3709, 4
    %v3712 = vshll.u32 %v3499, 16
    %v3714 = vrot.slane %v3712, 5
    %v3715 = vsel %vm2304, %v3710, %v3714
    %v3717 = vshrl.u32 %v3444, 16
    %v3719 = vrot.slane %v3717, 4
    %v3720 = vshll.u32 %v3444, 16
    %v3722 = vrot.slane %v3720, 5
    %v3723 = vor.u32 %v3719, %v3722
    %v3724 = vrot.slane %v3723, 4
    %v3726 = vshll.u32 %v3445, 16
    %v3728 = vrot.slane %v3726, 5
    %v3729 = vsel %vm2304, %v3724, %v3728
    %v3730 = vshrl.u32 %v3445, 16
    %v3732 = vrot.slane %v3730, 4
    %v3733 = vor.u32 %v3732, %v3728
    %v3734 = vrot.slane %v3733, 4
    %v3736 = vshll.u32 %v3500, 16
    %v3738 = vrot.slane %v3736, 5
    %v3739 = vsel %vm2304, %v3734, %v3738
    %v3741 = vshrl.u32 %v3446, 16
    %v3743 = vrot.slane %v3741, 4
    %v3744 = vshll.u32 %v3446, 16
    %v3746 = vrot.slane %v3744, 5
    %v3747 = vor.u32 %v3743, %v3746
    %v3748 = vrot.slane %v3747, 4
    %v3750 = vshll.u32 %v3447, 16
    %v3752 = vrot.slane %v3750, 5
    %v3753 = vsel %vm2304, %v3748, %v3752
    %v3754 = vshrl.u32 %v3447, 16
    %v3756 = vrot.slane %v3754, 4
    %v3757 = vor.u32 %v3756, %v3752
    %v3758 = vrot.slane %v3757, 4
    %v3760 = vshll.u32 %v3501, 16
    %v3762 = vrot.slane %v3760, 5
    %v3763 = vsel %vm2304, %v3758, %v3762
    %v3765 = vshrl.u32 %v3448, 16
    %v3767 = vrot.slane %v3765, 4
    %v3768 = vshll.u32 %v3448, 16
    %v3770 = vrot.slane %v3768, 5
    %v3771 = vor.u32 %v3767, %v3770
    %v3772 = vrot.slane %v3771, 4
    %v3774 = vshll.u32 %v3449, 16
    %v3776 = vrot.slane %v3774, 5
    %v3777 = vsel %vm2304, %v3772, %v3776
    %v3778 = vshrl.u32 %v3449, 16
    %v3780 = vrot.slane %v3778, 4
    %v3781 = vor.u32 %v3780, %v3776
    %v3782 = vrot.slane %v3781, 4
    %v3784 = vshll.u32 %v3502, 16
    %v3786 = vrot.slane %v3784, 5
    %v3787 = vsel %vm2304, %v3782, %v3786
    %v3789 = vshrl.u32 %v3450, 16
    %v3791 = vrot.slane %v3789, 4
    %v3792 = vshll.u32 %v3450, 16
    %v3794 = vrot.slane %v3792, 5
    %v3795 = vor.u32 %v3791, %v3794
    %v3796 = vrot.slane %v3795, 4
    %v3798 = vshll.u32 %v3451, 16
    %v3800 = vrot.slane %v3798, 5
    %v3801 = vsel %vm2304, %v3796, %v3800
    %v3802 = vshrl.u32 %v3451, 16
    %v3804 = vrot.slane %v3802, 4
    %v3805 = vor.u32 %v3804, %v3800
    %v3806 = vrot.slane %v3805, 4
    %v3808 = vshll.u32 %v3503, 16
    %v3810 = vrot.slane %v3808, 5
    %v3811 = vsel %vm2304, %v3806, %v3810
    %v3813 = vshrl.u32 %v3452, 16
    %v3815 = vrot.slane %v3813, 4
    %v3816 = vshll.u32 %v3452, 16
    %v3818 = vrot.slane %v3816, 5
    %v3819 = vor.u32 %v3815, %v3818
    %v3820 = vrot.slane %v3819, 4
    %v3822 = vshll.u32 %v3453, 16
    %v3824 = vrot.slane %v3822, 5
    %v3825 = vsel %vm2304, %v3820, %v3824
    %v3826 = vshrl.u32 %v3453, 16
    %v3828 = vrot.slane %v3826, 4
    %v3829 = vor.u32 %v3828, %v3824
    %v3830 = vrot.slane %v3829, 4
    %v3832 = vshll.u32 %v3504, 16
    %v3834 = vrot.slane %v3832, 5
    %v3835 = vsel %vm2304, %v3830, %v3834
    %v3837 = vshrl.u32 %v3454, 16
    %v3839 = vrot.slane %v3837, 4
    %v3840 = vshll.u32 %v3454, 16
    %v3842 = vrot.slane %v3840, 5
    %v3843 = vor.u32 %v3839, %v3842
    %v3844 = vrot.slane %v3843, 4
    %v3846 = vshll.u32 %v3455, 16
    %v3848 = vrot.slane %v3846, 5
    %v3849 = vsel %vm2304, %v3844, %v3848
    %v3850 = vshrl.u32 %v3455, 16
    %v3852 = vrot.slane %v3850, 4
    %v3853 = vor.u32 %v3852, %v3848
    %v3854 = vrot.slane %v3853, 4
    %v3856 = vshll.u32 %v3505, 16
    %v3858 = vrot.slane %v3856, 5
    %v3859 = vsel %vm2304, %v3854, %v3858
    %v3861 = vshrl.u32 %v3456, 16
    %v3863 = vrot.slane %v3861, 4
    %v3864 = vshll.u32 %v3456, 16
    %v3866 = vrot.slane %v3864, 5
    %v3867 = vor.u32 %v3863, %v3866
    %v3868 = vrot.slane %v3867, 4
    %v3870 = vshll.u32 %v3457, 16
    %v3872 = vrot.slane %v3870, 5
    %v3873 = vsel %vm2304, %v3868, %v3872
    %v3874 = vshrl.u32 %v3457, 16
    %v3876 = vrot.slane %v3874, 4
    %v3877 = vor.u32 %v3876, %v3872
    %v3878 = vrot.slane %v3877, 4
    %v3880 = vshll.u32 %v3506, 16
    %v3882 = vrot.slane %v3880, 5
    %v3883 = vsel %vm2304, %v3878, %v3882
    %v3885 = vshrl.u32 %v3458, 16
    %v3887 = vrot.slane %v3885, 4
    %v3888 = vshll.u32 %v3458, 16
    %v3890 = vrot.slane %v3888, 5
    %v3891 = vor.u32 %v3887, %v3890
    %v3892 = vrot.slane %v3891, 4
    %v3894 = vshll.u32 %v3459, 16
    %v3896 = vrot.slane %v3894, 5
    %v3897 = vsel %vm2304, %v3892, %v3896
    %v3898 = vshrl.u32 %v3459, 16
    %v3900 = vrot.slane %v3898, 4
    %v3901 = vor.u32 %v3900, %v3896
    %v3902 = vrot.slane %v3901, 4
    %v3904 = vshll.u32 %v3507, 16
    %v3906 = vrot.slane %v3904, 5
    %v3907 = vsel %vm2304, %v3902, %v3906
    %v3909 = vshrl.u32 %v3460, 16
    %v3911 = vrot.slane %v3909, 4
    %v3912 = vshll.u32 %v3460, 16
    %v3914 = vrot.slane %v3912, 5
    %v3915 = vor.u32 %v3911, %v3914
    %v3916 = vrot.slane %v3915, 4
    %v3918 = vshll.u32 %v3461, 16
    %v3920 = vrot.slane %v3918, 5
    %v3921 = vsel %vm2304, %v3916, %v3920
    %v3922 = vshrl.u32 %v3461, 16
    %v3924 = vrot.slane %v3922, 4
    %v3925 = vor.u32 %v3924, %v3920
    %v3926 = vrot.slane %v3925, 4
    %v3928 = vshll.u32 %v3508, 16
    %v3930 = vrot.slane %v3928, 5
    %v3931 = vsel %vm2304, %v3926, %v3930
    %v3933 = vshrl.u32 %v3462, 16
    %v3935 = vrot.slane %v3933, 4
    %v3936 = vshll.u32 %v3462, 16
    %v3938 = vrot.slane %v3936, 5
    %v3939 = vor.u32 %v3935, %v3938
    %v3940 = vrot.slane %v3939, 4
    %v3942 = vshll.u32 %v3463, 16
    %v3944 = vrot.slane %v3942, 5
    %v3945 = vsel %vm2304, %v3940, %v3944
    %v3946 = vshrl.u32 %v3463, 16
    %v3948 = vrot.slane %v3946, 4
    %v3949 = vor.u32 %v3948, %v3944
    %v3950 = vrot.slane %v3949, 4
    %v3952 = vshll.u32 %v3509, 16
    %v3954 = vrot.slane %v3952, 5
    %v3955 = vsel %vm2304, %v3950, %v3954
    %v3957 = vshrl.u32 %v3464, 16
    %v3959 = vrot.slane %v3957, 4
    %v3960 = vshll.u32 %v3464, 16
    %v3962 = vrot.slane %v3960, 5
    %v3963 = vor.u32 %v3959, %v3962
    %v3964 = vrot.slane %v3963, 4
    %v3966 = vshll.u32 %v3465, 16
    %v3968 = vrot.slane %v3966, 5
    %v3969 = vsel %vm2304, %v3964, %v3968
    %v3970 = vshrl.u32 %v3465, 16
    %v3972 = vrot.slane %v3970, 4
    %v3973 = vor.u32 %v3972, %v3968
    %v3974 = vrot.slane %v3973, 4
    %v3976 = vshll.u32 %v3510, 16
    %v3978 = vrot.slane %v3976, 5
    %v3979 = vsel %vm2304, %v3974, %v3978
    %v3981 = vshrl.u32 %v3466, 16
    %v3983 = vrot.slane %v3981, 4
    %v3984 = vshll.u32 %v3466, 16
    %v3986 = vrot.slane %v3984, 5
    %v3987 = vor.u32 %v3983, %v3986
    %v3988 = vrot.slane %v3987, 4
    %v3990 = vshll.u32 %v3467, 16
    %v3992 = vrot.slane %v3990, 5
    %v3993 = vsel %vm2304, %v3988, %v3992
    %v3994 = vshrl.u32 %v3467, 16
    %v3996 = vrot.slane %v3994, 4
    %v3997 = vor.u32 %v3996, %v3992
    %v3998 = vrot.slane %v3997, 4
    %v4000 = vshll.u32 %v3511, 16
    %v4002 = vrot.slane %v4000, 5
    %v4003 = vsel %vm2304, %v3998, %v4002
    %v4005 = vshrl.u32 %v3468, 16
    %v4007 = vrot.slane %v4005, 4
    %v4008 = vshll.u32 %v3468, 16
    %v4010 = vrot.slane %v4008, 5
    %v4011 = vor.u32 %v4007, %v4010
    %v4012 = vrot.slane %v4011, 4
    %v4014 = vshll.u32 %v3469, 16
    %v4016 = vrot.slane %v4014, 5
    %v4017 = vsel %vm2304, %v4012, %v4016
    %v4018 = vshrl.u32 %v3469, 16
    %v4020 = vrot.slane %v4018, 4
    %v4021 = vor.u32 %v4020, %v4016
    %v4022 = vrot.slane %v4021, 4
    %v4024 = vshll.u32 %v3512, 16
    %v4026 = vrot.slane %v4024, 5
    %v4027 = vsel %vm2304, %v4022, %v4026
    %v4029 = vshrl.u32 %v3470, 16
    %v4031 = vrot.slane %v4029, 4
    %v4032 = vshll.u32 %v3470, 16
    %v4034 = vrot.slane %v4032, 5
    %v4035 = vor.u32 %v4031, %v4034
    %v4036 = vrot.slane %v4035, 4
    %v4038 = vshll.u32 %v3471, 16
    %v4040 = vrot.slane %v4038, 5
    %v4041 = vsel %vm2304, %v4036, %v4040
    %v4042 = vshrl.u32 %v3471, 16
    %v4044 = vrot.slane %v4042, 4
    %v4045 = vor.u32 %v4044, %v4040
    %v4046 = vrot.slane %v4045, 4
    %v4048 = vshll.u32 %v3513, 16
    %v4050 = vrot.slane %v4048, 5
    %v4051 = vsel %vm2304, %v4046, %v4050
    %v4053 = vshrl.u32 %v3472, 16
    %v4055 = vrot.slane %v4053, 4
    %v4056 = vshll.u32 %v3472, 16
    %v4058 = vrot.slane %v4056, 5
    %v4059 = vor.u32 %v4055, %v4058
    %v4060 = vrot.slane %v4059, 4
    %v4062 = vshll.u32 %v3473, 16
    %v4064 = vrot.slane %v4062, 5
    %v4065 = vsel %vm2304, %v4060, %v4064
    %v4066 = vshrl.u32 %v3473, 16
    %v4068 = vrot.slane %v4066, 4
    %v4069 = vor.u32 %v4068, %v4064
    %v4070 = vrot.slane %v4069, 4
    %v4072 = vshll.u32 %v3514, 16
    %v4074 = vrot.slane %v4072, 5
    %v4075 = vsel %vm2304, %v4070, %v4074
    %v4077 = vshrl.u32 %v3474, 16
    %v4079 = vrot.slane %v4077, 4
    %v4080 = vshll.u32 %v3474, 16
    %v4082 = vrot.slane %v4080, 5
    %v4083 = vor.u32 %v4079, %v4082
    %v4084 = vrot.slane %v4083, 4
    %v4086 = vshll.u32 %v3475, 16
    %v4088 = vrot.slane %v4086, 5
    %v4089 = vsel %vm2304, %v4084, %v4088
    %v4090 = vshrl.u32 %v3475, 16
    %v4092 = vrot.slane %v4090, 4
    %v4093 = vor.u32 %v4092, %v4088
    %v4094 = vrot.slane %v4093, 4
    %v4096 = vshll.u32 %v3515, 16
    %v4098 = vrot.slane %v4096, 5
    %v4099 = vsel %vm2304, %v4094, %v4098
    %v4101 = vshrl.u32 %v3476, 16
    %v4103 = vrot.slane %v4101, 4
    %v4104 = vshll.u32 %v3476, 16
    %v4106 = vrot.slane %v4104, 5
    %v4107 = vor.u32 %v4103, %v4106
    %v4108 = vrot.slane %v4107, 4
    %v4110 = vshll.u32 %v3477, 16
    %v4112 = vrot.slane %v4110, 5
    %v4113 = vsel %vm2304, %v4108, %v4112
    %v4114 = vshrl.u32 %v3477, 16
    %v4116 = vrot.slane %v4114, 4
    %v4117 = vor.u32 %v4116, %v4112
    %v4118 = vrot.slane %v4117, 4
    %v4120 = vshll.u32 %v3516, 16
    %v4122 = vrot.slane %v4120, 5
    %v4123 = vsel %vm2304, %v4118, %v4122
    %v4125 = vshrl.u32 %v3478, 16
    %v4127 = vrot.slane %v4125, 4
    %v4128 = vshll.u32 %v3478, 16
    %v4130 = vrot.slane %v4128, 5
    %v4131 = vor.u32 %v4127, %v4130
    %v4132 = vrot.slane %v4131, 4
    %v4134 = vshll.u32 %v3479, 16
    %v4136 = vrot.slane %v4134, 5
    %v4137 = vsel %vm2304, %v4132, %v4136
    %v4138 = vshrl.u32 %v3479, 16
    %v4140 = vrot.slane %v4138, 4
    %v4141 = vor.u32 %v4140, %v4136
    %v4142 = vrot.slane %v4141, 4
    %v4144 = vshll.u32 %v3517, 16
    %v4146 = vrot.slane %v4144, 5
    %v4147 = vsel %vm2304, %v4142, %v4146
    %v4149 = vshrl.u32 %v3480, 16
    %v4151 = vrot.slane %v4149, 4
    %v4152 = vshll.u32 %v3480, 16
    %v4154 = vrot.slane %v4152, 5
    %v4155 = vor.u32 %v4151, %v4154
    %v4156 = vrot.slane %v4155, 4
    %v4158 = vshll.u32 %v3481, 16
    %v4160 = vrot.slane %v4158, 5
    %v4161 = vsel %vm2304, %v4156, %v4160
    %v4162 = vshrl.u32 %v3481, 16
    %v4164 = vrot.slane %v4162, 4
    %v4165 = vor.u32 %v4164, %v4160
    %v4166 = vrot.slane %v4165, 4
    %v4168 = vshll.u32 %v3518, 16
    %v4170 = vrot.slane %v4168, 5
    %v4171 = vsel %vm2304, %v4166, %v4170
    %v4173 = vshrl.u32 %v3482, 16
    %v4175 = vrot.slane %v4173, 4
    %v4176 = vshll.u32 %v3482, 16
    %v4178 = vrot.slane %v4176, 5
    %v4179 = vor.u32 %v4175, %v4178
    %v4180 = vrot.slane %v4179, 4
    %v4182 = vshll.u32 %v3483, 16
    %v4184 = vrot.slane %v4182, 5
    %v4185 = vsel %vm2304, %v4180, %v4184
    %v4186 = vshrl.u32 %v3483, 16
    %v4188 = vrot.slane %v4186, 4
    %v4189 = vor.u32 %v4188, %v4184
    %v4190 = vrot.slane %v4189, 4
    %v4192 = vshll.u32 %v3519, 16
    %v4194 = vrot.slane %v4192, 5
    %v4195 = vsel %vm2304, %v4190, %v4194
    %v4197 = vshrl.u32 %v3484, 16
    %v4199 = vrot.slane %v4197, 4
    %v4200 = vshll.u32 %v3484, 16
    %v4202 = vrot.slane %v4200, 5
    %v4203 = vor.u32 %v4199, %v4202
    %v4204 = vrot.slane %v4203, 4
    %v4206 = vshll.u32 %v3485, 16
    %v4208 = vrot.slane %v4206, 5
    %v4209 = vsel %vm2304, %v4204, %v4208
    %v4210 = vshrl.u32 %v3485, 16
    %v4212 = vrot.slane %v4210, 4
    %v4213 = vor.u32 %v4212, %v4208
    %v4214 = vrot.slane %v4213, 4
    %v4216 = vshll.u32 %v3520, 16
    %v4218 = vrot.slane %v4216, 5
    %v4219 = vsel %vm2304, %v4214, %v4218
    %v4221 = vshrl.u32 %v3486, 16
    %v4223 = vrot.slane %v4221, 4
    %v4224 = vshll.u32 %v3486, 16
    %v4226 = vrot.slane %v4224, 5
    %v4227 = vor.u32 %v4223, %v4226
    %v4228 = vrot.slane %v4227, 4
    %v4230 = vshll.u32 %v3487, 16
    %v4232 = vrot.slane %v4230, 5
    %v4233 = vsel %vm2304, %v4228, %v4232
    %v4234 = vshrl.u32 %v3487, 16
    %v4236 = vrot.slane %v4234, 4
    %v4237 = vor.u32 %v4236, %v4232
    %v4238 = vrot.slane %v4237, 4
    %v4240 = vshll.u32 %v3521, 16
    %v4242 = vrot.slane %v4240, 5
    %v4243 = vsel %vm2304, %v4238, %v4242
    %v4245 = vshrl.u32 %v3488, 16
    %v4247 = vrot.slane %v4245, 4
    %v4248 = vshll.u32 %v3488, 16
    %v4250 = vrot.slane %v4248, 5
    %v4251 = vor.u32 %v4247, %v4250
    %v4252 = vrot.slane %v4251, 4
    %v4254 = vshll.u32 %v3489, 16
    %v4256 = vrot.slane %v4254, 5
    %v4257 = vsel %vm2304, %v4252, %v4256
    %v4258 = vshrl.u32 %v3489, 16
    %v4260 = vrot.slane %v4258, 4
    %v4261 = vor.u32 %v4260, %v4256
    %v4262 = vrot.slane %v4261, 4
    %v4264 = vshll.u32 %v3522, 16
    %v4266 = vrot.slane %v4264, 5
    %v4267 = vsel %vm2304, %v4262, %v4266
    %v4269 = vshrl.u32 %v3490, 16
    %v4271 = vrot.slane %v4269, 4
    %v4272 = vshll.u32 %v3490, 16
    %v4274 = vrot.slane %v4272, 5
    %v4275 = vor.u32 %v4271, %v4274
    %v4276 = vrot.slane %v4275, 4
    %v4278 = vshll.u32 %v3491, 16
    %v4280 = vrot.slane %v4278, 5
    %v4281 = vsel %vm2304, %v4276, %v4280
    %v4282 = vshrl.u32 %v3491, 16
    %v4284 = vrot.slane %v4282, 4
    %v4285 = vor.u32 %v4284, %v4280
    %v4286 = vrot.slane %v4285, 4
    %v4288 = vshll.u32 %v3523, 16
    %v4290 = vrot.slane %v4288, 5
    %v4291 = vsel %vm2304, %v4286, %v4290
    %v4292 = vld [vmem:[%s2109] sm:$0xe]
    %v4293 = vld [vmem:[%s2109 + $0xc] sm:$0xe]
    %v4294 = vld [vmem:[%s2109 + $0x18] sm:$0xe]
    %v4295 = vld [vmem:[%s2109 + $0x24] sm:$0xe]
    %v4296 = vld [vmem:[%s2109 + $0x30] sm:$0xe]
    %v4297 = vld [vmem:[%s2109 + $0x3c] sm:$0xe]
    %v4298 = vld [vmem:[%s2109 + $0x48] sm:$0xe]
    %v4299 = vld [vmem:[%s2109 + $0x54] sm:$0xe]
    %v4300 = vld [vmem:[%s2109 + $0x60] sm:$0xe]
    %v4301 = vld [vmem:[%s2109 + $0x6c] sm:$0xe]
    %v4302 = vld [vmem:[%s2109 + $0x78] sm:$0xe]
    %v4303 = vld [vmem:[%s2109 + $0x84] sm:$0xe]
    %v4304 = vld [vmem:[%s2109 + $0x90] sm:$0xe]
    %v4305 = vld [vmem:[%s2109 + $0x9c] sm:$0xe]
    %v4306 = vld [vmem:[%s2109 + $0xa8] sm:$0xe]
    %v4307 = vld [vmem:[%s2109 + $0xb4] sm:$0xe]
    %v4308 = vld [vmem:[%s2109 + $0xd8] sm:$0xe]
    %v4309 = vld [vmem:[%s2109 + $0xe4] sm:$0xe]
    %v4310 = vld [vmem:[%s2109 + $0xf0] sm:$0xe]
    %v4311 = vld [vmem:[%s2109 + $0xfc] sm:$0xe]
    %v4312 = vld [vmem:[%s2109 + $0x108] sm:$0xe]
    %v4313 = vld [vmem:[%s2109 + $0x114] sm:$0xe]
    %v4314 = vld [vmem:[%s2109 + $0x120] sm:$0xe]
    %v4315 = vld [vmem:[%s2109 + $0x12c] sm:$0xe]
    %v4316 = vld [vmem:[%s2109 + $0x138] sm:$0xe]
    %v4317 = vld [vmem:[%s2109 + $0x144] sm:$0xe]
    %v4318 = vld [vmem:[%s2109 + $0x150] sm:$0xe]
    %v4319 = vld [vmem:[%s2109 + $0x15c] sm:$0xe]
    %v4320 = vld [vmem:[%s2109 + $0x168] sm:$0xe]
    %v4321 = vld [vmem:[%s2109 + $0x174] sm:$0xe]
    %v4322 = vld [vmem:[%s2109 + $0x180] sm:$0xe]
    %v4323 = vld [vmem:[%s2109 + $0x18c] sm:$0xe]
    %v4420 = vrot.slane %v4292, 5
    %v4421 = vrot.slane %v4420, 4
    %v4422 = vrot.slane %v3429, 5
    %v4423 = vsel %vm3203, %v4421, %v4422
    %v4424 = vrot.slane %v4422, 4
    %v4425 = vrot.slane %v3492, 5
    %v4426 = vsel %vm3203, %v4424, %v4425
    %v4427 = vrot.slane %v4293, 5
    %v4428 = vrot.slane %v4427, 4
    %v4429 = vrot.slane %v3431, 5
    %v4430 = vsel %vm3203, %v4428, %v4429
    %v4431 = vrot.slane %v4429, 4
    %v4432 = vrot.slane %v3493, 5
    %v4433 = vsel %vm3203, %v4431, %v4432
    %v4434 = vrot.slane %v4294, 5
    %v4435 = vrot.slane %v4434, 4
    %v4436 = vrot.slane %v3433, 5
    %v4437 = vsel %vm3203, %v4435, %v4436
    %v4438 = vrot.slane %v4436, 4
    %v4439 = vrot.slane %v3494, 5
    %v4440 = vsel %vm3203, %v4438, %v4439
    %v4441 = vrot.slane %v4295, 5
    %v4442 = vrot.slane %v4441, 4
    %v4443 = vrot.slane %v3435, 5
    %v4444 = vsel %vm3203, %v4442, %v4443
    %v4445 = vrot.slane %v4443, 4
    %v4446 = vrot.slane %v3495, 5
    %v4447 = vsel %vm3203, %v4445, %v4446
    %v4448 = vrot.slane %v4296, 5
    %v4449 = vrot.slane %v4448, 4
    %v4450 = vrot.slane %v3437, 5
    %v4451 = vsel %vm3203, %v4449, %v4450
    %v4452 = vrot.slane %v4450, 4
    %v4453 = vrot.slane %v3496, 5
    %v4454 = vsel %vm3203, %v4452, %v4453
    %v4455 = vrot.slane %v4297, 5
    %v4456 = vrot.slane %v4455, 4
    %v4457 = vrot.slane %v3439, 5
    %v4458 = vsel %vm3203, %v4456, %v4457
    %v4459 = vrot.slane %v4457, 4
    %v4460 = vrot.slane %v3497, 5
    %v4461 = vsel %vm3203, %v4459, %v4460
    %v4462 = vrot.slane %v4298, 5
    %v4463 = vrot.slane %v4462, 4
    %v4464 = vrot.slane %v3441, 5
    %v4465 = vsel %vm3203, %v4463, %v4464
    %v4466 = vrot.slane %v4464, 4
    %v4467 = vrot.slane %v3498, 5
    %v4468 = vsel %vm3203, %v4466, %v4467
    %v4469 = vrot.slane %v4299, 5
    %v4470 = vrot.slane %v4469, 4
    %v4471 = vrot.slane %v3443, 5
    %v4472 = vsel %vm3203, %v4470, %v4471
    %v4473 = vrot.slane %v4471, 4
    %v4474 = vrot.slane %v3499, 5
    %v4475 = vsel %vm3203, %v4473, %v4474
    %v4476 = vrot.slane %v4300, 5
    %v4477 = vrot.slane %v4476, 4
    %v4478 = vrot.slane %v3445, 5
    %v4479 = vsel %vm3203, %v4477, %v4478
    %v4480 = vrot.slane %v4478, 4
    %v4481 = vrot.slane %v3500, 5
    %v4482 = vsel %vm3203, %v4480, %v4481
    %v4483 = vrot.slane %v4301, 5
    %v4484 = vrot.slane %v4483, 4
    %v4485 = vrot.slane %v3447, 5
    %v4486 = vsel %vm3203, %v4484, %v4485
    %v4487 = vrot.slane %v4485, 4
    %v4488 = vrot.slane %v3501, 5
    %v4489 = vsel %vm3203, %v4487, %v4488
    %v4490 = vrot.slane %v4302, 5
    %v4491 = vrot.slane %v4490, 4
    %v4492 = vrot.slane %v3449, 5
    %v4493 = vsel %vm3203, %v4491, %v4492
    %v4494 = vrot.slane %v4492, 4
    %v4495 = vrot.slane %v3502, 5
    %v4496 = vsel %vm3203, %v4494, %v4495
    %v4497 = vrot.slane %v4303, 5
    %v4498 = vrot.slane %v4497, 4
    %v4499 = vrot.slane %v3451, 5
    %v4500 = vsel %vm3203, %v4498, %v4499
    %v4501 = vrot.slane %v4499, 4
    %v4502 = vrot.slane %v3503, 5
    %v4503 = vsel %vm3203, %v4501, %v4502
    %v4504 = vrot.slane %v4304, 5
    %v4505 = vrot.slane %v4504, 4
    %v4506 = vrot.slane %v3453, 5
    %v4507 = vsel %vm3203, %v4505, %v4506
    %v4508 = vrot.slane %v4506, 4
    %v4509 = vrot.slane %v3504, 5
    %v4510 = vsel %vm3203, %v4508, %v4509
    %v4511 = vrot.slane %v4305, 5
    %v4512 = vrot.slane %v4511, 4
    %v4513 = vrot.slane %v3455, 5
    %v4514 = vsel %vm3203, %v4512, %v4513
    %v4515 = vrot.slane %v4513, 4
    %v4516 = vrot.slane %v3505, 5
    %v4517 = vsel %vm3203, %v4515, %v4516
    %v4518 = vrot.slane %v4306, 5
    %v4519 = vrot.slane %v4518, 4
    %v4520 = vrot.slane %v3457, 5
    %v4521 = vsel %vm3203, %v4519, %v4520
    %v4522 = vrot.slane %v4520, 4
    %v4523 = vrot.slane %v3506, 5
    %v4524 = vsel %vm3203, %v4522, %v4523
    %v4525 = vrot.slane %v4307, 5
    %v4526 = vrot.slane %v4525, 4
    %v4527 = vrot.slane %v3459, 5
    %v4528 = vsel %vm3203, %v4526, %v4527
    %v4529 = vrot.slane %v4527, 4
    %v4530 = vrot.slane %v3507, 5
    %v4531 = vsel %vm3203, %v4529, %v4530
    %v4532 = vrot.slane %v4308, 5
    %v4533 = vrot.slane %v4532, 4
    %v4534 = vrot.slane %v3461, 5
    %v4535 = vsel %vm3203, %v4533, %v4534
    %v4536 = vrot.slane %v4534, 4
    %v4537 = vrot.slane %v3508, 5
    %v4538 = vsel %vm3203, %v4536, %v4537
    %v4539 = vrot.slane %v4309, 5
    %v4540 = vrot.slane %v4539, 4
    %v4541 = vrot.slane %v3463, 5
    %v4542 = vsel %vm3203, %v4540, %v4541
    %v4543 = vrot.slane %v4541, 4
    %v4544 = vrot.slane %v3509, 5
    %v4545 = vsel %vm3203, %v4543, %v4544
    %v4546 = vrot.slane %v4310, 5
    %v4547 = vrot.slane %v4546, 4
    %v4548 = vrot.slane %v3465, 5
    %v4549 = vsel %vm3203, %v4547, %v4548
    %v4550 = vrot.slane %v4548, 4
    %v4551 = vrot.slane %v3510, 5
    %v4552 = vsel %vm3203, %v4550, %v4551
    %v4553 = vrot.slane %v4311, 5
    %v4554 = vrot.slane %v4553, 4
    %v4555 = vrot.slane %v3467, 5
    %v4556 = vsel %vm3203, %v4554, %v4555
    %v4557 = vrot.slane %v4555, 4
    %v4558 = vrot.slane %v3511, 5
    %v4559 = vsel %vm3203, %v4557, %v4558
    %v4560 = vrot.slane %v4312, 5
    %v4561 = vrot.slane %v4560, 4
    %v4562 = vrot.slane %v3469, 5
    %v4563 = vsel %vm3203, %v4561, %v4562
    %v4564 = vrot.slane %v4562, 4
    %v4565 = vrot.slane %v3512, 5
    %v4566 = vsel %vm3203, %v4564, %v4565
    %v4567 = vrot.slane %v4313, 5
    %v4568 = vrot.slane %v4567, 4
    %v4569 = vrot.slane %v3471, 5
    %v4570 = vsel %vm3203, %v4568, %v4569
    %v4571 = vrot.slane %v4569, 4
    %v4572 = vrot.slane %v3513, 5
    %v4573 = vsel %vm3203, %v4571, %v4572
    %v4574 = vrot.slane %v4314, 5
    %v4575 = vrot.slane %v4574, 4
    %v4576 = vrot.slane %v3473, 5
    %v4577 = vsel %vm3203, %v4575, %v4576
    %v4578 = vrot.slane %v4576, 4
    %v4579 = vrot.slane %v3514, 5
    %v4580 = vsel %vm3203, %v4578, %v4579
    %v4581 = vrot.slane %v4315, 5
    %v4582 = vrot.slane %v4581, 4
    %v4583 = vrot.slane %v3475, 5
    %v4584 = vsel %vm3203, %v4582, %v4583
    %v4585 = vrot.slane %v4583, 4
    %v4586 = vrot.slane %v3515, 5
    %v4587 = vsel %vm3203, %v4585, %v4586
    %v4588 = vrot.slane %v4316, 5
    %v4589 = vrot.slane %v4588, 4
    %v4590 = vrot.slane %v3477, 5
    %v4591 = vsel %vm3203, %v4589, %v4590
    %v4592 = vrot.slane %v4590, 4
    %v4593 = vrot.slane %v3516, 5
    %v4594 = vsel %vm3203, %v4592, %v4593
    %v4595 = vrot.slane %v4317, 5
    %v4596 = vrot.slane %v4595, 4
    %v4597 = vrot.slane %v3479, 5
    %v4598 = vsel %vm3203, %v4596, %v4597
    %v4599 = vrot.slane %v4597, 4
    %v4600 = vrot.slane %v3517, 5
    %v4601 = vsel %vm3203, %v4599, %v4600
    %v4602 = vrot.slane %v4318, 5
    %v4603 = vrot.slane %v4602, 4
    %v4604 = vrot.slane %v3481, 5
    %v4605 = vsel %vm3203, %v4603, %v4604
    %v4606 = vrot.slane %v4604, 4
    %v4607 = vrot.slane %v3518, 5
    %v4608 = vsel %vm3203, %v4606, %v4607
    %v4609 = vrot.slane %v4319, 5
    %v4610 = vrot.slane %v4609, 4
    %v4611 = vrot.slane %v3483, 5
    %v4612 = vsel %vm3203, %v4610, %v4611
    %v4613 = vrot.slane %v4611, 4
    %v4614 = vrot.slane %v3519, 5
    %v4615 = vsel %vm3203, %v4613, %v4614
    %v4616 = vrot.slane %v4320, 5
    %v4617 = vrot.slane %v4616, 4
    %v4618 = vrot.slane %v3485, 5
    %v4619 = vsel %vm3203, %v4617, %v4618
    %v4620 = vrot.slane %v4618, 4
    %v4621 = vrot.slane %v3520, 5
    %v4622 = vsel %vm3203, %v4620, %v4621
    %v4623 = vrot.slane %v4321, 5
    %v4624 = vrot.slane %v4623, 4
    %v4625 = vrot.slane %v3487, 5
    %v4626 = vsel %vm3203, %v4624, %v4625
    %v4627 = vrot.slane %v4625, 4
    %v4628 = vrot.slane %v3521, 5
    %v4629 = vsel %vm3203, %v4627, %v4628
    %v4630 = vrot.slane %v4322, 5
    %v4631 = vrot.slane %v4630, 4
    %v4632 = vrot.slane %v3489, 5
    %v4633 = vsel %vm3203, %v4631, %v4632
    %v4634 = vrot.slane %v4632, 4
    %v4635 = vrot.slane %v3522, 5
    %v4636 = vsel %vm3203, %v4634, %v4635
    %v4637 = vrot.slane %v4323, 5
    %v4638 = vrot.slane %v4637, 4
    %v4639 = vrot.slane %v3491, 5
    %v4640 = vsel %vm3203, %v4638, %v4639
    %v4641 = vrot.slane %v4639, 4
    %v4642 = vrot.slane %v3523, 5
    %v4643 = vsel %vm3203, %v4641, %v4642
    %s4644 = scalar_lea.vmem [#allocation2], 24
    %v4645 = vld [vmem:[%s4644] sm:$0xf]
    %v4646 = vld [vmem:[%s4644 + $0x4] sm:$0xf]
    %v4647 = vld [vmem:[%s4644 + $0xc] sm:$0xf]
    %v4648 = vld [vmem:[%s4644 + $0x10] sm:$0xf]
    %v4649 = vld [vmem:[%s4644 + $0x18] sm:$0xf]
    %v4650 = vld [vmem:[%s4644 + $0x1c] sm:$0xf]
    %v4651 = vld [vmem:[%s4644 + $0x24] sm:$0xf]
    %v4652 = vld [vmem:[%s4644 + $0x28] sm:$0xf]
    %v4653 = vld [vmem:[%s4644 + $0x30] sm:$0xf]
    %v4654 = vld [vmem:[%s4644 + $0x34] sm:$0xf]
    %v4655 = vld [vmem:[%s4644 + $0x3c] sm:$0xf]
    %v4656 = vld [vmem:[%s4644 + $0x40] sm:$0xf]
    %v4657 = vld [vmem:[%s4644 + $0x48] sm:$0xf]
    %v4658 = vld [vmem:[%s4644 + $0x4c] sm:$0xf]
    %v4659 = vld [vmem:[%s4644 + $0x54] sm:$0xf]
    %v4660 = vld [vmem:[%s4644 + $0x58] sm:$0xf]
    %v4661 = vld [vmem:[%s4644 + $0x60] sm:$0xf]
    %v4662 = vld [vmem:[%s4644 + $0x64] sm:$0xf]
    %v4663 = vld [vmem:[%s4644 + $0x6c] sm:$0xf]
    %v4664 = vld [vmem:[%s4644 + $0x70] sm:$0xf]
    %v4665 = vld [vmem:[%s4644 + $0x78] sm:$0xf]
    %v4666 = vld [vmem:[%s4644 + $0x7c] sm:$0xf]
    %v4667 = vld [vmem:[%s4644 + $0x84] sm:$0xf]
    %v4668 = vld [vmem:[%s4644 + $0x88] sm:$0xf]
    %v4669 = vld [vmem:[%s4644 + $0x90] sm:$0xf]
    %v4670 = vld [vmem:[%s4644 + $0x94] sm:$0xf]
    %v4671 = vld [vmem:[%s4644 + $0x9c] sm:$0xf]
    %v4672 = vld [vmem:[%s4644 + $0xa0] sm:$0xf]
    %v4673 = vld [vmem:[%s4644 + $0xa8] sm:$0xf]
    %v4674 = vld [vmem:[%s4644 + $0xac] sm:$0xf]
    %v4675 = vld [vmem:[%s4644 + $0xb4] sm:$0xf]
    %v4676 = vld [vmem:[%s4644 + $0xb8] sm:$0xf]
    %v4677 = vld [vmem:[%s4644 + $0xd8] sm:$0xf]
    %v4678 = vld [vmem:[%s4644 + $0xdc] sm:$0xf]
    %v4679 = vld [vmem:[%s4644 + $0xe4] sm:$0xf]
    %v4680 = vld [vmem:[%s4644 + $0xe8] sm:$0xf]
    %v4681 = vld [vmem:[%s4644 + $0xf0] sm:$0xf]
    %v4682 = vld [vmem:[%s4644 + $0xf4] sm:$0xf]
    %v4683 = vld [vmem:[%s4644 + $0xfc] sm:$0xf]
    %v4684 = vld [vmem:[%s4644 + $0x100] sm:$0xf]
    %v4685 = vld [vmem:[%s4644 + $0x108] sm:$0xf]
    %v4686 = vld [vmem:[%s4644 + $0x10c] sm:$0xf]
    %v4687 = vld [vmem:[%s4644 + $0x114] sm:$0xf]
    %v4688 = vld [vmem:[%s4644 + $0x118] sm:$0xf]
    %v4689 = vld [vmem:[%s4644 + $0x120] sm:$0xf]
    %v4690 = vld [vmem:[%s4644 + $0x124] sm:$0xf]
    %v4691 = vld [vmem:[%s4644 + $0x12c] sm:$0xf]
    %v4692 = vld [vmem:[%s4644 + $0x130] sm:$0xf]
    %v4693 = vld [vmem:[%s4644 + $0x138] sm:$0xf]
    %v4694 = vld [vmem:[%s4644 + $0x13c] sm:$0xf]
    %v4695 = vld [vmem:[%s4644 + $0x144] sm:$0xf]
    %v4696 = vld [vmem:[%s4644 + $0x148] sm:$0xf]
    %v4697 = vld [vmem:[%s4644 + $0x150] sm:$0xf]
    %v4698 = vld [vmem:[%s4644 + $0x154] sm:$0xf]
    %v4699 = vld [vmem:[%s4644 + $0x15c] sm:$0xf]
    %v4700 = vld [vmem:[%s4644 + $0x160] sm:$0xf]
    %v4701 = vld [vmem:[%s4644 + $0x168] sm:$0xf]
    %v4702 = vld [vmem:[%s4644 + $0x16c] sm:$0xf]
    %v4703 = vld [vmem:[%s4644 + $0x174] sm:$0xf]
    %v4704 = vld [vmem:[%s4644 + $0x178] sm:$0xf]
    %v4705 = vld [vmem:[%s4644 + $0x180] sm:$0xf]
    %v4706 = vld [vmem:[%s4644 + $0x184] sm:$0xf]
    %v4707 = vld [vmem:[%s4644 + $0x18c] sm:$0xf]
    %v4708 = vld [vmem:[%s4644 + $0x190] sm:$0xf]
    %v4709 = vld [vmem:[%s4644 + $0x8] sm:$0x1]
    %v4710 = vld [vmem:[%s4644 + $0x14] sm:$0x1]
    %v4711 = vld [vmem:[%s4644 + $0x20] sm:$0x1]
    %v4712 = vld [vmem:[%s4644 + $0x2c] sm:$0x1]
    %v4713 = vld [vmem:[%s4644 + $0x38] sm:$0x1]
    %v4714 = vld [vmem:[%s4644 + $0x44] sm:$0x1]
    %v4715 = vld [vmem:[%s4644 + $0x50] sm:$0x1]
    %v4716 = vld [vmem:[%s4644 + $0x5c] sm:$0x1]
    %v4717 = vld [vmem:[%s4644 + $0x68] sm:$0x1]
    %v4718 = vld [vmem:[%s4644 + $0x74] sm:$0x1]
    %v4719 = vld [vmem:[%s4644 + $0x80] sm:$0x1]
    %v4720 = vld [vmem:[%s4644 + $0x8c] sm:$0x1]
    %v4721 = vld [vmem:[%s4644 + $0x98] sm:$0x1]
    %v4722 = vld [vmem:[%s4644 + $0xa4] sm:$0x1]
    %v4723 = vld [vmem:[%s4644 + $0xb0] sm:$0x1]
    %v4724 = vld [vmem:[%s4644 + $0xbc] sm:$0x1]
    %v4725 = vld [vmem:[%s4644 + $0xe0] sm:$0x1]
    %v4726 = vld [vmem:[%s4644 + $0xec] sm:$0x1]
    %v4727 = vld [vmem:[%s4644 + $0xf8] sm:$0x1]
    %v4728 = vld [vmem:[%s4644 + $0x104] sm:$0x1]
    %v4729 = vld [vmem:[%s4644 + $0x110] sm:$0x1]
    %v4730 = vld [vmem:[%s4644 + $0x11c] sm:$0x1]
    %v4731 = vld [vmem:[%s4644 + $0x128] sm:$0x1]
    %v4732 = vld [vmem:[%s4644 + $0x134] sm:$0x1]
    %v4733 = vld [vmem:[%s4644 + $0x140] sm:$0x1]
    %v4734 = vld [vmem:[%s4644 + $0x14c] sm:$0x1]
    %v4735 = vld [vmem:[%s4644 + $0x158] sm:$0x1]
    %v4736 = vld [vmem:[%s4644 + $0x164] sm:$0x1]
    %v4737 = vld [vmem:[%s4644 + $0x170] sm:$0x1]
    %v4738 = vld [vmem:[%s4644 + $0x17c] sm:$0x1]
    %v4739 = vld [vmem:[%s4644 + $0x188] sm:$0x1]
    %v4740 = vld [vmem:[%s4644 + $0x194] sm:$0x1]
    %v4742 = vshrl.u32 %v4645, 16
    %v4744 = vrot.slane %v4742, 4
    %v4745 = vshll.u32 %v4645, 16
    %v4747 = vrot.slane %v4745, 5
    %v4748 = vor.u32 %v4744, %v4747
    %v4749 = vrot.slane %v4748, 4
    %v4751 = vshll.u32 %v4646, 16
    %v4753 = vrot.slane %v4751, 5
    %v4754 = vsel %vm2304, %v4749, %v4753
    %v4755 = vshrl.u32 %v4646, 16
    %v4757 = vrot.slane %v4755, 4
    %v4758 = vor.u32 %v4757, %v4753
    %v4759 = vrot.slane %v4758, 4
    %v4761 = vshll.u32 %v4709, 16
    %v4763 = vrot.slane %v4761, 5
    %v4764 = vsel %vm2304, %v4759, %v4763
    %v4766 = vshrl.u32 %v4647, 16
    %v4768 = vrot.slane %v4766, 4
    %v4769 = vshll.u32 %v4647, 16
    %v4771 = vrot.slane %v4769, 5
    %v4772 = vor.u32 %v4768, %v4771
    %v4773 = vrot.slane %v4772, 4
    %v4775 = vshll.u32 %v4648, 16
    %v4777 = vrot.slane %v4775, 5
    %v4778 = vsel %vm2304, %v4773, %v4777
    %v4779 = vshrl.u32 %v4648, 16
    %v4781 = vrot.slane %v4779, 4
    %v4782 = vor.u32 %v4781, %v4777
    %v4783 = vrot.slane %v4782, 4
    %v4785 = vshll.u32 %v4710, 16
    %v4787 = vrot.slane %v4785, 5
    %v4788 = vsel %vm2304, %v4783, %v4787
    %v4790 = vshrl.u32 %v4649, 16
    %v4792 = vrot.slane %v4790, 4
    %v4793 = vshll.u32 %v4649, 16
    %v4795 = vrot.slane %v4793, 5
    %v4796 = vor.u32 %v4792, %v4795
    %v4797 = vrot.slane %v4796, 4
    %v4799 = vshll.u32 %v4650, 16
    %v4801 = vrot.slane %v4799, 5
    %v4802 = vsel %vm2304, %v4797, %v4801
    %v4803 = vshrl.u32 %v4650, 16
    %v4805 = vrot.slane %v4803, 4
    %v4806 = vor.u32 %v4805, %v4801
    %v4807 = vrot.slane %v4806, 4
    %v4809 = vshll.u32 %v4711, 16
    %v4811 = vrot.slane %v4809, 5
    %v4812 = vsel %vm2304, %v4807, %v4811
    %v4814 = vshrl.u32 %v4651, 16
    %v4816 = vrot.slane %v4814, 4
    %v4817 = vshll.u32 %v4651, 16
    %v4819 = vrot.slane %v4817, 5
    %v4820 = vor.u32 %v4816, %v4819
    %v4821 = vrot.slane %v4820, 4
    %v4823 = vshll.u32 %v4652, 16
    %v4825 = vrot.slane %v4823, 5
    %v4826 = vsel %vm2304, %v4821, %v4825
    %v4827 = vshrl.u32 %v4652, 16
    %v4829 = vrot.slane %v4827, 4
    %v4830 = vor.u32 %v4829, %v4825
    %v4831 = vrot.slane %v4830, 4
    %v4833 = vshll.u32 %v4712, 16
    %v4835 = vrot.slane %v4833, 5
    %v4836 = vsel %vm2304, %v4831, %v4835
    %v4838 = vshrl.u32 %v4653, 16
    %v4840 = vrot.slane %v4838, 4
    %v4841 = vshll.u32 %v4653, 16
    %v4843 = vrot.slane %v4841, 5
    %v4844 = vor.u32 %v4840, %v4843
    %v4845 = vrot.slane %v4844, 4
    %v4847 = vshll.u32 %v4654, 16
    %v4849 = vrot.slane %v4847, 5
    %v4850 = vsel %vm2304, %v4845, %v4849
    %v4851 = vshrl.u32 %v4654, 16
    %v4853 = vrot.slane %v4851, 4
    %v4854 = vor.u32 %v4853, %v4849
    %v4855 = vrot.slane %v4854, 4
    %v4857 = vshll.u32 %v4713, 16
    %v4859 = vrot.slane %v4857, 5
    %v4860 = vsel %vm2304, %v4855, %v4859
    %v4862 = vshrl.u32 %v4655, 16
    %v4864 = vrot.slane %v4862, 4
    %v4865 = vshll.u32 %v4655, 16
    %v4867 = vrot.slane %v4865, 5
    %v4868 = vor.u32 %v4864, %v4867
    %v4869 = vrot.slane %v4868, 4
    %v4871 = vshll.u32 %v4656, 16
    %v4873 = vrot.slane %v4871, 5
    %v4874 = vsel %vm2304, %v4869, %v4873
    %v4875 = vshrl.u32 %v4656, 16
    %v4877 = vrot.slane %v4875, 4
    %v4878 = vor.u32 %v4877, %v4873
    %v4879 = vrot.slane %v4878, 4
    %v4881 = vshll.u32 %v4714, 16
    %v4883 = vrot.slane %v4881, 5
    %v4884 = vsel %vm2304, %v4879, %v4883
    %v4886 = vshrl.u32 %v4657, 16
    %v4888 = vrot.slane %v4886, 4
    %v4889 = vshll.u32 %v4657, 16
    %v4891 = vrot.slane %v4889, 5
    %v4892 = vor.u32 %v4888, %v4891
    %v4893 = vrot.slane %v4892, 4
    %v4895 = vshll.u32 %v4658, 16
    %v4897 = vrot.slane %v4895, 5
    %v4898 = vsel %vm2304, %v4893, %v4897
    %v4899 = vshrl.u32 %v4658, 16
    %v4901 = vrot.slane %v4899, 4
    %v4902 = vor.u32 %v4901, %v4897
    %v4903 = vrot.slane %v4902, 4
    %v4905 = vshll.u32 %v4715, 16
    %v4907 = vrot.slane %v4905, 5
    %v4908 = vsel %vm2304, %v4903, %v4907
    %v4910 = vshrl.u32 %v4659, 16
    %v4912 = vrot.slane %v4910, 4
    %v4913 = vshll.u32 %v4659, 16
    %v4915 = vrot.slane %v4913, 5
    %v4916 = vor.u32 %v4912, %v4915
    %v4917 = vrot.slane %v4916, 4
    %v4919 = vshll.u32 %v4660, 16
    %v4921 = vrot.slane %v4919, 5
    %v4922 = vsel %vm2304, %v4917, %v4921
    %v4923 = vshrl.u32 %v4660, 16
    %v4925 = vrot.slane %v4923, 4
    %v4926 = vor.u32 %v4925, %v4921
    %v4927 = vrot.slane %v4926, 4
    %v4929 = vshll.u32 %v4716, 16
    %v4931 = vrot.slane %v4929, 5
    %v4932 = vsel %vm2304, %v4927, %v4931
    %v4934 = vshrl.u32 %v4661, 16
    %v4936 = vrot.slane %v4934, 4
    %v4937 = vshll.u32 %v4661, 16
    %v4939 = vrot.slane %v4937, 5
    %v4940 = vor.u32 %v4936, %v4939
    %v4941 = vrot.slane %v4940, 4
    %v4943 = vshll.u32 %v4662, 16
    %v4945 = vrot.slane %v4943, 5
    %v4946 = vsel %vm2304, %v4941, %v4945
    %v4947 = vshrl.u32 %v4662, 16
    %v4949 = vrot.slane %v4947, 4
    %v4950 = vor.u32 %v4949, %v4945
    %v4951 = vrot.slane %v4950, 4
    %v4953 = vshll.u32 %v4717, 16
    %v4955 = vrot.slane %v4953, 5
    %v4956 = vsel %vm2304, %v4951, %v4955
    %v4958 = vshrl.u32 %v4663, 16
    %v4960 = vrot.slane %v4958, 4
    %v4961 = vshll.u32 %v4663, 16
    %v4963 = vrot.slane %v4961, 5
    %v4964 = vor.u32 %v4960, %v4963
    %v4965 = vrot.slane %v4964, 4
    %v4967 = vshll.u32 %v4664, 16
    %v4969 = vrot.slane %v4967, 5
    %v4970 = vsel %vm2304, %v4965, %v4969
    %v4971 = vshrl.u32 %v4664, 16
    %v4973 = vrot.slane %v4971, 4
    %v4974 = vor.u32 %v4973, %v4969
    %v4975 = vrot.slane %v4974, 4
    %v4977 = vshll.u32 %v4718, 16
    %v4979 = vrot.slane %v4977, 5
    %v4980 = vsel %vm2304, %v4975, %v4979
    %v4982 = vshrl.u32 %v4665, 16
    %v4984 = vrot.slane %v4982, 4
    %v4985 = vshll.u32 %v4665, 16
    %v4987 = vrot.slane %v4985, 5
    %v4988 = vor.u32 %v4984, %v4987
    %v4989 = vrot.slane %v4988, 4
    %v4991 = vshll.u32 %v4666, 16
    %v4993 = vrot.slane %v4991, 5
    %v4994 = vsel %vm2304, %v4989, %v4993
    %v4995 = vshrl.u32 %v4666, 16
    %v4997 = vrot.slane %v4995, 4
    %v4998 = vor.u32 %v4997, %v4993
    %v4999 = vrot.slane %v4998, 4
    %v5001 = vshll.u32 %v4719, 16
    %v5003 = vrot.slane %v5001, 5
    %v5004 = vsel %vm2304, %v4999, %v5003
    %v5006 = vshrl.u32 %v4667, 16
    %v5008 = vrot.slane %v5006, 4
    %v5009 = vshll.u32 %v4667, 16
    %v5011 = vrot.slane %v5009, 5
    %v5012 = vor.u32 %v5008, %v5011
    %v5013 = vrot.slane %v5012, 4
    %v5015 = vshll.u32 %v4668, 16
    %v5017 = vrot.slane %v5015, 5
    %v5018 = vsel %vm2304, %v5013, %v5017
    %v5019 = vshrl.u32 %v4668, 16
    %v5021 = vrot.slane %v5019, 4
    %v5022 = vor.u32 %v5021, %v5017
    %v5023 = vrot.slane %v5022, 4
    %v5025 = vshll.u32 %v4720, 16
    %v5027 = vrot.slane %v5025, 5
    %v5028 = vsel %vm2304, %v5023, %v5027
    %v5030 = vshrl.u32 %v4669, 16
    %v5032 = vrot.slane %v5030, 4
    %v5033 = vshll.u32 %v4669, 16
    %v5035 = vrot.slane %v5033, 5
    %v5036 = vor.u32 %v5032, %v5035
    %v5037 = vrot.slane %v5036, 4
    %v5039 = vshll.u32 %v4670, 16
    %v5041 = vrot.slane %v5039, 5
    %v5042 = vsel %vm2304, %v5037, %v5041
    %v5043 = vshrl.u32 %v4670, 16
    %v5045 = vrot.slane %v5043, 4
    %v5046 = vor.u32 %v5045, %v5041
    %v5047 = vrot.slane %v5046, 4
    %v5049 = vshll.u32 %v4721, 16
    %v5051 = vrot.slane %v5049, 5
    %v5052 = vsel %vm2304, %v5047, %v5051
    %v5054 = vshrl.u32 %v4671, 16
    %v5056 = vrot.slane %v5054, 4
    %v5057 = vshll.u32 %v4671, 16
    %v5059 = vrot.slane %v5057, 5
    %v5060 = vor.u32 %v5056, %v5059
    %v5061 = vrot.slane %v5060, 4
    %v5063 = vshll.u32 %v4672, 16
    %v5065 = vrot.slane %v5063, 5
    %v5066 = vsel %vm2304, %v5061, %v5065
    %v5067 = vshrl.u32 %v4672, 16
    %v5069 = vrot.slane %v5067, 4
    %v5070 = vor.u32 %v5069, %v5065
    %v5071 = vrot.slane %v5070, 4
    %v5073 = vshll.u32 %v4722, 16
    %v5075 = vrot.slane %v5073, 5
    %v5076 = vsel %vm2304, %v5071, %v5075
    %v5078 = vshrl.u32 %v4673, 16
    %v5080 = vrot.slane %v5078, 4
    %v5081 = vshll.u32 %v4673, 16
    %v5083 = vrot.slane %v5081, 5
    %v5084 = vor.u32 %v5080, %v5083
    %v5085 = vrot.slane %v5084, 4
    %v5087 = vshll.u32 %v4674, 16
    %v5089 = vrot.slane %v5087, 5
    %v5090 = vsel %vm2304, %v5085, %v5089
    %v5091 = vshrl.u32 %v4674, 16
    %v5093 = vrot.slane %v5091, 4
    %v5094 = vor.u32 %v5093, %v5089
    %v5095 = vrot.slane %v5094, 4
    %v5097 = vshll.u32 %v4723, 16
    %v5099 = vrot.slane %v5097, 5
    %v5100 = vsel %vm2304, %v5095, %v5099
    %v5102 = vshrl.u32 %v4675, 16
    %v5104 = vrot.slane %v5102, 4
    %v5105 = vshll.u32 %v4675, 16
    %v5107 = vrot.slane %v5105, 5
    %v5108 = vor.u32 %v5104, %v5107
    %v5109 = vrot.slane %v5108, 4
    %v5111 = vshll.u32 %v4676, 16
    %v5113 = vrot.slane %v5111, 5
    %v5114 = vsel %vm2304, %v5109, %v5113
    %v5115 = vshrl.u32 %v4676, 16
    %v5117 = vrot.slane %v5115, 4
    %v5118 = vor.u32 %v5117, %v5113
    %v5119 = vrot.slane %v5118, 4
    %v5121 = vshll.u32 %v4724, 16
    %v5123 = vrot.slane %v5121, 5
    %v5124 = vsel %vm2304, %v5119, %v5123
    %v5126 = vshrl.u32 %v4677, 16
    %v5128 = vrot.slane %v5126, 4
    %v5129 = vshll.u32 %v4677, 16
    %v5131 = vrot.slane %v5129, 5
    %v5132 = vor.u32 %v5128, %v5131
    %v5133 = vrot.slane %v5132, 4
    %v5135 = vshll.u32 %v4678, 16
    %v5137 = vrot.slane %v5135, 5
    %v5138 = vsel %vm2304, %v5133, %v5137
    %v5139 = vshrl.u32 %v4678, 16
    %v5141 = vrot.slane %v5139, 4
    %v5142 = vor.u32 %v5141, %v5137
    %v5143 = vrot.slane %v5142, 4
    %v5145 = vshll.u32 %v4725, 16
    %v5147 = vrot.slane %v5145, 5
    %v5148 = vsel %vm2304, %v5143, %v5147
    %v5150 = vshrl.u32 %v4679, 16
    %v5152 = vrot.slane %v5150, 4
    %v5153 = vshll.u32 %v4679, 16
    %v5155 = vrot.slane %v5153, 5
    %v5156 = vor.u32 %v5152, %v5155
    %v5157 = vrot.slane %v5156, 4
    %v5159 = vshll.u32 %v4680, 16
    %v5161 = vrot.slane %v5159, 5
    %v5162 = vsel %vm2304, %v5157, %v5161
    %v5163 = vshrl.u32 %v4680, 16
    %v5165 = vrot.slane %v5163, 4
    %v5166 = vor.u32 %v5165, %v5161
    %v5167 = vrot.slane %v5166, 4
    %v5169 = vshll.u32 %v4726, 16
    %v5171 = vrot.slane %v5169, 5
    %v5172 = vsel %vm2304, %v5167, %v5171
    %v5174 = vshrl.u32 %v4681, 16
    %v5176 = vrot.slane %v5174, 4
    %v5177 = vshll.u32 %v4681, 16
    %v5179 = vrot.slane %v5177, 5
    %v5180 = vor.u32 %v5176, %v5179
    %v5181 = vrot.slane %v5180, 4
    %v5183 = vshll.u32 %v4682, 16
    %v5185 = vrot.slane %v5183, 5
    %v5186 = vsel %vm2304, %v5181, %v5185
    %v5187 = vshrl.u32 %v4682, 16
    %v5189 = vrot.slane %v5187, 4
    %v5190 = vor.u32 %v5189, %v5185
    %v5191 = vrot.slane %v5190, 4
    %v5193 = vshll.u32 %v4727, 16
    %v5195 = vrot.slane %v5193, 5
    %v5196 = vsel %vm2304, %v5191, %v5195
    %v5198 = vshrl.u32 %v4683, 16
    %v5200 = vrot.slane %v5198, 4
    %v5201 = vshll.u32 %v4683, 16
    %v5203 = vrot.slane %v5201, 5
    %v5204 = vor.u32 %v5200, %v5203
    %v5205 = vrot.slane %v5204, 4
    %v5207 = vshll.u32 %v4684, 16
    %v5209 = vrot.slane %v5207, 5
    %v5210 = vsel %vm2304, %v5205, %v5209
    %v5211 = vshrl.u32 %v4684, 16
    %v5213 = vrot.slane %v5211, 4
    %v5214 = vor.u32 %v5213, %v5209
    %v5215 = vrot.slane %v5214, 4
    %v5217 = vshll.u32 %v4728, 16
    %v5219 = vrot.slane %v5217, 5
    %v5220 = vsel %vm2304, %v5215, %v5219
    %v5222 = vshrl.u32 %v4685, 16
    %v5224 = vrot.slane %v5222, 4
    %v5225 = vshll.u32 %v4685, 16
    %v5227 = vrot.slane %v5225, 5
    %v5228 = vor.u32 %v5224, %v5227
    %v5229 = vrot.slane %v5228, 4
    %v5231 = vshll.u32 %v4686, 16
    %v5233 = vrot.slane %v5231, 5
    %v5234 = vsel %vm2304, %v5229, %v5233
    %v5235 = vshrl.u32 %v4686, 16
    %v5237 = vrot.slane %v5235, 4
    %v5238 = vor.u32 %v5237, %v5233
    %v5239 = vrot.slane %v5238, 4
    %v5241 = vshll.u32 %v4729, 16
    %v5243 = vrot.slane %v5241, 5
    %v5244 = vsel %vm2304, %v5239, %v5243
    %v5246 = vshrl.u32 %v4687, 16
    %v5248 = vrot.slane %v5246, 4
    %v5249 = vshll.u32 %v4687, 16
    %v5251 = vrot.slane %v5249, 5
    %v5252 = vor.u32 %v5248, %v5251
    %v5253 = vrot.slane %v5252, 4
    %v5255 = vshll.u32 %v4688, 16
    %v5257 = vrot.slane %v5255, 5
    %v5258 = vsel %vm2304, %v5253, %v5257
    %v5259 = vshrl.u32 %v4688, 16
    %v5261 = vrot.slane %v5259, 4
    %v5262 = vor.u32 %v5261, %v5257
    %v5263 = vrot.slane %v5262, 4
    %v5265 = vshll.u32 %v4730, 16
    %v5267 = vrot.slane %v5265, 5
    %v5268 = vsel %vm2304, %v5263, %v5267
    %v5270 = vshrl.u32 %v4689, 16
    %v5272 = vrot.slane %v5270, 4
    %v5273 = vshll.u32 %v4689, 16
    %v5275 = vrot.slane %v5273, 5
    %v5276 = vor.u32 %v5272, %v5275
    %v5277 = vrot.slane %v5276, 4
    %v5279 = vshll.u32 %v4690, 16
    %v5281 = vrot.slane %v5279, 5
    %v5282 = vsel %vm2304, %v5277, %v5281
    %v5283 = vshrl.u32 %v4690, 16
    %v5285 = vrot.slane %v5283, 4
    %v5286 = vor.u32 %v5285, %v5281
    %v5287 = vrot.slane %v5286, 4
    %v5289 = vshll.u32 %v4731, 16
    %v5291 = vrot.slane %v5289, 5
    %v5292 = vsel %vm2304, %v5287, %v5291
    %v5294 = vshrl.u32 %v4691, 16
    %v5296 = vrot.slane %v5294, 4
    %v5297 = vshll.u32 %v4691, 16
    %v5299 = vrot.slane %v5297, 5
    %v5300 = vor.u32 %v5296, %v5299
    %v5301 = vrot.slane %v5300, 4
    %v5303 = vshll.u32 %v4692, 16
    %v5305 = vrot.slane %v5303, 5
    %v5306 = vsel %vm2304, %v5301, %v5305
    %v5307 = vshrl.u32 %v4692, 16
    %v5309 = vrot.slane %v5307, 4
    %v5310 = vor.u32 %v5309, %v5305
    %v5311 = vrot.slane %v5310, 4
    %v5313 = vshll.u32 %v4732, 16
    %v5315 = vrot.slane %v5313, 5
    %v5316 = vsel %vm2304, %v5311, %v5315
    %v5318 = vshrl.u32 %v4693, 16
    %v5320 = vrot.slane %v5318, 4
    %v5321 = vshll.u32 %v4693, 16
    %v5323 = vrot.slane %v5321, 5
    %v5324 = vor.u32 %v5320, %v5323
    %v5325 = vrot.slane %v5324, 4
    %v5327 = vshll.u32 %v4694, 16
    %v5329 = vrot.slane %v5327, 5
    %v5330 = vsel %vm2304, %v5325, %v5329
    %v5331 = vshrl.u32 %v4694, 16
    %v5333 = vrot.slane %v5331, 4
    %v5334 = vor.u32 %v5333, %v5329
    %v5335 = vrot.slane %v5334, 4
    %v5337 = vshll.u32 %v4733, 16
    %v5339 = vrot.slane %v5337, 5
    %v5340 = vsel %vm2304, %v5335, %v5339
    %v5342 = vshrl.u32 %v4695, 16
    %v5344 = vrot.slane %v5342, 4
    %v5345 = vshll.u32 %v4695, 16
    %v5347 = vrot.slane %v5345, 5
    %v5348 = vor.u32 %v5344, %v5347
    %v5349 = vrot.slane %v5348, 4
    %v5351 = vshll.u32 %v4696, 16
    %v5353 = vrot.slane %v5351, 5
    %v5354 = vsel %vm2304, %v5349, %v5353
    %v5355 = vshrl.u32 %v4696, 16
    %v5357 = vrot.slane %v5355, 4
    %v5358 = vor.u32 %v5357, %v5353
    %v5359 = vrot.slane %v5358, 4
    %v5361 = vshll.u32 %v4734, 16
    %v5363 = vrot.slane %v5361, 5
    %v5364 = vsel %vm2304, %v5359, %v5363
    %v5366 = vshrl.u32 %v4697, 16
    %v5368 = vrot.slane %v5366, 4
    %v5369 = vshll.u32 %v4697, 16
    %v5371 = vrot.slane %v5369, 5
    %v5372 = vor.u32 %v5368, %v5371
    %v5373 = vrot.slane %v5372, 4
    %v5375 = vshll.u32 %v4698, 16
    %v5377 = vrot.slane %v5375, 5
    %v5378 = vsel %vm2304, %v5373, %v5377
    %v5379 = vshrl.u32 %v4698, 16
    %v5381 = vrot.slane %v5379, 4
    %v5382 = vor.u32 %v5381, %v5377
    %v5383 = vrot.slane %v5382, 4
    %v5385 = vshll.u32 %v4735, 16
    %v5387 = vrot.slane %v5385, 5
    %v5388 = vsel %vm2304, %v5383, %v5387
    %v5390 = vshrl.u32 %v4699, 16
    %v5392 = vrot.slane %v5390, 4
    %v5393 = vshll.u32 %v4699, 16
    %v5395 = vrot.slane %v5393, 5
    %v5396 = vor.u32 %v5392, %v5395
    %v5397 = vrot.slane %v5396, 4
    %v5399 = vshll.u32 %v4700, 16
    %v5401 = vrot.slane %v5399, 5
    %v5402 = vsel %vm2304, %v5397, %v5401
    %v5403 = vshrl.u32 %v4700, 16
    %v5405 = vrot.slane %v5403, 4
    %v5406 = vor.u32 %v5405, %v5401
    %v5407 = vrot.slane %v5406, 4
    %v5409 = vshll.u32 %v4736, 16
    %v5411 = vrot.slane %v5409, 5
    %v5412 = vsel %vm2304, %v5407, %v5411
    %v5414 = vshrl.u32 %v4701, 16
    %v5416 = vrot.slane %v5414, 4
    %v5417 = vshll.u32 %v4701, 16
    %v5419 = vrot.slane %v5417, 5
    %v5420 = vor.u32 %v5416, %v5419
    %v5421 = vrot.slane %v5420, 4
    %v5423 = vshll.u32 %v4702, 16
    %v5425 = vrot.slane %v5423, 5
    %v5426 = vsel %vm2304, %v5421, %v5425
    %v5427 = vshrl.u32 %v4702, 16
    %v5429 = vrot.slane %v5427, 4
    %v5430 = vor.u32 %v5429, %v5425
    %v5431 = vrot.slane %v5430, 4
    %v5433 = vshll.u32 %v4737, 16
    %v5435 = vrot.slane %v5433, 5
    %v5436 = vsel %vm2304, %v5431, %v5435
    %v5438 = vshrl.u32 %v4703, 16
    %v5440 = vrot.slane %v5438, 4
    %v5441 = vshll.u32 %v4703, 16
    %v5443 = vrot.slane %v5441, 5
    %v5444 = vor.u32 %v5440, %v5443
    %v5445 = vrot.slane %v5444, 4
    %v5447 = vshll.u32 %v4704, 16
    %v5449 = vrot.slane %v5447, 5
    %v5450 = vsel %vm2304, %v5445, %v5449
    %v5451 = vshrl.u32 %v4704, 16
    %v5453 = vrot.slane %v5451, 4
    %v5454 = vor.u32 %v5453, %v5449
    %v5455 = vrot.slane %v5454, 4
    %v5457 = vshll.u32 %v4738, 16
    %v5459 = vrot.slane %v5457, 5
    %v5460 = vsel %vm2304, %v5455, %v5459
    %v5462 = vshrl.u32 %v4705, 16
    %v5464 = vrot.slane %v5462, 4
    %v5465 = vshll.u32 %v4705, 16
    %v5467 = vrot.slane %v5465, 5
    %v5468 = vor.u32 %v5464, %v5467
    %v5469 = vrot.slane %v5468, 4
    %v5471 = vshll.u32 %v4706, 16
    %v5473 = vrot.slane %v5471, 5
    %v5474 = vsel %vm2304, %v5469, %v5473
    %v5475 = vshrl.u32 %v4706, 16
    %v5477 = vrot.slane %v5475, 4
    %v5478 = vor.u32 %v5477, %v5473
    %v5479 = vrot.slane %v5478, 4
    %v5481 = vshll.u32 %v4739, 16
    %v5483 = vrot.slane %v5481, 5
    %v5484 = vsel %vm2304, %v5479, %v5483
    %v5486 = vshrl.u32 %v4707, 16
    %v5488 = vrot.slane %v5486, 4
    %v5489 = vshll.u32 %v4707, 16
    %v5491 = vrot.slane %v5489, 5
    %v5492 = vor.u32 %v5488, %v5491
    %v5493 = vrot.slane %v5492, 4
    %v5495 = vshll.u32 %v4708, 16
    %v5497 = vrot.slane %v5495, 5
    %v5498 = vsel %vm2304, %v5493, %v5497
    %v5499 = vshrl.u32 %v4708, 16
    %v5501 = vrot.slane %v5499, 4
    %v5502 = vor.u32 %v5501, %v5497
    %v5503 = vrot.slane %v5502, 4
    %v5505 = vshll.u32 %v4740, 16
    %v5507 = vrot.slane %v5505, 5
    %v5508 = vsel %vm2304, %v5503, %v5507
    %v5509 = vld [vmem:[%s4644] sm:$0xe]
    %v5510 = vld [vmem:[%s4644 + $0xc] sm:$0xe]
    %v5511 = vld [vmem:[%s4644 + $0x18] sm:$0xe]
    %v5512 = vld [vmem:[%s4644 + $0x24] sm:$0xe]
    %v5513 = vld [vmem:[%s4644 + $0x30] sm:$0xe]
    %v5514 = vld [vmem:[%s4644 + $0x3c] sm:$0xe]
    %v5515 = vld [vmem:[%s4644 + $0x48] sm:$0xe]
    %v5516 = vld [vmem:[%s4644 + $0x54] sm:$0xe]
    %v5517 = vld [vmem:[%s4644 + $0x60] sm:$0xe]
    %v5518 = vld [vmem:[%s4644 + $0x6c] sm:$0xe]
    %v5519 = vld [vmem:[%s4644 + $0x78] sm:$0xe]
    %v5520 = vld [vmem:[%s4644 + $0x84] sm:$0xe]
    %v5521 = vld [vmem:[%s4644 + $0x90] sm:$0xe]
    %v5522 = vld [vmem:[%s4644 + $0x9c] sm:$0xe]
    %v5523 = vld [vmem:[%s4644 + $0xa8] sm:$0xe]
    %v5524 = vld [vmem:[%s4644 + $0xb4] sm:$0xe]
    %v5525 = vld [vmem:[%s4644 + $0xd8] sm:$0xe]
    %v5526 = vld [vmem:[%s4644 + $0xe4] sm:$0xe]
    %v5527 = vld [vmem:[%s4644 + $0xf0] sm:$0xe]
    %v5528 = vld [vmem:[%s4644 + $0xfc] sm:$0xe]
    %v5529 = vld [vmem:[%s4644 + $0x108] sm:$0xe]
    %v5530 = vld [vmem:[%s4644 + $0x114] sm:$0xe]
    %v5531 = vld [vmem:[%s4644 + $0x120] sm:$0xe]
    %v5532 = vld [vmem:[%s4644 + $0x12c] sm:$0xe]
    %v5533 = vld [vmem:[%s4644 + $0x138] sm:$0xe]
    %v5534 = vld [vmem:[%s4644 + $0x144] sm:$0xe]
    %v5535 = vld [vmem:[%s4644 + $0x150] sm:$0xe]
    %v5536 = vld [vmem:[%s4644 + $0x15c] sm:$0xe]
    %v5537 = vld [vmem:[%s4644 + $0x168] sm:$0xe]
    %v5538 = vld [vmem:[%s4644 + $0x174] sm:$0xe]
    %v5539 = vld [vmem:[%s4644 + $0x180] sm:$0xe]
    %v5540 = vld [vmem:[%s4644 + $0x18c] sm:$0xe]
    %v5637 = vrot.slane %v5509, 5
    %v5638 = vrot.slane %v5637, 4
    %v5639 = vrot.slane %v4646, 5
    %v5640 = vsel %vm3203, %v5638, %v5639
    %v5641 = vrot.slane %v5639, 4
    %v5642 = vrot.slane %v4709, 5
    %v5643 = vsel %vm3203, %v5641, %v5642
    %v5644 = vrot.slane %v5510, 5
    %v5645 = vrot.slane %v5644, 4
    %v5646 = vrot.slane %v4648, 5
    %v5647 = vsel %vm3203, %v5645, %v5646
    %v5648 = vrot.slane %v5646, 4
    %v5649 = vrot.slane %v4710, 5
    %v5650 = vsel %vm3203, %v5648, %v5649
    %v5651 = vrot.slane %v5511, 5
    %v5652 = vrot.slane %v5651, 4
    %v5653 = vrot.slane %v4650, 5
    %v5654 = vsel %vm3203, %v5652, %v5653
    %v5655 = vrot.slane %v5653, 4
    %v5656 = vrot.slane %v4711, 5
    %v5657 = vsel %vm3203, %v5655, %v5656
    %v5658 = vrot.slane %v5512, 5
    %v5659 = vrot.slane %v5658, 4
    %v5660 = vrot.slane %v4652, 5
    %v5661 = vsel %vm3203, %v5659, %v5660
    %v5662 = vrot.slane %v5660, 4
    %v5663 = vrot.slane %v4712, 5
    %v5664 = vsel %vm3203, %v5662, %v5663
    %v5665 = vrot.slane %v5513, 5
    %v5666 = vrot.slane %v5665, 4
    %v5667 = vrot.slane %v4654, 5
    %v5668 = vsel %vm3203, %v5666, %v5667
    %v5669 = vrot.slane %v5667, 4
    %v5670 = vrot.slane %v4713, 5
    %v5671 = vsel %vm3203, %v5669, %v5670
    %v5672 = vrot.slane %v5514, 5
    %v5673 = vrot.slane %v5672, 4
    %v5674 = vrot.slane %v4656, 5
    %v5675 = vsel %vm3203, %v5673, %v5674
    %v5676 = vrot.slane %v5674, 4
    %v5677 = vrot.slane %v4714, 5
    %v5678 = vsel %vm3203, %v5676, %v5677
    %v5679 = vrot.slane %v5515, 5
    %v5680 = vrot.slane %v5679, 4
    %v5681 = vrot.slane %v4658, 5
    %v5682 = vsel %vm3203, %v5680, %v5681
    %v5683 = vrot.slane %v5681, 4
    %v5684 = vrot.slane %v4715, 5
    %v5685 = vsel %vm3203, %v5683, %v5684
    %v5686 = vrot.slane %v5516, 5
    %v5687 = vrot.slane %v5686, 4
    %v5688 = vrot.slane %v4660, 5
    %v5689 = vsel %vm3203, %v5687, %v5688
    %v5690 = vrot.slane %v5688, 4
    %v5691 = vrot.slane %v4716, 5
    %v5692 = vsel %vm3203, %v5690, %v5691
    %v5693 = vrot.slane %v5517, 5
    %v5694 = vrot.slane %v5693, 4
    %v5695 = vrot.slane %v4662, 5
    %v5696 = vsel %vm3203, %v5694, %v5695
    %v5697 = vrot.slane %v5695, 4
    %v5698 = vrot.slane %v4717, 5
    %v5699 = vsel %vm3203, %v5697, %v5698
    %v5700 = vrot.slane %v5518, 5
    %v5701 = vrot.slane %v5700, 4
    %v5702 = vrot.slane %v4664, 5
    %v5703 = vsel %vm3203, %v5701, %v5702
    %v5704 = vrot.slane %v5702, 4
    %v5705 = vrot.slane %v4718, 5
    %v5706 = vsel %vm3203, %v5704, %v5705
    %v5707 = vrot.slane %v5519, 5
    %v5708 = vrot.slane %v5707, 4
    %v5709 = vrot.slane %v4666, 5
    %v5710 = vsel %vm3203, %v5708, %v5709
    %v5711 = vrot.slane %v5709, 4
    %v5712 = vrot.slane %v4719, 5
    %v5713 = vsel %vm3203, %v5711, %v5712
    %v5714 = vrot.slane %v5520, 5
    %v5715 = vrot.slane %v5714, 4
    %v5716 = vrot.slane %v4668, 5
    %v5717 = vsel %vm3203, %v5715, %v5716
    %v5718 = vrot.slane %v5716, 4
    %v5719 = vrot.slane %v4720, 5
    %v5720 = vsel %vm3203, %v5718, %v5719
    %v5721 = vrot.slane %v5521, 5
    %v5722 = vrot.slane %v5721, 4
    %v5723 = vrot.slane %v4670, 5
    %v5724 = vsel %vm3203, %v5722, %v5723
    %v5725 = vrot.slane %v5723, 4
    %v5726 = vrot.slane %v4721, 5
    %v5727 = vsel %vm3203, %v5725, %v5726
    %v5728 = vrot.slane %v5522, 5
    %v5729 = vrot.slane %v5728, 4
    %v5730 = vrot.slane %v4672, 5
    %v5731 = vsel %vm3203, %v5729, %v5730
    %v5732 = vrot.slane %v5730, 4
    %v5733 = vrot.slane %v4722, 5
    %v5734 = vsel %vm3203, %v5732, %v5733
    %v5735 = vrot.slane %v5523, 5
    %v5736 = vrot.slane %v5735, 4
    %v5737 = vrot.slane %v4674, 5
    %v5738 = vsel %vm3203, %v5736, %v5737
    %v5739 = vrot.slane %v5737, 4
    %v5740 = vrot.slane %v4723, 5
    %v5741 = vsel %vm3203, %v5739, %v5740
    %v5742 = vrot.slane %v5524, 5
    %v5743 = vrot.slane %v5742, 4
    %v5744 = vrot.slane %v4676, 5
    %v5745 = vsel %vm3203, %v5743, %v5744
    %v5746 = vrot.slane %v5744, 4
    %v5747 = vrot.slane %v4724, 5
    %v5748 = vsel %vm3203, %v5746, %v5747
    %v5749 = vrot.slane %v5525, 5
    %v5750 = vrot.slane %v5749, 4
    %v5751 = vrot.slane %v4678, 5
    %v5752 = vsel %vm3203, %v5750, %v5751
    %v5753 = vrot.slane %v5751, 4
    %v5754 = vrot.slane %v4725, 5
    %v5755 = vsel %vm3203, %v5753, %v5754
    %v5756 = vrot.slane %v5526, 5
    %v5757 = vrot.slane %v5756, 4
    %v5758 = vrot.slane %v4680, 5
    %v5759 = vsel %vm3203, %v5757, %v5758
    %v5760 = vrot.slane %v5758, 4
    %v5761 = vrot.slane %v4726, 5
    %v5762 = vsel %vm3203, %v5760, %v5761
    %v5763 = vrot.slane %v5527, 5
    %v5764 = vrot.slane %v5763, 4
    %v5765 = vrot.slane %v4682, 5
    %v5766 = vsel %vm3203, %v5764, %v5765
    %v5767 = vrot.slane %v5765, 4
    %v5768 = vrot.slane %v4727, 5
    %v5769 = vsel %vm3203, %v5767, %v5768
    %v5770 = vrot.slane %v5528, 5
    %v5771 = vrot.slane %v5770, 4
    %v5772 = vrot.slane %v4684, 5
    %v5773 = vsel %vm3203, %v5771, %v5772
    %v5774 = vrot.slane %v5772, 4
    %v5775 = vrot.slane %v4728, 5
    %v5776 = vsel %vm3203, %v5774, %v5775
    %v5777 = vrot.slane %v5529, 5
    %v5778 = vrot.slane %v5777, 4
    %v5779 = vrot.slane %v4686, 5
    %v5780 = vsel %vm3203, %v5778, %v5779
    %v5781 = vrot.slane %v5779, 4
    %v5782 = vrot.slane %v4729, 5
    %v5783 = vsel %vm3203, %v5781, %v5782
    %v5784 = vrot.slane %v5530, 5
    %v5785 = vrot.slane %v5784, 4
    %v5786 = vrot.slane %v4688, 5
    %v5787 = vsel %vm3203, %v5785, %v5786
    %v5788 = vrot.slane %v5786, 4
    %v5789 = vrot.slane %v4730, 5
    %v5790 = vsel %vm3203, %v5788, %v5789
    %v5791 = vrot.slane %v5531, 5
    %v5792 = vrot.slane %v5791, 4
    %v5793 = vrot.slane %v4690, 5
    %v5794 = vsel %vm3203, %v5792, %v5793
    %v5795 = vrot.slane %v5793, 4
    %v5796 = vrot.slane %v4731, 5
    %v5797 = vsel %vm3203, %v5795, %v5796
    %v5798 = vrot.slane %v5532, 5
    %v5799 = vrot.slane %v5798, 4
    %v5800 = vrot.slane %v4692, 5
    %v5801 = vsel %vm3203, %v5799, %v5800
    %v5802 = vrot.slane %v5800, 4
    %v5803 = vrot.slane %v4732, 5
    %v5804 = vsel %vm3203, %v5802, %v5803
    %v5805 = vrot.slane %v5533, 5
    %v5806 = vrot.slane %v5805, 4
    %v5807 = vrot.slane %v4694, 5
    %v5808 = vsel %vm3203, %v5806, %v5807
    %v5809 = vrot.slane %v5807, 4
    %v5810 = vrot.slane %v4733, 5
    %v5811 = vsel %vm3203, %v5809, %v5810
    %v5812 = vrot.slane %v5534, 5
    %v5813 = vrot.slane %v5812, 4
    %v5814 = vrot.slane %v4696, 5
    %v5815 = vsel %vm3203, %v5813, %v5814
    %v5816 = vrot.slane %v5814, 4
    %v5817 = vrot.slane %v4734, 5
    %v5818 = vsel %vm3203, %v5816, %v5817
    %v5819 = vrot.slane %v5535, 5
    %v5820 = vrot.slane %v5819, 4
    %v5821 = vrot.slane %v4698, 5
    %v5822 = vsel %vm3203, %v5820, %v5821
    %v5823 = vrot.slane %v5821, 4
    %v5824 = vrot.slane %v4735, 5
    %v5825 = vsel %vm3203, %v5823, %v5824
    %v5826 = vrot.slane %v5536, 5
    %v5827 = vrot.slane %v5826, 4
    %v5828 = vrot.slane %v4700, 5
    %v5829 = vsel %vm3203, %v5827, %v5828
    %v5830 = vrot.slane %v5828, 4
    %v5831 = vrot.slane %v4736, 5
    %v5832 = vsel %vm3203, %v5830, %v5831
    %v5833 = vrot.slane %v5537, 5
    %v5834 = vrot.slane %v5833, 4
    %v5835 = vrot.slane %v4702, 5
    %v5836 = vsel %vm3203, %v5834, %v5835
    %v5837 = vrot.slane %v5835, 4
    %v5838 = vrot.slane %v4737, 5
    %v5839 = vsel %vm3203, %v5837, %v5838
    %v5840 = vrot.slane %v5538, 5
    %v5841 = vrot.slane %v5840, 4
    %v5842 = vrot.slane %v4704, 5
    %v5843 = vsel %vm3203, %v5841, %v5842
    %v5844 = vrot.slane %v5842, 4
    %v5845 = vrot.slane %v4738, 5
    %v5846 = vsel %vm3203, %v5844, %v5845
    %v5847 = vrot.slane %v5539, 5
    %v5848 = vrot.slane %v5847, 4
    %v5849 = vrot.slane %v4706, 5
    %v5850 = vsel %vm3203, %v5848, %v5849
    %v5851 = vrot.slane %v5849, 4
    %v5852 = vrot.slane %v4739, 5
    %v5853 = vsel %vm3203, %v5851, %v5852
    %v5854 = vrot.slane %v5540, 5
    %v5855 = vrot.slane %v5854, 4
    %v5856 = vrot.slane %v4708, 5
    %v5857 = vsel %vm3203, %v5855, %v5856
    %v5858 = vrot.slane %v5856, 4
    %v5859 = vrot.slane %v4740, 5
    %v5860 = vsel %vm3203, %v5858, %v5859
    %v5893 = vunpack.c.l.b16 %v2206
    %v5894 = vunpack.c.l.b16 %v2207
    %v5895 = vunpack.c.l.b16 %v2208
    %v5896 = vunpack.c.l.b16 %v2209
    %v5897 = vunpack.c.l.b16 %v2210
    %v5898 = vunpack.c.l.b16 %v2211
    %v5899 = vunpack.c.l.b16 %v2212
    %v5900 = vunpack.c.l.b16 %v2213
    %v5901 = vunpack.c.l.b16 %v2214
    %v5902 = vunpack.c.l.b16 %v2215
    %v5903 = vunpack.c.l.b16 %v2216
    %v5904 = vunpack.c.l.b16 %v2217
    %v5905 = vunpack.c.l.b16 %v2218
    %v5906 = vunpack.c.l.b16 %v2219
    %v5907 = vunpack.c.l.b16 %v2220
    %v5908 = vunpack.c.l.b16 %v2221
    %v5909 = vunpack.c.l.b16 %v2222
    %v5910 = vunpack.c.l.b16 %v2223
    %v5911 = vunpack.c.l.b16 %v2224
    %v5912 = vunpack.c.l.b16 %v2225
    %v5913 = vunpack.c.l.b16 %v2226
    %v5914 = vunpack.c.l.b16 %v2227
    %v5915 = vunpack.c.l.b16 %v2228
    %v5916 = vunpack.c.l.b16 %v2229
    %v5917 = vunpack.c.l.b16 %v2230
    %v5918 = vunpack.c.l.b16 %v2231
    %v5919 = vunpack.c.l.b16 %v2232
    %v5920 = vunpack.c.l.b16 %v2233
    %v5921 = vunpack.c.l.b16 %v2234
    %v5922 = vunpack.c.l.b16 %v2235
    %v5923 = vunpack.c.l.b16 %v2236
    %v5924 = vunpack.c.l.b16 %v2237
    %v5925 = vunpack.c.l.b16 %v2238
    %v5926 = vunpack.c.l.b16 %v2239
    %v5927 = vunpack.c.l.b16 %v2240
    %v5928 = vunpack.c.l.b16 %v2241
    %v5929 = vunpack.c.l.b16 %v2242
    %v5930 = vunpack.c.l.b16 %v2243
    %v5931 = vunpack.c.l.b16 %v2244
    %v5932 = vunpack.c.l.b16 %v2245
    %v5933 = vunpack.c.l.b16 %v2246
    %v5934 = vunpack.c.l.b16 %v2247
    %v5935 = vunpack.c.l.b16 %v2248
    %v5936 = vunpack.c.l.b16 %v2249
    %v5937 = vunpack.c.l.b16 %v2250
    %v5938 = vunpack.c.l.b16 %v2251
    %v5939 = vunpack.c.l.b16 %v2252
    %v5940 = vunpack.c.l.b16 %v2253
    %v5941 = vunpack.c.l.b16 %v2254
    %v5942 = vunpack.c.l.b16 %v2255
    %v5943 = vunpack.c.l.b16 %v2256
    %v5944 = vunpack.c.l.b16 %v2257
    %v5945 = vunpack.c.l.b16 %v2258
    %v5946 = vunpack.c.l.b16 %v2259
    %v5947 = vunpack.c.l.b16 %v2260
    %v5948 = vunpack.c.l.b16 %v2261
    %v5949 = vunpack.c.l.b16 %v2262
    %v5950 = vunpack.c.l.b16 %v2263
    %v5951 = vunpack.c.l.b16 %v2264
    %v5952 = vunpack.c.l.b16 %v2265
    %v5953 = vunpack.c.l.b16 %v2266
    %v5954 = vunpack.c.l.b16 %v2267
    %v5955 = vunpack.c.l.b16 %v2268
    %v5956 = vunpack.c.l.b16 %v2269
    %v5957 = vpack.c.b16 %v5894, %v5893
    %v5958 = vpack.c.b16 %v5896, %v5895
    %v5959 = vpack.c.b16 %v5898, %v5897
    %v5960 = vpack.c.b16 %v5900, %v5899
    %v5961 = vpack.c.b16 %v5902, %v5901
    %v5962 = vpack.c.b16 %v5904, %v5903
    %v5963 = vpack.c.b16 %v5906, %v5905
    %v5964 = vpack.c.b16 %v5908, %v5907
    %v5965 = vpack.c.b16 %v5910, %v5909
    %v5966 = vpack.c.b16 %v5912, %v5911
    %v5967 = vpack.c.b16 %v5914, %v5913
    %v5968 = vpack.c.b16 %v5916, %v5915
    %v5969 = vpack.c.b16 %v5918, %v5917
    %v5970 = vpack.c.b16 %v5920, %v5919
    %v5971 = vpack.c.b16 %v5922, %v5921
    %v5972 = vpack.c.b16 %v5924, %v5923
    %v5973 = vpack.c.b16 %v5926, %v5925
    %v5974 = vpack.c.b16 %v5928, %v5927
    %v5975 = vpack.c.b16 %v5930, %v5929
    %v5976 = vpack.c.b16 %v5932, %v5931
    %v5977 = vpack.c.b16 %v5934, %v5933
    %v5978 = vpack.c.b16 %v5936, %v5935
    %v5979 = vpack.c.b16 %v5938, %v5937
    %v5980 = vpack.c.b16 %v5940, %v5939
    %v5981 = vpack.c.b16 %v5942, %v5941
    %v5982 = vpack.c.b16 %v5944, %v5943
    %v5983 = vpack.c.b16 %v5946, %v5945
    %v5984 = vpack.c.b16 %v5948, %v5947
    %v5985 = vpack.c.b16 %v5950, %v5949
    %v5986 = vpack.c.b16 %v5952, %v5951
    %v5987 = vpack.c.b16 %v5954, %v5953
    %v5988 = vpack.c.b16 %v5956, %v5955
    %v5989 = vunpack.c.l.b16 %v2318
    %v5990 = vunpack.c.l.b16 %v2328
    %v5991 = vunpack.c.l.b16 %v2342
    %v5992 = vunpack.c.l.b16 %v2352
    %v5993 = vunpack.c.l.b16 %v2366
    %v5994 = vunpack.c.l.b16 %v2376
    %v5995 = vunpack.c.l.b16 %v2390
    %v5996 = vunpack.c.l.b16 %v2400
    %v5997 = vunpack.c.l.b16 %v2414
    %v5998 = vunpack.c.l.b16 %v2424
    %v5999 = vunpack.c.l.b16 %v2438
    %v6000 = vunpack.c.l.b16 %v2448
    %v6001 = vunpack.c.l.b16 %v2462
    %v6002 = vunpack.c.l.b16 %v2472
    %v6003 = vunpack.c.l.b16 %v2486
    %v6004 = vunpack.c.l.b16 %v2496
    %v6005 = vunpack.c.l.b16 %v2510
    %v6006 = vunpack.c.l.b16 %v2520
    %v6007 = vunpack.c.l.b16 %v2534
    %v6008 = vunpack.c.l.b16 %v2544
    %v6009 = vunpack.c.l.b16 %v2558
    %v6010 = vunpack.c.l.b16 %v2568
    %v6011 = vunpack.c.l.b16 %v2582
    %v6012 = vunpack.c.l.b16 %v2592
    %v6013 = vunpack.c.l.b16 %v2606
    %v6014 = vunpack.c.l.b16 %v2616
    %v6015 = vunpack.c.l.b16 %v2630
    %v6016 = vunpack.c.l.b16 %v2640
    %v6017 = vunpack.c.l.b16 %v2654
    %v6018 = vunpack.c.l.b16 %v2664
    %v6019 = vunpack.c.l.b16 %v2678
    %v6020 = vunpack.c.l.b16 %v2688
    %v6021 = vunpack.c.l.b16 %v2702
    %v6022 = vunpack.c.l.b16 %v2712
    %v6023 = vunpack.c.l.b16 %v2726
    %v6024 = vunpack.c.l.b16 %v2736
    %v6025 = vunpack.c.l.b16 %v2750
    %v6026 = vunpack.c.l.b16 %v2760
    %v6027 = vunpack.c.l.b16 %v2774
    %v6028 = vunpack.c.l.b16 %v2784
    %v6029 = vunpack.c.l.b16 %v2798
    %v6030 = vunpack.c.l.b16 %v2808
    %v6031 = vunpack.c.l.b16 %v2822
    %v6032 = vunpack.c.l.b16 %v2832
    %v6033 = vunpack.c.l.b16 %v2846
    %v6034 = vunpack.c.l.b16 %v2856
    %v6035 = vunpack.c.l.b16 %v2870
    %v6036 = vunpack.c.l.b16 %v2880
    %v6037 = vunpack.c.l.b16 %v2894
    %v6038 = vunpack.c.l.b16 %v2904
    %v6039 = vunpack.c.l.b16 %v2918
    %v6040 = vunpack.c.l.b16 %v2928
    %v6041 = vunpack.c.l.b16 %v2942
    %v6042 = vunpack.c.l.b16 %v2952
    %v6043 = vunpack.c.l.b16 %v2966
    %v6044 = vunpack.c.l.b16 %v2976
    %v6045 = vunpack.c.l.b16 %v2990
    %v6046 = vunpack.c.l.b16 %v3000
    %v6047 = vunpack.c.l.b16 %v3014
    %v6048 = vunpack.c.l.b16 %v3024
    %v6049 = vunpack.c.l.b16 %v3038
    %v6050 = vunpack.c.l.b16 %v3048
    %v6051 = vunpack.c.l.b16 %v3062
    %v6052 = vunpack.c.l.b16 %v3072
    %v6053 = vpack.c.b16 %v5990, %v5989
    %v6054 = vpack.c.b16 %v5992, %v5991
    %v6055 = vpack.c.b16 %v5994, %v5993
    %v6056 = vpack.c.b16 %v5996, %v5995
    %v6057 = vpack.c.b16 %v5998, %v5997
    %v6058 = vpack.c.b16 %v6000, %v5999
    %v6059 = vpack.c.b16 %v6002, %v6001
    %v6060 = vpack.c.b16 %v6004, %v6003
    %v6061 = vpack.c.b16 %v6006, %v6005
    %v6062 = vpack.c.b16 %v6008, %v6007
    %v6063 = vpack.c.b16 %v6010, %v6009
    %v6064 = vpack.c.b16 %v6012, %v6011
    %v6065 = vpack.c.b16 %v6014, %v6013
    %v6066 = vpack.c.b16 %v6016, %v6015
    %v6067 = vpack.c.b16 %v6018, %v6017
    %v6068 = vpack.c.b16 %v6020, %v6019
    %v6069 = vpack.c.b16 %v6022, %v6021
    %v6070 = vpack.c.b16 %v6024, %v6023
    %v6071 = vpack.c.b16 %v6026, %v6025
    %v6072 = vpack.c.b16 %v6028, %v6027
    %v6073 = vpack.c.b16 %v6030, %v6029
    %v6074 = vpack.c.b16 %v6032, %v6031
    %v6075 = vpack.c.b16 %v6034, %v6033
    %v6076 = vpack.c.b16 %v6036, %v6035
    %v6077 = vpack.c.b16 %v6038, %v6037
    %v6078 = vpack.c.b16 %v6040, %v6039
    %v6079 = vpack.c.b16 %v6042, %v6041
    %v6080 = vpack.c.b16 %v6044, %v6043
    %v6081 = vpack.c.b16 %v6046, %v6045
    %v6082 = vpack.c.b16 %v6048, %v6047
    %v6083 = vpack.c.b16 %v6050, %v6049
    %v6084 = vpack.c.b16 %v6052, %v6051
    %6085 = vrot.lane.b32.xlu0 %v6053, 32
    %v6086 = vpop.permute.xlu0 %6085
    %6087 = vrot.lane.b32.xlu0 %v6054, 32
    %v6088 = vpop.permute.xlu0 %6087
    %6089 = vrot.lane.b32.xlu0 %v6055, 32
    %v6090 = vpop.permute.xlu0 %6089
    %6091 = vrot.lane.b32.xlu0 %v6056, 32
    %v6092 = vpop.permute.xlu0 %6091
    %6093 = vrot.lane.b32.xlu0 %v6057, 32
    %v6094 = vpop.permute.xlu0 %6093
    %6095 = vrot.lane.b32.xlu0 %v6058, 32
    %v6096 = vpop.permute.xlu0 %6095
    %6097 = vrot.lane.b32.xlu0 %v6059, 32
    %v6098 = vpop.permute.xlu0 %6097
    %6099 = vrot.lane.b32.xlu0 %v6060, 32
    %v6100 = vpop.permute.xlu0 %6099
    %6101 = vrot.lane.b32.xlu0 %v6061, 32
    %v6102 = vpop.permute.xlu0 %6101
    %6103 = vrot.lane.b32.xlu0 %v6062, 32
    %v6104 = vpop.permute.xlu0 %6103
    %6105 = vrot.lane.b32.xlu0 %v6063, 32
    %v6106 = vpop.permute.xlu0 %6105
    %6107 = vrot.lane.b32.xlu0 %v6064, 32
    %v6108 = vpop.permute.xlu0 %6107
    %6109 = vrot.lane.b32.xlu0 %v6065, 32
    %v6110 = vpop.permute.xlu0 %6109
    %6111 = vrot.lane.b32.xlu0 %v6066, 32
    %v6112 = vpop.permute.xlu0 %6111
    %6113 = vrot.lane.b32.xlu0 %v6067, 32
    %v6114 = vpop.permute.xlu0 %6113
    %6115 = vrot.lane.b32.xlu0 %v6068, 32
    %v6116 = vpop.permute.xlu0 %6115
    %6117 = vrot.lane.b32.xlu0 %v6069, 32
    %v6118 = vpop.permute.xlu0 %6117
    %6119 = vrot.lane.b32.xlu0 %v6070, 32
    %v6120 = vpop.permute.xlu0 %6119
    %6121 = vrot.lane.b32.xlu0 %v6071, 32
    %v6122 = vpop.permute.xlu0 %6121
    %6123 = vrot.lane.b32.xlu0 %v6072, 32
    %v6124 = vpop.permute.xlu0 %6123
    %6125 = vrot.lane.b32.xlu0 %v6073, 32
    %v6126 = vpop.permute.xlu0 %6125
    %6127 = vrot.lane.b32.xlu0 %v6074, 32
    %v6128 = vpop.permute.xlu0 %6127
    %6129 = vrot.lane.b32.xlu0 %v6075, 32
    %v6130 = vpop.permute.xlu0 %6129
    %6131 = vrot.lane.b32.xlu0 %v6076, 32
    %v6132 = vpop.permute.xlu0 %6131
    %6133 = vrot.lane.b32.xlu0 %v6077, 32
    %v6134 = vpop.permute.xlu0 %6133
    %6135 = vrot.lane.b32.xlu0 %v6078, 32
    %v6136 = vpop.permute.xlu0 %6135
    %6137 = vrot.lane.b32.xlu0 %v6079, 32
    %v6138 = vpop.permute.xlu0 %6137
    %6139 = vrot.lane.b32.xlu0 %v6080, 32
    %v6140 = vpop.permute.xlu0 %6139
    %6141 = vrot.lane.b32.xlu0 %v6081, 32
    %v6142 = vpop.permute.xlu0 %6141
    %6143 = vrot.lane.b32.xlu0 %v6082, 32
    %v6144 = vpop.permute.xlu0 %6143
    %6145 = vrot.lane.b32.xlu0 %v6083, 32
    %v6146 = vpop.permute.xlu0 %6145
    %6147 = vrot.lane.b32.xlu0 %v6084, 32
    %v6148 = vpop.permute.xlu0 %6147
    %v6149 = vunpack.c.l.b16 %v3207
    %v6150 = vunpack.c.l.b16 %v3210
    %v6151 = vunpack.c.l.b16 %v3214
    %v6152 = vunpack.c.l.b16 %v3217
    %v6153 = vunpack.c.l.b16 %v3221
    %v6154 = vunpack.c.l.b16 %v3224
    %v6155 = vunpack.c.l.b16 %v3228
    %v6156 = vunpack.c.l.b16 %v3231
    %v6157 = vunpack.c.l.b16 %v3235
    %v6158 = vunpack.c.l.b16 %v3238
    %v6159 = vunpack.c.l.b16 %v3242
    %v6160 = vunpack.c.l.b16 %v3245
    %v6161 = vunpack.c.l.b16 %v3249
    %v6162 = vunpack.c.l.b16 %v3252
    %v6163 = vunpack.c.l.b16 %v3256
    %v6164 = vunpack.c.l.b16 %v3259
    %v6165 = vunpack.c.l.b16 %v3263
    %v6166 = vunpack.c.l.b16 %v3266
    %v6167 = vunpack.c.l.b16 %v3270
    %v6168 = vunpack.c.l.b16 %v3273
    %v6169 = vunpack.c.l.b16 %v3277
    %v6170 = vunpack.c.l.b16 %v3280
    %v6171 = vunpack.c.l.b16 %v3284
    %v6172 = vunpack.c.l.b16 %v3287
    %v6173 = vunpack.c.l.b16 %v3291
    %v6174 = vunpack.c.l.b16 %v3294
    %v6175 = vunpack.c.l.b16 %v3298
    %v6176 = vunpack.c.l.b16 %v3301
    %v6177 = vunpack.c.l.b16 %v3305
    %v6178 = vunpack.c.l.b16 %v3308
    %v6179 = vunpack.c.l.b16 %v3312
    %v6180 = vunpack.c.l.b16 %v3315
    %v6181 = vunpack.c.l.b16 %v3319
    %v6182 = vunpack.c.l.b16 %v3322
    %v6183 = vunpack.c.l.b16 %v3326
    %v6184 = vunpack.c.l.b16 %v3329
    %v6185 = vunpack.c.l.b16 %v3333
    %v6186 = vunpack.c.l.b16 %v3336
    %v6187 = vunpack.c.l.b16 %v3340
    %v6188 = vunpack.c.l.b16 %v3343
    %v6189 = vunpack.c.l.b16 %v3347
    %v6190 = vunpack.c.l.b16 %v3350
    %v6191 = vunpack.c.l.b16 %v3354
    %v6192 = vunpack.c.l.b16 %v3357
    %v6193 = vunpack.c.l.b16 %v3361
    %v6194 = vunpack.c.l.b16 %v3364
    %v6195 = vunpack.c.l.b16 %v3368
    %v6196 = vunpack.c.l.b16 %v3371
    %v6197 = vunpack.c.l.b16 %v3375
    %v6198 = vunpack.c.l.b16 %v3378
    %v6199 = vunpack.c.l.b16 %v3382
    %v6200 = vunpack.c.l.b16 %v3385
    %v6201 = vunpack.c.l.b16 %v3389
    %v6202 = vunpack.c.l.b16 %v3392
    %v6203 = vunpack.c.l.b16 %v3396
    %v6204 = vunpack.c.l.b16 %v3399
    %v6205 = vunpack.c.l.b16 %v3403
    %v6206 = vunpack.c.l.b16 %v3406
    %v6207 = vunpack.c.l.b16 %v3410
    %v6208 = vunpack.c.l.b16 %v3413
    %v6209 = vunpack.c.l.b16 %v3417
    %v6210 = vunpack.c.l.b16 %v3420
    %v6211 = vunpack.c.l.b16 %v3424
    %v6212 = vunpack.c.l.b16 %v3427
    %v6213 = vpack.c.b16 %v6150, %v6149
    %v6214 = vpack.c.b16 %v6152, %v6151
    %v6215 = vpack.c.b16 %v6154, %v6153
    %v6216 = vpack.c.b16 %v6156, %v6155
    %v6217 = vpack.c.b16 %v6158, %v6157
    %v6218 = vpack.c.b16 %v6160, %v6159
    %v6219 = vpack.c.b16 %v6162, %v6161
    %v6220 = vpack.c.b16 %v6164, %v6163
    %v6221 = vpack.c.b16 %v6166, %v6165
    %v6222 = vpack.c.b16 %v6168, %v6167
    %v6223 = vpack.c.b16 %v6170, %v6169
    %v6224 = vpack.c.b16 %v6172, %v6171
    %v6225 = vpack.c.b16 %v6174, %v6173
    %v6226 = vpack.c.b16 %v6176, %v6175
    %v6227 = vpack.c.b16 %v6178, %v6177
    %v6228 = vpack.c.b16 %v6180, %v6179
    %v6229 = vpack.c.b16 %v6182, %v6181
    %v6230 = vpack.c.b16 %v6184, %v6183
    %v6231 = vpack.c.b16 %v6186, %v6185
    %v6232 = vpack.c.b16 %v6188, %v6187
    %v6233 = vpack.c.b16 %v6190, %v6189
    %v6234 = vpack.c.b16 %v6192, %v6191
    %v6235 = vpack.c.b16 %v6194, %v6193
    %v6236 = vpack.c.b16 %v6196, %v6195
    %v6237 = vpack.c.b16 %v6198, %v6197
    %v6238 = vpack.c.b16 %v6200, %v6199
    %v6239 = vpack.c.b16 %v6202, %v6201
    %v6240 = vpack.c.b16 %v6204, %v6203
    %v6241 = vpack.c.b16 %v6206, %v6205
    %v6242 = vpack.c.b16 %v6208, %v6207
    %v6243 = vpack.c.b16 %v6210, %v6209
    %v6244 = vpack.c.b16 %v6212, %v6211
    %6245 = vrot.lane.b32.xlu0 %v6213, 64
    %v6246 = vpop.permute.xlu0 %6245
    %6247 = vrot.lane.b32.xlu0 %v6214, 64
    %v6248 = vpop.permute.xlu0 %6247
    %6249 = vrot.lane.b32.xlu0 %v6215, 64
    %v6250 = vpop.permute.xlu0 %6249
    %6251 = vrot.lane.b32.xlu0 %v6216, 64
    %v6252 = vpop.permute.xlu0 %6251
    %6253 = vrot.lane.b32.xlu0 %v6217, 64
    %v6254 = vpop.permute.xlu0 %6253
    %6255 = vrot.lane.b32.xlu0 %v6218, 64
    %v6256 = vpop.permute.xlu0 %6255
    %6257 = vrot.lane.b32.xlu0 %v6219, 64
    %v6258 = vpop.permute.xlu0 %6257
    %6259 = vrot.lane.b32.xlu0 %v6220, 64
    %v6260 = vpop.permute.xlu0 %6259
    %6261 = vrot.lane.b32.xlu0 %v6221, 64
    %v6262 = vpop.permute.xlu0 %6261
    %6263 = vrot.lane.b32.xlu0 %v6222, 64
    %v6264 = vpop.permute.xlu0 %6263
    %6265 = vrot.lane.b32.xlu0 %v6223, 64
    %v6266 = vpop.permute.xlu0 %6265
    %6267 = vrot.lane.b32.xlu0 %v6224, 64
    %v6268 = vpop.permute.xlu0 %6267
    %6269 = vrot.lane.b32.xlu0 %v6225, 64
    %v6270 = vpop.permute.xlu0 %6269
    %6271 = vrot.lane.b32.xlu0 %v6226, 64
    %v6272 = vpop.permute.xlu0 %6271
    %6273 = vrot.lane.b32.xlu0 %v6227, 64
    %v6274 = vpop.permute.xlu0 %6273
    %6275 = vrot.lane.b32.xlu0 %v6228, 64
    %v6276 = vpop.permute.xlu0 %6275
    %6277 = vrot.lane.b32.xlu0 %v6229, 64
    %v6278 = vpop.permute.xlu0 %6277
    %6279 = vrot.lane.b32.xlu0 %v6230, 64
    %v6280 = vpop.permute.xlu0 %6279
    %6281 = vrot.lane.b32.xlu0 %v6231, 64
    %v6282 = vpop.permute.xlu0 %6281
    %6283 = vrot.lane.b32.xlu0 %v6232, 64
    %v6284 = vpop.permute.xlu0 %6283
    %6285 = vrot.lane.b32.xlu0 %v6233, 64
    %v6286 = vpop.permute.xlu0 %6285
    %6287 = vrot.lane.b32.xlu0 %v6234, 64
    %v6288 = vpop.permute.xlu0 %6287
    %6289 = vrot.lane.b32.xlu0 %v6235, 64
    %v6290 = vpop.permute.xlu0 %6289
    %6291 = vrot.lane.b32.xlu0 %v6236, 64
    %v6292 = vpop.permute.xlu0 %6291
    %6293 = vrot.lane.b32.xlu0 %v6237, 64
    %v6294 = vpop.permute.xlu0 %6293
    %6295 = vrot.lane.b32.xlu0 %v6238, 64
    %v6296 = vpop.permute.xlu0 %6295
    %6297 = vrot.lane.b32.xlu0 %v6239, 64
    %v6298 = vpop.permute.xlu0 %6297
    %6299 = vrot.lane.b32.xlu0 %v6240, 64
    %v6300 = vpop.permute.xlu0 %6299
    %6301 = vrot.lane.b32.xlu0 %v6241, 64
    %v6302 = vpop.permute.xlu0 %6301
    %6303 = vrot.lane.b32.xlu0 %v6242, 64
    %v6304 = vpop.permute.xlu0 %6303
    %6305 = vrot.lane.b32.xlu0 %v6243, 64
    %v6306 = vpop.permute.xlu0 %6305
    %6307 = vrot.lane.b32.xlu0 %v6244, 64
    %v6308 = vpop.permute.xlu0 %6307
    %v6341 = vunpack.c.l.b16 %v3428
    %v6342 = vunpack.c.l.b16 %v3429
    %v6343 = vunpack.c.l.b16 %v3430
    %v6344 = vunpack.c.l.b16 %v3431
    %v6345 = vunpack.c.l.b16 %v3432
    %v6346 = vunpack.c.l.b16 %v3433
    %v6347 = vunpack.c.l.b16 %v3434
    %v6348 = vunpack.c.l.b16 %v3435
    %v6349 = vunpack.c.l.b16 %v3436
    %v6350 = vunpack.c.l.b16 %v3437
    %v6351 = vunpack.c.l.b16 %v3438
    %v6352 = vunpack.c.l.b16 %v3439
    %v6353 = vunpack.c.l.b16 %v3440
    %v6354 = vunpack.c.l.b16 %v3441
    %v6355 = vunpack.c.l.b16 %v3442
    %v6356 = vunpack.c.l.b16 %v3443
    %v6357 = vunpack.c.l.b16 %v3444
    %v6358 = vunpack.c.l.b16 %v3445
    %v6359 = vunpack.c.l.b16 %v3446
    %v6360 = vunpack.c.l.b16 %v3447
    %v6361 = vunpack.c.l.b16 %v3448
    %v6362 = vunpack.c.l.b16 %v3449
    %v6363 = vunpack.c.l.b16 %v3450
    %v6364 = vunpack.c.l.b16 %v3451
    %v6365 = vunpack.c.l.b16 %v3452
    %v6366 = vunpack.c.l.b16 %v3453
    %v6367 = vunpack.c.l.b16 %v3454
    %v6368 = vunpack.c.l.b16 %v3455
    %v6369 = vunpack.c.l.b16 %v3456
    %v6370 = vunpack.c.l.b16 %v3457
    %v6371 = vunpack.c.l.b16 %v3458
    %v6372 = vunpack.c.l.b16 %v3459
    %v6373 = vunpack.c.l.b16 %v3460
    %v6374 = vunpack.c.l.b16 %v3461
    %v6375 = vunpack.c.l.b16 %v3462
    %v6376 = vunpack.c.l.b16 %v3463
    %v6377 = vunpack.c.l.b16 %v3464
    %v6378 = vunpack.c.l.b16 %v3465
    %v6379 = vunpack.c.l.b16 %v3466
    %v6380 = vunpack.c.l.b16 %v3467
    %v6381 = vunpack.c.l.b16 %v3468
    %v6382 = vunpack.c.l.b16 %v3469
    %v6383 = vunpack.c.l.b16 %v3470
    %v6384 = vunpack.c.l.b16 %v3471
    %v6385 = vunpack.c.l.b16 %v3472
    %v6386 = vunpack.c.l.b16 %v3473
    %v6387 = vunpack.c.l.b16 %v3474
    %v6388 = vunpack.c.l.b16 %v3475
    %v6389 = vunpack.c.l.b16 %v3476
    %v6390 = vunpack.c.l.b16 %v3477
    %v6391 = vunpack.c.l.b16 %v3478
    %v6392 = vunpack.c.l.b16 %v3479
    %v6393 = vunpack.c.l.b16 %v3480
    %v6394 = vunpack.c.l.b16 %v3481
    %v6395 = vunpack.c.l.b16 %v3482
    %v6396 = vunpack.c.l.b16 %v3483
    %v6397 = vunpack.c.l.b16 %v3484
    %v6398 = vunpack.c.l.b16 %v3485
    %v6399 = vunpack.c.l.b16 %v3486
    %v6400 = vunpack.c.l.b16 %v3487
    %v6401 = vunpack.c.l.b16 %v3488
    %v6402 = vunpack.c.l.b16 %v3489
    %v6403 = vunpack.c.l.b16 %v3490
    %v6404 = vunpack.c.l.b16 %v3491
    %v6405 = vpack.c.b16 %v6342, %v6341
    %v6406 = vpack.c.b16 %v6344, %v6343
    %v6407 = vpack.c.b16 %v6346, %v6345
    %v6408 = vpack.c.b16 %v6348, %v6347
    %v6409 = vpack.c.b16 %v6350, %v6349
    %v6410 = vpack.c.b16 %v6352, %v6351
    %v6411 = vpack.c.b16 %v6354, %v6353
    %v6412 = vpack.c.b16 %v6356, %v6355
    %v6413 = vpack.c.b16 %v6358, %v6357
    %v6414 = vpack.c.b16 %v6360, %v6359
    %v6415 = vpack.c.b16 %v6362, %v6361
    %v6416 = vpack.c.b16 %v6364, %v6363
    %v6417 = vpack.c.b16 %v6366, %v6365
    %v6418 = vpack.c.b16 %v6368, %v6367
    %v6419 = vpack.c.b16 %v6370, %v6369
    %v6420 = vpack.c.b16 %v6372, %v6371
    %v6421 = vpack.c.b16 %v6374, %v6373
    %v6422 = vpack.c.b16 %v6376, %v6375
    %v6423 = vpack.c.b16 %v6378, %v6377
    %v6424 = vpack.c.b16 %v6380, %v6379
    %v6425 = vpack.c.b16 %v6382, %v6381
    %v6426 = vpack.c.b16 %v6384, %v6383
    %v6427 = vpack.c.b16 %v6386, %v6385
    %v6428 = vpack.c.b16 %v6388, %v6387
    %v6429 = vpack.c.b16 %v6390, %v6389
    %v6430 = vpack.c.b16 %v6392, %v6391
    %v6431 = vpack.c.b16 %v6394, %v6393
    %v6432 = vpack.c.b16 %v6396, %v6395
    %v6433 = vpack.c.b16 %v6398, %v6397
    %v6434 = vpack.c.b16 %v6400, %v6399
    %v6435 = vpack.c.b16 %v6402, %v6401
    %v6436 = vpack.c.b16 %v6404, %v6403
    %6437 = vrot.lane.b32.xlu0 %v6405, 96
    %v6438 = vpop.permute.xlu0 %6437
    %6439 = vrot.lane.b32.xlu0 %v6406, 96
    %v6440 = vpop.permute.xlu0 %6439
    %6441 = vrot.lane.b32.xlu0 %v6407, 96
    %v6442 = vpop.permute.xlu0 %6441
    %6443 = vrot.lane.b32.xlu0 %v6408, 96
    %v6444 = vpop.permute.xlu0 %6443
    %6445 = vrot.lane.b32.xlu0 %v6409, 96
    %v6446 = vpop.permute.xlu0 %6445
    %6447 = vrot.lane.b32.xlu0 %v6410, 96
    %v6448 = vpop.permute.xlu0 %6447
    %6449 = vrot.lane.b32.xlu0 %v6411, 96
    %v6450 = vpop.permute.xlu0 %6449
    %6451 = vrot.lane.b32.xlu0 %v6412, 96
    %v6452 = vpop.permute.xlu0 %6451
    %6453 = vrot.lane.b32.xlu0 %v6413, 96
    %v6454 = vpop.permute.xlu0 %6453
    %6455 = vrot.lane.b32.xlu0 %v6414, 96
    %v6456 = vpop.permute.xlu0 %6455
    %6457 = vrot.lane.b32.xlu0 %v6415, 96
    %v6458 = vpop.permute.xlu0 %6457
    %6459 = vrot.lane.b32.xlu0 %v6416, 96
    %v6460 = vpop.permute.xlu0 %6459
    %6461 = vrot.lane.b32.xlu0 %v6417, 96
    %v6462 = vpop.permute.xlu0 %6461
    %6463 = vrot.lane.b32.xlu0 %v6418, 96
    %v6464 = vpop.permute.xlu0 %6463
    %6465 = vrot.lane.b32.xlu0 %v6419, 96
    %v6466 = vpop.permute.xlu0 %6465
    %6467 = vrot.lane.b32.xlu0 %v6420, 96
    %v6468 = vpop.permute.xlu0 %6467
    %6469 = vrot.lane.b32.xlu0 %v6421, 96
    %v6470 = vpop.permute.xlu0 %6469
    %6471 = vrot.lane.b32.xlu0 %v6422, 96
    %v6472 = vpop.permute.xlu0 %6471
    %6473 = vrot.lane.b32.xlu0 %v6423, 96
    %v6474 = vpop.permute.xlu0 %6473
    %6475 = vrot.lane.b32.xlu0 %v6424, 96
    %v6476 = vpop.permute.xlu0 %6475
    %6477 = vrot.lane.b32.xlu0 %v6425, 96
    %v6478 = vpop.permute.xlu0 %6477
    %6479 = vrot.lane.b32.xlu0 %v6426, 96
    %v6480 = vpop.permute.xlu0 %6479
    %6481 = vrot.lane.b32.xlu0 %v6427, 96
    %v6482 = vpop.permute.xlu0 %6481
    %6483 = vrot.lane.b32.xlu0 %v6428, 96
    %v6484 = vpop.permute.xlu0 %6483
    %6485 = vrot.lane.b32.xlu0 %v6429, 96
    %v6486 = vpop.permute.xlu0 %6485
    %6487 = vrot.lane.b32.xlu0 %v6430, 96
    %v6488 = vpop.permute.xlu0 %6487
    %6489 = vrot.lane.b32.xlu0 %v6431, 96
    %v6490 = vpop.permute.xlu0 %6489
    %6491 = vrot.lane.b32.xlu0 %v6432, 96
    %v6492 = vpop.permute.xlu0 %6491
    %6493 = vrot.lane.b32.xlu0 %v6433, 96
    %v6494 = vpop.permute.xlu0 %6493
    %6495 = vrot.lane.b32.xlu0 %v6434, 96
    %v6496 = vpop.permute.xlu0 %6495
    %6497 = vrot.lane.b32.xlu0 %v6435, 96
    %v6498 = vpop.permute.xlu0 %6497
    %6499 = vrot.lane.b32.xlu0 %v6436, 96
    %v6500 = vpop.permute.xlu0 %6499
    %v6501 = vunpack.c.l.b16 %v3537
    %v6502 = vunpack.c.l.b16 %v3547
    %v6503 = vunpack.c.l.b16 %v3561
    %v6504 = vunpack.c.l.b16 %v3571
    %v6505 = vunpack.c.l.b16 %v3585
    %v6506 = vunpack.c.l.b16 %v3595
    %v6507 = vunpack.c.l.b16 %v3609
    %v6508 = vunpack.c.l.b16 %v3619
    %v6509 = vunpack.c.l.b16 %v3633
    %v6510 = vunpack.c.l.b16 %v3643
    %v6511 = vunpack.c.l.b16 %v3657
    %v6512 = vunpack.c.l.b16 %v3667
    %v6513 = vunpack.c.l.b16 %v3681
    %v6514 = vunpack.c.l.b16 %v3691
    %v6515 = vunpack.c.l.b16 %v3705
    %v6516 = vunpack.c.l.b16 %v3715
    %v6517 = vunpack.c.l.b16 %v3729
    %v6518 = vunpack.c.l.b16 %v3739
    %v6519 = vunpack.c.l.b16 %v3753
    %v6520 = vunpack.c.l.b16 %v3763
    %v6521 = vunpack.c.l.b16 %v3777
    %v6522 = vunpack.c.l.b16 %v3787
    %v6523 = vunpack.c.l.b16 %v3801
    %v6524 = vunpack.c.l.b16 %v3811
    %v6525 = vunpack.c.l.b16 %v3825
    %v6526 = vunpack.c.l.b16 %v3835
    %v6527 = vunpack.c.l.b16 %v3849
    %v6528 = vunpack.c.l.b16 %v3859
    %v6529 = vunpack.c.l.b16 %v3873
    %v6530 = vunpack.c.l.b16 %v3883
    %v6531 = vunpack.c.l.b16 %v3897
    %v6532 = vunpack.c.l.b16 %v3907
    %v6533 = vunpack.c.l.b16 %v3921
    %v6534 = vunpack.c.l.b16 %v3931
    %v6535 = vunpack.c.l.b16 %v3945
    %v6536 = vunpack.c.l.b16 %v3955
    %v6537 = vunpack.c.l.b16 %v3969
    %v6538 = vunpack.c.l.b16 %v3979
    %v6539 = vunpack.c.l.b16 %v3993
    %v6540 = vunpack.c.l.b16 %v4003
    %v6541 = vunpack.c.l.b16 %v4017
    %v6542 = vunpack.c.l.b16 %v4027
    %v6543 = vunpack.c.l.b16 %v4041
    %v6544 = vunpack.c.l.b16 %v4051
    %v6545 = vunpack.c.l.b16 %v4065
    %v6546 = vunpack.c.l.b16 %v4075
    %v6547 = vunpack.c.l.b16 %v4089
    %v6548 = vunpack.c.l.b16 %v4099
    %v6549 = vunpack.c.l.b16 %v4113
    %v6550 = vunpack.c.l.b16 %v4123
    %v6551 = vunpack.c.l.b16 %v4137
    %v6552 = vunpack.c.l.b16 %v4147
    %v6553 = vunpack.c.l.b16 %v4161
    %v6554 = vunpack.c.l.b16 %v4171
    %v6555 = vunpack.c.l.b16 %v4185
    %v6556 = vunpack.c.l.b16 %v4195
    %v6557 = vunpack.c.l.b16 %v4209
    %v6558 = vunpack.c.l.b16 %v4219
    %v6559 = vunpack.c.l.b16 %v4233
    %v6560 = vunpack.c.l.b16 %v4243
    %v6561 = vunpack.c.l.b16 %v4257
    %v6562 = vunpack.c.l.b16 %v4267
    %v6563 = vunpack.c.l.b16 %v4281
    %v6564 = vunpack.c.l.b16 %v4291
    %v6565 = vpack.c.b16 %v6502, %v6501
    %v6566 = vpack.c.b16 %v6504, %v6503
    %v6567 = vpack.c.b16 %v6506, %v6505
    %v6568 = vpack.c.b16 %v6508, %v6507
    %v6569 = vpack.c.b16 %v6510, %v6509
    %v6570 = vpack.c.b16 %v6512, %v6511
    %v6571 = vpack.c.b16 %v6514, %v6513
    %v6572 = vpack.c.b16 %v6516, %v6515
    %v6573 = vpack.c.b16 %v6518, %v6517
    %v6574 = vpack.c.b16 %v6520, %v6519
    %v6575 = vpack.c.b16 %v6522, %v6521
    %v6576 = vpack.c.b16 %v6524, %v6523
    %v6577 = vpack.c.b16 %v6526, %v6525
    %v6578 = vpack.c.b16 %v6528, %v6527
    %v6579 = vpack.c.b16 %v6530, %v6529
    %v6580 = vpack.c.b16 %v6532, %v6531
    %v6581 = vpack.c.b16 %v6534, %v6533
    %v6582 = vpack.c.b16 %v6536, %v6535
    %v6583 = vpack.c.b16 %v6538, %v6537
    %v6584 = vpack.c.b16 %v6540, %v6539
    %v6585 = vpack.c.b16 %v6542, %v6541
    %v6586 = vpack.c.b16 %v6544, %v6543
    %v6587 = vpack.c.b16 %v6546, %v6545
    %v6588 = vpack.c.b16 %v6548, %v6547
    %v6589 = vpack.c.b16 %v6550, %v6549
    %v6590 = vpack.c.b16 %v6552, %v6551
    %v6591 = vpack.c.b16 %v6554, %v6553
    %v6592 = vpack.c.b16 %v6556, %v6555
    %v6593 = vpack.c.b16 %v6558, %v6557
    %v6594 = vpack.c.b16 %v6560, %v6559
    %v6595 = vpack.c.b16 %v6562, %v6561
    %v6596 = vpack.c.b16 %v6564, %v6563
    %v6597 = vunpack.c.l.b16 %v4423
    %v6598 = vunpack.c.l.b16 %v4426
    %v6599 = vunpack.c.l.b16 %v4430
    %v6600 = vunpack.c.l.b16 %v4433
    %v6601 = vunpack.c.l.b16 %v4437
    %v6602 = vunpack.c.l.b16 %v4440
    %v6603 = vunpack.c.l.b16 %v4444
    %v6604 = vunpack.c.l.b16 %v4447
    %v6605 = vunpack.c.l.b16 %v4451
    %v6606 = vunpack.c.l.b16 %v4454
    %v6607 = vunpack.c.l.b16 %v4458
    %v6608 = vunpack.c.l.b16 %v4461
    %v6609 = vunpack.c.l.b16 %v4465
    %v6610 = vunpack.c.l.b16 %v4468
    %v6611 = vunpack.c.l.b16 %v4472
    %v6612 = vunpack.c.l.b16 %v4475
    %v6613 = vunpack.c.l.b16 %v4479
    %v6614 = vunpack.c.l.b16 %v4482
    %v6615 = vunpack.c.l.b16 %v4486
    %v6616 = vunpack.c.l.b16 %v4489
    %v6617 = vunpack.c.l.b16 %v4493
    %v6618 = vunpack.c.l.b16 %v4496
    %v6619 = vunpack.c.l.b16 %v4500
    %v6620 = vunpack.c.l.b16 %v4503
    %v6621 = vunpack.c.l.b16 %v4507
    %v6622 = vunpack.c.l.b16 %v4510
    %v6623 = vunpack.c.l.b16 %v4514
    %v6624 = vunpack.c.l.b16 %v4517
    %v6625 = vunpack.c.l.b16 %v4521
    %v6626 = vunpack.c.l.b16 %v4524
    %v6627 = vunpack.c.l.b16 %v4528
    %v6628 = vunpack.c.l.b16 %v4531
    %v6629 = vunpack.c.l.b16 %v4535
    %v6630 = vunpack.c.l.b16 %v4538
    %v6631 = vunpack.c.l.b16 %v4542
    %v6632 = vunpack.c.l.b16 %v4545
    %v6633 = vunpack.c.l.b16 %v4549
    %v6634 = vunpack.c.l.b16 %v4552
    %v6635 = vunpack.c.l.b16 %v4556
    %v6636 = vunpack.c.l.b16 %v4559
    %v6637 = vunpack.c.l.b16 %v4563
    %v6638 = vunpack.c.l.b16 %v4566
    %v6639 = vunpack.c.l.b16 %v4570
    %v6640 = vunpack.c.l.b16 %v4573
    %v6641 = vunpack.c.l.b16 %v4577
    %v6642 = vunpack.c.l.b16 %v4580
    %v6643 = vunpack.c.l.b16 %v4584
    %v6644 = vunpack.c.l.b16 %v4587
    %v6645 = vunpack.c.l.b16 %v4591
    %v6646 = vunpack.c.l.b16 %v4594
    %v6647 = vunpack.c.l.b16 %v4598
    %v6648 = vunpack.c.l.b16 %v4601
    %v6649 = vunpack.c.l.b16 %v4605
    %v6650 = vunpack.c.l.b16 %v4608
    %v6651 = vunpack.c.l.b16 %v4612
    %v6652 = vunpack.c.l.b16 %v4615
    %v6653 = vunpack.c.l.b16 %v4619
    %v6654 = vunpack.c.l.b16 %v4622
    %v6655 = vunpack.c.l.b16 %v4626
    %v6656 = vunpack.c.l.b16 %v4629
    %v6657 = vunpack.c.l.b16 %v4633
    %v6658 = vunpack.c.l.b16 %v4636
    %v6659 = vunpack.c.l.b16 %v4640
    %v6660 = vunpack.c.l.b16 %v4643
    %v6661 = vpack.c.b16 %v6598, %v6597
    %v6662 = vpack.c.b16 %v6600, %v6599
    %v6663 = vpack.c.b16 %v6602, %v6601
    %v6664 = vpack.c.b16 %v6604, %v6603
    %v6665 = vpack.c.b16 %v6606, %v6605
    %v6666 = vpack.c.b16 %v6608, %v6607
    %v6667 = vpack.c.b16 %v6610, %v6609
    %v6668 = vpack.c.b16 %v6612, %v6611
    %v6669 = vpack.c.b16 %v6614, %v6613
    %v6670 = vpack.c.b16 %v6616, %v6615
    %v6671 = vpack.c.b16 %v6618, %v6617
    %v6672 = vpack.c.b16 %v6620, %v6619
    %v6673 = vpack.c.b16 %v6622, %v6621
    %v6674 = vpack.c.b16 %v6624, %v6623
    %v6675 = vpack.c.b16 %v6626, %v6625
    %v6676 = vpack.c.b16 %v6628, %v6627
    %v6677 = vpack.c.b16 %v6630, %v6629
    %v6678 = vpack.c.b16 %v6632, %v6631
    %v6679 = vpack.c.b16 %v6634, %v6633
    %v6680 = vpack.c.b16 %v6636, %v6635
    %v6681 = vpack.c.b16 %v6638, %v6637
    %v6682 = vpack.c.b16 %v6640, %v6639
    %v6683 = vpack.c.b16 %v6642, %v6641
    %v6684 = vpack.c.b16 %v6644, %v6643
    %v6685 = vpack.c.b16 %v6646, %v6645
    %v6686 = vpack.c.b16 %v6648, %v6647
    %v6687 = vpack.c.b16 %v6650, %v6649
    %v6688 = vpack.c.b16 %v6652, %v6651
    %v6689 = vpack.c.b16 %v6654, %v6653
    %v6690 = vpack.c.b16 %v6656, %v6655
    %v6691 = vpack.c.b16 %v6658, %v6657
    %v6692 = vpack.c.b16 %v6660, %v6659
    %6693 = vrot.lane.b32.xlu0 %v6661, 32
    %v6694 = vpop.permute.xlu0 %6693
    %6695 = vrot.lane.b32.xlu0 %v6662, 32
    %v6696 = vpop.permute.xlu0 %6695
    %6697 = vrot.lane.b32.xlu0 %v6663, 32
    %v6698 = vpop.permute.xlu0 %6697
    %6699 = vrot.lane.b32.xlu0 %v6664, 32
    %v6700 = vpop.permute.xlu0 %6699
    %6701 = vrot.lane.b32.xlu0 %v6665, 32
    %v6702 = vpop.permute.xlu0 %6701
    %6703 = vrot.lane.b32.xlu0 %v6666, 32
    %v6704 = vpop.permute.xlu0 %6703
    %6705 = vrot.lane.b32.xlu0 %v6667, 32
    %v6706 = vpop.permute.xlu0 %6705
    %6707 = vrot.lane.b32.xlu0 %v6668, 32
    %v6708 = vpop.permute.xlu0 %6707
    %6709 = vrot.lane.b32.xlu0 %v6669, 32
    %v6710 = vpop.permute.xlu0 %6709
    %6711 = vrot.lane.b32.xlu0 %v6670, 32
    %v6712 = vpop.permute.xlu0 %6711
    %6713 = vrot.lane.b32.xlu0 %v6671, 32
    %v6714 = vpop.permute.xlu0 %6713
    %6715 = vrot.lane.b32.xlu0 %v6672, 32
    %v6716 = vpop.permute.xlu0 %6715
    %6717 = vrot.lane.b32.xlu0 %v6673, 32
    %v6718 = vpop.permute.xlu0 %6717
    %6719 = vrot.lane.b32.xlu0 %v6674, 32
    %v6720 = vpop.permute.xlu0 %6719
    %6721 = vrot.lane.b32.xlu0 %v6675, 32
    %v6722 = vpop.permute.xlu0 %6721
    %6723 = vrot.lane.b32.xlu0 %v6676, 32
    %v6724 = vpop.permute.xlu0 %6723
    %6725 = vrot.lane.b32.xlu0 %v6677, 32
    %v6726 = vpop.permute.xlu0 %6725
    %6727 = vrot.lane.b32.xlu0 %v6678, 32
    %v6728 = vpop.permute.xlu0 %6727
    %6729 = vrot.lane.b32.xlu0 %v6679, 32
    %v6730 = vpop.permute.xlu0 %6729
    %6731 = vrot.lane.b32.xlu0 %v6680, 32
    %v6732 = vpop.permute.xlu0 %6731
    %6733 = vrot.lane.b32.xlu0 %v6681, 32
    %v6734 = vpop.permute.xlu0 %6733
    %6735 = vrot.lane.b32.xlu0 %v6682, 32
    %v6736 = vpop.permute.xlu0 %6735
    %6737 = vrot.lane.b32.xlu0 %v6683, 32
    %v6738 = vpop.permute.xlu0 %6737
    %6739 = vrot.lane.b32.xlu0 %v6684, 32
    %v6740 = vpop.permute.xlu0 %6739
    %6741 = vrot.lane.b32.xlu0 %v6685, 32
    %v6742 = vpop.permute.xlu0 %6741
    %6743 = vrot.lane.b32.xlu0 %v6686, 32
    %v6744 = vpop.permute.xlu0 %6743
    %6745 = vrot.lane.b32.xlu0 %v6687, 32
    %v6746 = vpop.permute.xlu0 %6745
    %6747 = vrot.lane.b32.xlu0 %v6688, 32
    %v6748 = vpop.permute.xlu0 %6747
    %6749 = vrot.lane.b32.xlu0 %v6689, 32
    %v6750 = vpop.permute.xlu0 %6749
    %6751 = vrot.lane.b32.xlu0 %v6690, 32
    %v6752 = vpop.permute.xlu0 %6751
    %6753 = vrot.lane.b32.xlu0 %v6691, 32
    %v6754 = vpop.permute.xlu0 %6753
    %6755 = vrot.lane.b32.xlu0 %v6692, 32
    %v6756 = vpop.permute.xlu0 %6755
    %v6789 = vunpack.c.l.b16 %v4645
    %v6790 = vunpack.c.l.b16 %v4646
    %v6791 = vunpack.c.l.b16 %v4647
    %v6792 = vunpack.c.l.b16 %v4648
    %v6793 = vunpack.c.l.b16 %v4649
    %v6794 = vunpack.c.l.b16 %v4650
    %v6795 = vunpack.c.l.b16 %v4651
    %v6796 = vunpack.c.l.b16 %v4652
    %v6797 = vunpack.c.l.b16 %v4653
    %v6798 = vunpack.c.l.b16 %v4654
    %v6799 = vunpack.c.l.b16 %v4655
    %v6800 = vunpack.c.l.b16 %v4656
    %v6801 = vunpack.c.l.b16 %v4657
    %v6802 = vunpack.c.l.b16 %v4658
    %v6803 = vunpack.c.l.b16 %v4659
    %v6804 = vunpack.c.l.b16 %v4660
    %v6805 = vunpack.c.l.b16 %v4661
    %v6806 = vunpack.c.l.b16 %v4662
    %v6807 = vunpack.c.l.b16 %v4663
    %v6808 = vunpack.c.l.b16 %v4664
    %v6809 = vunpack.c.l.b16 %v4665
    %v6810 = vunpack.c.l.b16 %v4666
    %v6811 = vunpack.c.l.b16 %v4667
    %v6812 = vunpack.c.l.b16 %v4668
    %v6813 = vunpack.c.l.b16 %v4669
    %v6814 = vunpack.c.l.b16 %v4670
    %v6815 = vunpack.c.l.b16 %v4671
    %v6816 = vunpack.c.l.b16 %v4672
    %v6817 = vunpack.c.l.b16 %v4673
    %v6818 = vunpack.c.l.b16 %v4674
    %v6819 = vunpack.c.l.b16 %v4675
    %v6820 = vunpack.c.l.b16 %v4676
    %v6821 = vunpack.c.l.b16 %v4677
    %v6822 = vunpack.c.l.b16 %v4678
    %v6823 = vunpack.c.l.b16 %v4679
    %v6824 = vunpack.c.l.b16 %v4680
    %v6825 = vunpack.c.l.b16 %v4681
    %v6826 = vunpack.c.l.b16 %v4682
    %v6827 = vunpack.c.l.b16 %v4683
    %v6828 = vunpack.c.l.b16 %v4684
    %v6829 = vunpack.c.l.b16 %v4685
    %v6830 = vunpack.c.l.b16 %v4686
    %v6831 = vunpack.c.l.b16 %v4687
    %v6832 = vunpack.c.l.b16 %v4688
    %v6833 = vunpack.c.l.b16 %v4689
    %v6834 = vunpack.c.l.b16 %v4690
    %v6835 = vunpack.c.l.b16 %v4691
    %v6836 = vunpack.c.l.b16 %v4692
    %v6837 = vunpack.c.l.b16 %v4693
    %v6838 = vunpack.c.l.b16 %v4694
    %v6839 = vunpack.c.l.b16 %v4695
    %v6840 = vunpack.c.l.b16 %v4696
    %v6841 = vunpack.c.l.b16 %v4697
    %v6842 = vunpack.c.l.b16 %v4698
    %v6843 = vunpack.c.l.b16 %v4699
    %v6844 = vunpack.c.l.b16 %v4700
    %v6845 = vunpack.c.l.b16 %v4701
    %v6846 = vunpack.c.l.b16 %v4702
    %v6847 = vunpack.c.l.b16 %v4703
    %v6848 = vunpack.c.l.b16 %v4704
    %v6849 = vunpack.c.l.b16 %v4705
    %v6850 = vunpack.c.l.b16 %v4706
    %v6851 = vunpack.c.l.b16 %v4707
    %v6852 = vunpack.c.l.b16 %v4708
    %v6853 = vpack.c.b16 %v6790, %v6789
    %v6854 = vpack.c.b16 %v6792, %v6791
    %v6855 = vpack.c.b16 %v6794, %v6793
    %v6856 = vpack.c.b16 %v6796, %v6795
    %v6857 = vpack.c.b16 %v6798, %v6797
    %v6858 = vpack.c.b16 %v6800, %v6799
    %v6859 = vpack.c.b16 %v6802, %v6801
    %v6860 = vpack.c.b16 %v6804, %v6803
    %v6861 = vpack.c.b16 %v6806, %v6805
    %v6862 = vpack.c.b16 %v6808, %v6807
    %v6863 = vpack.c.b16 %v6810, %v6809
    %v6864 = vpack.c.b16 %v6812, %v6811
    %v6865 = vpack.c.b16 %v6814, %v6813
    %v6866 = vpack.c.b16 %v6816, %v6815
    %v6867 = vpack.c.b16 %v6818, %v6817
    %v6868 = vpack.c.b16 %v6820, %v6819
    %v6869 = vpack.c.b16 %v6822, %v6821
    %v6870 = vpack.c.b16 %v6824, %v6823
    %v6871 = vpack.c.b16 %v6826, %v6825
    %v6872 = vpack.c.b16 %v6828, %v6827
    %v6873 = vpack.c.b16 %v6830, %v6829
    %v6874 = vpack.c.b16 %v6832, %v6831
    %v6875 = vpack.c.b16 %v6834, %v6833
    %v6876 = vpack.c.b16 %v6836, %v6835
    %v6877 = vpack.c.b16 %v6838, %v6837
    %v6878 = vpack.c.b16 %v6840, %v6839
    %v6879 = vpack.c.b16 %v6842, %v6841
    %v6880 = vpack.c.b16 %v6844, %v6843
    %v6881 = vpack.c.b16 %v6846, %v6845
    %v6882 = vpack.c.b16 %v6848, %v6847
    %v6883 = vpack.c.b16 %v6850, %v6849
    %v6884 = vpack.c.b16 %v6852, %v6851
    %6885 = vrot.lane.b32.xlu0 %v6853, 64
    %v6886 = vpop.permute.xlu0 %6885
    %6887 = vrot.lane.b32.xlu0 %v6854, 64
    %v6888 = vpop.permute.xlu0 %6887
    %6889 = vrot.lane.b32.xlu0 %v6855, 64
    %v6890 = vpop.permute.xlu0 %6889
    %6891 = vrot.lane.b32.xlu0 %v6856, 64
    %v6892 = vpop.permute.xlu0 %6891
    %6893 = vrot.lane.b32.xlu0 %v6857, 64
    %v6894 = vpop.permute.xlu0 %6893
    %6895 = vrot.lane.b32.xlu0 %v6858, 64
    %v6896 = vpop.permute.xlu0 %6895
    %6897 = vrot.lane.b32.xlu0 %v6859, 64
    %v6898 = vpop.permute.xlu0 %6897
    %6899 = vrot.lane.b32.xlu0 %v6860, 64
    %v6900 = vpop.permute.xlu0 %6899
    %6901 = vrot.lane.b32.xlu0 %v6861, 64
    %v6902 = vpop.permute.xlu0 %6901
    %6903 = vrot.lane.b32.xlu0 %v6862, 64
    %v6904 = vpop.permute.xlu0 %6903
    %6905 = vrot.lane.b32.xlu0 %v6863, 64
    %v6906 = vpop.permute.xlu0 %6905
    %6907 = vrot.lane.b32.xlu0 %v6864, 64
    %v6908 = vpop.permute.xlu0 %6907
    %6909 = vrot.lane.b32.xlu0 %v6865, 64
    %v6910 = vpop.permute.xlu0 %6909
    %6911 = vrot.lane.b32.xlu0 %v6866, 64
    %v6912 = vpop.permute.xlu0 %6911
    %6913 = vrot.lane.b32.xlu0 %v6867, 64
    %v6914 = vpop.permute.xlu0 %6913
    %6915 = vrot.lane.b32.xlu0 %v6868, 64
    %v6916 = vpop.permute.xlu0 %6915
    %6917 = vrot.lane.b32.xlu0 %v6869, 64
    %v6918 = vpop.permute.xlu0 %6917
    %6919 = vrot.lane.b32.xlu0 %v6870, 64
    %v6920 = vpop.permute.xlu0 %6919
    %6921 = vrot.lane.b32.xlu0 %v6871, 64
    %v6922 = vpop.permute.xlu0 %6921
    %6923 = vrot.lane.b32.xlu0 %v6872, 64
    %v6924 = vpop.permute.xlu0 %6923
    %6925 = vrot.lane.b32.xlu0 %v6873, 64
    %v6926 = vpop.permute.xlu0 %6925
    %6927 = vrot.lane.b32.xlu0 %v6874, 64
    %v6928 = vpop.permute.xlu0 %6927
    %6929 = vrot.lane.b32.xlu0 %v6875, 64
    %v6930 = vpop.permute.xlu0 %6929
    %6931 = vrot.lane.b32.xlu0 %v6876, 64
    %v6932 = vpop.permute.xlu0 %6931
    %6933 = vrot.lane.b32.xlu0 %v6877, 64
    %v6934 = vpop.permute.xlu0 %6933
    %6935 = vrot.lane.b32.xlu0 %v6878, 64
    %v6936 = vpop.permute.xlu0 %6935
    %6937 = vrot.lane.b32.xlu0 %v6879, 64
    %v6938 = vpop.permute.xlu0 %6937
    %6939 = vrot.lane.b32.xlu0 %v6880, 64
    %v6940 = vpop.permute.xlu0 %6939
    %6941 = vrot.lane.b32.xlu0 %v6881, 64
    %v6942 = vpop.permute.xlu0 %6941
    %6943 = vrot.lane.b32.xlu0 %v6882, 64
    %v6944 = vpop.permute.xlu0 %6943
    %6945 = vrot.lane.b32.xlu0 %v6883, 64
    %v6946 = vpop.permute.xlu0 %6945
    %6947 = vrot.lane.b32.xlu0 %v6884, 64
    %v6948 = vpop.permute.xlu0 %6947
    %v6949 = vunpack.c.l.b16 %v4754
    %v6950 = vunpack.c.l.b16 %v4764
    %v6951 = vunpack.c.l.b16 %v4778
    %v6952 = vunpack.c.l.b16 %v4788
    %v6953 = vunpack.c.l.b16 %v4802
    %v6954 = vunpack.c.l.b16 %v4812
    %v6955 = vunpack.c.l.b16 %v4826
    %v6956 = vunpack.c.l.b16 %v4836
    %v6957 = vunpack.c.l.b16 %v4850
    %v6958 = vunpack.c.l.b16 %v4860
    %v6959 = vunpack.c.l.b16 %v4874
    %v6960 = vunpack.c.l.b16 %v4884
    %v6961 = vunpack.c.l.b16 %v4898
    %v6962 = vunpack.c.l.b16 %v4908
    %v6963 = vunpack.c.l.b16 %v4922
    %v6964 = vunpack.c.l.b16 %v4932
    %v6965 = vunpack.c.l.b16 %v4946
    %v6966 = vunpack.c.l.b16 %v4956
    %v6967 = vunpack.c.l.b16 %v4970
    %v6968 = vunpack.c.l.b16 %v4980
    %v6969 = vunpack.c.l.b16 %v4994
    %v6970 = vunpack.c.l.b16 %v5004
    %v6971 = vunpack.c.l.b16 %v5018
    %v6972 = vunpack.c.l.b16 %v5028
    %v6973 = vunpack.c.l.b16 %v5042
    %v6974 = vunpack.c.l.b16 %v5052
    %v6975 = vunpack.c.l.b16 %v5066
    %v6976 = vunpack.c.l.b16 %v5076
    %v6977 = vunpack.c.l.b16 %v5090
    %v6978 = vunpack.c.l.b16 %v5100
    %v6979 = vunpack.c.l.b16 %v5114
    %v6980 = vunpack.c.l.b16 %v5124
    %v6981 = vunpack.c.l.b16 %v5138
    %v6982 = vunpack.c.l.b16 %v5148
    %v6983 = vunpack.c.l.b16 %v5162
    %v6984 = vunpack.c.l.b16 %v5172
    %v6985 = vunpack.c.l.b16 %v5186
    %v6986 = vunpack.c.l.b16 %v5196
    %v6987 = vunpack.c.l.b16 %v5210
    %v6988 = vunpack.c.l.b16 %v5220
    %v6989 = vunpack.c.l.b16 %v5234
    %v6990 = vunpack.c.l.b16 %v5244
    %v6991 = vunpack.c.l.b16 %v5258
    %v6992 = vunpack.c.l.b16 %v5268
    %v6993 = vunpack.c.l.b16 %v5282
    %v6994 = vunpack.c.l.b16 %v5292
    %v6995 = vunpack.c.l.b16 %v5306
    %v6996 = vunpack.c.l.b16 %v5316
    %v6997 = vunpack.c.l.b16 %v5330
    %v6998 = vunpack.c.l.b16 %v5340
    %v6999 = vunpack.c.l.b16 %v5354
    %v7000 = vunpack.c.l.b16 %v5364
    %v7001 = vunpack.c.l.b16 %v5378
    %v7002 = vunpack.c.l.b16 %v5388
    %v7003 = vunpack.c.l.b16 %v5402
    %v7004 = vunpack.c.l.b16 %v5412
    %v7005 = vunpack.c.l.b16 %v5426
    %v7006 = vunpack.c.l.b16 %v5436
    %v7007 = vunpack.c.l.b16 %v5450
    %v7008 = vunpack.c.l.b16 %v5460
    %v7009 = vunpack.c.l.b16 %v5474
    %v7010 = vunpack.c.l.b16 %v5484
    %v7011 = vunpack.c.l.b16 %v5498
    %v7012 = vunpack.c.l.b16 %v5508
    %v7013 = vpack.c.b16 %v6950, %v6949
    %v7014 = vpack.c.b16 %v6952, %v6951
    %v7015 = vpack.c.b16 %v6954, %v6953
    %v7016 = vpack.c.b16 %v6956, %v6955
    %v7017 = vpack.c.b16 %v6958, %v6957
    %v7018 = vpack.c.b16 %v6960, %v6959
    %v7019 = vpack.c.b16 %v6962, %v6961
    %v7020 = vpack.c.b16 %v6964, %v6963
    %v7021 = vpack.c.b16 %v6966, %v6965
    %v7022 = vpack.c.b16 %v6968, %v6967
    %v7023 = vpack.c.b16 %v6970, %v6969
    %v7024 = vpack.c.b16 %v6972, %v6971
    %v7025 = vpack.c.b16 %v6974, %v6973
    %v7026 = vpack.c.b16 %v6976, %v6975
    %v7027 = vpack.c.b16 %v6978, %v6977
    %v7028 = vpack.c.b16 %v6980, %v6979
    %v7029 = vpack.c.b16 %v6982, %v6981
    %v7030 = vpack.c.b16 %v6984, %v6983
    %v7031 = vpack.c.b16 %v6986, %v6985
    %v7032 = vpack.c.b16 %v6988, %v6987
    %v7033 = vpack.c.b16 %v6990, %v6989
    %v7034 = vpack.c.b16 %v6992, %v6991
    %v7035 = vpack.c.b16 %v6994, %v6993
    %v7036 = vpack.c.b16 %v6996, %v6995
    %v7037 = vpack.c.b16 %v6998, %v6997
    %v7038 = vpack.c.b16 %v7000, %v6999
    %v7039 = vpack.c.b16 %v7002, %v7001
    %v7040 = vpack.c.b16 %v7004, %v7003
    %v7041 = vpack.c.b16 %v7006, %v7005
    %v7042 = vpack.c.b16 %v7008, %v7007
    %v7043 = vpack.c.b16 %v7010, %v7009
    %v7044 = vpack.c.b16 %v7012, %v7011
    %7045 = vrot.lane.b32.xlu0 %v7013, 96
    %v7046 = vpop.permute.xlu0 %7045
    %7047 = vrot.lane.b32.xlu0 %v7014, 96
    %v7048 = vpop.permute.xlu0 %7047
    %7049 = vrot.lane.b32.xlu0 %v7015, 96
    %v7050 = vpop.permute.xlu0 %7049
    %7051 = vrot.lane.b32.xlu0 %v7016, 96
    %v7052 = vpop.permute.xlu0 %7051
    %7053 = vrot.lane.b32.xlu0 %v7017, 96
    %v7054 = vpop.permute.xlu0 %7053
    %7055 = vrot.lane.b32.xlu0 %v7018, 96
    %v7056 = vpop.permute.xlu0 %7055
    %7057 = vrot.lane.b32.xlu0 %v7019, 96
    %v7058 = vpop.permute.xlu0 %7057
    %7059 = vrot.lane.b32.xlu0 %v7020, 96
    %v7060 = vpop.permute.xlu0 %7059
    %7061 = vrot.lane.b32.xlu0 %v7021, 96
    %v7062 = vpop.permute.xlu0 %7061
    %7063 = vrot.lane.b32.xlu0 %v7022, 96
    %v7064 = vpop.permute.xlu0 %7063
    %7065 = vrot.lane.b32.xlu0 %v7023, 96
    %v7066 = vpop.permute.xlu0 %7065
    %7067 = vrot.lane.b32.xlu0 %v7024, 96
    %v7068 = vpop.permute.xlu0 %7067
    %7069 = vrot.lane.b32.xlu0 %v7025, 96
    %v7070 = vpop.permute.xlu0 %7069
    %7071 = vrot.lane.b32.xlu0 %v7026, 96
    %v7072 = vpop.permute.xlu0 %7071
    %7073 = vrot.lane.b32.xlu0 %v7027, 96
    %v7074 = vpop.permute.xlu0 %7073
    %7075 = vrot.lane.b32.xlu0 %v7028, 96
    %v7076 = vpop.permute.xlu0 %7075
    %7077 = vrot.lane.b32.xlu0 %v7029, 96
    %v7078 = vpop.permute.xlu0 %7077
    %7079 = vrot.lane.b32.xlu0 %v7030, 96
    %v7080 = vpop.permute.xlu0 %7079
    %7081 = vrot.lane.b32.xlu0 %v7031, 96
    %v7082 = vpop.permute.xlu0 %7081
    %7083 = vrot.lane.b32.xlu0 %v7032, 96
    %v7084 = vpop.permute.xlu0 %7083
    %7085 = vrot.lane.b32.xlu0 %v7033, 96
    %v7086 = vpop.permute.xlu0 %7085
    %7087 = vrot.lane.b32.xlu0 %v7034, 96
    %v7088 = vpop.permute.xlu0 %7087
    %7089 = vrot.lane.b32.xlu0 %v7035, 96
    %v7090 = vpop.permute.xlu0 %7089
    %7091 = vrot.lane.b32.xlu0 %v7036, 96
    %v7092 = vpop.permute.xlu0 %7091
    %7093 = vrot.lane.b32.xlu0 %v7037, 96
    %v7094 = vpop.permute.xlu0 %7093
    %7095 = vrot.lane.b32.xlu0 %v7038, 96
    %v7096 = vpop.permute.xlu0 %7095
    %7097 = vrot.lane.b32.xlu0 %v7039, 96
    %v7098 = vpop.permute.xlu0 %7097
    %7099 = vrot.lane.b32.xlu0 %v7040, 96
    %v7100 = vpop.permute.xlu0 %7099
    %7101 = vrot.lane.b32.xlu0 %v7041, 96
    %v7102 = vpop.permute.xlu0 %7101
    %7103 = vrot.lane.b32.xlu0 %v7042, 96
    %v7104 = vpop.permute.xlu0 %7103
    %7105 = vrot.lane.b32.xlu0 %v7043, 96
    %v7106 = vpop.permute.xlu0 %7105
    %7107 = vrot.lane.b32.xlu0 %v7044, 96
    %v7108 = vpop.permute.xlu0 %7107
    %v7109 = vunpack.c.l.b16 %v5640
    %v7110 = vunpack.c.l.b16 %v5643
    %v7111 = vunpack.c.l.b16 %v5647
    %v7112 = vunpack.c.l.b16 %v5650
    %v7113 = vunpack.c.l.b16 %v5654
    %v7114 = vunpack.c.l.b16 %v5657
    %v7115 = vunpack.c.l.b16 %v5661
    %v7116 = vunpack.c.l.b16 %v5664
    %v7117 = vunpack.c.l.b16 %v5668
    %v7118 = vunpack.c.l.b16 %v5671
    %v7119 = vunpack.c.l.b16 %v5675
    %v7120 = vunpack.c.l.b16 %v5678
    %v7121 = vunpack.c.l.b16 %v5682
    %v7122 = vunpack.c.l.b16 %v5685
    %v7123 = vunpack.c.l.b16 %v5689
    %v7124 = vunpack.c.l.b16 %v5692
    %v7125 = vunpack.c.l.b16 %v5696
    %v7126 = vunpack.c.l.b16 %v5699
    %v7127 = vunpack.c.l.b16 %v5703
    %v7128 = vunpack.c.l.b16 %v5706
    %v7129 = vunpack.c.l.b16 %v5710
    %v7130 = vunpack.c.l.b16 %v5713
    %v7131 = vunpack.c.l.b16 %v5717
    %v7132 = vunpack.c.l.b16 %v5720
    %v7133 = vunpack.c.l.b16 %v5724
    %v7134 = vunpack.c.l.b16 %v5727
    %v7135 = vunpack.c.l.b16 %v5731
    %v7136 = vunpack.c.l.b16 %v5734
    %v7137 = vunpack.c.l.b16 %v5738
    %v7138 = vunpack.c.l.b16 %v5741
    %v7139 = vunpack.c.l.b16 %v5745
    %v7140 = vunpack.c.l.b16 %v5748
    %v7141 = vunpack.c.l.b16 %v5752
    %v7142 = vunpack.c.l.b16 %v5755
    %v7143 = vunpack.c.l.b16 %v5759
    %v7144 = vunpack.c.l.b16 %v5762
    %v7145 = vunpack.c.l.b16 %v5766
    %v7146 = vunpack.c.l.b16 %v5769
    %v7147 = vunpack.c.l.b16 %v5773
    %v7148 = vunpack.c.l.b16 %v5776
    %v7149 = vunpack.c.l.b16 %v5780
    %v7150 = vunpack.c.l.b16 %v5783
    %v7151 = vunpack.c.l.b16 %v5787
    %v7152 = vunpack.c.l.b16 %v5790
    %v7153 = vunpack.c.l.b16 %v5794
    %v7154 = vunpack.c.l.b16 %v5797
    %v7155 = vunpack.c.l.b16 %v5801
    %v7156 = vunpack.c.l.b16 %v5804
    %v7157 = vunpack.c.l.b16 %v5808
    %v7158 = vunpack.c.l.b16 %v5811
    %v7159 = vunpack.c.l.b16 %v5815
    %v7160 = vunpack.c.l.b16 %v5818
    %v7161 = vunpack.c.l.b16 %v5822
    %v7162 = vunpack.c.l.b16 %v5825
    %v7163 = vunpack.c.l.b16 %v5829
    %v7164 = vunpack.c.l.b16 %v5832
    %v7165 = vunpack.c.l.b16 %v5836
    %v7166 = vunpack.c.l.b16 %v5839
    %v7167 = vunpack.c.l.b16 %v5843
    %v7168 = vunpack.c.l.b16 %v5846
    %v7169 = vunpack.c.l.b16 %v5850
    %v7170 = vunpack.c.l.b16 %v5853
    %v7171 = vunpack.c.l.b16 %v5857
    %v7172 = vunpack.c.l.b16 %v5860
    %v7173 = vpack.c.b16 %v7110, %v7109
    %v7174 = vpack.c.b16 %v7112, %v7111
    %v7175 = vpack.c.b16 %v7114, %v7113
    %v7176 = vpack.c.b16 %v7116, %v7115
    %v7177 = vpack.c.b16 %v7118, %v7117
    %v7178 = vpack.c.b16 %v7120, %v7119
    %v7179 = vpack.c.b16 %v7122, %v7121
    %v7180 = vpack.c.b16 %v7124, %v7123
    %v7181 = vpack.c.b16 %v7126, %v7125
    %v7182 = vpack.c.b16 %v7128, %v7127
    %v7183 = vpack.c.b16 %v7130, %v7129
    %v7184 = vpack.c.b16 %v7132, %v7131
    %v7185 = vpack.c.b16 %v7134, %v7133
    %v7186 = vpack.c.b16 %v7136, %v7135
    %v7187 = vpack.c.b16 %v7138, %v7137
    %v7188 = vpack.c.b16 %v7140, %v7139
    %v7189 = vpack.c.b16 %v7142, %v7141
    %v7190 = vpack.c.b16 %v7144, %v7143
    %v7191 = vpack.c.b16 %v7146, %v7145
    %v7192 = vpack.c.b16 %v7148, %v7147
    %v7193 = vpack.c.b16 %v7150, %v7149
    %v7194 = vpack.c.b16 %v7152, %v7151
    %v7195 = vpack.c.b16 %v7154, %v7153
    %v7196 = vpack.c.b16 %v7156, %v7155
    %v7197 = vpack.c.b16 %v7158, %v7157
    %v7198 = vpack.c.b16 %v7160, %v7159
    %v7199 = vpack.c.b16 %v7162, %v7161
    %v7200 = vpack.c.b16 %v7164, %v7163
    %v7201 = vpack.c.b16 %v7166, %v7165
    %v7202 = vpack.c.b16 %v7168, %v7167
    %v7203 = vpack.c.b16 %v7170, %v7169
    %v7204 = vpack.c.b16 %v7172, %v7171
    %v7207 = vsel %vm688, %v5957, %v6086
    %v7210 = vsel %vm688, %v5958, %v6088
    %v7213 = vsel %vm688, %v5959, %v6090
    %v7216 = vsel %vm688, %v5960, %v6092
    %v7219 = vsel %vm688, %v5961, %v6094
    %v7222 = vsel %vm688, %v5962, %v6096
    %v7225 = vsel %vm688, %v5963, %v6098
    %v7228 = vsel %vm688, %v5964, %v6100
    %v7231 = vsel %vm688, %v5965, %v6102
    %v7234 = vsel %vm688, %v5966, %v6104
    %v7237 = vsel %vm688, %v5967, %v6106
    %v7240 = vsel %vm688, %v5968, %v6108
    %v7243 = vsel %vm688, %v5969, %v6110
    %v7246 = vsel %vm688, %v5970, %v6112
    %v7249 = vsel %vm688, %v5971, %v6114
    %v7252 = vsel %vm688, %v5972, %v6116
    %v7255 = vsel %vm688, %v5973, %v6118
    %v7258 = vsel %vm688, %v5974, %v6120
    %v7261 = vsel %vm688, %v5975, %v6122
    %v7264 = vsel %vm688, %v5976, %v6124
    %v7267 = vsel %vm688, %v5977, %v6126
    %v7270 = vsel %vm688, %v5978, %v6128
    %v7273 = vsel %vm688, %v5979, %v6130
    %v7276 = vsel %vm688, %v5980, %v6132
    %v7279 = vsel %vm688, %v5981, %v6134
    %v7282 = vsel %vm688, %v5982, %v6136
    %v7285 = vsel %vm688, %v5983, %v6138
    %v7288 = vsel %vm688, %v5984, %v6140
    %v7291 = vsel %vm688, %v5985, %v6142
    %v7294 = vsel %vm688, %v5986, %v6144
    %v7297 = vsel %vm688, %v5987, %v6146
    %v7300 = vsel %vm688, %v5988, %v6148
    %vm7301 = vcmask 523264
    %v7303 = vsel %vm7301, %v7207, %v6246
    %v7305 = vsel %vm7301, %v7210, %v6248
    %v7307 = vsel %vm7301, %v7213, %v6250
    %v7309 = vsel %vm7301, %v7216, %v6252
    %v7311 = vsel %vm7301, %v7219, %v6254
    %v7313 = vsel %vm7301, %v7222, %v6256
    %v7315 = vsel %vm7301, %v7225, %v6258
    %v7317 = vsel %vm7301, %v7228, %v6260
    %v7319 = vsel %vm7301, %v7231, %v6262
    %v7321 = vsel %vm7301, %v7234, %v6264
    %v7323 = vsel %vm7301, %v7237, %v6266
    %v7325 = vsel %vm7301, %v7240, %v6268
    %v7327 = vsel %vm7301, %v7243, %v6270
    %v7329 = vsel %vm7301, %v7246, %v6272
    %v7331 = vsel %vm7301, %v7249, %v6274
    %v7333 = vsel %vm7301, %v7252, %v6276
    %v7335 = vsel %vm7301, %v7255, %v6278
    %v7337 = vsel %vm7301, %v7258, %v6280
    %v7339 = vsel %vm7301, %v7261, %v6282
    %v7341 = vsel %vm7301, %v7264, %v6284
    %v7343 = vsel %vm7301, %v7267, %v6286
    %v7345 = vsel %vm7301, %v7270, %v6288
    %v7347 = vsel %vm7301, %v7273, %v6290
    %v7349 = vsel %vm7301, %v7276, %v6292
    %v7351 = vsel %vm7301, %v7279, %v6294
    %v7353 = vsel %vm7301, %v7282, %v6296
    %v7355 = vsel %vm7301, %v7285, %v6298
    %v7357 = vsel %vm7301, %v7288, %v6300
    %v7359 = vsel %vm7301, %v7291, %v6302
    %v7361 = vsel %vm7301, %v7294, %v6304
    %v7363 = vsel %vm7301, %v7297, %v6306
    %v7365 = vsel %vm7301, %v7300, %v6308
    %vm7366 = vcmask 785408
    %v7368 = vsel %vm7366, %v7303, %v6438
    %v7371 = vsel %vm7366, %v7305, %v6440
    %v7374 = vsel %vm7366, %v7307, %v6442
    %v7377 = vsel %vm7366, %v7309, %v6444
    %v7380 = vsel %vm7366, %v7311, %v6446
    %v7383 = vsel %vm7366, %v7313, %v6448
    %v7386 = vsel %vm7366, %v7315, %v6450
    %v7389 = vsel %vm7366, %v7317, %v6452
    %v7392 = vsel %vm7366, %v7319, %v6454
    %v7395 = vsel %vm7366, %v7321, %v6456
    %v7398 = vsel %vm7366, %v7323, %v6458
    %v7401 = vsel %vm7366, %v7325, %v6460
    %v7404 = vsel %vm7366, %v7327, %v6462
    %v7407 = vsel %vm7366, %v7329, %v6464
    %v7410 = vsel %vm7366, %v7331, %v6466
    %v7413 = vsel %vm7366, %v7333, %v6468
    %v7416 = vsel %vm7366, %v7335, %v6470
    %v7419 = vsel %vm7366, %v7337, %v6472
    %v7422 = vsel %vm7366, %v7339, %v6474
    %v7425 = vsel %vm7366, %v7341, %v6476
    %v7428 = vsel %vm7366, %v7343, %v6478
    %v7431 = vsel %vm7366, %v7345, %v6480
    %v7434 = vsel %vm7366, %v7347, %v6482
    %v7437 = vsel %vm7366, %v7349, %v6484
    %v7440 = vsel %vm7366, %v7351, %v6486
    %v7443 = vsel %vm7366, %v7353, %v6488
    %v7446 = vsel %vm7366, %v7355, %v6490
    %v7449 = vsel %vm7366, %v7357, %v6492
    %v7452 = vsel %vm7366, %v7359, %v6494
    %v7455 = vsel %vm7366, %v7361, %v6496
    %v7458 = vsel %vm7366, %v7363, %v6498
    %v7461 = vsel %vm7366, %v7365, %v6500
    %v7465 = vsel %vm688, %v6565, %v6694
    %v7468 = vsel %vm688, %v6566, %v6696
    %v7471 = vsel %vm688, %v6567, %v6698
    %v7474 = vsel %vm688, %v6568, %v6700
    %v7477 = vsel %vm688, %v6569, %v6702
    %v7480 = vsel %vm688, %v6570, %v6704
    %v7483 = vsel %vm688, %v6571, %v6706
    %v7486 = vsel %vm688, %v6572, %v6708
    %v7489 = vsel %vm688, %v6573, %v6710
    %v7492 = vsel %vm688, %v6574, %v6712
    %v7495 = vsel %vm688, %v6575, %v6714
    %v7498 = vsel %vm688, %v6576, %v6716
    %v7501 = vsel %vm688, %v6577, %v6718
    %v7504 = vsel %vm688, %v6578, %v6720
    %v7507 = vsel %vm688, %v6579, %v6722
    %v7510 = vsel %vm688, %v6580, %v6724
    %v7513 = vsel %vm688, %v6581, %v6726
    %v7516 = vsel %vm688, %v6582, %v6728
    %v7519 = vsel %vm688, %v6583, %v6730
    %v7522 = vsel %vm688, %v6584, %v6732
    %v7525 = vsel %vm688, %v6585, %v6734
    %v7528 = vsel %vm688, %v6586, %v6736
    %v7531 = vsel %vm688, %v6587, %v6738
    %v7534 = vsel %vm688, %v6588, %v6740
    %v7537 = vsel %vm688, %v6589, %v6742
    %v7540 = vsel %vm688, %v6590, %v6744
    %v7543 = vsel %vm688, %v6591, %v6746
    %v7546 = vsel %vm688, %v6592, %v6748
    %v7549 = vsel %vm688, %v6593, %v6750
    %v7552 = vsel %vm688, %v6594, %v6752
    %v7555 = vsel %vm688, %v6595, %v6754
    %v7558 = vsel %vm688, %v6596, %v6756
    %v7560 = vsel %vm7301, %v7465, %v6886
    %v7562 = vsel %vm7301, %v7468, %v6888
    %v7564 = vsel %vm7301, %v7471, %v6890
    %v7566 = vsel %vm7301, %v7474, %v6892
    %v7568 = vsel %vm7301, %v7477, %v6894
    %v7570 = vsel %vm7301, %v7480, %v6896
    %v7572 = vsel %vm7301, %v7483, %v6898
    %v7574 = vsel %vm7301, %v7486, %v6900
    %v7576 = vsel %vm7301, %v7489, %v6902
    %v7578 = vsel %vm7301, %v7492, %v6904
    %v7580 = vsel %vm7301, %v7495, %v6906
    %v7582 = vsel %vm7301, %v7498, %v6908
    %v7584 = vsel %vm7301, %v7501, %v6910
    %v7586 = vsel %vm7301, %v7504, %v6912
    %v7588 = vsel %vm7301, %v7507, %v6914
    %v7590 = vsel %vm7301, %v7510, %v6916
    %v7592 = vsel %vm7301, %v7513, %v6918
    %v7594 = vsel %vm7301, %v7516, %v6920
    %v7596 = vsel %vm7301, %v7519, %v6922
    %v7598 = vsel %vm7301, %v7522, %v6924
    %v7600 = vsel %vm7301, %v7525, %v6926
    %v7602 = vsel %vm7301, %v7528, %v6928
    %v7604 = vsel %vm7301, %v7531, %v6930
    %v7606 = vsel %vm7301, %v7534, %v6932
    %v7608 = vsel %vm7301, %v7537, %v6934
    %v7610 = vsel %vm7301, %v7540, %v6936
    %v7612 = vsel %vm7301, %v7543, %v6938
    %v7614 = vsel %vm7301, %v7546, %v6940
    %v7616 = vsel %vm7301, %v7549, %v6942
    %v7618 = vsel %vm7301, %v7552, %v6944
    %v7620 = vsel %vm7301, %v7555, %v6946
    %v7622 = vsel %vm7301, %v7558, %v6948
    %v7624 = vsel %vm7366, %v7560, %v7046
    %v7627 = vsel %vm7366, %v7562, %v7048
    %v7630 = vsel %vm7366, %v7564, %v7050
    %v7633 = vsel %vm7366, %v7566, %v7052
    %v7636 = vsel %vm7366, %v7568, %v7054
    %v7639 = vsel %vm7366, %v7570, %v7056
    %v7642 = vsel %vm7366, %v7572, %v7058
    %v7645 = vsel %vm7366, %v7574, %v7060
    %v7648 = vsel %vm7366, %v7576, %v7062
    %v7651 = vsel %vm7366, %v7578, %v7064
    %v7654 = vsel %vm7366, %v7580, %v7066
    %v7657 = vsel %vm7366, %v7582, %v7068
    %v7660 = vsel %vm7366, %v7584, %v7070
    %v7663 = vsel %vm7366, %v7586, %v7072
    %v7666 = vsel %vm7366, %v7588, %v7074
    %v7669 = vsel %vm7366, %v7590, %v7076
    %v7672 = vsel %vm7366, %v7592, %v7078
    %v7675 = vsel %vm7366, %v7594, %v7080
    %v7678 = vsel %vm7366, %v7596, %v7082
    %v7681 = vsel %vm7366, %v7598, %v7084
    %v7684 = vsel %vm7366, %v7600, %v7086
    %v7687 = vsel %vm7366, %v7602, %v7088
    %v7690 = vsel %vm7366, %v7604, %v7090
    %v7693 = vsel %vm7366, %v7606, %v7092
    %v7696 = vsel %vm7366, %v7608, %v7094
    %v7699 = vsel %vm7366, %v7610, %v7096
    %v7702 = vsel %vm7366, %v7612, %v7098
    %v7705 = vsel %vm7366, %v7614, %v7100
    %v7708 = vsel %vm7366, %v7616, %v7102
    %v7711 = vsel %vm7366, %v7618, %v7104
    %v7714 = vsel %vm7366, %v7620, %v7106
    %v7717 = vsel %vm7366, %v7622, %v7108
    %v7719 = vld [vmem:[%s4] sm:$0xf]
    %v7720 = vld [vmem:[%s4 + $0x4] sm:$0xf]
    %v7721 = vld [vmem:[%s4 + $0x8] sm:$0xf]
    %v7722 = vld [vmem:[%s4 + $0xc] sm:$0xf]
    %v7723 = vld [vmem:[%s4 + $0x10] sm:$0xf]
    %v7724 = vld [vmem:[%s4 + $0x14] sm:$0xf]
    %v7725 = vld [vmem:[%s4 + $0x18] sm:$0xf]
    %v7726 = vld [vmem:[%s4 + $0x1c] sm:$0xf]
    %v7727 = vld [vmem:[%s4 + $0x20] sm:$0xf]
    %v7728 = vld [vmem:[%s4 + $0x24] sm:$0xf]
    %v7729 = vld [vmem:[%s4 + $0x28] sm:$0xf]
    %v7730 = vld [vmem:[%s4 + $0x2c] sm:$0xf]
    %v7731 = vld [vmem:[%s4 + $0x30] sm:$0xf]
    %v7732 = vld [vmem:[%s4 + $0x34] sm:$0xf]
    %v7733 = vld [vmem:[%s4 + $0x38] sm:$0xf]
    %v7734 = vld [vmem:[%s4 + $0x3c] sm:$0xf]
    %v7735 = vld [vmem:[%s4 + $0x40] sm:$0xf]
    %v7736 = vld [vmem:[%s4 + $0x44] sm:$0xf]
    %v7737 = vld [vmem:[%s4 + $0x48] sm:$0xf]
    %v7738 = vld [vmem:[%s4 + $0x4c] sm:$0xf]
    %v7739 = vld [vmem:[%s4 + $0x50] sm:$0xf]
    %v7740 = vld [vmem:[%s4 + $0x54] sm:$0xf]
    %v7741 = vld [vmem:[%s4 + $0x58] sm:$0xf]
    %v7742 = vld [vmem:[%s4 + $0x5c] sm:$0xf]
    %v7743 = vld [vmem:[%s4 + $0x60] sm:$0xf]
    %v7744 = vld [vmem:[%s4 + $0x64] sm:$0xf]
    %v7745 = vld [vmem:[%s4 + $0x68] sm:$0xf]
    %v7746 = vld [vmem:[%s4 + $0x6c] sm:$0xf]
    %v7747 = vld [vmem:[%s4 + $0x70] sm:$0xf]
    %v7748 = vld [vmem:[%s4 + $0x74] sm:$0xf]
    %v7749 = vld [vmem:[%s4 + $0x78] sm:$0xf]
    %v7750 = vld [vmem:[%s4 + $0x7c] sm:$0xf]
    %v7751 = vld [vmem:[%s4 + $0x80] sm:$0xf]
    %v7752 = vld [vmem:[%s4 + $0x84] sm:$0xf]
    %v7753 = vld [vmem:[%s4 + $0x88] sm:$0xf]
    %v7754 = vld [vmem:[%s4 + $0x8c] sm:$0xf]
    %v7791 = vunpack.c.l.b16 %v7719
    %v7792 = vunpack.c.l.b16 %v7720
    %v7793 = vunpack.c.l.b16 %v7721
    %v7794 = vunpack.c.l.b16 %v7722
    %v7795 = vunpack.c.l.b16 %v7723
    %v7796 = vunpack.c.l.b16 %v7724
    %v7797 = vunpack.c.l.b16 %v7725
    %v7798 = vunpack.c.l.b16 %v7726
    %v7799 = vunpack.c.l.b16 %v7727
    %v7800 = vunpack.c.l.b16 %v7728
    %v7801 = vunpack.c.l.b16 %v7729
    %v7802 = vunpack.c.l.b16 %v7730
    %v7803 = vunpack.c.l.b16 %v7731
    %v7804 = vunpack.c.l.b16 %v7732
    %v7805 = vunpack.c.l.b16 %v7733
    %v7806 = vunpack.c.l.b16 %v7734
    %v7807 = vunpack.c.l.b16 %v7735
    %v7808 = vunpack.c.l.b16 %v7736
    %v7809 = vunpack.c.l.b16 %v7737
    %v7810 = vunpack.c.l.b16 %v7738
    %v7811 = vunpack.c.l.b16 %v7739
    %v7812 = vunpack.c.l.b16 %v7740
    %v7813 = vunpack.c.l.b16 %v7741
    %v7814 = vunpack.c.l.b16 %v7742
    %v7815 = vunpack.c.l.b16 %v7743
    %v7816 = vunpack.c.l.b16 %v7744
    %v7817 = vunpack.c.l.b16 %v7745
    %v7818 = vunpack.c.l.b16 %v7746
    %v7819 = vunpack.c.l.b16 %v7747
    %v7820 = vunpack.c.l.b16 %v7748
    %v7821 = vunpack.c.l.b16 %v7749
    %v7822 = vunpack.c.l.b16 %v7750
    %v7823 = vunpack.c.l.b16 %v7751
    %v7824 = vunpack.c.l.b16 %v7752
    %v7825 = vunpack.c.l.b16 %v7753
    %v7826 = vunpack.c.l.b16 %v7754
    %v7827 = vpack.c.b16 %v7792, %v7791
    %v7828 = vpack.c.b16 %v7794, %v7793
    %v7829 = vpack.c.b16 %v7796, %v7795
    %v7830 = vpack.c.b16 %v7798, %v7797
    %v7831 = vpack.c.b16 %v7800, %v7799
    %v7832 = vpack.c.b16 %v7802, %v7801
    %v7833 = vpack.c.b16 %v7804, %v7803
    %v7834 = vpack.c.b16 %v7806, %v7805
    %v7835 = vpack.c.b16 %v7808, %v7807
    %v7836 = vpack.c.b16 %v7810, %v7809
    %v7837 = vpack.c.b16 %v7812, %v7811
    %v7838 = vpack.c.b16 %v7814, %v7813
    %v7839 = vpack.c.b16 %v7816, %v7815
    %v7840 = vpack.c.b16 %v7818, %v7817
    %v7841 = vpack.c.b16 %v7820, %v7819
    %v7842 = vpack.c.b16 %v7822, %v7821
    %v7843 = vpack.c.b16 %v7824, %v7823
    %v7844 = vpack.c.b16 %v7826, %v7825
    %v7864 = vsel %vm688, %v7173, 0
    %v7867 = vsel %vm688, %v7174, 0
    %v7870 = vsel %vm688, %v7175, 0
    %v7873 = vsel %vm688, %v7176, 0
    %v7876 = vsel %vm688, %v7177, 0
    %v7879 = vsel %vm688, %v7178, 0
    %v7882 = vsel %vm688, %v7179, 0
    %v7885 = vsel %vm688, %v7180, 0
    %v7888 = vsel %vm688, %v7181, 0
    %v7891 = vsel %vm688, %v7182, 0
    %v7894 = vsel %vm688, %v7183, 0
    %v7897 = vsel %vm688, %v7184, 0
    %v7900 = vsel %vm688, %v7185, 0
    %v7903 = vsel %vm688, %v7186, 0
    %v7906 = vsel %vm688, %v7187, 0
    %v7909 = vsel %vm688, %v7188, 0
    %v7912 = vsel %vm688, %v7189, 0
    %v7915 = vsel %vm688, %v7190, 0
    %v7918 = vsel %vm688, %v7191, 0
    %v7921 = vsel %vm688, %v7192, 0
    %v7924 = vsel %vm688, %v7193, 0
    %v7927 = vsel %vm688, %v7194, 0
    %v7930 = vsel %vm688, %v7195, 0
    %v7933 = vsel %vm688, %v7196, 0
    %v7936 = vsel %vm688, %v7197, 0
    %v7939 = vsel %vm688, %v7198, 0
    %v7942 = vsel %vm688, %v7199, 0
    %v7945 = vsel %vm688, %v7200, 0
    %v7948 = vsel %vm688, %v7201, 0
    %v7951 = vsel %vm688, %v7202, 0
    %v7954 = vsel %vm688, %v7203, 0
    %v7957 = vsel %vm688, %v7204, 0
    %7959 = vmatprep.subr.bf16.mxu0 0
    %7960 = vmatpush1.bf16.msra.mxu0 %v7834
    %7961 = vmatprep.subr.bf16.mxu0 0
    %7962 = vmatpush1.bf16.msra.mxu0 %v7833
    %7963 = vmatprep.subr.bf16.mxu0 0
    %7964 = vmatpush1.bf16.msra.mxu0 %v7832
    %7965 = vmatprep.subr.bf16.mxu0 0
    %7966 = vmatpush1.bf16.msra.mxu0 %v7831
    %7967 = vmatprep.subr.bf16.mxu0 0
    %7968 = vmatpush1.bf16.msra.mxu0 %v7830
    %7969 = vmatprep.subr.bf16.mxu0 0
    %7970 = vmatpush1.bf16.msra.mxu0 %v7829
    %7971 = vmatprep.subr.bf16.mxu0 0
    %7972 = vmatpush1.bf16.msra.mxu0 %v7828
    %7973 = vmatprep.subr.bf16.mxu0 0
    %7974 = vmatpush1.bf16.msra.mxu0 %v7827
    %7975 = vmatprep.subr.bf16.mxu0 0
    %7976 = vmatpush2.bf16.msra.mxu0 %v7842
    %7977 = vmatprep.subr.bf16.mxu0 0
    %7978 = vmatpush2.bf16.msra.mxu0 %v7841
    %7979 = vmatprep.subr.bf16.mxu0 0
    %7980 = vmatpush2.bf16.msra.mxu0 %v7840
    %7981 = vmatprep.subr.bf16.mxu0 0
    %7982 = vmatpush2.bf16.msra.mxu0 %v7839
    %7983 = vmatprep.subr.bf16.mxu0 0
    %7984 = vmatpush2.bf16.msra.mxu0 %v7838
    %7985 = vmatprep.subr.bf16.mxu0 0
    %7986 = vmatpush2.bf16.msra.mxu0 %v7837
    %7987 = vmatprep.subr.bf16.mxu0 0
    %7988 = vmatpush2.bf16.msra.mxu0 %v7836
    %7989 = vmatprep.subr.bf16.mxu0 0
    %7990 = vmatpush2.bf16.msra.mxu0 %v7835
    %7991 = vmatprep.mubr.bf16.mxu0 %v7624
    %7992 = vmatmul.mubr.bf16.gmra.mxu0 %v7368
    %v7993 = vpop.f32.mrf.mxu0
    %v7994 = vadd.f32 0.0, %v7993
    %v7995 = vpop.f32.mrf.mxu0
    %v7996 = vpop.f32.mrf.mxu0
    %v7997 = vadd.f32 0.0, %v7996
    %v7998 = vpop.f32.mrf.mxu0
    %7999 = vmatprep.mubr.bf16.mxu0 %v7627
    %8000 = vmatmul.mubr.bf16.gmra.mxu0 %v7371
    %v8001 = vpop.f32.mrf.mxu0
    %v8002 = vadd.f32 0.0, %v8001
    %v8003 = vpop.f32.mrf.mxu0
    %v8004 = vpop.f32.mrf.mxu0
    %v8005 = vadd.f32 0.0, %v8004
    %v8006 = vpop.f32.mrf.mxu0
    %8007 = vmatprep.mubr.bf16.mxu0 %v7630
    %8008 = vmatmul.mubr.bf16.gmra.mxu0 %v7374
    %v8009 = vpop.f32.mrf.mxu0
    %v8010 = vadd.f32 0.0, %v8009
    %v8011 = vpop.f32.mrf.mxu0
    %v8012 = vpop.f32.mrf.mxu0
    %v8013 = vadd.f32 0.0, %v8012
    %v8014 = vpop.f32.mrf.mxu0
    %8015 = vmatprep.mubr.bf16.mxu0 %v7633
    %8016 = vmatmul.mubr.bf16.gmra.mxu0 %v7377
    %v8017 = vpop.f32.mrf.mxu0
    %v8018 = vadd.f32 0.0, %v8017
    %v8019 = vpop.f32.mrf.mxu0
    %v8020 = vpop.f32.mrf.mxu0
    %v8021 = vadd.f32 0.0, %v8020
    %v8022 = vpop.f32.mrf.mxu0
    %8023 = vmatprep.mubr.bf16.mxu0 %v7636
    %8024 = vmatmul.mubr.bf16.gmra.mxu0 %v7380
    %v8025 = vpop.f32.mrf.mxu0
    %v8026 = vadd.f32 0.0, %v8025
    %v8027 = vpop.f32.mrf.mxu0
    %v8028 = vpop.f32.mrf.mxu0
    %v8029 = vadd.f32 0.0, %v8028
    %v8030 = vpop.f32.mrf.mxu0
    %8031 = vmatprep.mubr.bf16.mxu0 %v7639
    %8032 = vmatmul.mubr.bf16.gmra.mxu0 %v7383
    %v8033 = vpop.f32.mrf.mxu0
    %v8034 = vadd.f32 0.0, %v8033
    %v8035 = vpop.f32.mrf.mxu0
    %v8036 = vpop.f32.mrf.mxu0
    %v8037 = vadd.f32 0.0, %v8036
    %v8038 = vpop.f32.mrf.mxu0
    %8039 = vmatprep.mubr.bf16.mxu0 %v7642
    %8040 = vmatmul.mubr.bf16.gmra.mxu0 %v7386
    %v8041 = vpop.f32.mrf.mxu0
    %v8042 = vadd.f32 0.0, %v8041
    %v8043 = vpop.f32.mrf.mxu0
    %v8044 = vpop.f32.mrf.mxu0
    %v8045 = vadd.f32 0.0, %v8044
    %v8046 = vpop.f32.mrf.mxu0
    %8047 = vmatprep.mubr.bf16.mxu0 %v7645
    %8048 = vmatmul.mubr.bf16.gmra.mxu0 %v7389
    %v8049 = vpop.f32.mrf.mxu0
    %v8050 = vadd.f32 0.0, %v8049
    %v8051 = vpop.f32.mrf.mxu0
    %v8052 = vpop.f32.mrf.mxu0
    %v8053 = vadd.f32 0.0, %v8052
    %v8054 = vpop.f32.mrf.mxu0
    %8055 = vmatprep.mubr.bf16.mxu0 %v7648
    %8056 = vmatmul.mubr.bf16.gmra.mxu0 %v7392
    %v8057 = vpop.f32.mrf.mxu0
    %v8058 = vadd.f32 0.0, %v8057
    %v8059 = vpop.f32.mrf.mxu0
    %v8060 = vpop.f32.mrf.mxu0
    %v8061 = vadd.f32 0.0, %v8060
    %v8062 = vpop.f32.mrf.mxu0
    %8063 = vmatprep.mubr.bf16.mxu0 %v7651
    %8064 = vmatmul.mubr.bf16.gmra.mxu0 %v7395
    %v8065 = vpop.f32.mrf.mxu0
    %v8066 = vadd.f32 0.0, %v8065
    %v8067 = vpop.f32.mrf.mxu0
    %v8068 = vpop.f32.mrf.mxu0
    %v8069 = vadd.f32 0.0, %v8068
    %v8070 = vpop.f32.mrf.mxu0
    %8071 = vmatprep.mubr.bf16.mxu0 %v7654
    %8072 = vmatmul.mubr.bf16.gmra.mxu0 %v7398
    %v8073 = vpop.f32.mrf.mxu0
    %v8074 = vadd.f32 0.0, %v8073
    %v8075 = vpop.f32.mrf.mxu0
    %v8076 = vpop.f32.mrf.mxu0
    %v8077 = vadd.f32 0.0, %v8076
    %v8078 = vpop.f32.mrf.mxu0
    %8079 = vmatprep.mubr.bf16.mxu0 %v7657
    %8080 = vmatmul.mubr.bf16.gmra.mxu0 %v7401
    %v8081 = vpop.f32.mrf.mxu0
    %v8082 = vadd.f32 0.0, %v8081
    %v8083 = vpop.f32.mrf.mxu0
    %v8084 = vpop.f32.mrf.mxu0
    %v8085 = vadd.f32 0.0, %v8084
    %v8086 = vpop.f32.mrf.mxu0
    %8087 = vmatprep.mubr.bf16.mxu0 %v7660
    %8088 = vmatmul.mubr.bf16.gmra.mxu0 %v7404
    %v8089 = vpop.f32.mrf.mxu0
    %v8090 = vadd.f32 0.0, %v8089
    %v8091 = vpop.f32.mrf.mxu0
    %v8092 = vpop.f32.mrf.mxu0
    %v8093 = vadd.f32 0.0, %v8092
    %v8094 = vpop.f32.mrf.mxu0
    %8095 = vmatprep.mubr.bf16.mxu0 %v7663
    %8096 = vmatmul.mubr.bf16.gmra.mxu0 %v7407
    %v8097 = vpop.f32.mrf.mxu0
    %v8098 = vadd.f32 0.0, %v8097
    %v8099 = vpop.f32.mrf.mxu0
    %v8100 = vpop.f32.mrf.mxu0
    %v8101 = vadd.f32 0.0, %v8100
    %v8102 = vpop.f32.mrf.mxu0
    %8103 = vmatprep.mubr.bf16.mxu0 %v7666
    %8104 = vmatmul.mubr.bf16.gmra.mxu0 %v7410
    %v8105 = vpop.f32.mrf.mxu0
    %v8106 = vadd.f32 0.0, %v8105
    %v8107 = vpop.f32.mrf.mxu0
    %v8108 = vpop.f32.mrf.mxu0
    %v8109 = vadd.f32 0.0, %v8108
    %v8110 = vpop.f32.mrf.mxu0
    %8111 = vmatprep.mubr.bf16.mxu0 %v7669
    %8112 = vmatmul.mubr.bf16.gmra.mxu0 %v7413
    %v8113 = vpop.f32.mrf.mxu0
    %v8114 = vadd.f32 0.0, %v8113
    %v8115 = vpop.f32.mrf.mxu0
    %v8116 = vpop.f32.mrf.mxu0
    %v8117 = vadd.f32 0.0, %v8116
    %v8118 = vpop.f32.mrf.mxu0
    %8119 = vmatprep.mubr.bf16.mxu0 %v7672
    %8120 = vmatmul.mubr.bf16.gmra.mxu0 %v7416
    %v8121 = vpop.f32.mrf.mxu0
    %v8122 = vadd.f32 0.0, %v8121
    %v8123 = vpop.f32.mrf.mxu0
    %v8124 = vpop.f32.mrf.mxu0
    %v8125 = vadd.f32 0.0, %v8124
    %v8126 = vpop.f32.mrf.mxu0
    %8127 = vmatprep.mubr.bf16.mxu0 %v7675
    %8128 = vmatmul.mubr.bf16.gmra.mxu0 %v7419
    %v8129 = vpop.f32.mrf.mxu0
    %v8130 = vadd.f32 0.0, %v8129
    %v8131 = vpop.f32.mrf.mxu0
    %v8132 = vpop.f32.mrf.mxu0
    %v8133 = vadd.f32 0.0, %v8132
    %v8134 = vpop.f32.mrf.mxu0
    %8135 = vmatprep.mubr.bf16.mxu0 %v7678
    %8136 = vmatmul.mubr.bf16.gmra.mxu0 %v7422
    %v8137 = vpop.f32.mrf.mxu0
    %v8138 = vadd.f32 0.0, %v8137
    %v8139 = vpop.f32.mrf.mxu0
    %v8140 = vpop.f32.mrf.mxu0
    %v8141 = vadd.f32 0.0, %v8140
    %v8142 = vpop.f32.mrf.mxu0
    %8143 = vmatprep.mubr.bf16.mxu0 %v7681
    %8144 = vmatmul.mubr.bf16.gmra.mxu0 %v7425
    %v8145 = vpop.f32.mrf.mxu0
    %v8146 = vadd.f32 0.0, %v8145
    %v8147 = vpop.f32.mrf.mxu0
    %v8148 = vpop.f32.mrf.mxu0
    %v8149 = vadd.f32 0.0, %v8148
    %v8150 = vpop.f32.mrf.mxu0
    %8151 = vmatprep.mubr.bf16.mxu0 %v7684
    %8152 = vmatmul.mubr.bf16.gmra.mxu0 %v7428
    %v8153 = vpop.f32.mrf.mxu0
    %v8154 = vadd.f32 0.0, %v8153
    %v8155 = vpop.f32.mrf.mxu0
    %v8156 = vpop.f32.mrf.mxu0
    %v8157 = vadd.f32 0.0, %v8156
    %v8158 = vpop.f32.mrf.mxu0
    %8159 = vmatprep.mubr.bf16.mxu0 %v7687
    %8160 = vmatmul.mubr.bf16.gmra.mxu0 %v7431
    %v8161 = vpop.f32.mrf.mxu0
    %v8162 = vadd.f32 0.0, %v8161
    %v8163 = vpop.f32.mrf.mxu0
    %v8164 = vpop.f32.mrf.mxu0
    %v8165 = vadd.f32 0.0, %v8164
    %v8166 = vpop.f32.mrf.mxu0
    %8167 = vmatprep.mubr.bf16.mxu0 %v7690
    %8168 = vmatmul.mubr.bf16.gmra.mxu0 %v7434
    %v8169 = vpop.f32.mrf.mxu0
    %v8170 = vadd.f32 0.0, %v8169
    %v8171 = vpop.f32.mrf.mxu0
    %v8172 = vpop.f32.mrf.mxu0
    %v8173 = vadd.f32 0.0, %v8172
    %v8174 = vpop.f32.mrf.mxu0
    %8175 = vmatprep.mubr.bf16.mxu0 %v7693
    %8176 = vmatmul.mubr.bf16.gmra.mxu0 %v7437
    %v8177 = vpop.f32.mrf.mxu0
    %v8178 = vadd.f32 0.0, %v8177
    %v8179 = vpop.f32.mrf.mxu0
    %v8180 = vpop.f32.mrf.mxu0
    %v8181 = vadd.f32 0.0, %v8180
    %v8182 = vpop.f32.mrf.mxu0
    %8183 = vmatprep.mubr.bf16.mxu0 %v7696
    %8184 = vmatmul.mubr.bf16.gmra.mxu0 %v7440
    %v8185 = vpop.f32.mrf.mxu0
    %v8186 = vadd.f32 0.0, %v8185
    %v8187 = vpop.f32.mrf.mxu0
    %v8188 = vpop.f32.mrf.mxu0
    %v8189 = vadd.f32 0.0, %v8188
    %v8190 = vpop.f32.mrf.mxu0
    %8191 = vmatprep.mubr.bf16.mxu0 %v7699
    %8192 = vmatmul.mubr.bf16.gmra.mxu0 %v7443
    %v8193 = vpop.f32.mrf.mxu0
    %v8194 = vadd.f32 0.0, %v8193
    %v8195 = vpop.f32.mrf.mxu0
    %v8196 = vpop.f32.mrf.mxu0
    %v8197 = vadd.f32 0.0, %v8196
    %v8198 = vpop.f32.mrf.mxu0
    %8199 = vmatprep.mubr.bf16.mxu0 %v7702
    %8200 = vmatmul.mubr.bf16.gmra.mxu0 %v7446
    %v8201 = vpop.f32.mrf.mxu0
    %v8202 = vadd.f32 0.0, %v8201
    %v8203 = vpop.f32.mrf.mxu0
    %v8204 = vpop.f32.mrf.mxu0
    %v8205 = vadd.f32 0.0, %v8204
    %v8206 = vpop.f32.mrf.mxu0
    %8207 = vmatprep.mubr.bf16.mxu0 %v7705
    %8208 = vmatmul.mubr.bf16.gmra.mxu0 %v7449
    %v8209 = vpop.f32.mrf.mxu0
    %v8210 = vadd.f32 0.0, %v8209
    %v8211 = vpop.f32.mrf.mxu0
    %v8212 = vpop.f32.mrf.mxu0
    %v8213 = vadd.f32 0.0, %v8212
    %v8214 = vpop.f32.mrf.mxu0
    %8215 = vmatprep.mubr.bf16.mxu0 %v7708
    %8216 = vmatmul.mubr.bf16.gmra.mxu0 %v7452
    %v8217 = vpop.f32.mrf.mxu0
    %v8218 = vadd.f32 0.0, %v8217
    %v8219 = vpop.f32.mrf.mxu0
    %v8220 = vpop.f32.mrf.mxu0
    %v8221 = vadd.f32 0.0, %v8220
    %v8222 = vpop.f32.mrf.mxu0
    %8223 = vmatprep.mubr.bf16.mxu0 %v7711
    %8224 = vmatmul.mubr.bf16.gmra.mxu0 %v7455
    %v8225 = vpop.f32.mrf.mxu0
    %v8226 = vadd.f32 0.0, %v8225
    %v8227 = vpop.f32.mrf.mxu0
    %v8228 = vpop.f32.mrf.mxu0
    %v8229 = vadd.f32 0.0, %v8228
    %v8230 = vpop.f32.mrf.mxu0
    %8231 = vmatprep.mubr.bf16.mxu0 %v7714
    %8232 = vmatmul.mubr.bf16.gmra.mxu0 %v7458
    %v8233 = vpop.f32.mrf.mxu0
    %v8234 = vadd.f32 0.0, %v8233
    %v8235 = vpop.f32.mrf.mxu0
    %v8236 = vpop.f32.mrf.mxu0
    %v8237 = vadd.f32 0.0, %v8236
    %v8238 = vpop.f32.mrf.mxu0
    %8239 = vmatprep.mubr.bf16.mxu0 %v7717
    %8240 = vmatmul.mubr.bf16.gmra.mxu0 %v7461
    %v8241 = vpop.f32.mrf.mxu0
    %v8242 = vadd.f32 0.0, %v8241
    %v8243 = vpop.f32.mrf.mxu0
    %v8244 = vpop.f32.mrf.mxu0
    %v8245 = vadd.f32 0.0, %v8244
    %v8246 = vpop.f32.mrf.mxu0
    %8247 = vdwg.mxu0
    %8248 = vmatprep.subr.bf16.mxu0 0
    %8249 = vmatpush1.bf16.msra.mxu0 0
    %8250 = vmatprep.subr.bf16.mxu0 0
    %8251 = vmatpush1.bf16.msra.mxu0 0
    %8252 = vmatprep.subr.bf16.mxu0 0
    %8253 = vmatpush1.bf16.msra.mxu0 0
    %8254 = vmatprep.subr.bf16.mxu0 0
    %8255 = vmatpush1.bf16.msra.mxu0 0
    %8256 = vmatprep.subr.bf16.mxu0 0
    %8257 = vmatpush1.bf16.msra.mxu0 0
    %8258 = vmatprep.subr.bf16.mxu0 0
    %8259 = vmatpush1.bf16.msra.mxu0 0
    %8260 = vmatprep.subr.bf16.mxu0 0
    %8261 = vmatpush1.bf16.msra.mxu0 %v7844
    %8262 = vmatprep.subr.bf16.mxu0 0
    %8263 = vmatpush1.bf16.msra.mxu0 %v7843
    %8264 = vmatprep.subr.bf16.mxu0 0
    %8265 = vmatpush2.bf16.msra.mxu0 0
    %8266 = vmatprep.subr.bf16.mxu0 0
    %8267 = vmatpush2.bf16.msra.mxu0 0
    %8268 = vmatprep.subr.bf16.mxu0 0
    %8269 = vmatpush2.bf16.msra.mxu0 0
    %8270 = vmatprep.subr.bf16.mxu0 0
    %8271 = vmatpush2.bf16.msra.mxu0 0
    %8272 = vmatprep.subr.bf16.mxu0 0
    %8273 = vmatpush2.bf16.msra.mxu0 0
    %8274 = vmatprep.subr.bf16.mxu0 0
    %8275 = vmatpush2.bf16.msra.mxu0 0
    %8276 = vmatprep.subr.bf16.mxu0 0
    %8277 = vmatpush2.bf16.msra.mxu0 0
    %8278 = vmatprep.subr.bf16.mxu0 0
    %8279 = vmatpush2.bf16.msra.mxu0 0
    %8280 = vmatprep.mubr.bf16.mxu0 0
    %8281 = vmatmul.mubr.bf16.gmra.mxu0 %v7864
    %v8282 = vpop.f32.mrf.mxu0
    %v8283 = vadd.f32 %v7994, %v8282
    %v8284 = vpop.f32.mrf.mxu0
    %v8285 = vpop.f32.mrf.mxu0
    %v8286 = vadd.f32 %v7997, %v8285
    %v8287 = vpop.f32.mrf.mxu0
    %8288 = vmatprep.mubr.bf16.mxu0 0
    %8289 = vmatmul.mubr.bf16.gmra.mxu0 %v7867
    %v8290 = vpop.f32.mrf.mxu0
    %v8291 = vadd.f32 %v8002, %v8290
    %v8292 = vpop.f32.mrf.mxu0
    %v8293 = vpop.f32.mrf.mxu0
    %v8294 = vadd.f32 %v8005, %v8293
    %v8295 = vpop.f32.mrf.mxu0
    %8296 = vmatprep.mubr.bf16.mxu0 0
    %8297 = vmatmul.mubr.bf16.gmra.mxu0 %v7870
    %v8298 = vpop.f32.mrf.mxu0
    %v8299 = vadd.f32 %v8010, %v8298
    %v8300 = vpop.f32.mrf.mxu0
    %v8301 = vpop.f32.mrf.mxu0
    %v8302 = vadd.f32 %v8013, %v8301
    %v8303 = vpop.f32.mrf.mxu0
    %8304 = vmatprep.mubr.bf16.mxu0 0
    %8305 = vmatmul.mubr.bf16.gmra.mxu0 %v7873
    %v8306 = vpop.f32.mrf.mxu0
    %v8307 = vadd.f32 %v8018, %v8306
    %v8308 = vpop.f32.mrf.mxu0
    %v8309 = vpop.f32.mrf.mxu0
    %v8310 = vadd.f32 %v8021, %v8309
    %v8311 = vpop.f32.mrf.mxu0
    %8312 = vmatprep.mubr.bf16.mxu0 0
    %8313 = vmatmul.mubr.bf16.gmra.mxu0 %v7876
    %v8314 = vpop.f32.mrf.mxu0
    %v8315 = vadd.f32 %v8026, %v8314
    %v8316 = vpop.f32.mrf.mxu0
    %v8317 = vpop.f32.mrf.mxu0
    %v8318 = vadd.f32 %v8029, %v8317
    %v8319 = vpop.f32.mrf.mxu0
    %8320 = vmatprep.mubr.bf16.mxu0 0
    %8321 = vmatmul.mubr.bf16.gmra.mxu0 %v7879
    %v8322 = vpop.f32.mrf.mxu0
    %v8323 = vadd.f32 %v8034, %v8322
    %v8324 = vpop.f32.mrf.mxu0
    %v8325 = vpop.f32.mrf.mxu0
    %v8326 = vadd.f32 %v8037, %v8325
    %v8327 = vpop.f32.mrf.mxu0
    %8328 = vmatprep.mubr.bf16.mxu0 0
    %8329 = vmatmul.mubr.bf16.gmra.mxu0 %v7882
    %v8330 = vpop.f32.mrf.mxu0
    %v8331 = vadd.f32 %v8042, %v8330
    %v8332 = vpop.f32.mrf.mxu0
    %v8333 = vpop.f32.mrf.mxu0
    %v8334 = vadd.f32 %v8045, %v8333
    %v8335 = vpop.f32.mrf.mxu0
    %8336 = vmatprep.mubr.bf16.mxu0 0
    %8337 = vmatmul.mubr.bf16.gmra.mxu0 %v7885
    %v8338 = vpop.f32.mrf.mxu0
    %v8339 = vadd.f32 %v8050, %v8338
    %v8340 = vpop.f32.mrf.mxu0
    %v8341 = vpop.f32.mrf.mxu0
    %v8342 = vadd.f32 %v8053, %v8341
    %v8343 = vpop.f32.mrf.mxu0
    %8344 = vmatprep.mubr.bf16.mxu0 0
    %8345 = vmatmul.mubr.bf16.gmra.mxu0 %v7888
    %v8346 = vpop.f32.mrf.mxu0
    %v8347 = vadd.f32 %v8058, %v8346
    %v8348 = vpop.f32.mrf.mxu0
    %v8349 = vpop.f32.mrf.mxu0
    %v8350 = vadd.f32 %v8061, %v8349
    %v8351 = vpop.f32.mrf.mxu0
    %8352 = vmatprep.mubr.bf16.mxu0 0
    %8353 = vmatmul.mubr.bf16.gmra.mxu0 %v7891
    %v8354 = vpop.f32.mrf.mxu0
    %v8355 = vadd.f32 %v8066, %v8354
    %v8356 = vpop.f32.mrf.mxu0
    %v8357 = vpop.f32.mrf.mxu0
    %v8358 = vadd.f32 %v8069, %v8357
    %v8359 = vpop.f32.mrf.mxu0
    %8360 = vmatprep.mubr.bf16.mxu0 0
    %8361 = vmatmul.mubr.bf16.gmra.mxu0 %v7894
    %v8362 = vpop.f32.mrf.mxu0
    %v8363 = vadd.f32 %v8074, %v8362
    %v8364 = vpop.f32.mrf.mxu0
    %v8365 = vpop.f32.mrf.mxu0
    %v8366 = vadd.f32 %v8077, %v8365
    %v8367 = vpop.f32.mrf.mxu0
    %8368 = vmatprep.mubr.bf16.mxu0 0
    %8369 = vmatmul.mubr.bf16.gmra.mxu0 %v7897
    %v8370 = vpop.f32.mrf.mxu0
    %v8371 = vadd.f32 %v8082, %v8370
    %v8372 = vpop.f32.mrf.mxu0
    %v8373 = vpop.f32.mrf.mxu0
    %v8374 = vadd.f32 %v8085, %v8373
    %v8375 = vpop.f32.mrf.mxu0
    %8376 = vmatprep.mubr.bf16.mxu0 0
    %8377 = vmatmul.mubr.bf16.gmra.mxu0 %v7900
    %v8378 = vpop.f32.mrf.mxu0
    %v8379 = vadd.f32 %v8090, %v8378
    %v8380 = vpop.f32.mrf.mxu0
    %v8381 = vpop.f32.mrf.mxu0
    %v8382 = vadd.f32 %v8093, %v8381
    %v8383 = vpop.f32.mrf.mxu0
    %8384 = vmatprep.mubr.bf16.mxu0 0
    %8385 = vmatmul.mubr.bf16.gmra.mxu0 %v7903
    %v8386 = vpop.f32.mrf.mxu0
    %v8387 = vadd.f32 %v8098, %v8386
    %v8388 = vpop.f32.mrf.mxu0
    %v8389 = vpop.f32.mrf.mxu0
    %v8390 = vadd.f32 %v8101, %v8389
    %v8391 = vpop.f32.mrf.mxu0
    %8392 = vmatprep.mubr.bf16.mxu0 0
    %8393 = vmatmul.mubr.bf16.gmra.mxu0 %v7906
    %v8394 = vpop.f32.mrf.mxu0
    %v8395 = vadd.f32 %v8106, %v8394
    %v8396 = vpop.f32.mrf.mxu0
    %v8397 = vpop.f32.mrf.mxu0
    %v8398 = vadd.f32 %v8109, %v8397
    %v8399 = vpop.f32.mrf.mxu0
    %8400 = vmatprep.mubr.bf16.mxu0 0
    %8401 = vmatmul.mubr.bf16.gmra.mxu0 %v7909
    %v8402 = vpop.f32.mrf.mxu0
    %v8403 = vadd.f32 %v8114, %v8402
    %v8404 = vpop.f32.mrf.mxu0
    %v8405 = vpop.f32.mrf.mxu0
    %v8406 = vadd.f32 %v8117, %v8405
    %v8407 = vpop.f32.mrf.mxu0
    %8408 = vmatprep.mubr.bf16.mxu0 0
    %8409 = vmatmul.mubr.bf16.gmra.mxu0 %v7912
    %v8410 = vpop.f32.mrf.mxu0
    %v8411 = vadd.f32 %v8122, %v8410
    %v8412 = vpop.f32.mrf.mxu0
    %v8413 = vpop.f32.mrf.mxu0
    %v8414 = vadd.f32 %v8125, %v8413
    %v8415 = vpop.f32.mrf.mxu0
    %8416 = vmatprep.mubr.bf16.mxu0 0
    %8417 = vmatmul.mubr.bf16.gmra.mxu0 %v7915
    %v8418 = vpop.f32.mrf.mxu0
    %v8419 = vadd.f32 %v8130, %v8418
    %v8420 = vpop.f32.mrf.mxu0
    %v8421 = vpop.f32.mrf.mxu0
    %v8422 = vadd.f32 %v8133, %v8421
    %v8423 = vpop.f32.mrf.mxu0
    %8424 = vmatprep.mubr.bf16.mxu0 0
    %8425 = vmatmul.mubr.bf16.gmra.mxu0 %v7918
    %v8426 = vpop.f32.mrf.mxu0
    %v8427 = vadd.f32 %v8138, %v8426
    %v8428 = vpop.f32.mrf.mxu0
    %v8429 = vpop.f32.mrf.mxu0
    %v8430 = vadd.f32 %v8141, %v8429
    %v8431 = vpop.f32.mrf.mxu0
    %8432 = vmatprep.mubr.bf16.mxu0 0
    %8433 = vmatmul.mubr.bf16.gmra.mxu0 %v7921
    %v8434 = vpop.f32.mrf.mxu0
    %v8435 = vadd.f32 %v8146, %v8434
    %v8436 = vpop.f32.mrf.mxu0
    %v8437 = vpop.f32.mrf.mxu0
    %v8438 = vadd.f32 %v8149, %v8437
    %v8439 = vpop.f32.mrf.mxu0
    %8440 = vmatprep.mubr.bf16.mxu0 0
    %8441 = vmatmul.mubr.bf16.gmra.mxu0 %v7924
    %v8442 = vpop.f32.mrf.mxu0
    %v8443 = vadd.f32 %v8154, %v8442
    %v8444 = vpop.f32.mrf.mxu0
    %v8445 = vpop.f32.mrf.mxu0
    %v8446 = vadd.f32 %v8157, %v8445
    %v8447 = vpop.f32.mrf.mxu0
    %8448 = vmatprep.mubr.bf16.mxu0 0
    %8449 = vmatmul.mubr.bf16.gmra.mxu0 %v7927
    %v8450 = vpop.f32.mrf.mxu0
    %v8451 = vadd.f32 %v8162, %v8450
    %v8452 = vpop.f32.mrf.mxu0
    %v8453 = vpop.f32.mrf.mxu0
    %v8454 = vadd.f32 %v8165, %v8453
    %v8455 = vpop.f32.mrf.mxu0
    %8456 = vmatprep.mubr.bf16.mxu0 0
    %8457 = vmatmul.mubr.bf16.gmra.mxu0 %v7930
    %v8458 = vpop.f32.mrf.mxu0
    %v8459 = vadd.f32 %v8170, %v8458
    %v8460 = vpop.f32.mrf.mxu0
    %v8461 = vpop.f32.mrf.mxu0
    %v8462 = vadd.f32 %v8173, %v8461
    %v8463 = vpop.f32.mrf.mxu0
    %8464 = vmatprep.mubr.bf16.mxu0 0
    %8465 = vmatmul.mubr.bf16.gmra.mxu0 %v7933
    %v8466 = vpop.f32.mrf.mxu0
    %v8467 = vadd.f32 %v8178, %v8466
    %v8468 = vpop.f32.mrf.mxu0
    %v8469 = vpop.f32.mrf.mxu0
    %v8470 = vadd.f32 %v8181, %v8469
    %v8471 = vpop.f32.mrf.mxu0
    %8472 = vmatprep.mubr.bf16.mxu0 0
    %8473 = vmatmul.mubr.bf16.gmra.mxu0 %v7936
    %v8474 = vpop.f32.mrf.mxu0
    %v8475 = vadd.f32 %v8186, %v8474
    %v8476 = vpop.f32.mrf.mxu0
    %v8477 = vpop.f32.mrf.mxu0
    %v8478 = vadd.f32 %v8189, %v8477
    %v8479 = vpop.f32.mrf.mxu0
    %8480 = vmatprep.mubr.bf16.mxu0 0
    %8481 = vmatmul.mubr.bf16.gmra.mxu0 %v7939
    %v8482 = vpop.f32.mrf.mxu0
    %v8483 = vadd.f32 %v8194, %v8482
    %v8484 = vpop.f32.mrf.mxu0
    %v8485 = vpop.f32.mrf.mxu0
    %v8486 = vadd.f32 %v8197, %v8485
    %v8487 = vpop.f32.mrf.mxu0
    %8488 = vmatprep.mubr.bf16.mxu0 0
    %8489 = vmatmul.mubr.bf16.gmra.mxu0 %v7942
    %v8490 = vpop.f32.mrf.mxu0
    %v8491 = vadd.f32 %v8202, %v8490
    %v8492 = vpop.f32.mrf.mxu0
    %v8493 = vpop.f32.mrf.mxu0
    %v8494 = vadd.f32 %v8205, %v8493
    %v8495 = vpop.f32.mrf.mxu0
    %8496 = vmatprep.mubr.bf16.mxu0 0
    %8497 = vmatmul.mubr.bf16.gmra.mxu0 %v7945
    %v8498 = vpop.f32.mrf.mxu0
    %v8499 = vadd.f32 %v8210, %v8498
    %v8500 = vpop.f32.mrf.mxu0
    %v8501 = vpop.f32.mrf.mxu0
    %v8502 = vadd.f32 %v8213, %v8501
    %v8503 = vpop.f32.mrf.mxu0
    %8504 = vmatprep.mubr.bf16.mxu0 0
    %8505 = vmatmul.mubr.bf16.gmra.mxu0 %v7948
    %v8506 = vpop.f32.mrf.mxu0
    %v8507 = vadd.f32 %v8218, %v8506
    %v8508 = vpop.f32.mrf.mxu0
    %v8509 = vpop.f32.mrf.mxu0
    %v8510 = vadd.f32 %v8221, %v8509
    %v8511 = vpop.f32.mrf.mxu0
    %8512 = vmatprep.mubr.bf16.mxu0 0
    %8513 = vmatmul.mubr.bf16.gmra.mxu0 %v7951
    %v8514 = vpop.f32.mrf.mxu0
    %v8515 = vadd.f32 %v8226, %v8514
    %v8516 = vpop.f32.mrf.mxu0
    %v8517 = vpop.f32.mrf.mxu0
    %v8518 = vadd.f32 %v8229, %v8517
    %v8519 = vpop.f32.mrf.mxu0
    %8520 = vmatprep.mubr.bf16.mxu0 0
    %8521 = vmatmul.mubr.bf16.gmra.mxu0 %v7954
    %v8522 = vpop.f32.mrf.mxu0
    %v8523 = vadd.f32 %v8234, %v8522
    %v8524 = vpop.f32.mrf.mxu0
    %v8525 = vpop.f32.mrf.mxu0
    %v8526 = vadd.f32 %v8237, %v8525
    %v8527 = vpop.f32.mrf.mxu0
    %8528 = vmatprep.mubr.bf16.mxu0 0
    %8529 = vmatmul.mubr.bf16.gmra.mxu0 %v7957
    %v8530 = vpop.f32.mrf.mxu0
    %v8531 = vadd.f32 %v8242, %v8530
    %v8532 = vpop.f32.mrf.mxu0
    %v8533 = vpop.f32.mrf.mxu0
    %v8534 = vadd.f32 %v8245, %v8533
    %v8535 = vpop.f32.mrf.mxu0
    %8536 = vdwg.mxu0
    %v8537 = vld [vmem:[%s5] sm:$0x1]
    %v8538 = vld [vmem:[%s6] sm:$0x1]
    %v8539 = vsel %vm688, %v8283, 0.0
    %v8540 = vsel %vm688, %v8286, 0.0
    %v8541 = vadd.f32 %v8539, %v8540
    %v8542 = vsel %vm688, %v8291, 0.0
    %v8543 = vadd.f32 %v8541, %v8542
    %v8544 = vsel %vm688, %v8294, 0.0
    %v8545 = vadd.f32 %v8543, %v8544
    %v8546 = vsel %vm688, %v8299, 0.0
    %v8547 = vadd.f32 %v8545, %v8546
    %v8548 = vsel %vm688, %v8302, 0.0
    %v8549 = vadd.f32 %v8547, %v8548
    %v8550 = vsel %vm688, %v8307, 0.0
    %v8551 = vadd.f32 %v8549, %v8550
    %v8552 = vsel %vm688, %v8310, 0.0
    %v8553 = vadd.f32 %v8551, %v8552
    %v8554 = vsel %vm688, %v8315, 0.0
    %v8555 = vadd.f32 %v8553, %v8554
    %v8556 = vsel %vm688, %v8318, 0.0
    %v8557 = vadd.f32 %v8555, %v8556
    %v8558 = vsel %vm688, %v8323, 0.0
    %v8559 = vadd.f32 %v8557, %v8558
    %v8560 = vsel %vm688, %v8326, 0.0
    %v8561 = vadd.f32 %v8559, %v8560
    %v8562 = vsel %vm688, %v8331, 0.0
    %v8563 = vadd.f32 %v8561, %v8562
    %v8564 = vsel %vm688, %v8334, 0.0
    %v8565 = vadd.f32 %v8563, %v8564
    %v8566 = vsel %vm688, %v8339, 0.0
    %v8567 = vadd.f32 %v8565, %v8566
    %v8568 = vsel %vm688, %v8342, 0.0
    %v8569 = vadd.f32 %v8567, %v8568
    %v8570 = vsel %vm688, %v8347, 0.0
    %v8571 = vadd.f32 %v8569, %v8570
    %v8572 = vsel %vm688, %v8350, 0.0
    %v8573 = vadd.f32 %v8571, %v8572
    %v8574 = vsel %vm688, %v8355, 0.0
    %v8575 = vadd.f32 %v8573, %v8574
    %v8576 = vsel %vm688, %v8358, 0.0
    %v8577 = vadd.f32 %v8575, %v8576
    %v8578 = vsel %vm688, %v8363, 0.0
    %v8579 = vadd.f32 %v8577, %v8578
    %v8580 = vsel %vm688, %v8366, 0.0
    %v8581 = vadd.f32 %v8579, %v8580
    %v8582 = vsel %vm688, %v8371, 0.0
    %v8583 = vadd.f32 %v8581, %v8582
    %v8584 = vsel %vm688, %v8374, 0.0
    %v8585 = vadd.f32 %v8583, %v8584
    %v8586 = vsel %vm688, %v8379, 0.0
    %v8587 = vadd.f32 %v8585, %v8586
    %v8588 = vsel %vm688, %v8382, 0.0
    %v8589 = vadd.f32 %v8587, %v8588
    %v8590 = vsel %vm688, %v8387, 0.0
    %v8591 = vadd.f32 %v8589, %v8590
    %v8592 = vsel %vm688, %v8390, 0.0
    %v8593 = vadd.f32 %v8591, %v8592
    %v8594 = vsel %vm688, %v8395, 0.0
    %v8595 = vadd.f32 %v8593, %v8594
    %v8596 = vsel %vm688, %v8398, 0.0
    %v8597 = vadd.f32 %v8595, %v8596
    %v8598 = vsel %vm688, %v8403, 0.0
    %v8599 = vadd.f32 %v8597, %v8598
    %v8600 = vsel %vm688, %v8406, 0.0
    %v8601 = vadd.f32 %v8599, %v8600
    %v8602 = vsel %vm688, %v8411, 0.0
    %v8603 = vadd.f32 %v8601, %v8602
    %v8604 = vsel %vm688, %v8414, 0.0
    %v8605 = vadd.f32 %v8603, %v8604
    %v8606 = vsel %vm688, %v8419, 0.0
    %v8607 = vadd.f32 %v8605, %v8606
    %v8608 = vsel %vm688, %v8422, 0.0
    %v8609 = vadd.f32 %v8607, %v8608
    %v8610 = vsel %vm688, %v8427, 0.0
    %v8611 = vadd.f32 %v8609, %v8610
    %v8612 = vsel %vm688, %v8430, 0.0
    %v8613 = vadd.f32 %v8611, %v8612
    %v8614 = vsel %vm688, %v8435, 0.0
    %v8615 = vadd.f32 %v8613, %v8614
    %v8616 = vsel %vm688, %v8438, 0.0
    %v8617 = vadd.f32 %v8615, %v8616
    %v8618 = vsel %vm688, %v8443, 0.0
    %v8619 = vadd.f32 %v8617, %v8618
    %v8620 = vsel %vm688, %v8446, 0.0
    %v8621 = vadd.f32 %v8619, %v8620
    %v8622 = vsel %vm688, %v8451, 0.0
    %v8623 = vadd.f32 %v8621, %v8622
    %v8624 = vsel %vm688, %v8454, 0.0
    %v8625 = vadd.f32 %v8623, %v8624
    %v8626 = vsel %vm688, %v8459, 0.0
    %v8627 = vadd.f32 %v8625, %v8626
    %v8628 = vsel %vm688, %v8462, 0.0
    %v8629 = vadd.f32 %v8627, %v8628
    %v8630 = vsel %vm688, %v8467, 0.0
    %v8631 = vadd.f32 %v8629, %v8630
    %v8632 = vsel %vm688, %v8470, 0.0
    %v8633 = vadd.f32 %v8631, %v8632
    %v8634 = vsel %vm688, %v8475, 0.0
    %v8635 = vadd.f32 %v8633, %v8634
    %v8636 = vsel %vm688, %v8478, 0.0
    %v8637 = vadd.f32 %v8635, %v8636
    %v8638 = vsel %vm688, %v8483, 0.0
    %v8639 = vadd.f32 %v8637, %v8638
    %v8640 = vsel %vm688, %v8486, 0.0
    %v8641 = vadd.f32 %v8639, %v8640
    %v8642 = vsel %vm688, %v8491, 0.0
    %v8643 = vadd.f32 %v8641, %v8642
    %v8644 = vsel %vm688, %v8494, 0.0
    %v8645 = vadd.f32 %v8643, %v8644
    %v8646 = vsel %vm688, %v8499, 0.0
    %v8647 = vadd.f32 %v8645, %v8646
    %v8648 = vsel %vm688, %v8502, 0.0
    %v8649 = vadd.f32 %v8647, %v8648
    %v8650 = vsel %vm688, %v8507, 0.0
    %v8651 = vadd.f32 %v8649, %v8650
    %v8652 = vsel %vm688, %v8510, 0.0
    %v8653 = vadd.f32 %v8651, %v8652
    %v8654 = vsel %vm688, %v8515, 0.0
    %v8655 = vadd.f32 %v8653, %v8654
    %v8656 = vsel %vm688, %v8518, 0.0
    %v8657 = vadd.f32 %v8655, %v8656
    %v8658 = vsel %vm688, %v8523, 0.0
    %v8659 = vadd.f32 %v8657, %v8658
    %v8660 = vsel %vm688, %v8526, 0.0
    %v8661 = vadd.f32 %v8659, %v8660
    %v8662 = vsel %vm688, %v8531, 0.0
    %v8663 = vadd.f32 %v8661, %v8662
    %v8664 = vsel %vm688, %v8534, 0.0
    %v8665 = vadd.f32 %v8663, %v8664
    %v8666 = vrot.slane %v8665, 4
    %v8667 = vadd.f32 %v8665, %v8666
    %v8668 = vrot.slane %v8667, 2
    %v8669 = vadd.f32 %v8667, %v8668
    %v8670 = vrot.slane %v8669, 1
    %v8671 = vadd.f32 %v8669, %v8670
    %v8672 = vmul.f32 %v8671, 0.001953125
    %v8673 = vsub.f32 %v8283, %v8672
    %v8674 = vsub.f32 %v8286, %v8672
    %v8675 = vsub.f32 %v8291, %v8672
    %v8676 = vsub.f32 %v8294, %v8672
    %v8677 = vsub.f32 %v8299, %v8672
    %v8678 = vsub.f32 %v8302, %v8672
    %v8679 = vsub.f32 %v8307, %v8672
    %v8680 = vsub.f32 %v8310, %v8672
    %v8681 = vsub.f32 %v8315, %v8672
    %v8682 = vsub.f32 %v8318, %v8672
    %v8683 = vsub.f32 %v8323, %v8672
    %v8684 = vsub.f32 %v8326, %v8672
    %v8685 = vsub.f32 %v8331, %v8672
    %v8686 = vsub.f32 %v8334, %v8672
    %v8687 = vsub.f32 %v8339, %v8672
    %v8688 = vsub.f32 %v8342, %v8672
    %v8689 = vsub.f32 %v8347, %v8672
    %v8690 = vsub.f32 %v8350, %v8672
    %v8691 = vsub.f32 %v8355, %v8672
    %v8692 = vsub.f32 %v8358, %v8672
    %v8693 = vsub.f32 %v8363, %v8672
    %v8694 = vsub.f32 %v8366, %v8672
    %v8695 = vsub.f32 %v8371, %v8672
    %v8696 = vsub.f32 %v8374, %v8672
    %v8697 = vsub.f32 %v8379, %v8672
    %v8698 = vsub.f32 %v8382, %v8672
    %v8699 = vsub.f32 %v8387, %v8672
    %v8700 = vsub.f32 %v8390, %v8672
    %v8701 = vsub.f32 %v8395, %v8672
    %v8702 = vsub.f32 %v8398, %v8672
    %v8703 = vsub.f32 %v8403, %v8672
    %v8704 = vsub.f32 %v8406, %v8672
    %v8705 = vsub.f32 %v8411, %v8672
    %v8706 = vsub.f32 %v8414, %v8672
    %v8707 = vsub.f32 %v8419, %v8672
    %v8708 = vsub.f32 %v8422, %v8672
    %v8709 = vsub.f32 %v8427, %v8672
    %v8710 = vsub.f32 %v8430, %v8672
    %v8711 = vsub.f32 %v8435, %v8672
    %v8712 = vsub.f32 %v8438, %v8672
    %v8713 = vsub.f32 %v8443, %v8672
    %v8714 = vsub.f32 %v8446, %v8672
    %v8715 = vsub.f32 %v8451, %v8672
    %v8716 = vsub.f32 %v8454, %v8672
    %v8717 = vsub.f32 %v8459, %v8672
    %v8718 = vsub.f32 %v8462, %v8672
    %v8719 = vsub.f32 %v8467, %v8672
    %v8720 = vsub.f32 %v8470, %v8672
    %v8721 = vsub.f32 %v8475, %v8672
    %v8722 = vsub.f32 %v8478, %v8672
    %v8723 = vsub.f32 %v8483, %v8672
    %v8724 = vsub.f32 %v8486, %v8672
    %v8725 = vsub.f32 %v8491, %v8672
    %v8726 = vsub.f32 %v8494, %v8672
    %v8727 = vsub.f32 %v8499, %v8672
    %v8728 = vsub.f32 %v8502, %v8672
    %v8729 = vsub.f32 %v8507, %v8672
    %v8730 = vsub.f32 %v8510, %v8672
    %v8731 = vsub.f32 %v8515, %v8672
    %v8732 = vsub.f32 %v8518, %v8672
    %v8733 = vsub.f32 %v8523, %v8672
    %v8734 = vsub.f32 %v8526, %v8672
    %v8735 = vsub.f32 %v8531, %v8672
    %v8736 = vsub.f32 %v8534, %v8672
    %v8737 = vmul.f32 %v8673, %v8673
    %v8738 = vmul.f32 %v8674, %v8674
    %v8739 = vmul.f32 %v8675, %v8675
    %v8740 = vmul.f32 %v8676, %v8676
    %v8741 = vmul.f32 %v8677, %v8677
    %v8742 = vmul.f32 %v8678, %v8678
    %v8743 = vmul.f32 %v8679, %v8679
    %v8744 = vmul.f32 %v8680, %v8680
    %v8745 = vmul.f32 %v8681, %v8681
    %v8746 = vmul.f32 %v8682, %v8682
    %v8747 = vmul.f32 %v8683, %v8683
    %v8748 = vmul.f32 %v8684, %v8684
    %v8749 = vmul.f32 %v8685, %v8685
    %v8750 = vmul.f32 %v8686, %v8686
    %v8751 = vmul.f32 %v8687, %v8687
    %v8752 = vmul.f32 %v8688, %v8688
    %v8753 = vmul.f32 %v8689, %v8689
    %v8754 = vmul.f32 %v8690, %v8690
    %v8755 = vmul.f32 %v8691, %v8691
    %v8756 = vmul.f32 %v8692, %v8692
    %v8757 = vmul.f32 %v8693, %v8693
    %v8758 = vmul.f32 %v8694, %v8694
    %v8759 = vmul.f32 %v8695, %v8695
    %v8760 = vmul.f32 %v8696, %v8696
    %v8761 = vmul.f32 %v8697, %v8697
    %v8762 = vmul.f32 %v8698, %v8698
    %v8763 = vmul.f32 %v8699, %v8699
    %v8764 = vmul.f32 %v8700, %v8700
    %v8765 = vmul.f32 %v8701, %v8701
    %v8766 = vmul.f32 %v8702, %v8702
    %v8767 = vmul.f32 %v8703, %v8703
    %v8768 = vmul.f32 %v8704, %v8704
    %v8769 = vmul.f32 %v8705, %v8705
    %v8770 = vmul.f32 %v8706, %v8706
    %v8771 = vmul.f32 %v8707, %v8707
    %v8772 = vmul.f32 %v8708, %v8708
    %v8773 = vmul.f32 %v8709, %v8709
    %v8774 = vmul.f32 %v8710, %v8710
    %v8775 = vmul.f32 %v8711, %v8711
    %v8776 = vmul.f32 %v8712, %v8712
    %v8777 = vmul.f32 %v8713, %v8713
    %v8778 = vmul.f32 %v8714, %v8714
    %v8779 = vmul.f32 %v8715, %v8715
    %v8780 = vmul.f32 %v8716, %v8716
    %v8781 = vmul.f32 %v8717, %v8717
    %v8782 = vmul.f32 %v8718, %v8718
    %v8783 = vmul.f32 %v8719, %v8719
    %v8784 = vmul.f32 %v8720, %v8720
    %v8785 = vmul.f32 %v8721, %v8721
    %v8786 = vmul.f32 %v8722, %v8722
    %v8787 = vmul.f32 %v8723, %v8723
    %v8788 = vmul.f32 %v8724, %v8724
    %v8789 = vmul.f32 %v8725, %v8725
    %v8790 = vmul.f32 %v8726, %v8726
    %v8791 = vmul.f32 %v8727, %v8727
    %v8792 = vmul.f32 %v8728, %v8728
    %v8793 = vmul.f32 %v8729, %v8729
    %v8794 = vmul.f32 %v8730, %v8730
    %v8795 = vmul.f32 %v8731, %v8731
    %v8796 = vmul.f32 %v8732, %v8732
    %v8797 = vmul.f32 %v8733, %v8733
    %v8798 = vmul.f32 %v8734, %v8734
    %v8799 = vmul.f32 %v8735, %v8735
    %v8800 = vmul.f32 %v8736, %v8736
    %v8801 = vsel %vm688, %v8737, 0.0
    %v8802 = vsel %vm688, %v8738, 0.0
    %v8803 = vadd.f32 %v8801, %v8802
    %v8804 = vsel %vm688, %v8739, 0.0
    %v8805 = vadd.f32 %v8803, %v8804
    %v8806 = vsel %vm688, %v8740, 0.0
    %v8807 = vadd.f32 %v8805, %v8806
    %v8808 = vsel %vm688, %v8741, 0.0
    %v8809 = vadd.f32 %v8807, %v8808
    %v8810 = vsel %vm688, %v8742, 0.0
    %v8811 = vadd.f32 %v8809, %v8810
    %v8812 = vsel %vm688, %v8743, 0.0
    %v8813 = vadd.f32 %v8811, %v8812
    %v8814 = vsel %vm688, %v8744, 0.0
    %v8815 = vadd.f32 %v8813, %v8814
    %v8816 = vsel %vm688, %v8745, 0.0
    %v8817 = vadd.f32 %v8815, %v8816
    %v8818 = vsel %vm688, %v8746, 0.0
    %v8819 = vadd.f32 %v8817, %v8818
    %v8820 = vsel %vm688, %v8747, 0.0
    %v8821 = vadd.f32 %v8819, %v8820
    %v8822 = vsel %vm688, %v8748, 0.0
    %v8823 = vadd.f32 %v8821, %v8822
    %v8824 = vsel %vm688, %v8749, 0.0
    %v8825 = vadd.f32 %v8823, %v8824
    %v8826 = vsel %vm688, %v8750, 0.0
    %v8827 = vadd.f32 %v8825, %v8826
    %v8828 = vsel %vm688, %v8751, 0.0
    %v8829 = vadd.f32 %v8827, %v8828
    %v8830 = vsel %vm688, %v8752, 0.0
    %v8831 = vadd.f32 %v8829, %v8830
    %v8832 = vsel %vm688, %v8753, 0.0
    %v8833 = vadd.f32 %v8831, %v8832
    %v8834 = vsel %vm688, %v8754, 0.0
    %v8835 = vadd.f32 %v8833, %v8834
    %v8836 = vsel %vm688, %v8755, 0.0
    %v8837 = vadd.f32 %v8835, %v8836
    %v8838 = vsel %vm688, %v8756, 0.0
    %v8839 = vadd.f32 %v8837, %v8838
    %v8840 = vsel %vm688, %v8757, 0.0
    %v8841 = vadd.f32 %v8839, %v8840
    %v8842 = vsel %vm688, %v8758, 0.0
    %v8843 = vadd.f32 %v8841, %v8842
    %v8844 = vsel %vm688, %v8759, 0.0
    %v8845 = vadd.f32 %v8843, %v8844
    %v8846 = vsel %vm688, %v8760, 0.0
    %v8847 = vadd.f32 %v8845, %v8846
    %v8848 = vsel %vm688, %v8761, 0.0
    %v8849 = vadd.f32 %v8847, %v8848
    %v8850 = vsel %vm688, %v8762, 0.0
    %v8851 = vadd.f32 %v8849, %v8850
    %v8852 = vsel %vm688, %v8763, 0.0
    %v8853 = vadd.f32 %v8851, %v8852
    %v8854 = vsel %vm688, %v8764, 0.0
    %v8855 = vadd.f32 %v8853, %v8854
    %v8856 = vsel %vm688, %v8765, 0.0
    %v8857 = vadd.f32 %v8855, %v8856
    %v8858 = vsel %vm688, %v8766, 0.0
    %v8859 = vadd.f32 %v8857, %v8858
    %v8860 = vsel %vm688, %v8767, 0.0
    %v8861 = vadd.f32 %v8859, %v8860
    %v8862 = vsel %vm688, %v8768, 0.0
    %v8863 = vadd.f32 %v8861, %v8862
    %v8864 = vsel %vm688, %v8769, 0.0
    %v8865 = vadd.f32 %v8863, %v8864
    %v8866 = vsel %vm688, %v8770, 0.0
    %v8867 = vadd.f32 %v8865, %v8866
    %v8868 = vsel %vm688, %v8771, 0.0
    %v8869 = vadd.f32 %v8867, %v8868
    %v8870 = vsel %vm688, %v8772, 0.0
    %v8871 = vadd.f32 %v8869, %v8870
    %v8872 = vsel %vm688, %v8773, 0.0
    %v8873 = vadd.f32 %v8871, %v8872
    %v8874 = vsel %vm688, %v8774, 0.0
    %v8875 = vadd.f32 %v8873, %v8874
    %v8876 = vsel %vm688, %v8775, 0.0
    %v8877 = vadd.f32 %v8875, %v8876
    %v8878 = vsel %vm688, %v8776, 0.0
    %v8879 = vadd.f32 %v8877, %v8878
    %v8880 = vsel %vm688, %v8777, 0.0
    %v8881 = vadd.f32 %v8879, %v8880
    %v8882 = vsel %vm688, %v8778, 0.0
    %v8883 = vadd.f32 %v8881, %v8882
    %v8884 = vsel %vm688, %v8779, 0.0
    %v8885 = vadd.f32 %v8883, %v8884
    %v8886 = vsel %vm688, %v8780, 0.0
    %v8887 = vadd.f32 %v8885, %v8886
    %v8888 = vsel %vm688, %v8781, 0.0
    %v8889 = vadd.f32 %v8887, %v8888
    %v8890 = vsel %vm688, %v8782, 0.0
    %v8891 = vadd.f32 %v8889, %v8890
    %v8892 = vsel %vm688, %v8783, 0.0
    %v8893 = vadd.f32 %v8891, %v8892
    %v8894 = vsel %vm688, %v8784, 0.0
    %v8895 = vadd.f32 %v8893, %v8894
    %v8896 = vsel %vm688, %v8785, 0.0
    %v8897 = vadd.f32 %v8895, %v8896
    %v8898 = vsel %vm688, %v8786, 0.0
    %v8899 = vadd.f32 %v8897, %v8898
    %v8900 = vsel %vm688, %v8787, 0.0
    %v8901 = vadd.f32 %v8899, %v8900
    %v8902 = vsel %vm688, %v8788, 0.0
    %v8903 = vadd.f32 %v8901, %v8902
    %v8904 = vsel %vm688, %v8789, 0.0
    %v8905 = vadd.f32 %v8903, %v8904
    %v8906 = vsel %vm688, %v8790, 0.0
    %v8907 = vadd.f32 %v8905, %v8906
    %v8908 = vsel %vm688, %v8791, 0.0
    %v8909 = vadd.f32 %v8907, %v8908
    %v8910 = vsel %vm688, %v8792, 0.0
    %v8911 = vadd.f32 %v8909, %v8910
    %v8912 = vsel %vm688, %v8793, 0.0
    %v8913 = vadd.f32 %v8911, %v8912
    %v8914 = vsel %vm688, %v8794, 0.0
    %v8915 = vadd.f32 %v8913, %v8914
    %v8916 = vsel %vm688, %v8795, 0.0
    %v8917 = vadd.f32 %v8915, %v8916
    %v8918 = vsel %vm688, %v8796, 0.0
    %v8919 = vadd.f32 %v8917, %v8918
    %v8920 = vsel %vm688, %v8797, 0.0
    %v8921 = vadd.f32 %v8919, %v8920
    %v8922 = vsel %vm688, %v8798, 0.0
    %v8923 = vadd.f32 %v8921, %v8922
    %v8924 = vsel %vm688, %v8799, 0.0
    %v8925 = vadd.f32 %v8923, %v8924
    %v8926 = vsel %vm688, %v8800, 0.0
    %v8927 = vadd.f32 %v8925, %v8926
    %v8928 = vrot.slane %v8927, 4
    %v8929 = vadd.f32 %v8927, %v8928
    %v8930 = vrot.slane %v8929, 2
    %v8931 = vadd.f32 %v8929, %v8930
    %v8932 = vrot.slane %v8931, 1
    %v8933 = vadd.f32 %v8931, %v8932
    %v8934 = vmul.f32 %v8933, 0.001953125
    %v8935 = vadd.f32 %v8934, 1e-05
    %v8936 = vrsqrt.pop %v8935
    %v8937 = vmul.f32 %v8673, %v8936
    %v8938 = vmul.f32 %v8674, %v8936
    %v8939 = vmul.f32 %v8675, %v8936
    %v8940 = vmul.f32 %v8676, %v8936
    %v8941 = vmul.f32 %v8677, %v8936
    %v8942 = vmul.f32 %v8678, %v8936
    %v8943 = vmul.f32 %v8679, %v8936
    %v8944 = vmul.f32 %v8680, %v8936
    %v8945 = vmul.f32 %v8681, %v8936
    %v8946 = vmul.f32 %v8682, %v8936
    %v8947 = vmul.f32 %v8683, %v8936
    %v8948 = vmul.f32 %v8684, %v8936
    %v8949 = vmul.f32 %v8685, %v8936
    %v8950 = vmul.f32 %v8686, %v8936
    %v8951 = vmul.f32 %v8687, %v8936
    %v8952 = vmul.f32 %v8688, %v8936
    %v8953 = vmul.f32 %v8689, %v8936
    %v8954 = vmul.f32 %v8690, %v8936
    %v8955 = vmul.f32 %v8691, %v8936
    %v8956 = vmul.f32 %v8692, %v8936
    %v8957 = vmul.f32 %v8693, %v8936
    %v8958 = vmul.f32 %v8694, %v8936
    %v8959 = vmul.f32 %v8695, %v8936
    %v8960 = vmul.f32 %v8696, %v8936
    %v8961 = vmul.f32 %v8697, %v8936
    %v8962 = vmul.f32 %v8698, %v8936
    %v8963 = vmul.f32 %v8699, %v8936
    %v8964 = vmul.f32 %v8700, %v8936
    %v8965 = vmul.f32 %v8701, %v8936
    %v8966 = vmul.f32 %v8702, %v8936
    %v8967 = vmul.f32 %v8703, %v8936
    %v8968 = vmul.f32 %v8704, %v8936
    %v8969 = vmul.f32 %v8705, %v8936
    %v8970 = vmul.f32 %v8706, %v8936
    %v8971 = vmul.f32 %v8707, %v8936
    %v8972 = vmul.f32 %v8708, %v8936
    %v8973 = vmul.f32 %v8709, %v8936
    %v8974 = vmul.f32 %v8710, %v8936
    %v8975 = vmul.f32 %v8711, %v8936
    %v8976 = vmul.f32 %v8712, %v8936
    %v8977 = vmul.f32 %v8713, %v8936
    %v8978 = vmul.f32 %v8714, %v8936
    %v8979 = vmul.f32 %v8715, %v8936
    %v8980 = vmul.f32 %v8716, %v8936
    %v8981 = vmul.f32 %v8717, %v8936
    %v8982 = vmul.f32 %v8718, %v8936
    %v8983 = vmul.f32 %v8719, %v8936
    %v8984 = vmul.f32 %v8720, %v8936
    %v8985 = vmul.f32 %v8721, %v8936
    %v8986 = vmul.f32 %v8722, %v8936
    %v8987 = vmul.f32 %v8723, %v8936
    %v8988 = vmul.f32 %v8724, %v8936
    %v8989 = vmul.f32 %v8725, %v8936
    %v8990 = vmul.f32 %v8726, %v8936
    %v8991 = vmul.f32 %v8727, %v8936
    %v8992 = vmul.f32 %v8728, %v8936
    %v8993 = vmul.f32 %v8729, %v8936
    %v8994 = vmul.f32 %v8730, %v8936
    %v8995 = vmul.f32 %v8731, %v8936
    %v8996 = vmul.f32 %v8732, %v8936
    %v8997 = vmul.f32 %v8733, %v8936
    %v8998 = vmul.f32 %v8734, %v8936
    %v8999 = vmul.f32 %v8735, %v8936
    %v9000 = vmul.f32 %v8736, %v8936
    %v9002 = vlaneseq
    %v9003 = vshrl.u32 %v9002, 7
    %v9004 = vsub.s32 0, %v9003
    %v9005 = vrot.slane %v8537, %v9004
    %v9007 = vmul.f32 %v8937, %v9005
    %v9008 = vmul.f32 %v8938, %v9005
    %v9009 = vmul.f32 %v8939, %v9005
    %v9010 = vmul.f32 %v8940, %v9005
    %v9011 = vmul.f32 %v8941, %v9005
    %v9012 = vmul.f32 %v8942, %v9005
    %v9013 = vmul.f32 %v8943, %v9005
    %v9014 = vmul.f32 %v8944, %v9005
    %v9015 = vmul.f32 %v8945, %v9005
    %v9016 = vmul.f32 %v8946, %v9005
    %v9017 = vmul.f32 %v8947, %v9005
    %v9018 = vmul.f32 %v8948, %v9005
    %v9019 = vmul.f32 %v8949, %v9005
    %v9020 = vmul.f32 %v8950, %v9005
    %v9021 = vmul.f32 %v8951, %v9005
    %v9022 = vmul.f32 %v8952, %v9005
    %v9023 = vmul.f32 %v8953, %v9005
    %v9024 = vmul.f32 %v8954, %v9005
    %v9025 = vmul.f32 %v8955, %v9005
    %v9026 = vmul.f32 %v8956, %v9005
    %v9027 = vmul.f32 %v8957, %v9005
    %v9028 = vmul.f32 %v8958, %v9005
    %v9029 = vmul.f32 %v8959, %v9005
    %v9030 = vmul.f32 %v8960, %v9005
    %v9031 = vmul.f32 %v8961, %v9005
    %v9032 = vmul.f32 %v8962, %v9005
    %v9033 = vmul.f32 %v8963, %v9005
    %v9034 = vmul.f32 %v8964, %v9005
    %v9035 = vmul.f32 %v8965, %v9005
    %v9036 = vmul.f32 %v8966, %v9005
    %v9037 = vmul.f32 %v8967, %v9005
    %v9038 = vmul.f32 %v8968, %v9005
    %v9039 = vmul.f32 %v8969, %v9005
    %v9040 = vmul.f32 %v8970, %v9005
    %v9041 = vmul.f32 %v8971, %v9005
    %v9042 = vmul.f32 %v8972, %v9005
    %v9043 = vmul.f32 %v8973, %v9005
    %v9044 = vmul.f32 %v8974, %v9005
    %v9045 = vmul.f32 %v8975, %v9005
    %v9046 = vmul.f32 %v8976, %v9005
    %v9047 = vmul.f32 %v8977, %v9005
    %v9048 = vmul.f32 %v8978, %v9005
    %v9049 = vmul.f32 %v8979, %v9005
    %v9050 = vmul.f32 %v8980, %v9005
    %v9051 = vmul.f32 %v8981, %v9005
    %v9052 = vmul.f32 %v8982, %v9005
    %v9053 = vmul.f32 %v8983, %v9005
    %v9054 = vmul.f32 %v8984, %v9005
    %v9055 = vmul.f32 %v8985, %v9005
    %v9056 = vmul.f32 %v8986, %v9005
    %v9057 = vmul.f32 %v8987, %v9005
    %v9058 = vmul.f32 %v8988, %v9005
    %v9059 = vmul.f32 %v8989, %v9005
    %v9060 = vmul.f32 %v8990, %v9005
    %v9061 = vmul.f32 %v8991, %v9005
    %v9062 = vmul.f32 %v8992, %v9005
    %v9063 = vmul.f32 %v8993, %v9005
    %v9064 = vmul.f32 %v8994, %v9005
    %v9065 = vmul.f32 %v8995, %v9005
    %v9066 = vmul.f32 %v8996, %v9005
    %v9067 = vmul.f32 %v8997, %v9005
    %v9068 = vmul.f32 %v8998, %v9005
    %v9069 = vmul.f32 %v8999, %v9005
    %v9070 = vmul.f32 %v9000, %v9005
    %v9072 = vlaneseq
    %v9073 = vshrl.u32 %v9072, 7
    %v9074 = vsub.s32 0, %v9073
    %v9075 = vrot.slane %v8538, %v9074
    %v9077 = vadd.f32 %v9007, %v9075
    %v9078 = vadd.f32 %v9008, %v9075
    %v9079 = vadd.f32 %v9009, %v9075
    %v9080 = vadd.f32 %v9010, %v9075
    %v9081 = vadd.f32 %v9011, %v9075
    %v9082 = vadd.f32 %v9012, %v9075
    %v9083 = vadd.f32 %v9013, %v9075
    %v9084 = vadd.f32 %v9014, %v9075
    %v9085 = vadd.f32 %v9015, %v9075
    %v9086 = vadd.f32 %v9016, %v9075
    %v9087 = vadd.f32 %v9017, %v9075
    %v9088 = vadd.f32 %v9018, %v9075
    %v9089 = vadd.f32 %v9019, %v9075
    %v9090 = vadd.f32 %v9020, %v9075
    %v9091 = vadd.f32 %v9021, %v9075
    %v9092 = vadd.f32 %v9022, %v9075
    %v9093 = vadd.f32 %v9023, %v9075
    %v9094 = vadd.f32 %v9024, %v9075
    %v9095 = vadd.f32 %v9025, %v9075
    %v9096 = vadd.f32 %v9026, %v9075
    %v9097 = vadd.f32 %v9027, %v9075
    %v9098 = vadd.f32 %v9028, %v9075
    %v9099 = vadd.f32 %v9029, %v9075
    %v9100 = vadd.f32 %v9030, %v9075
    %v9101 = vadd.f32 %v9031, %v9075
    %v9102 = vadd.f32 %v9032, %v9075
    %v9103 = vadd.f32 %v9033, %v9075
    %v9104 = vadd.f32 %v9034, %v9075
    %v9105 = vadd.f32 %v9035, %v9075
    %v9106 = vadd.f32 %v9036, %v9075
    %v9107 = vadd.f32 %v9037, %v9075
    %v9108 = vadd.f32 %v9038, %v9075
    %v9109 = vadd.f32 %v9039, %v9075
    %v9110 = vadd.f32 %v9040, %v9075
    %v9111 = vadd.f32 %v9041, %v9075
    %v9112 = vadd.f32 %v9042, %v9075
    %v9113 = vadd.f32 %v9043, %v9075
    %v9114 = vadd.f32 %v9044, %v9075
    %v9115 = vadd.f32 %v9045, %v9075
    %v9116 = vadd.f32 %v9046, %v9075
    %v9117 = vadd.f32 %v9047, %v9075
    %v9118 = vadd.f32 %v9048, %v9075
    %v9119 = vadd.f32 %v9049, %v9075
    %v9120 = vadd.f32 %v9050, %v9075
    %v9121 = vadd.f32 %v9051, %v9075
    %v9122 = vadd.f32 %v9052, %v9075
    %v9123 = vadd.f32 %v9053, %v9075
    %v9124 = vadd.f32 %v9054, %v9075
    %v9125 = vadd.f32 %v9055, %v9075
    %v9126 = vadd.f32 %v9056, %v9075
    %v9127 = vadd.f32 %v9057, %v9075
    %v9128 = vadd.f32 %v9058, %v9075
    %v9129 = vadd.f32 %v9059, %v9075
    %v9130 = vadd.f32 %v9060, %v9075
    %v9131 = vadd.f32 %v9061, %v9075
    %v9132 = vadd.f32 %v9062, %v9075
    %v9133 = vadd.f32 %v9063, %v9075
    %v9134 = vadd.f32 %v9064, %v9075
    %v9135 = vadd.f32 %v9065, %v9075
    %v9136 = vadd.f32 %v9066, %v9075
    %v9137 = vadd.f32 %v9067, %v9075
    %v9138 = vadd.f32 %v9068, %v9075
    %v9139 = vadd.f32 %v9069, %v9075
    %v9140 = vadd.f32 %v9070, %v9075
    %v9141 = vmax.f32 %v9077, 0.0
    %v9142 = vmax.f32 %v9078, 0.0
    %v9143 = vmax.f32 %v9079, 0.0
    %v9144 = vmax.f32 %v9080, 0.0
    %v9145 = vmax.f32 %v9081, 0.0
    %v9146 = vmax.f32 %v9082, 0.0
    %v9147 = vmax.f32 %v9083, 0.0
    %v9148 = vmax.f32 %v9084, 0.0
    %v9149 = vmax.f32 %v9085, 0.0
    %v9150 = vmax.f32 %v9086, 0.0
    %v9151 = vmax.f32 %v9087, 0.0
    %v9152 = vmax.f32 %v9088, 0.0
    %v9153 = vmax.f32 %v9089, 0.0
    %v9154 = vmax.f32 %v9090, 0.0
    %v9155 = vmax.f32 %v9091, 0.0
    %v9156 = vmax.f32 %v9092, 0.0
    %v9157 = vmax.f32 %v9093, 0.0
    %v9158 = vmax.f32 %v9094, 0.0
    %v9159 = vmax.f32 %v9095, 0.0
    %v9160 = vmax.f32 %v9096, 0.0
    %v9161 = vmax.f32 %v9097, 0.0
    %v9162 = vmax.f32 %v9098, 0.0
    %v9163 = vmax.f32 %v9099, 0.0
    %v9164 = vmax.f32 %v9100, 0.0
    %v9165 = vmax.f32 %v9101, 0.0
    %v9166 = vmax.f32 %v9102, 0.0
    %v9167 = vmax.f32 %v9103, 0.0
    %v9168 = vmax.f32 %v9104, 0.0
    %v9169 = vmax.f32 %v9105, 0.0
    %v9170 = vmax.f32 %v9106, 0.0
    %v9171 = vmax.f32 %v9107, 0.0
    %v9172 = vmax.f32 %v9108, 0.0
    %v9173 = vmax.f32 %v9109, 0.0
    %v9174 = vmax.f32 %v9110, 0.0
    %v9175 = vmax.f32 %v9111, 0.0
    %v9176 = vmax.f32 %v9112, 0.0
    %v9177 = vmax.f32 %v9113, 0.0
    %v9178 = vmax.f32 %v9114, 0.0
    %v9179 = vmax.f32 %v9115, 0.0
    %v9180 = vmax.f32 %v9116, 0.0
    %v9181 = vmax.f32 %v9117, 0.0
    %v9182 = vmax.f32 %v9118, 0.0
    %v9183 = vmax.f32 %v9119, 0.0
    %v9184 = vmax.f32 %v9120, 0.0
    %v9185 = vmax.f32 %v9121, 0.0
    %v9186 = vmax.f32 %v9122, 0.0
    %v9187 = vmax.f32 %v9123, 0.0
    %v9188 = vmax.f32 %v9124, 0.0
    %v9189 = vmax.f32 %v9125, 0.0
    %v9190 = vmax.f32 %v9126, 0.0
    %v9191 = vmax.f32 %v9127, 0.0
    %v9192 = vmax.f32 %v9128, 0.0
    %v9193 = vmax.f32 %v9129, 0.0
    %v9194 = vmax.f32 %v9130, 0.0
    %v9195 = vmax.f32 %v9131, 0.0
    %v9196 = vmax.f32 %v9132, 0.0
    %v9197 = vmax.f32 %v9133, 0.0
    %v9198 = vmax.f32 %v9134, 0.0
    %v9199 = vmax.f32 %v9135, 0.0
    %v9200 = vmax.f32 %v9136, 0.0
    %v9201 = vmax.f32 %v9137, 0.0
    %v9202 = vmax.f32 %v9138, 0.0
    %v9203 = vmax.f32 %v9139, 0.0
    %v9204 = vmax.f32 %v9140, 0.0
    %v9205 = vsel %vm688, %v9141, 0.0
    %v9206 = vsel %vm688, %v9142, 0.0
    %v9207 = vadd.f32 %v9205, %v9206
    %v9208 = vsel %vm688, %v9143, 0.0
    %v9209 = vadd.f32 %v9207, %v9208
    %v9210 = vsel %vm688, %v9144, 0.0
    %v9211 = vadd.f32 %v9209, %v9210
    %v9212 = vsel %vm688, %v9145, 0.0
    %v9213 = vadd.f32 %v9211, %v9212
    %v9214 = vsel %vm688, %v9146, 0.0
    %v9215 = vadd.f32 %v9213, %v9214
    %v9216 = vsel %vm688, %v9147, 0.0
    %v9217 = vadd.f32 %v9215, %v9216
    %v9218 = vsel %vm688, %v9148, 0.0
    %v9219 = vadd.f32 %v9217, %v9218
    %v9220 = vsel %vm688, %v9149, 0.0
    %v9221 = vadd.f32 %v9219, %v9220
    %v9222 = vsel %vm688, %v9150, 0.0
    %v9223 = vadd.f32 %v9221, %v9222
    %v9224 = vsel %vm688, %v9151, 0.0
    %v9225 = vadd.f32 %v9223, %v9224
    %v9226 = vsel %vm688, %v9152, 0.0
    %v9227 = vadd.f32 %v9225, %v9226
    %v9228 = vsel %vm688, %v9153, 0.0
    %v9229 = vadd.f32 %v9227, %v9228
    %v9230 = vsel %vm688, %v9154, 0.0
    %v9231 = vadd.f32 %v9229, %v9230
    %v9232 = vsel %vm688, %v9155, 0.0
    %v9233 = vadd.f32 %v9231, %v9232
    %v9234 = vsel %vm688, %v9156, 0.0
    %v9235 = vadd.f32 %v9233, %v9234
    %v9236 = vsel %vm688, %v9157, 0.0
    %v9237 = vadd.f32 %v9235, %v9236
    %v9238 = vsel %vm688, %v9158, 0.0
    %v9239 = vadd.f32 %v9237, %v9238
    %v9240 = vsel %vm688, %v9159, 0.0
    %v9241 = vadd.f32 %v9239, %v9240
    %v9242 = vsel %vm688, %v9160, 0.0
    %v9243 = vadd.f32 %v9241, %v9242
    %v9244 = vsel %vm688, %v9161, 0.0
    %v9245 = vadd.f32 %v9243, %v9244
    %v9246 = vsel %vm688, %v9162, 0.0
    %v9247 = vadd.f32 %v9245, %v9246
    %v9248 = vsel %vm688, %v9163, 0.0
    %v9249 = vadd.f32 %v9247, %v9248
    %v9250 = vsel %vm688, %v9164, 0.0
    %v9251 = vadd.f32 %v9249, %v9250
    %v9252 = vsel %vm688, %v9165, 0.0
    %v9253 = vadd.f32 %v9251, %v9252
    %v9254 = vsel %vm688, %v9166, 0.0
    %v9255 = vadd.f32 %v9253, %v9254
    %v9256 = vsel %vm688, %v9167, 0.0
    %v9257 = vadd.f32 %v9255, %v9256
    %v9258 = vsel %vm688, %v9168, 0.0
    %v9259 = vadd.f32 %v9257, %v9258
    %v9260 = vsel %vm688, %v9169, 0.0
    %v9261 = vadd.f32 %v9259, %v9260
    %v9262 = vsel %vm688, %v9170, 0.0
    %v9263 = vadd.f32 %v9261, %v9262
    %v9264 = vsel %vm688, %v9171, 0.0
    %v9265 = vadd.f32 %v9263, %v9264
    %v9266 = vsel %vm688, %v9172, 0.0
    %v9267 = vadd.f32 %v9265, %v9266
    %v9268 = vrot.slane %v9267, 4
    %v9269 = vadd.f32 %v9267, %v9268
    %v9270 = vrot.slane %v9269, 2
    %v9271 = vadd.f32 %v9269, %v9270
    %v9272 = vrot.slane %v9271, 1
    %v9273 = vadd.f32 %v9271, %v9272
    %v9274 = vsel %vm688, %v9173, 0.0
    %v9275 = vsel %vm688, %v9174, 0.0
    %v9276 = vadd.f32 %v9274, %v9275
    %v9277 = vsel %vm688, %v9175, 0.0
    %v9278 = vadd.f32 %v9276, %v9277
    %v9279 = vsel %vm688, %v9176, 0.0
    %v9280 = vadd.f32 %v9278, %v9279
    %v9281 = vsel %vm688, %v9177, 0.0
    %v9282 = vadd.f32 %v9280, %v9281
    %v9283 = vsel %vm688, %v9178, 0.0
    %v9284 = vadd.f32 %v9282, %v9283
    %v9285 = vsel %vm688, %v9179, 0.0
    %v9286 = vadd.f32 %v9284, %v9285
    %v9287 = vsel %vm688, %v9180, 0.0
    %v9288 = vadd.f32 %v9286, %v9287
    %v9289 = vsel %vm688, %v9181, 0.0
    %v9290 = vadd.f32 %v9288, %v9289
    %v9291 = vsel %vm688, %v9182, 0.0
    %v9292 = vadd.f32 %v9290, %v9291
    %v9293 = vsel %vm688, %v9183, 0.0
    %v9294 = vadd.f32 %v9292, %v9293
    %v9295 = vsel %vm688, %v9184, 0.0
    %v9296 = vadd.f32 %v9294, %v9295
    %v9297 = vsel %vm688, %v9185, 0.0
    %v9298 = vadd.f32 %v9296, %v9297
    %v9299 = vsel %vm688, %v9186, 0.0
    %v9300 = vadd.f32 %v9298, %v9299
    %v9301 = vsel %vm688, %v9187, 0.0
    %v9302 = vadd.f32 %v9300, %v9301
    %v9303 = vsel %vm688, %v9188, 0.0
    %v9304 = vadd.f32 %v9302, %v9303
    %v9305 = vsel %vm688, %v9189, 0.0
    %v9306 = vadd.f32 %v9304, %v9305
    %v9307 = vsel %vm688, %v9190, 0.0
    %v9308 = vadd.f32 %v9306, %v9307
    %v9309 = vsel %vm688, %v9191, 0.0
    %v9310 = vadd.f32 %v9308, %v9309
    %v9311 = vsel %vm688, %v9192, 0.0
    %v9312 = vadd.f32 %v9310, %v9311
    %v9313 = vsel %vm688, %v9193, 0.0
    %v9314 = vadd.f32 %v9312, %v9313
    %v9315 = vsel %vm688, %v9194, 0.0
    %v9316 = vadd.f32 %v9314, %v9315
    %v9317 = vsel %vm688, %v9195, 0.0
    %v9318 = vadd.f32 %v9316, %v9317
    %v9319 = vsel %vm688, %v9196, 0.0
    %v9320 = vadd.f32 %v9318, %v9319
    %v9321 = vsel %vm688, %v9197, 0.0
    %v9322 = vadd.f32 %v9320, %v9321
    %v9323 = vsel %vm688, %v9198, 0.0
    %v9324 = vadd.f32 %v9322, %v9323
    %v9325 = vsel %vm688, %v9199, 0.0
    %v9326 = vadd.f32 %v9324, %v9325
    %v9327 = vsel %vm688, %v9200, 0.0
    %v9328 = vadd.f32 %v9326, %v9327
    %v9329 = vsel %vm688, %v9201, 0.0
    %v9330 = vadd.f32 %v9328, %v9329
    %v9331 = vsel %vm688, %v9202, 0.0
    %v9332 = vadd.f32 %v9330, %v9331
    %v9333 = vsel %vm688, %v9203, 0.0
    %v9334 = vadd.f32 %v9332, %v9333
    %v9335 = vsel %vm688, %v9204, 0.0
    %v9336 = vadd.f32 %v9334, %v9335
    %v9337 = vrot.slane %v9336, 4
    %v9338 = vadd.f32 %v9336, %v9337
    %v9339 = vrot.slane %v9338, 2
    %v9340 = vadd.f32 %v9338, %v9339
    %v9341 = vrot.slane %v9340, 1
    %v9342 = vadd.f32 %v9340, %v9341
    %v9343 = vrcp.pop 256.0
    %v9344 = vmul.f32 %v9273, %v9343
    %v9345 = vmul.f32 %v9342, %v9343
    %v9346 = vpack.c.bf16 %v9344, %v9344
    %v9347 = vpack.c.bf16 %v9345, %v9345
    %v9348 = vld [vmem:[%s7] sm:$0xf]
    %v9349 = vld [vmem:[%s7 + $0x4] sm:$0xf]
    %v9350 = vld [vmem:[%s7 + $0x8] sm:$0xf]
    %v9351 = vld [vmem:[%s7 + $0xc] sm:$0xf]
    %v9352 = vld [vmem:[%s8] sm:$0x1]
    %v9354 = vlaneseq
    %v9355 = vshrl.u32 %v9354, 7
    %v9356 = vsub.s32 0, %v9355
    %v9357 = vrot.slane %v9352, %v9356
    %v9361 = vunpack.c.l.b16 %v9346
    %v9362 = vunpack.c.l.b16 %v9347
    %vm9363 = vcmask 1041409
    %v9364 = vsel %vm9363, %v9362, %v9361
    %v9365 = vpack.c.b16 %v9364, %v9364
    %v9370 = vunpack.c.l.b16 %v9348
    %v9371 = vunpack.c.l.b16 %v9349
    %v9372 = vunpack.c.l.b16 %v9350
    %v9373 = vunpack.c.l.b16 %v9351
    %v9374 = vpack.c.b16 %v9371, %v9370
    %v9375 = vpack.c.b16 %v9373, %v9372
    %v9379 = vsel %vm688, %v9365, 0
    %9381 = vmatprep.subr.bf16.mxu0 0
    %9382 = vmatpush1.bf16.msra.mxu0 0
    %9383 = vmatprep.subr.bf16.mxu0 0
    %9384 = vmatpush1.bf16.msra.mxu0 0
    %9385 = vmatprep.subr.bf16.mxu0 0
    %9386 = vmatpush1.bf16.msra.mxu0 0
    %9387 = vmatprep.subr.bf16.mxu0 0
    %9388 = vmatpush1.bf16.msra.mxu0 0
    %9389 = vmatprep.subr.bf16.mxu0 0
    %9390 = vmatpush1.bf16.msra.mxu0 0
    %9391 = vmatprep.subr.bf16.mxu0 0
    %9392 = vmatpush1.bf16.msra.mxu0 0
    %9393 = vmatprep.subr.bf16.mxu0 0
    %9394 = vmatpush1.bf16.msra.mxu0 %v9375
    %9395 = vmatprep.subr.bf16.mxu0 0
    %9396 = vmatpush1.bf16.msra.mxu0 %v9374
    %9397 = vmatprep.subr.bf16.mxu0 0
    %9398 = vmatpush2.bf16.msra.mxu0 0
    %9399 = vmatprep.subr.bf16.mxu0 0
    %9400 = vmatpush2.bf16.msra.mxu0 0
    %9401 = vmatprep.subr.bf16.mxu0 0
    %9402 = vmatpush2.bf16.msra.mxu0 0
    %9403 = vmatprep.subr.bf16.mxu0 0
    %9404 = vmatpush2.bf16.msra.mxu0 0
    %9405 = vmatprep.subr.bf16.mxu0 0
    %9406 = vmatpush2.bf16.msra.mxu0 0
    %9407 = vmatprep.subr.bf16.mxu0 0
    %9408 = vmatpush2.bf16.msra.mxu0 0
    %9409 = vmatprep.subr.bf16.mxu0 0
    %9410 = vmatpush2.bf16.msra.mxu0 0
    %9411 = vmatprep.subr.bf16.mxu0 0
    %9412 = vmatpush2.bf16.msra.mxu0 0
    %9413 = vmatprep.mubr.bf16.mxu0 0
    %9414 = vmatmul.mubr.bf16.gmra.mxu0 %v9379
    %v9415 = vpop.f32.mrf.mxu0
    %v9416 = vadd.f32 %v9357, %v9415
    %v9417 = vpop.f32.mrf.mxu0
    %v9418 = vpop.f32.mrf.mxu0
    %v9419 = vpop.f32.mrf.mxu0
    %9420 = vdwg.mxu0
    %v9421 = vmax.f32 %v9416, 0.0
    %v9422 = vpack.c.bf16 %v9421, %v9421
    %v9423 = vld [vmem:[%s9] sm:$0xf]
    %v9424 = vld [vmem:[%s10] sm:$0x1]
    %v9426 = vlaneseq
    %v9427 = vshrl.u32 %v9426, 7
    %v9428 = vsub.s32 0, %v9427
    %v9429 = vrot.slane %v9424, %v9428
    %vm9431 = vcmask 64512
    %v9433 = vsel %vm9431, %v9422, 0
    %vm9435 = vcmask 1043456
    %v9437 = vsel %vm9435, %v9423, 0
    %9439 = vmatprep.subr.bf16.mxu0 0
    %9440 = vmatpush1.bf16.msra.mxu0 0
    %9441 = vmatprep.subr.bf16.mxu0 0
    %9442 = vmatpush1.bf16.msra.mxu0 0
    %9443 = vmatprep.subr.bf16.mxu0 0
    %9444 = vmatpush1.bf16.msra.mxu0 0
    %9445 = vmatprep.subr.bf16.mxu0 0
    %9446 = vmatpush1.bf16.msra.mxu0 0
    %9447 = vmatprep.subr.bf16.mxu0 0
    %9448 = vmatpush1.bf16.msra.mxu0 0
    %9449 = vmatprep.subr.bf16.mxu0 0
    %9450 = vmatpush1.bf16.msra.mxu0 0
    %9451 = vmatprep.subr.bf16.mxu0 0
    %9452 = vmatpush1.bf16.msra.mxu0 0
    %9453 = vmatprep.subr.bf16.mxu0 0
    %9454 = vmatpush1.bf16.msra.mxu0 %v9437
    %9455 = vmatprep.subr.bf16.mxu0 0
    %9456 = vmatpush2.bf16.msra.mxu0 0
    %9457 = vmatprep.subr.bf16.mxu0 0
    %9458 = vmatpush2.bf16.msra.mxu0 0
    %9459 = vmatprep.subr.bf16.mxu0 0
    %9460 = vmatpush2.bf16.msra.mxu0 0
    %9461 = vmatprep.subr.bf16.mxu0 0
    %9462 = vmatpush2.bf16.msra.mxu0 0
    %9463 = vmatprep.subr.bf16.mxu0 0
    %9464 = vmatpush2.bf16.msra.mxu0 0
    %9465 = vmatprep.subr.bf16.mxu0 0
    %9466 = vmatpush2.bf16.msra.mxu0 0
    %9467 = vmatprep.subr.bf16.mxu0 0
    %9468 = vmatpush2.bf16.msra.mxu0 0
    %9469 = vmatprep.subr.bf16.mxu0 0
    %9470 = vmatpush2.bf16.msra.mxu0 0
    %9471 = vmatprep.mubr.bf16.mxu0 0
    %9472 = vmatmul.mubr.bf16.gmra.mxu0 %v9433
    %v9473 = vpop.f32.mrf.mxu0
    %v9474 = vadd.f32 %v9429, %v9473
    %v9475 = vpop.f32.mrf.mxu0
    %v9476 = vpop.f32.mrf.mxu0
    %v9477 = vpop.f32.mrf.mxu0
    %9478 = vdwg.mxu0
    %v9479 = vsub.f32 0.0, %v9474
    %v9480 = vmul.f32 %v9479, 1.442695
    %v9481 = vpow.pop %v9480
    %v9482 = vadd.f32 %v9481, 1.0
    %v9483 = vrcp.pop %v9482
    %v9484 = vmul.f32 1.0, %v9483
    %v9487 = vunpack.c.l.s4 1966171168
    %v9488 = vunpack.c.0.s8 %v9487
    %v9489 = vlaneseq
    %v9490 = vshrl.u32 %v9489, 7
    %v9491 = vsub.s32 %v9488, %v9490
    %v9492 = vrot.slane %v9484, %v9491
    %v9493 = vcombine.high %v9492, %v9492
    %v9495 = vunpack.c.l.s4 1966171168
    %v9496 = vunpack.c.0.s8 %v9495
    %v9497 = vlaneseq
    %v9498 = vshrl.u32 %v9497, 7
    %v9499 = vsub.s32 %v9496, %v9498
    %v9500 = vrot.slane %v9492, %v9499
    %v9502 = vunpack.c.l.s4 1966171168
    %v9503 = vunpack.c.0.s8 %v9502
    %v9504 = vlaneseq
    %v9505 = vshrl.u32 %v9504, 7
    %v9506 = vsub.s32 %v9503, %v9505
    %v9507 = vrot.slane %v9493, %v9506
    %v9508 = vlaneseq
    %v9509 = vshrl.u32 %v9508, 7
    %v9510 = vsub.s32 0, %v9509
    %v9511 = vrot.slane %v9500, %v9510
    %v9512 = vlaneseq
    %v9513 = vshrl.u32 %v9512, 7
    %v9514 = vsub.s32 0, %v9513
    %v9515 = vrot.slane %v9507, %v9514
    %v9518 = vmul.f32 %v9141, %v9511
    %v9519 = vmul.f32 %v9142, %v9511
    %v9520 = vmul.f32 %v9143, %v9511
    %v9521 = vmul.f32 %v9144, %v9511
    %v9522 = vmul.f32 %v9145, %v9511
    %v9523 = vmul.f32 %v9146, %v9511
    %v9524 = vmul.f32 %v9147, %v9511
    %v9525 = vmul.f32 %v9148, %v9511
    %v9526 = vmul.f32 %v9149, %v9511
    %v9527 = vmul.f32 %v9150, %v9511
    %v9528 = vmul.f32 %v9151, %v9511
    %v9529 = vmul.f32 %v9152, %v9511
    %v9530 = vmul.f32 %v9153, %v9511
    %v9531 = vmul.f32 %v9154, %v9511
    %v9532 = vmul.f32 %v9155, %v9511
    %v9533 = vmul.f32 %v9156, %v9511
    %v9534 = vmul.f32 %v9157, %v9511
    %v9535 = vmul.f32 %v9158, %v9511
    %v9536 = vmul.f32 %v9159, %v9511
    %v9537 = vmul.f32 %v9160, %v9511
    %v9538 = vmul.f32 %v9161, %v9511
    %v9539 = vmul.f32 %v9162, %v9511
    %v9540 = vmul.f32 %v9163, %v9511
    %v9541 = vmul.f32 %v9164, %v9511
    %v9542 = vmul.f32 %v9165, %v9511
    %v9543 = vmul.f32 %v9166, %v9511
    %v9544 = vmul.f32 %v9167, %v9511
    %v9545 = vmul.f32 %v9168, %v9511
    %v9546 = vmul.f32 %v9169, %v9511
    %v9547 = vmul.f32 %v9170, %v9511
    %v9548 = vmul.f32 %v9171, %v9511
    %v9549 = vmul.f32 %v9172, %v9511
    %v9550 = vmul.f32 %v9173, %v9515
    %v9551 = vmul.f32 %v9174, %v9515
    %v9552 = vmul.f32 %v9175, %v9515
    %v9553 = vmul.f32 %v9176, %v9515
    %v9554 = vmul.f32 %v9177, %v9515
    %v9555 = vmul.f32 %v9178, %v9515
    %v9556 = vmul.f32 %v9179, %v9515
    %v9557 = vmul.f32 %v9180, %v9515
    %v9558 = vmul.f32 %v9181, %v9515
    %v9559 = vmul.f32 %v9182, %v9515
    %v9560 = vmul.f32 %v9183, %v9515
    %v9561 = vmul.f32 %v9184, %v9515
    %v9562 = vmul.f32 %v9185, %v9515
    %v9563 = vmul.f32 %v9186, %v9515
    %v9564 = vmul.f32 %v9187, %v9515
    %v9565 = vmul.f32 %v9188, %v9515
    %v9566 = vmul.f32 %v9189, %v9515
    %v9567 = vmul.f32 %v9190, %v9515
    %v9568 = vmul.f32 %v9191, %v9515
    %v9569 = vmul.f32 %v9192, %v9515
    %v9570 = vmul.f32 %v9193, %v9515
    %v9571 = vmul.f32 %v9194, %v9515
    %v9572 = vmul.f32 %v9195, %v9515
    %v9573 = vmul.f32 %v9196, %v9515
    %v9574 = vmul.f32 %v9197, %v9515
    %v9575 = vmul.f32 %v9198, %v9515
    %v9576 = vmul.f32 %v9199, %v9515
    %v9577 = vmul.f32 %v9200, %v9515
    %v9578 = vmul.f32 %v9201, %v9515
    %v9579 = vmul.f32 %v9202, %v9515
    %v9580 = vmul.f32 %v9203, %v9515
    %v9581 = vmul.f32 %v9204, %v9515
    %v9582 = vpack.c.bf16 %v9519, %v9518
    %v9583 = vpack.c.bf16 %v9521, %v9520
    %v9584 = vpack.c.bf16 %v9523, %v9522
    %v9585 = vpack.c.bf16 %v9525, %v9524
    %v9586 = vpack.c.bf16 %v9527, %v9526
    %v9587 = vpack.c.bf16 %v9529, %v9528
    %v9588 = vpack.c.bf16 %v9531, %v9530
    %v9589 = vpack.c.bf16 %v9533, %v9532
    %v9590 = vpack.c.bf16 %v9535, %v9534
    %v9591 = vpack.c.bf16 %v9537, %v9536
    %v9592 = vpack.c.bf16 %v9539, %v9538
    %v9593 = vpack.c.bf16 %v9541, %v9540
    %v9594 = vpack.c.bf16 %v9543, %v9542
    %v9595 = vpack.c.bf16 %v9545, %v9544
    %v9596 = vpack.c.bf16 %v9547, %v9546
    %v9597 = vpack.c.bf16 %v9549, %v9548
    %v9598 = vpack.c.bf16 %v9551, %v9550
    %v9599 = vpack.c.bf16 %v9553, %v9552
    %v9600 = vpack.c.bf16 %v9555, %v9554
    %v9601 = vpack.c.bf16 %v9557, %v9556
    %v9602 = vpack.c.bf16 %v9559, %v9558
    %v9603 = vpack.c.bf16 %v9561, %v9560
    %v9604 = vpack.c.bf16 %v9563, %v9562
    %v9605 = vpack.c.bf16 %v9565, %v9564
    %v9606 = vpack.c.bf16 %v9567, %v9566
    %v9607 = vpack.c.bf16 %v9569, %v9568
    %v9608 = vpack.c.bf16 %v9571, %v9570
    %v9609 = vpack.c.bf16 %v9573, %v9572
    %v9610 = vpack.c.bf16 %v9575, %v9574
    %v9611 = vpack.c.bf16 %v9577, %v9576
    %v9612 = vpack.c.bf16 %v9579, %v9578
    %v9613 = vpack.c.bf16 %v9581, %v9580
    %v9614 = vld [vmem:[%s11] sm:$0xf]
    %v9615 = vld [vmem:[%s11 + $0x4] sm:$0xf]
    %v9616 = vld [vmem:[%s11 + $0x8] sm:$0xf]
    %v9617 = vld [vmem:[%s11 + $0xc] sm:$0xf]
    %v9622 = vunpack.c.l.b16 %v9614
    %v9623 = vunpack.c.l.b16 %v9615
    %v9624 = vunpack.c.l.b16 %v9616
    %v9625 = vunpack.c.l.b16 %v9617
    %v9626 = vpack.c.b16 %v9623, %v9622
    %v9627 = vpack.c.b16 %v9625, %v9624
    %v9631 = vsel %vm688, %v9582, 0
    %v9634 = vsel %vm688, %v9583, 0
    %v9637 = vsel %vm688, %v9584, 0
    %v9640 = vsel %vm688, %v9585, 0
    %v9643 = vsel %vm688, %v9586, 0
    %v9646 = vsel %vm688, %v9587, 0
    %v9649 = vsel %vm688, %v9588, 0
    %v9652 = vsel %vm688, %v9589, 0
    %v9655 = vsel %vm688, %v9590, 0
    %v9658 = vsel %vm688, %v9591, 0
    %v9661 = vsel %vm688, %v9592, 0
    %v9664 = vsel %vm688, %v9593, 0
    %v9667 = vsel %vm688, %v9594, 0
    %v9670 = vsel %vm688, %v9595, 0
    %v9673 = vsel %vm688, %v9596, 0
    %v9676 = vsel %vm688, %v9597, 0
    %v9679 = vsel %vm688, %v9598, 0
    %v9682 = vsel %vm688, %v9599, 0
    %v9685 = vsel %vm688, %v9600, 0
    %v9688 = vsel %vm688, %v9601, 0
    %v9691 = vsel %vm688, %v9602, 0
    %v9694 = vsel %vm688, %v9603, 0
    %v9697 = vsel %vm688, %v9604, 0
    %v9700 = vsel %vm688, %v9605, 0
    %v9703 = vsel %vm688, %v9606, 0
    %v9706 = vsel %vm688, %v9607, 0
    %v9709 = vsel %vm688, %v9608, 0
    %v9712 = vsel %vm688, %v9609, 0
    %v9715 = vsel %vm688, %v9610, 0
    %v9718 = vsel %vm688, %v9611, 0
    %v9721 = vsel %vm688, %v9612, 0
    %v9724 = vsel %vm688, %v9613, 0
    %9726 = vmatprep.subr.bf16.mxu0 0
    %9727 = vmatpush1.bf16.msra.mxu0 0
    %9728 = vmatprep.subr.bf16.mxu0 0
    %9729 = vmatpush1.bf16.msra.mxu0 0
    %9730 = vmatprep.subr.bf16.mxu0 0
    %9731 = vmatpush1.bf16.msra.mxu0 0
    %9732 = vmatprep.subr.bf16.mxu0 0
    %9733 = vmatpush1.bf16.msra.mxu0 0
    %9734 = vmatprep.subr.bf16.mxu0 0
    %9735 = vmatpush1.bf16.msra.mxu0 0
    %9736 = vmatprep.subr.bf16.mxu0 0
    %9737 = vmatpush1.bf16.msra.mxu0 0
    %9738 = vmatprep.subr.bf16.mxu0 0
    %9739 = vmatpush1.bf16.msra.mxu0 %v9627
    %9740 = vmatprep.subr.bf16.mxu0 0
    %9741 = vmatpush1.bf16.msra.mxu0 %v9626
    %9742 = vmatprep.subr.bf16.mxu0 0
    %9743 = vmatpush2.bf16.msra.mxu0 0
    %9744 = vmatprep.subr.bf16.mxu0 0
    %9745 = vmatpush2.bf16.msra.mxu0 0
    %9746 = vmatprep.subr.bf16.mxu0 0
    %9747 = vmatpush2.bf16.msra.mxu0 0
    %9748 = vmatprep.subr.bf16.mxu0 0
    %9749 = vmatpush2.bf16.msra.mxu0 0
    %9750 = vmatprep.subr.bf16.mxu0 0
    %9751 = vmatpush2.bf16.msra.mxu0 0
    %9752 = vmatprep.subr.bf16.mxu0 0
    %9753 = vmatpush2.bf16.msra.mxu0 0
    %9754 = vmatprep.subr.bf16.mxu0 0
    %9755 = vmatpush2.bf16.msra.mxu0 0
    %9756 = vmatprep.subr.bf16.mxu0 0
    %9757 = vmatpush2.bf16.msra.mxu0 0
    %9758 = vmatprep.mubr.bf16.mxu0 0
    %9759 = vmatmul.mubr.bf16.gmra.mxu0 %v9631
    %v9760 = vpop.f32.mrf.mxu0
    %v9761 = vadd.f32 0.0, %v9760
    %v9762 = vpop.f32.mrf.mxu0
    %v9763 = vpop.f32.mrf.mxu0
    %v9764 = vadd.f32 0.0, %v9763
    %v9765 = vpop.f32.mrf.mxu0
    %9766 = vmatprep.mubr.bf16.mxu0 0
    %9767 = vmatmul.mubr.bf16.gmra.mxu0 %v9634
    %v9768 = vpop.f32.mrf.mxu0
    %v9769 = vadd.f32 0.0, %v9768
    %v9770 = vpop.f32.mrf.mxu0
    %v9771 = vpop.f32.mrf.mxu0
    %v9772 = vadd.f32 0.0, %v9771
    %v9773 = vpop.f32.mrf.mxu0
    %9774 = vmatprep.mubr.bf16.mxu0 0
    %9775 = vmatmul.mubr.bf16.gmra.mxu0 %v9637
    %v9776 = vpop.f32.mrf.mxu0
    %v9777 = vadd.f32 0.0, %v9776
    %v9778 = vpop.f32.mrf.mxu0
    %v9779 = vpop.f32.mrf.mxu0
    %v9780 = vadd.f32 0.0, %v9779
    %v9781 = vpop.f32.mrf.mxu0
    %9782 = vmatprep.mubr.bf16.mxu0 0
    %9783 = vmatmul.mubr.bf16.gmra.mxu0 %v9640
    %v9784 = vpop.f32.mrf.mxu0
    %v9785 = vadd.f32 0.0, %v9784
    %v9786 = vpop.f32.mrf.mxu0
    %v9787 = vpop.f32.mrf.mxu0
    %v9788 = vadd.f32 0.0, %v9787
    %v9789 = vpop.f32.mrf.mxu0
    %9790 = vmatprep.mubr.bf16.mxu0 0
    %9791 = vmatmul.mubr.bf16.gmra.mxu0 %v9643
    %v9792 = vpop.f32.mrf.mxu0
    %v9793 = vadd.f32 0.0, %v9792
    %v9794 = vpop.f32.mrf.mxu0
    %v9795 = vpop.f32.mrf.mxu0
    %v9796 = vadd.f32 0.0, %v9795
    %v9797 = vpop.f32.mrf.mxu0
    %9798 = vmatprep.mubr.bf16.mxu0 0
    %9799 = vmatmul.mubr.bf16.gmra.mxu0 %v9646
    %v9800 = vpop.f32.mrf.mxu0
    %v9801 = vadd.f32 0.0, %v9800
    %v9802 = vpop.f32.mrf.mxu0
    %v9803 = vpop.f32.mrf.mxu0
    %v9804 = vadd.f32 0.0, %v9803
    %v9805 = vpop.f32.mrf.mxu0
    %9806 = vmatprep.mubr.bf16.mxu0 0
    %9807 = vmatmul.mubr.bf16.gmra.mxu0 %v9649
    %v9808 = vpop.f32.mrf.mxu0
    %v9809 = vadd.f32 0.0, %v9808
    %v9810 = vpop.f32.mrf.mxu0
    %v9811 = vpop.f32.mrf.mxu0
    %v9812 = vadd.f32 0.0, %v9811
    %v9813 = vpop.f32.mrf.mxu0
    %9814 = vmatprep.mubr.bf16.mxu0 0
    %9815 = vmatmul.mubr.bf16.gmra.mxu0 %v9652
    %v9816 = vpop.f32.mrf.mxu0
    %v9817 = vadd.f32 0.0, %v9816
    %v9818 = vpop.f32.mrf.mxu0
    %v9819 = vpop.f32.mrf.mxu0
    %v9820 = vadd.f32 0.0, %v9819
    %v9821 = vpop.f32.mrf.mxu0
    %9822 = vmatprep.mubr.bf16.mxu0 0
    %9823 = vmatmul.mubr.bf16.gmra.mxu0 %v9655
    %v9824 = vpop.f32.mrf.mxu0
    %v9825 = vadd.f32 0.0, %v9824
    %v9826 = vpop.f32.mrf.mxu0
    %v9827 = vpop.f32.mrf.mxu0
    %v9828 = vadd.f32 0.0, %v9827
    %v9829 = vpop.f32.mrf.mxu0
    %9830 = vmatprep.mubr.bf16.mxu0 0
    %9831 = vmatmul.mubr.bf16.gmra.mxu0 %v9658
    %v9832 = vpop.f32.mrf.mxu0
    %v9833 = vadd.f32 0.0, %v9832
    %v9834 = vpop.f32.mrf.mxu0
    %v9835 = vpop.f32.mrf.mxu0
    %v9836 = vadd.f32 0.0, %v9835
    %v9837 = vpop.f32.mrf.mxu0
    %9838 = vmatprep.mubr.bf16.mxu0 0
    %9839 = vmatmul.mubr.bf16.gmra.mxu0 %v9661
    %v9840 = vpop.f32.mrf.mxu0
    %v9841 = vadd.f32 0.0, %v9840
    %v9842 = vpop.f32.mrf.mxu0
    %v9843 = vpop.f32.mrf.mxu0
    %v9844 = vadd.f32 0.0, %v9843
    %v9845 = vpop.f32.mrf.mxu0
    %9846 = vmatprep.mubr.bf16.mxu0 0
    %9847 = vmatmul.mubr.bf16.gmra.mxu0 %v9664
    %v9848 = vpop.f32.mrf.mxu0
    %v9849 = vadd.f32 0.0, %v9848
    %v9850 = vpop.f32.mrf.mxu0
    %v9851 = vpop.f32.mrf.mxu0
    %v9852 = vadd.f32 0.0, %v9851
    %v9853 = vpop.f32.mrf.mxu0
    %9854 = vmatprep.mubr.bf16.mxu0 0
    %9855 = vmatmul.mubr.bf16.gmra.mxu0 %v9667
    %v9856 = vpop.f32.mrf.mxu0
    %v9857 = vadd.f32 0.0, %v9856
    %v9858 = vpop.f32.mrf.mxu0
    %v9859 = vpop.f32.mrf.mxu0
    %v9860 = vadd.f32 0.0, %v9859
    %v9861 = vpop.f32.mrf.mxu0
    %9862 = vmatprep.mubr.bf16.mxu0 0
    %9863 = vmatmul.mubr.bf16.gmra.mxu0 %v9670
    %v9864 = vpop.f32.mrf.mxu0
    %v9865 = vadd.f32 0.0, %v9864
    %v9866 = vpop.f32.mrf.mxu0
    %v9867 = vpop.f32.mrf.mxu0
    %v9868 = vadd.f32 0.0, %v9867
    %v9869 = vpop.f32.mrf.mxu0
    %9870 = vmatprep.mubr.bf16.mxu0 0
    %9871 = vmatmul.mubr.bf16.gmra.mxu0 %v9673
    %v9872 = vpop.f32.mrf.mxu0
    %v9873 = vadd.f32 0.0, %v9872
    %v9874 = vpop.f32.mrf.mxu0
    %v9875 = vpop.f32.mrf.mxu0
    %v9876 = vadd.f32 0.0, %v9875
    %v9877 = vpop.f32.mrf.mxu0
    %9878 = vmatprep.mubr.bf16.mxu0 0
    %9879 = vmatmul.mubr.bf16.gmra.mxu0 %v9676
    %v9880 = vpop.f32.mrf.mxu0
    %v9881 = vadd.f32 0.0, %v9880
    %v9882 = vpop.f32.mrf.mxu0
    %v9883 = vpop.f32.mrf.mxu0
    %v9884 = vadd.f32 0.0, %v9883
    %v9885 = vpop.f32.mrf.mxu0
    %9886 = vmatprep.mubr.bf16.mxu0 0
    %9887 = vmatmul.mubr.bf16.gmra.mxu0 %v9679
    %v9888 = vpop.f32.mrf.mxu0
    %v9889 = vadd.f32 0.0, %v9888
    %v9890 = vpop.f32.mrf.mxu0
    %v9891 = vpop.f32.mrf.mxu0
    %v9892 = vadd.f32 0.0, %v9891
    %v9893 = vpop.f32.mrf.mxu0
    %9894 = vmatprep.mubr.bf16.mxu0 0
    %9895 = vmatmul.mubr.bf16.gmra.mxu0 %v9682
    %v9896 = vpop.f32.mrf.mxu0
    %v9897 = vadd.f32 0.0, %v9896
    %v9898 = vpop.f32.mrf.mxu0
    %v9899 = vpop.f32.mrf.mxu0
    %v9900 = vadd.f32 0.0, %v9899
    %v9901 = vpop.f32.mrf.mxu0
    %9902 = vmatprep.mubr.bf16.mxu0 0
    %9903 = vmatmul.mubr.bf16.gmra.mxu0 %v9685
    %v9904 = vpop.f32.mrf.mxu0
    %v9905 = vadd.f32 0.0, %v9904
    %v9906 = vpop.f32.mrf.mxu0
    %v9907 = vpop.f32.mrf.mxu0
    %v9908 = vadd.f32 0.0, %v9907
    %v9909 = vpop.f32.mrf.mxu0
    %9910 = vmatprep.mubr.bf16.mxu0 0
    %9911 = vmatmul.mubr.bf16.gmra.mxu0 %v9688
    %v9912 = vpop.f32.mrf.mxu0
    %v9913 = vadd.f32 0.0, %v9912
    %v9914 = vpop.f32.mrf.mxu0
    %v9915 = vpop.f32.mrf.mxu0
    %v9916 = vadd.f32 0.0, %v9915
    %v9917 = vpop.f32.mrf.mxu0
    %9918 = vmatprep.mubr.bf16.mxu0 0
    %9919 = vmatmul.mubr.bf16.gmra.mxu0 %v9691
    %v9920 = vpop.f32.mrf.mxu0
    %v9921 = vadd.f32 0.0, %v9920
    %v9922 = vpop.f32.mrf.mxu0
    %v9923 = vpop.f32.mrf.mxu0
    %v9924 = vadd.f32 0.0, %v9923
    %v9925 = vpop.f32.mrf.mxu0
    %9926 = vmatprep.mubr.bf16.mxu0 0
    %9927 = vmatmul.mubr.bf16.gmra.mxu0 %v9694
    %v9928 = vpop.f32.mrf.mxu0
    %v9929 = vadd.f32 0.0, %v9928
    %v9930 = vpop.f32.mrf.mxu0
    %v9931 = vpop.f32.mrf.mxu0
    %v9932 = vadd.f32 0.0, %v9931
    %v9933 = vpop.f32.mrf.mxu0
    %9934 = vmatprep.mubr.bf16.mxu0 0
    %9935 = vmatmul.mubr.bf16.gmra.mxu0 %v9697
    %v9936 = vpop.f32.mrf.mxu0
    %v9937 = vadd.f32 0.0, %v9936
    %v9938 = vpop.f32.mrf.mxu0
    %v9939 = vpop.f32.mrf.mxu0
    %v9940 = vadd.f32 0.0, %v9939
    %v9941 = vpop.f32.mrf.mxu0
    %9942 = vmatprep.mubr.bf16.mxu0 0
    %9943 = vmatmul.mubr.bf16.gmra.mxu0 %v9700
    %v9944 = vpop.f32.mrf.mxu0
    %v9945 = vadd.f32 0.0, %v9944
    %v9946 = vpop.f32.mrf.mxu0
    %v9947 = vpop.f32.mrf.mxu0
    %v9948 = vadd.f32 0.0, %v9947
    %v9949 = vpop.f32.mrf.mxu0
    %9950 = vmatprep.mubr.bf16.mxu0 0
    %9951 = vmatmul.mubr.bf16.gmra.mxu0 %v9703
    %v9952 = vpop.f32.mrf.mxu0
    %v9953 = vadd.f32 0.0, %v9952
    %v9954 = vpop.f32.mrf.mxu0
    %v9955 = vpop.f32.mrf.mxu0
    %v9956 = vadd.f32 0.0, %v9955
    %v9957 = vpop.f32.mrf.mxu0
    %9958 = vmatprep.mubr.bf16.mxu0 0
    %9959 = vmatmul.mubr.bf16.gmra.mxu0 %v9706
    %v9960 = vpop.f32.mrf.mxu0
    %v9961 = vadd.f32 0.0, %v9960
    %v9962 = vpop.f32.mrf.mxu0
    %v9963 = vpop.f32.mrf.mxu0
    %v9964 = vadd.f32 0.0, %v9963
    %v9965 = vpop.f32.mrf.mxu0
    %9966 = vmatprep.mubr.bf16.mxu0 0
    %9967 = vmatmul.mubr.bf16.gmra.mxu0 %v9709
    %v9968 = vpop.f32.mrf.mxu0
    %v9969 = vadd.f32 0.0, %v9968
    %v9970 = vpop.f32.mrf.mxu0
    %v9971 = vpop.f32.mrf.mxu0
    %v9972 = vadd.f32 0.0, %v9971
    %v9973 = vpop.f32.mrf.mxu0
    %9974 = vmatprep.mubr.bf16.mxu0 0
    %9975 = vmatmul.mubr.bf16.gmra.mxu0 %v9712
    %v9976 = vpop.f32.mrf.mxu0
    %v9977 = vadd.f32 0.0, %v9976
    %v9978 = vpop.f32.mrf.mxu0
    %v9979 = vpop.f32.mrf.mxu0
    %v9980 = vadd.f32 0.0, %v9979
    %v9981 = vpop.f32.mrf.mxu0
    %9982 = vmatprep.mubr.bf16.mxu0 0
    %9983 = vmatmul.mubr.bf16.gmra.mxu0 %v9715
    %v9984 = vpop.f32.mrf.mxu0
    %v9985 = vadd.f32 0.0, %v9984
    %v9986 = vpop.f32.mrf.mxu0
    %v9987 = vpop.f32.mrf.mxu0
    %v9988 = vadd.f32 0.0, %v9987
    %v9989 = vpop.f32.mrf.mxu0
    %9990 = vmatprep.mubr.bf16.mxu0 0
    %9991 = vmatmul.mubr.bf16.gmra.mxu0 %v9718
    %v9992 = vpop.f32.mrf.mxu0
    %v9993 = vadd.f32 0.0, %v9992
    %v9994 = vpop.f32.mrf.mxu0
    %v9995 = vpop.f32.mrf.mxu0
    %v9996 = vadd.f32 0.0, %v9995
    %v9997 = vpop.f32.mrf.mxu0
    %9998 = vmatprep.mubr.bf16.mxu0 0
    %9999 = vmatmul.mubr.bf16.gmra.mxu0 %v9721
    %v10000 = vpop.f32.mrf.mxu0
    %v10001 = vadd.f32 0.0, %v10000
    %v10002 = vpop.f32.mrf.mxu0
    %v10003 = vpop.f32.mrf.mxu0
    %v10004 = vadd.f32 0.0, %v10003
    %v10005 = vpop.f32.mrf.mxu0
    %10006 = vmatprep.mubr.bf16.mxu0 0
    %10007 = vmatmul.mubr.bf16.gmra.mxu0 %v9724
    %v10008 = vpop.f32.mrf.mxu0
    %v10009 = vadd.f32 0.0, %v10008
    %v10010 = vpop.f32.mrf.mxu0
    %v10011 = vpop.f32.mrf.mxu0
    %v10012 = vadd.f32 0.0, %v10011
    %v10013 = vpop.f32.mrf.mxu0
    %10014 = vdwg.mxu0
    %v10015 = vld [vmem:[%s12] sm:$0x1]
    %v10016 = vld [vmem:[%s13] sm:$0x1]
    %v10017 = vsel %vm688, %v9761, 0.0
    %v10018 = vsel %vm688, %v9764, 0.0
    %v10019 = vadd.f32 %v10017, %v10018
    %v10020 = vsel %vm688, %v9769, 0.0
    %v10021 = vadd.f32 %v10019, %v10020
    %v10022 = vsel %vm688, %v9772, 0.0
    %v10023 = vadd.f32 %v10021, %v10022
    %v10024 = vsel %vm688, %v9777, 0.0
    %v10025 = vadd.f32 %v10023, %v10024
    %v10026 = vsel %vm688, %v9780, 0.0
    %v10027 = vadd.f32 %v10025, %v10026
    %v10028 = vsel %vm688, %v9785, 0.0
    %v10029 = vadd.f32 %v10027, %v10028
    %v10030 = vsel %vm688, %v9788, 0.0
    %v10031 = vadd.f32 %v10029, %v10030
    %v10032 = vsel %vm688, %v9793, 0.0
    %v10033 = vadd.f32 %v10031, %v10032
    %v10034 = vsel %vm688, %v9796, 0.0
    %v10035 = vadd.f32 %v10033, %v10034
    %v10036 = vsel %vm688, %v9801, 0.0
    %v10037 = vadd.f32 %v10035, %v10036
    %v10038 = vsel %vm688, %v9804, 0.0
    %v10039 = vadd.f32 %v10037, %v10038
    %v10040 = vsel %vm688, %v9809, 0.0
    %v10041 = vadd.f32 %v10039, %v10040
    %v10042 = vsel %vm688, %v9812, 0.0
    %v10043 = vadd.f32 %v10041, %v10042
    %v10044 = vsel %vm688, %v9817, 0.0
    %v10045 = vadd.f32 %v10043, %v10044
    %v10046 = vsel %vm688, %v9820, 0.0
    %v10047 = vadd.f32 %v10045, %v10046
    %v10048 = vsel %vm688, %v9825, 0.0
    %v10049 = vadd.f32 %v10047, %v10048
    %v10050 = vsel %vm688, %v9828, 0.0
    %v10051 = vadd.f32 %v10049, %v10050
    %v10052 = vsel %vm688, %v9833, 0.0
    %v10053 = vadd.f32 %v10051, %v10052
    %v10054 = vsel %vm688, %v9836, 0.0
    %v10055 = vadd.f32 %v10053, %v10054
    %v10056 = vsel %vm688, %v9841, 0.0
    %v10057 = vadd.f32 %v10055, %v10056
    %v10058 = vsel %vm688, %v9844, 0.0
    %v10059 = vadd.f32 %v10057, %v10058
    %v10060 = vsel %vm688, %v9849, 0.0
    %v10061 = vadd.f32 %v10059, %v10060
    %v10062 = vsel %vm688, %v9852, 0.0
    %v10063 = vadd.f32 %v10061, %v10062
    %v10064 = vsel %vm688, %v9857, 0.0
    %v10065 = vadd.f32 %v10063, %v10064
    %v10066 = vsel %vm688, %v9860, 0.0
    %v10067 = vadd.f32 %v10065, %v10066
    %v10068 = vsel %vm688, %v9865, 0.0
    %v10069 = vadd.f32 %v10067, %v10068
    %v10070 = vsel %vm688, %v9868, 0.0
    %v10071 = vadd.f32 %v10069, %v10070
    %v10072 = vsel %vm688, %v9873, 0.0
    %v10073 = vadd.f32 %v10071, %v10072
    %v10074 = vsel %vm688, %v9876, 0.0
    %v10075 = vadd.f32 %v10073, %v10074
    %v10076 = vsel %vm688, %v9881, 0.0
    %v10077 = vadd.f32 %v10075, %v10076
    %v10078 = vsel %vm688, %v9884, 0.0
    %v10079 = vadd.f32 %v10077, %v10078
    %v10080 = vsel %vm688, %v9889, 0.0
    %v10081 = vadd.f32 %v10079, %v10080
    %v10082 = vsel %vm688, %v9892, 0.0
    %v10083 = vadd.f32 %v10081, %v10082
    %v10084 = vsel %vm688, %v9897, 0.0
    %v10085 = vadd.f32 %v10083, %v10084
    %v10086 = vsel %vm688, %v9900, 0.0
    %v10087 = vadd.f32 %v10085, %v10086
    %v10088 = vsel %vm688, %v9905, 0.0
    %v10089 = vadd.f32 %v10087, %v10088
    %v10090 = vsel %vm688, %v9908, 0.0
    %v10091 = vadd.f32 %v10089, %v10090
    %v10092 = vsel %vm688, %v9913, 0.0
    %v10093 = vadd.f32 %v10091, %v10092
    %v10094 = vsel %vm688, %v9916, 0.0
    %v10095 = vadd.f32 %v10093, %v10094
    %v10096 = vsel %vm688, %v9921, 0.0
    %v10097 = vadd.f32 %v10095, %v10096
    %v10098 = vsel %vm688, %v9924, 0.0
    %v10099 = vadd.f32 %v10097, %v10098
    %v10100 = vsel %vm688, %v9929, 0.0
    %v10101 = vadd.f32 %v10099, %v10100
    %v10102 = vsel %vm688, %v9932, 0.0
    %v10103 = vadd.f32 %v10101, %v10102
    %v10104 = vsel %vm688, %v9937, 0.0
    %v10105 = vadd.f32 %v10103, %v10104
    %v10106 = vsel %vm688, %v9940, 0.0
    %v10107 = vadd.f32 %v10105, %v10106
    %v10108 = vsel %vm688, %v9945, 0.0
    %v10109 = vadd.f32 %v10107, %v10108
    %v10110 = vsel %vm688, %v9948, 0.0
    %v10111 = vadd.f32 %v10109, %v10110
    %v10112 = vsel %vm688, %v9953, 0.0
    %v10113 = vadd.f32 %v10111, %v10112
    %v10114 = vsel %vm688, %v9956, 0.0
    %v10115 = vadd.f32 %v10113, %v10114
    %v10116 = vsel %vm688, %v9961, 0.0
    %v10117 = vadd.f32 %v10115, %v10116
    %v10118 = vsel %vm688, %v9964, 0.0
    %v10119 = vadd.f32 %v10117, %v10118
    %v10120 = vsel %vm688, %v9969, 0.0
    %v10121 = vadd.f32 %v10119, %v10120
    %v10122 = vsel %vm688, %v9972, 0.0
    %v10123 = vadd.f32 %v10121, %v10122
    %v10124 = vsel %vm688, %v9977, 0.0
    %v10125 = vadd.f32 %v10123, %v10124
    %v10126 = vsel %vm688, %v9980, 0.0
    %v10127 = vadd.f32 %v10125, %v10126
    %v10128 = vsel %vm688, %v9985, 0.0
    %v10129 = vadd.f32 %v10127, %v10128
    %v10130 = vsel %vm688, %v9988, 0.0
    %v10131 = vadd.f32 %v10129, %v10130
    %v10132 = vsel %vm688, %v9993, 0.0
    %v10133 = vadd.f32 %v10131, %v10132
    %v10134 = vsel %vm688, %v9996, 0.0
    %v10135 = vadd.f32 %v10133, %v10134
    %v10136 = vsel %vm688, %v10001, 0.0
    %v10137 = vadd.f32 %v10135, %v10136
    %v10138 = vsel %vm688, %v10004, 0.0
    %v10139 = vadd.f32 %v10137, %v10138
    %v10140 = vsel %vm688, %v10009, 0.0
    %v10141 = vadd.f32 %v10139, %v10140
    %v10142 = vsel %vm688, %v10012, 0.0
    %v10143 = vadd.f32 %v10141, %v10142
    %v10144 = vrot.slane %v10143, 4
    %v10145 = vadd.f32 %v10143, %v10144
    %v10146 = vrot.slane %v10145, 2
    %v10147 = vadd.f32 %v10145, %v10146
    %v10148 = vrot.slane %v10147, 1
    %v10149 = vadd.f32 %v10147, %v10148
    %v10150 = vmul.f32 %v10149, 0.001953125
    %v10151 = vsub.f32 %v9761, %v10150
    %v10152 = vsub.f32 %v9764, %v10150
    %v10153 = vsub.f32 %v9769, %v10150
    %v10154 = vsub.f32 %v9772, %v10150
    %v10155 = vsub.f32 %v9777, %v10150
    %v10156 = vsub.f32 %v9780, %v10150
    %v10157 = vsub.f32 %v9785, %v10150
    %v10158 = vsub.f32 %v9788, %v10150
    %v10159 = vsub.f32 %v9793, %v10150
    %v10160 = vsub.f32 %v9796, %v10150
    %v10161 = vsub.f32 %v9801, %v10150
    %v10162 = vsub.f32 %v9804, %v10150
    %v10163 = vsub.f32 %v9809, %v10150
    %v10164 = vsub.f32 %v9812, %v10150
    %v10165 = vsub.f32 %v9817, %v10150
    %v10166 = vsub.f32 %v9820, %v10150
    %v10167 = vsub.f32 %v9825, %v10150
    %v10168 = vsub.f32 %v9828, %v10150
    %v10169 = vsub.f32 %v9833, %v10150
    %v10170 = vsub.f32 %v9836, %v10150
    %v10171 = vsub.f32 %v9841, %v10150
    %v10172 = vsub.f32 %v9844, %v10150
    %v10173 = vsub.f32 %v9849, %v10150
    %v10174 = vsub.f32 %v9852, %v10150
    %v10175 = vsub.f32 %v9857, %v10150
    %v10176 = vsub.f32 %v9860, %v10150
    %v10177 = vsub.f32 %v9865, %v10150
    %v10178 = vsub.f32 %v9868, %v10150
    %v10179 = vsub.f32 %v9873, %v10150
    %v10180 = vsub.f32 %v9876, %v10150
    %v10181 = vsub.f32 %v9881, %v10150
    %v10182 = vsub.f32 %v9884, %v10150
    %v10183 = vsub.f32 %v9889, %v10150
    %v10184 = vsub.f32 %v9892, %v10150
    %v10185 = vsub.f32 %v9897, %v10150
    %v10186 = vsub.f32 %v9900, %v10150
    %v10187 = vsub.f32 %v9905, %v10150
    %v10188 = vsub.f32 %v9908, %v10150
    %v10189 = vsub.f32 %v9913, %v10150
    %v10190 = vsub.f32 %v9916, %v10150
    %v10191 = vsub.f32 %v9921, %v10150
    %v10192 = vsub.f32 %v9924, %v10150
    %v10193 = vsub.f32 %v9929, %v10150
    %v10194 = vsub.f32 %v9932, %v10150
    %v10195 = vsub.f32 %v9937, %v10150
    %v10196 = vsub.f32 %v9940, %v10150
    %v10197 = vsub.f32 %v9945, %v10150
    %v10198 = vsub.f32 %v9948, %v10150
    %v10199 = vsub.f32 %v9953, %v10150
    %v10200 = vsub.f32 %v9956, %v10150
    %v10201 = vsub.f32 %v9961, %v10150
    %v10202 = vsub.f32 %v9964, %v10150
    %v10203 = vsub.f32 %v9969, %v10150
    %v10204 = vsub.f32 %v9972, %v10150
    %v10205 = vsub.f32 %v9977, %v10150
    %v10206 = vsub.f32 %v9980, %v10150
    %v10207 = vsub.f32 %v9985, %v10150
    %v10208 = vsub.f32 %v9988, %v10150
    %v10209 = vsub.f32 %v9993, %v10150
    %v10210 = vsub.f32 %v9996, %v10150
    %v10211 = vsub.f32 %v10001, %v10150
    %v10212 = vsub.f32 %v10004, %v10150
    %v10213 = vsub.f32 %v10009, %v10150
    %v10214 = vsub.f32 %v10012, %v10150
    %v10215 = vmul.f32 %v10151, %v10151
    %v10216 = vmul.f32 %v10152, %v10152
    %v10217 = vmul.f32 %v10153, %v10153
    %v10218 = vmul.f32 %v10154, %v10154
    %v10219 = vmul.f32 %v10155, %v10155
    %v10220 = vmul.f32 %v10156, %v10156
    %v10221 = vmul.f32 %v10157, %v10157
    %v10222 = vmul.f32 %v10158, %v10158
    %v10223 = vmul.f32 %v10159, %v10159
    %v10224 = vmul.f32 %v10160, %v10160
    %v10225 = vmul.f32 %v10161, %v10161
    %v10226 = vmul.f32 %v10162, %v10162
    %v10227 = vmul.f32 %v10163, %v10163
    %v10228 = vmul.f32 %v10164, %v10164
    %v10229 = vmul.f32 %v10165, %v10165
    %v10230 = vmul.f32 %v10166, %v10166
    %v10231 = vmul.f32 %v10167, %v10167
    %v10232 = vmul.f32 %v10168, %v10168
    %v10233 = vmul.f32 %v10169, %v10169
    %v10234 = vmul.f32 %v10170, %v10170
    %v10235 = vmul.f32 %v10171, %v10171
    %v10236 = vmul.f32 %v10172, %v10172
    %v10237 = vmul.f32 %v10173, %v10173
    %v10238 = vmul.f32 %v10174, %v10174
    %v10239 = vmul.f32 %v10175, %v10175
    %v10240 = vmul.f32 %v10176, %v10176
    %v10241 = vmul.f32 %v10177, %v10177
    %v10242 = vmul.f32 %v10178, %v10178
    %v10243 = vmul.f32 %v10179, %v10179
    %v10244 = vmul.f32 %v10180, %v10180
    %v10245 = vmul.f32 %v10181, %v10181
    %v10246 = vmul.f32 %v10182, %v10182
    %v10247 = vmul.f32 %v10183, %v10183
    %v10248 = vmul.f32 %v10184, %v10184
    %v10249 = vmul.f32 %v10185, %v10185
    %v10250 = vmul.f32 %v10186, %v10186
    %v10251 = vmul.f32 %v10187, %v10187
    %v10252 = vmul.f32 %v10188, %v10188
    %v10253 = vmul.f32 %v10189, %v10189
    %v10254 = vmul.f32 %v10190, %v10190
    %v10255 = vmul.f32 %v10191, %v10191
    %v10256 = vmul.f32 %v10192, %v10192
    %v10257 = vmul.f32 %v10193, %v10193
    %v10258 = vmul.f32 %v10194, %v10194
    %v10259 = vmul.f32 %v10195, %v10195
    %v10260 = vmul.f32 %v10196, %v10196
    %v10261 = vmul.f32 %v10197, %v10197
    %v10262 = vmul.f32 %v10198, %v10198
    %v10263 = vmul.f32 %v10199, %v10199
    %v10264 = vmul.f32 %v10200, %v10200
    %v10265 = vmul.f32 %v10201, %v10201
    %v10266 = vmul.f32 %v10202, %v10202
    %v10267 = vmul.f32 %v10203, %v10203
    %v10268 = vmul.f32 %v10204, %v10204
    %v10269 = vmul.f32 %v10205, %v10205
    %v10270 = vmul.f32 %v10206, %v10206
    %v10271 = vmul.f32 %v10207, %v10207
    %v10272 = vmul.f32 %v10208, %v10208
    %v10273 = vmul.f32 %v10209, %v10209
    %v10274 = vmul.f32 %v10210, %v10210
    %v10275 = vmul.f32 %v10211, %v10211
    %v10276 = vmul.f32 %v10212, %v10212
    %v10277 = vmul.f32 %v10213, %v10213
    %v10278 = vmul.f32 %v10214, %v10214
    %v10279 = vsel %vm688, %v10215, 0.0
    %v10280 = vsel %vm688, %v10216, 0.0
    %v10281 = vadd.f32 %v10279, %v10280
    %v10282 = vsel %vm688, %v10217, 0.0
    %v10283 = vadd.f32 %v10281, %v10282
    %v10284 = vsel %vm688, %v10218, 0.0
    %v10285 = vadd.f32 %v10283, %v10284
    %v10286 = vsel %vm688, %v10219, 0.0
    %v10287 = vadd.f32 %v10285, %v10286
    %v10288 = vsel %vm688, %v10220, 0.0
    %v10289 = vadd.f32 %v10287, %v10288
    %v10290 = vsel %vm688, %v10221, 0.0
    %v10291 = vadd.f32 %v10289, %v10290
    %v10292 = vsel %vm688, %v10222, 0.0
    %v10293 = vadd.f32 %v10291, %v10292
    %v10294 = vsel %vm688, %v10223, 0.0
    %v10295 = vadd.f32 %v10293, %v10294
    %v10296 = vsel %vm688, %v10224, 0.0
    %v10297 = vadd.f32 %v10295, %v10296
    %v10298 = vsel %vm688, %v10225, 0.0
    %v10299 = vadd.f32 %v10297, %v10298
    %v10300 = vsel %vm688, %v10226, 0.0
    %v10301 = vadd.f32 %v10299, %v10300
    %v10302 = vsel %vm688, %v10227, 0.0
    %v10303 = vadd.f32 %v10301, %v10302
    %v10304 = vsel %vm688, %v10228, 0.0
    %v10305 = vadd.f32 %v10303, %v10304
    %v10306 = vsel %vm688, %v10229, 0.0
    %v10307 = vadd.f32 %v10305, %v10306
    %v10308 = vsel %vm688, %v10230, 0.0
    %v10309 = vadd.f32 %v10307, %v10308
    %v10310 = vsel %vm688, %v10231, 0.0
    %v10311 = vadd.f32 %v10309, %v10310
    %v10312 = vsel %vm688, %v10232, 0.0
    %v10313 = vadd.f32 %v10311, %v10312
    %v10314 = vsel %vm688, %v10233, 0.0
    %v10315 = vadd.f32 %v10313, %v10314
    %v10316 = vsel %vm688, %v10234, 0.0
    %v10317 = vadd.f32 %v10315, %v10316
    %v10318 = vsel %vm688, %v10235, 0.0
    %v10319 = vadd.f32 %v10317, %v10318
    %v10320 = vsel %vm688, %v10236, 0.0
    %v10321 = vadd.f32 %v10319, %v10320
    %v10322 = vsel %vm688, %v10237, 0.0
    %v10323 = vadd.f32 %v10321, %v10322
    %v10324 = vsel %vm688, %v10238, 0.0
    %v10325 = vadd.f32 %v10323, %v10324
    %v10326 = vsel %vm688, %v10239, 0.0
    %v10327 = vadd.f32 %v10325, %v10326
    %v10328 = vsel %vm688, %v10240, 0.0
    %v10329 = vadd.f32 %v10327, %v10328
    %v10330 = vsel %vm688, %v10241, 0.0
    %v10331 = vadd.f32 %v10329, %v10330
    %v10332 = vsel %vm688, %v10242, 0.0
    %v10333 = vadd.f32 %v10331, %v10332
    %v10334 = vsel %vm688, %v10243, 0.0
    %v10335 = vadd.f32 %v10333, %v10334
    %v10336 = vsel %vm688, %v10244, 0.0
    %v10337 = vadd.f32 %v10335, %v10336
    %v10338 = vsel %vm688, %v10245, 0.0
    %v10339 = vadd.f32 %v10337, %v10338
    %v10340 = vsel %vm688, %v10246, 0.0
    %v10341 = vadd.f32 %v10339, %v10340
    %v10342 = vsel %vm688, %v10247, 0.0
    %v10343 = vadd.f32 %v10341, %v10342
    %v10344 = vsel %vm688, %v10248, 0.0
    %v10345 = vadd.f32 %v10343, %v10344
    %v10346 = vsel %vm688, %v10249, 0.0
    %v10347 = vadd.f32 %v10345, %v10346
    %v10348 = vsel %vm688, %v10250, 0.0
    %v10349 = vadd.f32 %v10347, %v10348
    %v10350 = vsel %vm688, %v10251, 0.0
    %v10351 = vadd.f32 %v10349, %v10350
    %v10352 = vsel %vm688, %v10252, 0.0
    %v10353 = vadd.f32 %v10351, %v10352
    %v10354 = vsel %vm688, %v10253, 0.0
    %v10355 = vadd.f32 %v10353, %v10354
    %v10356 = vsel %vm688, %v10254, 0.0
    %v10357 = vadd.f32 %v10355, %v10356
    %v10358 = vsel %vm688, %v10255, 0.0
    %v10359 = vadd.f32 %v10357, %v10358
    %v10360 = vsel %vm688, %v10256, 0.0
    %v10361 = vadd.f32 %v10359, %v10360
    %v10362 = vsel %vm688, %v10257, 0.0
    %v10363 = vadd.f32 %v10361, %v10362
    %v10364 = vsel %vm688, %v10258, 0.0
    %v10365 = vadd.f32 %v10363, %v10364
    %v10366 = vsel %vm688, %v10259, 0.0
    %v10367 = vadd.f32 %v10365, %v10366
    %v10368 = vsel %vm688, %v10260, 0.0
    %v10369 = vadd.f32 %v10367, %v10368
    %v10370 = vsel %vm688, %v10261, 0.0
    %v10371 = vadd.f32 %v10369, %v10370
    %v10372 = vsel %vm688, %v10262, 0.0
    %v10373 = vadd.f32 %v10371, %v10372
    %v10374 = vsel %vm688, %v10263, 0.0
    %v10375 = vadd.f32 %v10373, %v10374
    %v10376 = vsel %vm688, %v10264, 0.0
    %v10377 = vadd.f32 %v10375, %v10376
    %v10378 = vsel %vm688, %v10265, 0.0
    %v10379 = vadd.f32 %v10377, %v10378
    %v10380 = vsel %vm688, %v10266, 0.0
    %v10381 = vadd.f32 %v10379, %v10380
    %v10382 = vsel %vm688, %v10267, 0.0
    %v10383 = vadd.f32 %v10381, %v10382
    %v10384 = vsel %vm688, %v10268, 0.0
    %v10385 = vadd.f32 %v10383, %v10384
    %v10386 = vsel %vm688, %v10269, 0.0
    %v10387 = vadd.f32 %v10385, %v10386
    %v10388 = vsel %vm688, %v10270, 0.0
    %v10389 = vadd.f32 %v10387, %v10388
    %v10390 = vsel %vm688, %v10271, 0.0
    %v10391 = vadd.f32 %v10389, %v10390
    %v10392 = vsel %vm688, %v10272, 0.0
    %v10393 = vadd.f32 %v10391, %v10392
    %v10394 = vsel %vm688, %v10273, 0.0
    %v10395 = vadd.f32 %v10393, %v10394
    %v10396 = vsel %vm688, %v10274, 0.0
    %v10397 = vadd.f32 %v10395, %v10396
    %v10398 = vsel %vm688, %v10275, 0.0
    %v10399 = vadd.f32 %v10397, %v10398
    %v10400 = vsel %vm688, %v10276, 0.0
    %v10401 = vadd.f32 %v10399, %v10400
    %v10402 = vsel %vm688, %v10277, 0.0
    %v10403 = vadd.f32 %v10401, %v10402
    %v10404 = vsel %vm688, %v10278, 0.0
    %v10405 = vadd.f32 %v10403, %v10404
    %v10406 = vrot.slane %v10405, 4
    %v10407 = vadd.f32 %v10405, %v10406
    %v10408 = vrot.slane %v10407, 2
    %v10409 = vadd.f32 %v10407, %v10408
    %v10410 = vrot.slane %v10409, 1
    %v10411 = vadd.f32 %v10409, %v10410
    %v10412 = vmul.f32 %v10411, 0.001953125
    %v10413 = vadd.f32 %v10412, 1e-05
    %v10414 = vrsqrt.pop %v10413
    %v10415 = vmul.f32 %v10151, %v10414
    %v10416 = vmul.f32 %v10152, %v10414
    %v10417 = vmul.f32 %v10153, %v10414
    %v10418 = vmul.f32 %v10154, %v10414
    %v10419 = vmul.f32 %v10155, %v10414
    %v10420 = vmul.f32 %v10156, %v10414
    %v10421 = vmul.f32 %v10157, %v10414
    %v10422 = vmul.f32 %v10158, %v10414
    %v10423 = vmul.f32 %v10159, %v10414
    %v10424 = vmul.f32 %v10160, %v10414
    %v10425 = vmul.f32 %v10161, %v10414
    %v10426 = vmul.f32 %v10162, %v10414
    %v10427 = vmul.f32 %v10163, %v10414
    %v10428 = vmul.f32 %v10164, %v10414
    %v10429 = vmul.f32 %v10165, %v10414
    %v10430 = vmul.f32 %v10166, %v10414
    %v10431 = vmul.f32 %v10167, %v10414
    %v10432 = vmul.f32 %v10168, %v10414
    %v10433 = vmul.f32 %v10169, %v10414
    %v10434 = vmul.f32 %v10170, %v10414
    %v10435 = vmul.f32 %v10171, %v10414
    %v10436 = vmul.f32 %v10172, %v10414
    %v10437 = vmul.f32 %v10173, %v10414
    %v10438 = vmul.f32 %v10174, %v10414
    %v10439 = vmul.f32 %v10175, %v10414
    %v10440 = vmul.f32 %v10176, %v10414
    %v10441 = vmul.f32 %v10177, %v10414
    %v10442 = vmul.f32 %v10178, %v10414
    %v10443 = vmul.f32 %v10179, %v10414
    %v10444 = vmul.f32 %v10180, %v10414
    %v10445 = vmul.f32 %v10181, %v10414
    %v10446 = vmul.f32 %v10182, %v10414
    %v10447 = vmul.f32 %v10183, %v10414
    %v10448 = vmul.f32 %v10184, %v10414
    %v10449 = vmul.f32 %v10185, %v10414
    %v10450 = vmul.f32 %v10186, %v10414
    %v10451 = vmul.f32 %v10187, %v10414
    %v10452 = vmul.f32 %v10188, %v10414
    %v10453 = vmul.f32 %v10189, %v10414
    %v10454 = vmul.f32 %v10190, %v10414
    %v10455 = vmul.f32 %v10191, %v10414
    %v10456 = vmul.f32 %v10192, %v10414
    %v10457 = vmul.f32 %v10193, %v10414
    %v10458 = vmul.f32 %v10194, %v10414
    %v10459 = vmul.f32 %v10195, %v10414
    %v10460 = vmul.f32 %v10196, %v10414
    %v10461 = vmul.f32 %v10197, %v10414
    %v10462 = vmul.f32 %v10198, %v10414
    %v10463 = vmul.f32 %v10199, %v10414
    %v10464 = vmul.f32 %v10200, %v10414
    %v10465 = vmul.f32 %v10201, %v10414
    %v10466 = vmul.f32 %v10202, %v10414
    %v10467 = vmul.f32 %v10203, %v10414
    %v10468 = vmul.f32 %v10204, %v10414
    %v10469 = vmul.f32 %v10205, %v10414
    %v10470 = vmul.f32 %v10206, %v10414
    %v10471 = vmul.f32 %v10207, %v10414
    %v10472 = vmul.f32 %v10208, %v10414
    %v10473 = vmul.f32 %v10209, %v10414
    %v10474 = vmul.f32 %v10210, %v10414
    %v10475 = vmul.f32 %v10211, %v10414
    %v10476 = vmul.f32 %v10212, %v10414
    %v10477 = vmul.f32 %v10213, %v10414
    %v10478 = vmul.f32 %v10214, %v10414
    %v10480 = vlaneseq
    %v10481 = vshrl.u32 %v10480, 7
    %v10482 = vsub.s32 0, %v10481
    %v10483 = vrot.slane %v10015, %v10482
    %v10485 = vmul.f32 %v10415, %v10483
    %v10486 = vmul.f32 %v10416, %v10483
    %v10487 = vmul.f32 %v10417, %v10483
    %v10488 = vmul.f32 %v10418, %v10483
    %v10489 = vmul.f32 %v10419, %v10483
    %v10490 = vmul.f32 %v10420, %v10483
    %v10491 = vmul.f32 %v10421, %v10483
    %v10492 = vmul.f32 %v10422, %v10483
    %v10493 = vmul.f32 %v10423, %v10483
    %v10494 = vmul.f32 %v10424, %v10483
    %v10495 = vmul.f32 %v10425, %v10483
    %v10496 = vmul.f32 %v10426, %v10483
    %v10497 = vmul.f32 %v10427, %v10483
    %v10498 = vmul.f32 %v10428, %v10483
    %v10499 = vmul.f32 %v10429, %v10483
    %v10500 = vmul.f32 %v10430, %v10483
    %v10501 = vmul.f32 %v10431, %v10483
    %v10502 = vmul.f32 %v10432, %v10483
    %v10503 = vmul.f32 %v10433, %v10483
    %v10504 = vmul.f32 %v10434, %v10483
    %v10505 = vmul.f32 %v10435, %v10483
    %v10506 = vmul.f32 %v10436, %v10483
    %v10507 = vmul.f32 %v10437, %v10483
    %v10508 = vmul.f32 %v10438, %v10483
    %v10509 = vmul.f32 %v10439, %v10483
    %v10510 = vmul.f32 %v10440, %v10483
    %v10511 = vmul.f32 %v10441, %v10483
    %v10512 = vmul.f32 %v10442, %v10483
    %v10513 = vmul.f32 %v10443, %v10483
    %v10514 = vmul.f32 %v10444, %v10483
    %v10515 = vmul.f32 %v10445, %v10483
    %v10516 = vmul.f32 %v10446, %v10483
    %v10517 = vmul.f32 %v10447, %v10483
    %v10518 = vmul.f32 %v10448, %v10483
    %v10519 = vmul.f32 %v10449, %v10483
    %v10520 = vmul.f32 %v10450, %v10483
    %v10521 = vmul.f32 %v10451, %v10483
    %v10522 = vmul.f32 %v10452, %v10483
    %v10523 = vmul.f32 %v10453, %v10483
    %v10524 = vmul.f32 %v10454, %v10483
    %v10525 = vmul.f32 %v10455, %v10483
    %v10526 = vmul.f32 %v10456, %v10483
    %v10527 = vmul.f32 %v10457, %v10483
    %v10528 = vmul.f32 %v10458, %v10483
    %v10529 = vmul.f32 %v10459, %v10483
    %v10530 = vmul.f32 %v10460, %v10483
    %v10531 = vmul.f32 %v10461, %v10483
    %v10532 = vmul.f32 %v10462, %v10483
    %v10533 = vmul.f32 %v10463, %v10483
    %v10534 = vmul.f32 %v10464, %v10483
    %v10535 = vmul.f32 %v10465, %v10483
    %v10536 = vmul.f32 %v10466, %v10483
    %v10537 = vmul.f32 %v10467, %v10483
    %v10538 = vmul.f32 %v10468, %v10483
    %v10539 = vmul.f32 %v10469, %v10483
    %v10540 = vmul.f32 %v10470, %v10483
    %v10541 = vmul.f32 %v10471, %v10483
    %v10542 = vmul.f32 %v10472, %v10483
    %v10543 = vmul.f32 %v10473, %v10483
    %v10544 = vmul.f32 %v10474, %v10483
    %v10545 = vmul.f32 %v10475, %v10483
    %v10546 = vmul.f32 %v10476, %v10483
    %v10547 = vmul.f32 %v10477, %v10483
    %v10548 = vmul.f32 %v10478, %v10483
    %v10550 = vlaneseq
    %v10551 = vshrl.u32 %v10550, 7
    %v10552 = vsub.s32 0, %v10551
    %v10553 = vrot.slane %v10016, %v10552
    %v10555 = vadd.f32 %v10485, %v10553
    %v10556 = vadd.f32 %v10486, %v10553
    %v10557 = vadd.f32 %v10487, %v10553
    %v10558 = vadd.f32 %v10488, %v10553
    %v10559 = vadd.f32 %v10489, %v10553
    %v10560 = vadd.f32 %v10490, %v10553
    %v10561 = vadd.f32 %v10491, %v10553
    %v10562 = vadd.f32 %v10492, %v10553
    %v10563 = vadd.f32 %v10493, %v10553
    %v10564 = vadd.f32 %v10494, %v10553
    %v10565 = vadd.f32 %v10495, %v10553
    %v10566 = vadd.f32 %v10496, %v10553
    %v10567 = vadd.f32 %v10497, %v10553
    %v10568 = vadd.f32 %v10498, %v10553
    %v10569 = vadd.f32 %v10499, %v10553
    %v10570 = vadd.f32 %v10500, %v10553
    %v10571 = vadd.f32 %v10501, %v10553
    %v10572 = vadd.f32 %v10502, %v10553
    %v10573 = vadd.f32 %v10503, %v10553
    %v10574 = vadd.f32 %v10504, %v10553
    %v10575 = vadd.f32 %v10505, %v10553
    %v10576 = vadd.f32 %v10506, %v10553
    %v10577 = vadd.f32 %v10507, %v10553
    %v10578 = vadd.f32 %v10508, %v10553
    %v10579 = vadd.f32 %v10509, %v10553
    %v10580 = vadd.f32 %v10510, %v10553
    %v10581 = vadd.f32 %v10511, %v10553
    %v10582 = vadd.f32 %v10512, %v10553
    %v10583 = vadd.f32 %v10513, %v10553
    %v10584 = vadd.f32 %v10514, %v10553
    %v10585 = vadd.f32 %v10515, %v10553
    %v10586 = vadd.f32 %v10516, %v10553
    %v10587 = vadd.f32 %v10517, %v10553
    %v10588 = vadd.f32 %v10518, %v10553
    %v10589 = vadd.f32 %v10519, %v10553
    %v10590 = vadd.f32 %v10520, %v10553
    %v10591 = vadd.f32 %v10521, %v10553
    %v10592 = vadd.f32 %v10522, %v10553
    %v10593 = vadd.f32 %v10523, %v10553
    %v10594 = vadd.f32 %v10524, %v10553
    %v10595 = vadd.f32 %v10525, %v10553
    %v10596 = vadd.f32 %v10526, %v10553
    %v10597 = vadd.f32 %v10527, %v10553
    %v10598 = vadd.f32 %v10528, %v10553
    %v10599 = vadd.f32 %v10529, %v10553
    %v10600 = vadd.f32 %v10530, %v10553
    %v10601 = vadd.f32 %v10531, %v10553
    %v10602 = vadd.f32 %v10532, %v10553
    %v10603 = vadd.f32 %v10533, %v10553
    %v10604 = vadd.f32 %v10534, %v10553
    %v10605 = vadd.f32 %v10535, %v10553
    %v10606 = vadd.f32 %v10536, %v10553
    %v10607 = vadd.f32 %v10537, %v10553
    %v10608 = vadd.f32 %v10538, %v10553
    %v10609 = vadd.f32 %v10539, %v10553
    %v10610 = vadd.f32 %v10540, %v10553
    %v10611 = vadd.f32 %v10541, %v10553
    %v10612 = vadd.f32 %v10542, %v10553
    %v10613 = vadd.f32 %v10543, %v10553
    %v10614 = vadd.f32 %v10544, %v10553
    %v10615 = vadd.f32 %v10545, %v10553
    %v10616 = vadd.f32 %v10546, %v10553
    %v10617 = vadd.f32 %v10547, %v10553
    %v10618 = vadd.f32 %v10548, %v10553
    %v10619 = vld [vmem:[%s14] sm:$0x1]
    %v10620 = vld [vmem:[%s15] sm:$0x1]
    %vm10621 = vcmask 523520
    %v10622 = vsel %vm10621, %v432, 0.0
    %v10623 = vsel %vm10621, %v435, 0.0
    %v10624 = vadd.f32 %v10622, %v10623
    %v10625 = vsel %vm10621, %v440, 0.0
    %v10626 = vadd.f32 %v10624, %v10625
    %v10627 = vsel %vm10621, %v443, 0.0
    %v10628 = vadd.f32 %v10626, %v10627
    %v10629 = vsel %vm10621, %v448, 0.0
    %v10630 = vadd.f32 %v10628, %v10629
    %v10631 = vsel %vm10621, %v451, 0.0
    %v10632 = vadd.f32 %v10630, %v10631
    %v10633 = vsel %vm10621, %v456, 0.0
    %v10634 = vadd.f32 %v10632, %v10633
    %v10635 = vsel %vm10621, %v459, 0.0
    %v10636 = vadd.f32 %v10634, %v10635
    %v10637 = vsel %vm10621, %v464, 0.0
    %v10638 = vadd.f32 %v10636, %v10637
    %v10639 = vsel %vm10621, %v467, 0.0
    %v10640 = vadd.f32 %v10638, %v10639
    %v10641 = vsel %vm10621, %v472, 0.0
    %v10642 = vadd.f32 %v10640, %v10641
    %v10643 = vsel %vm10621, %v475, 0.0
    %v10644 = vadd.f32 %v10642, %v10643
    %v10645 = vsel %vm10621, %v480, 0.0
    %v10646 = vadd.f32 %v10644, %v10645
    %v10647 = vsel %vm10621, %v483, 0.0
    %v10648 = vadd.f32 %v10646, %v10647
    %v10649 = vsel %vm10621, %v488, 0.0
    %v10650 = vadd.f32 %v10648, %v10649
    %v10651 = vsel %vm10621, %v491, 0.0
    %v10652 = vadd.f32 %v10650, %v10651
    %v10653 = vsel %vm10621, %v496, 0.0
    %v10654 = vadd.f32 %v10652, %v10653
    %v10655 = vsel %vm10621, %v499, 0.0
    %v10656 = vadd.f32 %v10654, %v10655
    %v10657 = vsel %vm10621, %v504, 0.0
    %v10658 = vadd.f32 %v10656, %v10657
    %v10659 = vsel %vm10621, %v507, 0.0
    %v10660 = vadd.f32 %v10658, %v10659
    %v10661 = vsel %vm10621, %v512, 0.0
    %v10662 = vadd.f32 %v10660, %v10661
    %v10663 = vsel %vm10621, %v515, 0.0
    %v10664 = vadd.f32 %v10662, %v10663
    %v10665 = vsel %vm10621, %v520, 0.0
    %v10666 = vadd.f32 %v10664, %v10665
    %v10667 = vsel %vm10621, %v523, 0.0
    %v10668 = vadd.f32 %v10666, %v10667
    %v10669 = vsel %vm10621, %v528, 0.0
    %v10670 = vadd.f32 %v10668, %v10669
    %v10671 = vsel %vm10621, %v531, 0.0
    %v10672 = vadd.f32 %v10670, %v10671
    %v10673 = vsel %vm10621, %v536, 0.0
    %v10674 = vadd.f32 %v10672, %v10673
    %v10675 = vsel %vm10621, %v539, 0.0
    %v10676 = vadd.f32 %v10674, %v10675
    %v10677 = vsel %vm10621, %v544, 0.0
    %v10678 = vadd.f32 %v10676, %v10677
    %v10679 = vsel %vm10621, %v547, 0.0
    %v10680 = vadd.f32 %v10678, %v10679
    %v10681 = vsel %vm10621, %v552, 0.0
    %v10682 = vadd.f32 %v10680, %v10681
    %v10683 = vsel %vm10621, %v555, 0.0
    %v10684 = vadd.f32 %v10682, %v10683
    %v10685 = vsel %vm10621, %v560, 0.0
    %v10686 = vadd.f32 %v10684, %v10685
    %v10687 = vsel %vm10621, %v563, 0.0
    %v10688 = vadd.f32 %v10686, %v10687
    %v10689 = vsel %vm10621, %v568, 0.0
    %v10690 = vadd.f32 %v10688, %v10689
    %v10691 = vsel %vm10621, %v571, 0.0
    %v10692 = vadd.f32 %v10690, %v10691
    %v10693 = vsel %vm10621, %v576, 0.0
    %v10694 = vadd.f32 %v10692, %v10693
    %v10695 = vsel %vm10621, %v579, 0.0
    %v10696 = vadd.f32 %v10694, %v10695
    %v10697 = vsel %vm10621, %v584, 0.0
    %v10698 = vadd.f32 %v10696, %v10697
    %v10699 = vsel %vm10621, %v587, 0.0
    %v10700 = vadd.f32 %v10698, %v10699
    %v10701 = vsel %vm10621, %v592, 0.0
    %v10702 = vadd.f32 %v10700, %v10701
    %v10703 = vsel %vm10621, %v595, 0.0
    %v10704 = vadd.f32 %v10702, %v10703
    %v10705 = vsel %vm10621, %v600, 0.0
    %v10706 = vadd.f32 %v10704, %v10705
    %v10707 = vsel %vm10621, %v603, 0.0
    %v10708 = vadd.f32 %v10706, %v10707
    %v10709 = vsel %vm10621, %v608, 0.0
    %v10710 = vadd.f32 %v10708, %v10709
    %v10711 = vsel %vm10621, %v611, 0.0
    %v10712 = vadd.f32 %v10710, %v10711
    %v10713 = vsel %vm10621, %v616, 0.0
    %v10714 = vadd.f32 %v10712, %v10713
    %v10715 = vsel %vm10621, %v619, 0.0
    %v10716 = vadd.f32 %v10714, %v10715
    %v10717 = vsel %vm10621, %v624, 0.0
    %v10718 = vadd.f32 %v10716, %v10717
    %v10719 = vsel %vm10621, %v627, 0.0
    %v10720 = vadd.f32 %v10718, %v10719
    %v10721 = vsel %vm10621, %v632, 0.0
    %v10722 = vadd.f32 %v10720, %v10721
    %v10723 = vsel %vm10621, %v635, 0.0
    %v10724 = vadd.f32 %v10722, %v10723
    %v10725 = vsel %vm10621, %v640, 0.0
    %v10726 = vadd.f32 %v10724, %v10725
    %v10727 = vsel %vm10621, %v643, 0.0
    %v10728 = vadd.f32 %v10726, %v10727
    %v10729 = vsel %vm10621, %v648, 0.0
    %v10730 = vadd.f32 %v10728, %v10729
    %v10731 = vsel %vm10621, %v651, 0.0
    %v10732 = vadd.f32 %v10730, %v10731
    %v10733 = vsel %vm10621, %v656, 0.0
    %v10734 = vadd.f32 %v10732, %v10733
    %v10735 = vsel %vm10621, %v659, 0.0
    %v10736 = vadd.f32 %v10734, %v10735
    %v10737 = vsel %vm10621, %v664, 0.0
    %v10738 = vadd.f32 %v10736, %v10737
    %v10739 = vsel %vm10621, %v667, 0.0
    %v10740 = vadd.f32 %v10738, %v10739
    %v10741 = vsel %vm10621, %v672, 0.0
    %v10742 = vadd.f32 %v10740, %v10741
    %v10743 = vsel %vm10621, %v675, 0.0
    %v10744 = vadd.f32 %v10742, %v10743
    %v10745 = vsel %vm10621, %v680, 0.0
    %v10746 = vadd.f32 %v10744, %v10745
    %v10747 = vsel %vm10621, %v683, 0.0
    %v10748 = vadd.f32 %v10746, %v10747
    %v10749 = vrot.slane %v10748, 4
    %v10750 = vadd.f32 %v10748, %v10749
    %v10751 = vrot.slane %v10750, 2
    %v10752 = vadd.f32 %v10750, %v10751
    %v10753 = vrot.slane %v10752, 1
    %v10754 = vadd.f32 %v10752, %v10753
    %v10755 = vmul.f32 %v10754, 0.001953125
    %v10756 = vsub.f32 %v432, %v10755
    %v10757 = vsub.f32 %v435, %v10755
    %v10758 = vsub.f32 %v440, %v10755
    %v10759 = vsub.f32 %v443, %v10755
    %v10760 = vsub.f32 %v448, %v10755
    %v10761 = vsub.f32 %v451, %v10755
    %v10762 = vsub.f32 %v456, %v10755
    %v10763 = vsub.f32 %v459, %v10755
    %v10764 = vsub.f32 %v464, %v10755
    %v10765 = vsub.f32 %v467, %v10755
    %v10766 = vsub.f32 %v472, %v10755
    %v10767 = vsub.f32 %v475, %v10755
    %v10768 = vsub.f32 %v480, %v10755
    %v10769 = vsub.f32 %v483, %v10755
    %v10770 = vsub.f32 %v488, %v10755
    %v10771 = vsub.f32 %v491, %v10755
    %v10772 = vsub.f32 %v496, %v10755
    %v10773 = vsub.f32 %v499, %v10755
    %v10774 = vsub.f32 %v504, %v10755
    %v10775 = vsub.f32 %v507, %v10755
    %v10776 = vsub.f32 %v512, %v10755
    %v10777 = vsub.f32 %v515, %v10755
    %v10778 = vsub.f32 %v520, %v10755
    %v10779 = vsub.f32 %v523, %v10755
    %v10780 = vsub.f32 %v528, %v10755
    %v10781 = vsub.f32 %v531, %v10755
    %v10782 = vsub.f32 %v536, %v10755
    %v10783 = vsub.f32 %v539, %v10755
    %v10784 = vsub.f32 %v544, %v10755
    %v10785 = vsub.f32 %v547, %v10755
    %v10786 = vsub.f32 %v552, %v10755
    %v10787 = vsub.f32 %v555, %v10755
    %v10788 = vsub.f32 %v560, %v10755
    %v10789 = vsub.f32 %v563, %v10755
    %v10790 = vsub.f32 %v568, %v10755
    %v10791 = vsub.f32 %v571, %v10755
    %v10792 = vsub.f32 %v576, %v10755
    %v10793 = vsub.f32 %v579, %v10755
    %v10794 = vsub.f32 %v584, %v10755
    %v10795 = vsub.f32 %v587, %v10755
    %v10796 = vsub.f32 %v592, %v10755
    %v10797 = vsub.f32 %v595, %v10755
    %v10798 = vsub.f32 %v600, %v10755
    %v10799 = vsub.f32 %v603, %v10755
    %v10800 = vsub.f32 %v608, %v10755
    %v10801 = vsub.f32 %v611, %v10755
    %v10802 = vsub.f32 %v616, %v10755
    %v10803 = vsub.f32 %v619, %v10755
    %v10804 = vsub.f32 %v624, %v10755
    %v10805 = vsub.f32 %v627, %v10755
    %v10806 = vsub.f32 %v632, %v10755
    %v10807 = vsub.f32 %v635, %v10755
    %v10808 = vsub.f32 %v640, %v10755
    %v10809 = vsub.f32 %v643, %v10755
    %v10810 = vsub.f32 %v648, %v10755
    %v10811 = vsub.f32 %v651, %v10755
    %v10812 = vsub.f32 %v656, %v10755
    %v10813 = vsub.f32 %v659, %v10755
    %v10814 = vsub.f32 %v664, %v10755
    %v10815 = vsub.f32 %v667, %v10755
    %v10816 = vsub.f32 %v672, %v10755
    %v10817 = vsub.f32 %v675, %v10755
    %v10818 = vsub.f32 %v680, %v10755
    %v10819 = vsub.f32 %v683, %v10755
    %v10820 = vmul.f32 %v10756, %v10756
    %v10821 = vmul.f32 %v10757, %v10757
    %v10822 = vmul.f32 %v10758, %v10758
    %v10823 = vmul.f32 %v10759, %v10759
    %v10824 = vmul.f32 %v10760, %v10760
    %v10825 = vmul.f32 %v10761, %v10761
    %v10826 = vmul.f32 %v10762, %v10762
    %v10827 = vmul.f32 %v10763, %v10763
    %v10828 = vmul.f32 %v10764, %v10764
    %v10829 = vmul.f32 %v10765, %v10765
    %v10830 = vmul.f32 %v10766, %v10766
    %v10831 = vmul.f32 %v10767, %v10767
    %v10832 = vmul.f32 %v10768, %v10768
    %v10833 = vmul.f32 %v10769, %v10769
    %v10834 = vmul.f32 %v10770, %v10770
    %v10835 = vmul.f32 %v10771, %v10771
    %v10836 = vmul.f32 %v10772, %v10772
    %v10837 = vmul.f32 %v10773, %v10773
    %v10838 = vmul.f32 %v10774, %v10774
    %v10839 = vmul.f32 %v10775, %v10775
    %v10840 = vmul.f32 %v10776, %v10776
    %v10841 = vmul.f32 %v10777, %v10777
    %v10842 = vmul.f32 %v10778, %v10778
    %v10843 = vmul.f32 %v10779, %v10779
    %v10844 = vmul.f32 %v10780, %v10780
    %v10845 = vmul.f32 %v10781, %v10781
    %v10846 = vmul.f32 %v10782, %v10782
    %v10847 = vmul.f32 %v10783, %v10783
    %v10848 = vmul.f32 %v10784, %v10784
    %v10849 = vmul.f32 %v10785, %v10785
    %v10850 = vmul.f32 %v10786, %v10786
    %v10851 = vmul.f32 %v10787, %v10787
    %v10852 = vmul.f32 %v10788, %v10788
    %v10853 = vmul.f32 %v10789, %v10789
    %v10854 = vmul.f32 %v10790, %v10790
    %v10855 = vmul.f32 %v10791, %v10791
    %v10856 = vmul.f32 %v10792, %v10792
    %v10857 = vmul.f32 %v10793, %v10793
    %v10858 = vmul.f32 %v10794, %v10794
    %v10859 = vmul.f32 %v10795, %v10795
    %v10860 = vmul.f32 %v10796, %v10796
    %v10861 = vmul.f32 %v10797, %v10797
    %v10862 = vmul.f32 %v10798, %v10798
    %v10863 = vmul.f32 %v10799, %v10799
    %v10864 = vmul.f32 %v10800, %v10800
    %v10865 = vmul.f32 %v10801, %v10801
    %v10866 = vmul.f32 %v10802, %v10802
    %v10867 = vmul.f32 %v10803, %v10803
    %v10868 = vmul.f32 %v10804, %v10804
    %v10869 = vmul.f32 %v10805, %v10805
    %v10870 = vmul.f32 %v10806, %v10806
    %v10871 = vmul.f32 %v10807, %v10807
    %v10872 = vmul.f32 %v10808, %v10808
    %v10873 = vmul.f32 %v10809, %v10809
    %v10874 = vmul.f32 %v10810, %v10810
    %v10875 = vmul.f32 %v10811, %v10811
    %v10876 = vmul.f32 %v10812, %v10812
    %v10877 = vmul.f32 %v10813, %v10813
    %v10878 = vmul.f32 %v10814, %v10814
    %v10879 = vmul.f32 %v10815, %v10815
    %v10880 = vmul.f32 %v10816, %v10816
    %v10881 = vmul.f32 %v10817, %v10817
    %v10882 = vmul.f32 %v10818, %v10818
    %v10883 = vmul.f32 %v10819, %v10819
    %v10884 = vsel %vm10621, %v10820, 0.0
    %v10885 = vsel %vm10621, %v10821, 0.0
    %v10886 = vadd.f32 %v10884, %v10885
    %v10887 = vsel %vm10621, %v10822, 0.0
    %v10888 = vadd.f32 %v10886, %v10887
    %v10889 = vsel %vm10621, %v10823, 0.0
    %v10890 = vadd.f32 %v10888, %v10889
    %v10891 = vsel %vm10621, %v10824, 0.0
    %v10892 = vadd.f32 %v10890, %v10891
    %v10893 = vsel %vm10621, %v10825, 0.0
    %v10894 = vadd.f32 %v10892, %v10893
    %v10895 = vsel %vm10621, %v10826, 0.0
    %v10896 = vadd.f32 %v10894, %v10895
    %v10897 = vsel %vm10621, %v10827, 0.0
    %v10898 = vadd.f32 %v10896, %v10897
    %v10899 = vsel %vm10621, %v10828, 0.0
    %v10900 = vadd.f32 %v10898, %v10899
    %v10901 = vsel %vm10621, %v10829, 0.0
    %v10902 = vadd.f32 %v10900, %v10901
    %v10903 = vsel %vm10621, %v10830, 0.0
    %v10904 = vadd.f32 %v10902, %v10903
    %v10905 = vsel %vm10621, %v10831, 0.0
    %v10906 = vadd.f32 %v10904, %v10905
    %v10907 = vsel %vm10621, %v10832, 0.0
    %v10908 = vadd.f32 %v10906, %v10907
    %v10909 = vsel %vm10621, %v10833, 0.0
    %v10910 = vadd.f32 %v10908, %v10909
    %v10911 = vsel %vm10621, %v10834, 0.0
    %v10912 = vadd.f32 %v10910, %v10911
    %v10913 = vsel %vm10621, %v10835, 0.0
    %v10914 = vadd.f32 %v10912, %v10913
    %v10915 = vsel %vm10621, %v10836, 0.0
    %v10916 = vadd.f32 %v10914, %v10915
    %v10917 = vsel %vm10621, %v10837, 0.0
    %v10918 = vadd.f32 %v10916, %v10917
    %v10919 = vsel %vm10621, %v10838, 0.0
    %v10920 = vadd.f32 %v10918, %v10919
    %v10921 = vsel %vm10621, %v10839, 0.0
    %v10922 = vadd.f32 %v10920, %v10921
    %v10923 = vsel %vm10621, %v10840, 0.0
    %v10924 = vadd.f32 %v10922, %v10923
    %v10925 = vsel %vm10621, %v10841, 0.0
    %v10926 = vadd.f32 %v10924, %v10925
    %v10927 = vsel %vm10621, %v10842, 0.0
    %v10928 = vadd.f32 %v10926, %v10927
    %v10929 = vsel %vm10621, %v10843, 0.0
    %v10930 = vadd.f32 %v10928, %v10929
    %v10931 = vsel %vm10621, %v10844, 0.0
    %v10932 = vadd.f32 %v10930, %v10931
    %v10933 = vsel %vm10621, %v10845, 0.0
    %v10934 = vadd.f32 %v10932, %v10933
    %v10935 = vsel %vm10621, %v10846, 0.0
    %v10936 = vadd.f32 %v10934, %v10935
    %v10937 = vsel %vm10621, %v10847, 0.0
    %v10938 = vadd.f32 %v10936, %v10937
    %v10939 = vsel %vm10621, %v10848, 0.0
    %v10940 = vadd.f32 %v10938, %v10939
    %v10941 = vsel %vm10621, %v10849, 0.0
    %v10942 = vadd.f32 %v10940, %v10941
    %v10943 = vsel %vm10621, %v10850, 0.0
    %v10944 = vadd.f32 %v10942, %v10943
    %v10945 = vsel %vm10621, %v10851, 0.0
    %v10946 = vadd.f32 %v10944, %v10945
    %v10947 = vsel %vm10621, %v10852, 0.0
    %v10948 = vadd.f32 %v10946, %v10947
    %v10949 = vsel %vm10621, %v10853, 0.0
    %v10950 = vadd.f32 %v10948, %v10949
    %v10951 = vsel %vm10621, %v10854, 0.0
    %v10952 = vadd.f32 %v10950, %v10951
    %v10953 = vsel %vm10621, %v10855, 0.0
    %v10954 = vadd.f32 %v10952, %v10953
    %v10955 = vsel %vm10621, %v10856, 0.0
    %v10956 = vadd.f32 %v10954, %v10955
    %v10957 = vsel %vm10621, %v10857, 0.0
    %v10958 = vadd.f32 %v10956, %v10957
    %v10959 = vsel %vm10621, %v10858, 0.0
    %v10960 = vadd.f32 %v10958, %v10959
    %v10961 = vsel %vm10621, %v10859, 0.0
    %v10962 = vadd.f32 %v10960, %v10961
    %v10963 = vsel %vm10621, %v10860, 0.0
    %v10964 = vadd.f32 %v10962, %v10963
    %v10965 = vsel %vm10621, %v10861, 0.0
    %v10966 = vadd.f32 %v10964, %v10965
    %v10967 = vsel %vm10621, %v10862, 0.0
    %v10968 = vadd.f32 %v10966, %v10967
    %v10969 = vsel %vm10621, %v10863, 0.0
    %v10970 = vadd.f32 %v10968, %v10969
    %v10971 = vsel %vm10621, %v10864, 0.0
    %v10972 = vadd.f32 %v10970, %v10971
    %v10973 = vsel %vm10621, %v10865, 0.0
    %v10974 = vadd.f32 %v10972, %v10973
    %v10975 = vsel %vm10621, %v10866, 0.0
    %v10976 = vadd.f32 %v10974, %v10975
    %v10977 = vsel %vm10621, %v10867, 0.0
    %v10978 = vadd.f32 %v10976, %v10977
    %v10979 = vsel %vm10621, %v10868, 0.0
    %v10980 = vadd.f32 %v10978, %v10979
    %v10981 = vsel %vm10621, %v10869, 0.0
    %v10982 = vadd.f32 %v10980, %v10981
    %v10983 = vsel %vm10621, %v10870, 0.0
    %v10984 = vadd.f32 %v10982, %v10983
    %v10985 = vsel %vm10621, %v10871, 0.0
    %v10986 = vadd.f32 %v10984, %v10985
    %v10987 = vsel %vm10621, %v10872, 0.0
    %v10988 = vadd.f32 %v10986, %v10987
    %v10989 = vsel %vm10621, %v10873, 0.0
    %v10990 = vadd.f32 %v10988, %v10989
    %v10991 = vsel %vm10621, %v10874, 0.0
    %v10992 = vadd.f32 %v10990, %v10991
    %v10993 = vsel %vm10621, %v10875, 0.0
    %v10994 = vadd.f32 %v10992, %v10993
    %v10995 = vsel %vm10621, %v10876, 0.0
    %v10996 = vadd.f32 %v10994, %v10995
    %v10997 = vsel %vm10621, %v10877, 0.0
    %v10998 = vadd.f32 %v10996, %v10997
    %v10999 = vsel %vm10621, %v10878, 0.0
    %v11000 = vadd.f32 %v10998, %v10999
    %v11001 = vsel %vm10621, %v10879, 0.0
    %v11002 = vadd.f32 %v11000, %v11001
    %v11003 = vsel %vm10621, %v10880, 0.0
    %v11004 = vadd.f32 %v11002, %v11003
    %v11005 = vsel %vm10621, %v10881, 0.0
    %v11006 = vadd.f32 %v11004, %v11005
    %v11007 = vsel %vm10621, %v10882, 0.0
    %v11008 = vadd.f32 %v11006, %v11007
    %v11009 = vsel %vm10621, %v10883, 0.0
    %v11010 = vadd.f32 %v11008, %v11009
    %v11011 = vrot.slane %v11010, 4
    %v11012 = vadd.f32 %v11010, %v11011
    %v11013 = vrot.slane %v11012, 2
    %v11014 = vadd.f32 %v11012, %v11013
    %v11015 = vrot.slane %v11014, 1
    %v11016 = vadd.f32 %v11014, %v11015
    %v11017 = vmul.f32 %v11016, 0.001953125
    %v11018 = vadd.f32 %v11017, 1e-05
    %v11019 = vrsqrt.pop %v11018
    %v11020 = vmul.f32 %v10756, %v11019
    %v11021 = vmul.f32 %v10757, %v11019
    %v11022 = vmul.f32 %v10758, %v11019
    %v11023 = vmul.f32 %v10759, %v11019
    %v11024 = vmul.f32 %v10760, %v11019
    %v11025 = vmul.f32 %v10761, %v11019
    %v11026 = vmul.f32 %v10762, %v11019
    %v11027 = vmul.f32 %v10763, %v11019
    %v11028 = vmul.f32 %v10764, %v11019
    %v11029 = vmul.f32 %v10765, %v11019
    %v11030 = vmul.f32 %v10766, %v11019
    %v11031 = vmul.f32 %v10767, %v11019
    %v11032 = vmul.f32 %v10768, %v11019
    %v11033 = vmul.f32 %v10769, %v11019
    %v11034 = vmul.f32 %v10770, %v11019
    %v11035 = vmul.f32 %v10771, %v11019
    %v11036 = vmul.f32 %v10772, %v11019
    %v11037 = vmul.f32 %v10773, %v11019
    %v11038 = vmul.f32 %v10774, %v11019
    %v11039 = vmul.f32 %v10775, %v11019
    %v11040 = vmul.f32 %v10776, %v11019
    %v11041 = vmul.f32 %v10777, %v11019
    %v11042 = vmul.f32 %v10778, %v11019
    %v11043 = vmul.f32 %v10779, %v11019
    %v11044 = vmul.f32 %v10780, %v11019
    %v11045 = vmul.f32 %v10781, %v11019
    %v11046 = vmul.f32 %v10782, %v11019
    %v11047 = vmul.f32 %v10783, %v11019
    %v11048 = vmul.f32 %v10784, %v11019
    %v11049 = vmul.f32 %v10785, %v11019
    %v11050 = vmul.f32 %v10786, %v11019
    %v11051 = vmul.f32 %v10787, %v11019
    %v11052 = vmul.f32 %v10788, %v11019
    %v11053 = vmul.f32 %v10789, %v11019
    %v11054 = vmul.f32 %v10790, %v11019
    %v11055 = vmul.f32 %v10791, %v11019
    %v11056 = vmul.f32 %v10792, %v11019
    %v11057 = vmul.f32 %v10793, %v11019
    %v11058 = vmul.f32 %v10794, %v11019
    %v11059 = vmul.f32 %v10795, %v11019
    %v11060 = vmul.f32 %v10796, %v11019
    %v11061 = vmul.f32 %v10797, %v11019
    %v11062 = vmul.f32 %v10798, %v11019
    %v11063 = vmul.f32 %v10799, %v11019
    %v11064 = vmul.f32 %v10800, %v11019
    %v11065 = vmul.f32 %v10801, %v11019
    %v11066 = vmul.f32 %v10802, %v11019
    %v11067 = vmul.f32 %v10803, %v11019
    %v11068 = vmul.f32 %v10804, %v11019
    %v11069 = vmul.f32 %v10805, %v11019
    %v11070 = vmul.f32 %v10806, %v11019
    %v11071 = vmul.f32 %v10807, %v11019
    %v11072 = vmul.f32 %v10808, %v11019
    %v11073 = vmul.f32 %v10809, %v11019
    %v11074 = vmul.f32 %v10810, %v11019
    %v11075 = vmul.f32 %v10811, %v11019
    %v11076 = vmul.f32 %v10812, %v11019
    %v11077 = vmul.f32 %v10813, %v11019
    %v11078 = vmul.f32 %v10814, %v11019
    %v11079 = vmul.f32 %v10815, %v11019
    %v11080 = vmul.f32 %v10816, %v11019
    %v11081 = vmul.f32 %v10817, %v11019
    %v11082 = vmul.f32 %v10818, %v11019
    %v11083 = vmul.f32 %v10819, %v11019
    %v11085 = vlaneseq
    %v11086 = vshrl.u32 %v11085, 7
    %v11087 = vsub.s32 0, %v11086
    %v11088 = vrot.slane %v10619, %v11087
    %11089 = vrot.lane.b32.xlu0 %v11088, 32
    %v11090 = vpop.permute.xlu0 %11089
    %v11092 = vmul.f32 %v11020, %v11090
    %v11093 = vmul.f32 %v11021, %v11090
    %v11094 = vmul.f32 %v11022, %v11090
    %v11095 = vmul.f32 %v11023, %v11090
    %v11096 = vmul.f32 %v11024, %v11090
    %v11097 = vmul.f32 %v11025, %v11090
    %v11098 = vmul.f32 %v11026, %v11090
    %v11099 = vmul.f32 %v11027, %v11090
    %v11100 = vmul.f32 %v11028, %v11090
    %v11101 = vmul.f32 %v11029, %v11090
    %v11102 = vmul.f32 %v11030, %v11090
    %v11103 = vmul.f32 %v11031, %v11090
    %v11104 = vmul.f32 %v11032, %v11090
    %v11105 = vmul.f32 %v11033, %v11090
    %v11106 = vmul.f32 %v11034, %v11090
    %v11107 = vmul.f32 %v11035, %v11090
    %v11108 = vmul.f32 %v11036, %v11090
    %v11109 = vmul.f32 %v11037, %v11090
    %v11110 = vmul.f32 %v11038, %v11090
    %v11111 = vmul.f32 %v11039, %v11090
    %v11112 = vmul.f32 %v11040, %v11090
    %v11113 = vmul.f32 %v11041, %v11090
    %v11114 = vmul.f32 %v11042, %v11090
    %v11115 = vmul.f32 %v11043, %v11090
    %v11116 = vmul.f32 %v11044, %v11090
    %v11117 = vmul.f32 %v11045, %v11090
    %v11118 = vmul.f32 %v11046, %v11090
    %v11119 = vmul.f32 %v11047, %v11090
    %v11120 = vmul.f32 %v11048, %v11090
    %v11121 = vmul.f32 %v11049, %v11090
    %v11122 = vmul.f32 %v11050, %v11090
    %v11123 = vmul.f32 %v11051, %v11090
    %v11124 = vmul.f32 %v11052, %v11090
    %v11125 = vmul.f32 %v11053, %v11090
    %v11126 = vmul.f32 %v11054, %v11090
    %v11127 = vmul.f32 %v11055, %v11090
    %v11128 = vmul.f32 %v11056, %v11090
    %v11129 = vmul.f32 %v11057, %v11090
    %v11130 = vmul.f32 %v11058, %v11090
    %v11131 = vmul.f32 %v11059, %v11090
    %v11132 = vmul.f32 %v11060, %v11090
    %v11133 = vmul.f32 %v11061, %v11090
    %v11134 = vmul.f32 %v11062, %v11090
    %v11135 = vmul.f32 %v11063, %v11090
    %v11136 = vmul.f32 %v11064, %v11090
    %v11137 = vmul.f32 %v11065, %v11090
    %v11138 = vmul.f32 %v11066, %v11090
    %v11139 = vmul.f32 %v11067, %v11090
    %v11140 = vmul.f32 %v11068, %v11090
    %v11141 = vmul.f32 %v11069, %v11090
    %v11142 = vmul.f32 %v11070, %v11090
    %v11143 = vmul.f32 %v11071, %v11090
    %v11144 = vmul.f32 %v11072, %v11090
    %v11145 = vmul.f32 %v11073, %v11090
    %v11146 = vmul.f32 %v11074, %v11090
    %v11147 = vmul.f32 %v11075, %v11090
    %v11148 = vmul.f32 %v11076, %v11090
    %v11149 = vmul.f32 %v11077, %v11090
    %v11150 = vmul.f32 %v11078, %v11090
    %v11151 = vmul.f32 %v11079, %v11090
    %v11152 = vmul.f32 %v11080, %v11090
    %v11153 = vmul.f32 %v11081, %v11090
    %v11154 = vmul.f32 %v11082, %v11090
    %v11155 = vmul.f32 %v11083, %v11090
    %v11157 = vlaneseq
    %v11158 = vshrl.u32 %v11157, 7
    %v11159 = vsub.s32 0, %v11158
    %v11160 = vrot.slane %v10620, %v11159
    %11161 = vrot.lane.b32.xlu0 %v11160, 32
    %v11162 = vpop.permute.xlu0 %11161
    %v11164 = vadd.f32 %v11092, %v11162
    %v11165 = vadd.f32 %v11093, %v11162
    %v11166 = vadd.f32 %v11094, %v11162
    %v11167 = vadd.f32 %v11095, %v11162
    %v11168 = vadd.f32 %v11096, %v11162
    %v11169 = vadd.f32 %v11097, %v11162
    %v11170 = vadd.f32 %v11098, %v11162
    %v11171 = vadd.f32 %v11099, %v11162
    %v11172 = vadd.f32 %v11100, %v11162
    %v11173 = vadd.f32 %v11101, %v11162
    %v11174 = vadd.f32 %v11102, %v11162
    %v11175 = vadd.f32 %v11103, %v11162
    %v11176 = vadd.f32 %v11104, %v11162
    %v11177 = vadd.f32 %v11105, %v11162
    %v11178 = vadd.f32 %v11106, %v11162
    %v11179 = vadd.f32 %v11107, %v11162
    %v11180 = vadd.f32 %v11108, %v11162
    %v11181 = vadd.f32 %v11109, %v11162
    %v11182 = vadd.f32 %v11110, %v11162
    %v11183 = vadd.f32 %v11111, %v11162
    %v11184 = vadd.f32 %v11112, %v11162
    %v11185 = vadd.f32 %v11113, %v11162
    %v11186 = vadd.f32 %v11114, %v11162
    %v11187 = vadd.f32 %v11115, %v11162
    %v11188 = vadd.f32 %v11116, %v11162
    %v11189 = vadd.f32 %v11117, %v11162
    %v11190 = vadd.f32 %v11118, %v11162
    %v11191 = vadd.f32 %v11119, %v11162
    %v11192 = vadd.f32 %v11120, %v11162
    %v11193 = vadd.f32 %v11121, %v11162
    %v11194 = vadd.f32 %v11122, %v11162
    %v11195 = vadd.f32 %v11123, %v11162
    %v11196 = vadd.f32 %v11124, %v11162
    %v11197 = vadd.f32 %v11125, %v11162
    %v11198 = vadd.f32 %v11126, %v11162
    %v11199 = vadd.f32 %v11127, %v11162
    %v11200 = vadd.f32 %v11128, %v11162
    %v11201 = vadd.f32 %v11129, %v11162
    %v11202 = vadd.f32 %v11130, %v11162
    %v11203 = vadd.f32 %v11131, %v11162
    %v11204 = vadd.f32 %v11132, %v11162
    %v11205 = vadd.f32 %v11133, %v11162
    %v11206 = vadd.f32 %v11134, %v11162
    %v11207 = vadd.f32 %v11135, %v11162
    %v11208 = vadd.f32 %v11136, %v11162
    %v11209 = vadd.f32 %v11137, %v11162
    %v11210 = vadd.f32 %v11138, %v11162
    %v11211 = vadd.f32 %v11139, %v11162
    %v11212 = vadd.f32 %v11140, %v11162
    %v11213 = vadd.f32 %v11141, %v11162
    %v11214 = vadd.f32 %v11142, %v11162
    %v11215 = vadd.f32 %v11143, %v11162
    %v11216 = vadd.f32 %v11144, %v11162
    %v11217 = vadd.f32 %v11145, %v11162
    %v11218 = vadd.f32 %v11146, %v11162
    %v11219 = vadd.f32 %v11147, %v11162
    %v11220 = vadd.f32 %v11148, %v11162
    %v11221 = vadd.f32 %v11149, %v11162
    %v11222 = vadd.f32 %v11150, %v11162
    %v11223 = vadd.f32 %v11151, %v11162
    %v11224 = vadd.f32 %v11152, %v11162
    %v11225 = vadd.f32 %v11153, %v11162
    %v11226 = vadd.f32 %v11154, %v11162
    %v11227 = vadd.f32 %v11155, %v11162
    %11292 = vrot.lane.b32.xlu0 %v11164, 96
    %v11293 = vpop.permute.xlu0 %11292
    %11294 = vrot.lane.b32.xlu0 %v11165, 96
    %v11295 = vpop.permute.xlu0 %11294
    %11296 = vrot.lane.b32.xlu0 %v11166, 96
    %v11297 = vpop.permute.xlu0 %11296
    %11298 = vrot.lane.b32.xlu0 %v11167, 96
    %v11299 = vpop.permute.xlu0 %11298
    %11300 = vrot.lane.b32.xlu0 %v11168, 96
    %v11301 = vpop.permute.xlu0 %11300
    %11302 = vrot.lane.b32.xlu0 %v11169, 96
    %v11303 = vpop.permute.xlu0 %11302
    %11304 = vrot.lane.b32.xlu0 %v11170, 96
    %v11305 = vpop.permute.xlu0 %11304
    %11306 = vrot.lane.b32.xlu0 %v11171, 96
    %v11307 = vpop.permute.xlu0 %11306
    %11308 = vrot.lane.b32.xlu0 %v11172, 96
    %v11309 = vpop.permute.xlu0 %11308
    %11310 = vrot.lane.b32.xlu0 %v11173, 96
    %v11311 = vpop.permute.xlu0 %11310
    %11312 = vrot.lane.b32.xlu0 %v11174, 96
    %v11313 = vpop.permute.xlu0 %11312
    %11314 = vrot.lane.b32.xlu0 %v11175, 96
    %v11315 = vpop.permute.xlu0 %11314
    %11316 = vrot.lane.b32.xlu0 %v11176, 96
    %v11317 = vpop.permute.xlu0 %11316
    %11318 = vrot.lane.b32.xlu0 %v11177, 96
    %v11319 = vpop.permute.xlu0 %11318
    %11320 = vrot.lane.b32.xlu0 %v11178, 96
    %v11321 = vpop.permute.xlu0 %11320
    %11322 = vrot.lane.b32.xlu0 %v11179, 96
    %v11323 = vpop.permute.xlu0 %11322
    %11324 = vrot.lane.b32.xlu0 %v11180, 96
    %v11325 = vpop.permute.xlu0 %11324
    %11326 = vrot.lane.b32.xlu0 %v11181, 96
    %v11327 = vpop.permute.xlu0 %11326
    %11328 = vrot.lane.b32.xlu0 %v11182, 96
    %v11329 = vpop.permute.xlu0 %11328
    %11330 = vrot.lane.b32.xlu0 %v11183, 96
    %v11331 = vpop.permute.xlu0 %11330
    %11332 = vrot.lane.b32.xlu0 %v11184, 96
    %v11333 = vpop.permute.xlu0 %11332
    %11334 = vrot.lane.b32.xlu0 %v11185, 96
    %v11335 = vpop.permute.xlu0 %11334
    %11336 = vrot.lane.b32.xlu0 %v11186, 96
    %v11337 = vpop.permute.xlu0 %11336
    %11338 = vrot.lane.b32.xlu0 %v11187, 96
    %v11339 = vpop.permute.xlu0 %11338
    %11340 = vrot.lane.b32.xlu0 %v11188, 96
    %v11341 = vpop.permute.xlu0 %11340
    %11342 = vrot.lane.b32.xlu0 %v11189, 96
    %v11343 = vpop.permute.xlu0 %11342
    %11344 = vrot.lane.b32.xlu0 %v11190, 96
    %v11345 = vpop.permute.xlu0 %11344
    %11346 = vrot.lane.b32.xlu0 %v11191, 96
    %v11347 = vpop.permute.xlu0 %11346
    %11348 = vrot.lane.b32.xlu0 %v11192, 96
    %v11349 = vpop.permute.xlu0 %11348
    %11350 = vrot.lane.b32.xlu0 %v11193, 96
    %v11351 = vpop.permute.xlu0 %11350
    %11352 = vrot.lane.b32.xlu0 %v11194, 96
    %v11353 = vpop.permute.xlu0 %11352
    %11354 = vrot.lane.b32.xlu0 %v11195, 96
    %v11355 = vpop.permute.xlu0 %11354
    %11356 = vrot.lane.b32.xlu0 %v11196, 96
    %v11357 = vpop.permute.xlu0 %11356
    %11358 = vrot.lane.b32.xlu0 %v11197, 96
    %v11359 = vpop.permute.xlu0 %11358
    %11360 = vrot.lane.b32.xlu0 %v11198, 96
    %v11361 = vpop.permute.xlu0 %11360
    %11362 = vrot.lane.b32.xlu0 %v11199, 96
    %v11363 = vpop.permute.xlu0 %11362
    %11364 = vrot.lane.b32.xlu0 %v11200, 96
    %v11365 = vpop.permute.xlu0 %11364
    %11366 = vrot.lane.b32.xlu0 %v11201, 96
    %v11367 = vpop.permute.xlu0 %11366
    %11368 = vrot.lane.b32.xlu0 %v11202, 96
    %v11369 = vpop.permute.xlu0 %11368
    %11370 = vrot.lane.b32.xlu0 %v11203, 96
    %v11371 = vpop.permute.xlu0 %11370
    %11372 = vrot.lane.b32.xlu0 %v11204, 96
    %v11373 = vpop.permute.xlu0 %11372
    %11374 = vrot.lane.b32.xlu0 %v11205, 96
    %v11375 = vpop.permute.xlu0 %11374
    %11376 = vrot.lane.b32.xlu0 %v11206, 96
    %v11377 = vpop.permute.xlu0 %11376
    %11378 = vrot.lane.b32.xlu0 %v11207, 96
    %v11379 = vpop.permute.xlu0 %11378
    %11380 = vrot.lane.b32.xlu0 %v11208, 96
    %v11381 = vpop.permute.xlu0 %11380
    %11382 = vrot.lane.b32.xlu0 %v11209, 96
    %v11383 = vpop.permute.xlu0 %11382
    %11384 = vrot.lane.b32.xlu0 %v11210, 96
    %v11385 = vpop.permute.xlu0 %11384
    %11386 = vrot.lane.b32.xlu0 %v11211, 96
    %v11387 = vpop.permute.xlu0 %11386
    %11388 = vrot.lane.b32.xlu0 %v11212, 96
    %v11389 = vpop.permute.xlu0 %11388
    %11390 = vrot.lane.b32.xlu0 %v11213, 96
    %v11391 = vpop.permute.xlu0 %11390
    %11392 = vrot.lane.b32.xlu0 %v11214, 96
    %v11393 = vpop.permute.xlu0 %11392
    %11394 = vrot.lane.b32.xlu0 %v11215, 96
    %v11395 = vpop.permute.xlu0 %11394
    %11396 = vrot.lane.b32.xlu0 %v11216, 96
    %v11397 = vpop.permute.xlu0 %11396
    %11398 = vrot.lane.b32.xlu0 %v11217, 96
    %v11399 = vpop.permute.xlu0 %11398
    %11400 = vrot.lane.b32.xlu0 %v11218, 96
    %v11401 = vpop.permute.xlu0 %11400
    %11402 = vrot.lane.b32.xlu0 %v11219, 96
    %v11403 = vpop.permute.xlu0 %11402
    %11404 = vrot.lane.b32.xlu0 %v11220, 96
    %v11405 = vpop.permute.xlu0 %11404
    %11406 = vrot.lane.b32.xlu0 %v11221, 96
    %v11407 = vpop.permute.xlu0 %11406
    %11408 = vrot.lane.b32.xlu0 %v11222, 96
    %v11409 = vpop.permute.xlu0 %11408
    %11410 = vrot.lane.b32.xlu0 %v11223, 96
    %v11411 = vpop.permute.xlu0 %11410
    %11412 = vrot.lane.b32.xlu0 %v11224, 96
    %v11413 = vpop.permute.xlu0 %11412
    %11414 = vrot.lane.b32.xlu0 %v11225, 96
    %v11415 = vpop.permute.xlu0 %11414
    %11416 = vrot.lane.b32.xlu0 %v11226, 96
    %v11417 = vpop.permute.xlu0 %11416
    %11418 = vrot.lane.b32.xlu0 %v11227, 96
    %v11419 = vpop.permute.xlu0 %11418
    %v11484 = vadd.f32 %v10555, %v11293
    %v11485 = vadd.f32 %v10556, %v11295
    %v11486 = vadd.f32 %v10557, %v11297
    %v11487 = vadd.f32 %v10558, %v11299
    %v11488 = vadd.f32 %v10559, %v11301
    %v11489 = vadd.f32 %v10560, %v11303
    %v11490 = vadd.f32 %v10561, %v11305
    %v11491 = vadd.f32 %v10562, %v11307
    %v11492 = vadd.f32 %v10563, %v11309
    %v11493 = vadd.f32 %v10564, %v11311
    %v11494 = vadd.f32 %v10565, %v11313
    %v11495 = vadd.f32 %v10566, %v11315
    %v11496 = vadd.f32 %v10567, %v11317
    %v11497 = vadd.f32 %v10568, %v11319
    %v11498 = vadd.f32 %v10569, %v11321
    %v11499 = vadd.f32 %v10570, %v11323
    %v11500 = vadd.f32 %v10571, %v11325
    %v11501 = vadd.f32 %v10572, %v11327
    %v11502 = vadd.f32 %v10573, %v11329
    %v11503 = vadd.f32 %v10574, %v11331
    %v11504 = vadd.f32 %v10575, %v11333
    %v11505 = vadd.f32 %v10576, %v11335
    %v11506 = vadd.f32 %v10577, %v11337
    %v11507 = vadd.f32 %v10578, %v11339
    %v11508 = vadd.f32 %v10579, %v11341
    %v11509 = vadd.f32 %v10580, %v11343
    %v11510 = vadd.f32 %v10581, %v11345
    %v11511 = vadd.f32 %v10582, %v11347
    %v11512 = vadd.f32 %v10583, %v11349
    %v11513 = vadd.f32 %v10584, %v11351
    %v11514 = vadd.f32 %v10585, %v11353
    %v11515 = vadd.f32 %v10586, %v11355
    %v11516 = vadd.f32 %v10587, %v11357
    %v11517 = vadd.f32 %v10588, %v11359
    %v11518 = vadd.f32 %v10589, %v11361
    %v11519 = vadd.f32 %v10590, %v11363
    %v11520 = vadd.f32 %v10591, %v11365
    %v11521 = vadd.f32 %v10592, %v11367
    %v11522 = vadd.f32 %v10593, %v11369
    %v11523 = vadd.f32 %v10594, %v11371
    %v11524 = vadd.f32 %v10595, %v11373
    %v11525 = vadd.f32 %v10596, %v11375
    %v11526 = vadd.f32 %v10597, %v11377
    %v11527 = vadd.f32 %v10598, %v11379
    %v11528 = vadd.f32 %v10599, %v11381
    %v11529 = vadd.f32 %v10600, %v11383
    %v11530 = vadd.f32 %v10601, %v11385
    %v11531 = vadd.f32 %v10602, %v11387
    %v11532 = vadd.f32 %v10603, %v11389
    %v11533 = vadd.f32 %v10604, %v11391
    %v11534 = vadd.f32 %v10605, %v11393
    %v11535 = vadd.f32 %v10606, %v11395
    %v11536 = vadd.f32 %v10607, %v11397
    %v11537 = vadd.f32 %v10608, %v11399
    %v11538 = vadd.f32 %v10609, %v11401
    %v11539 = vadd.f32 %v10610, %v11403
    %v11540 = vadd.f32 %v10611, %v11405
    %v11541 = vadd.f32 %v10612, %v11407
    %v11542 = vadd.f32 %v10613, %v11409
    %v11543 = vadd.f32 %v10614, %v11411
    %v11544 = vadd.f32 %v10615, %v11413
    %v11545 = vadd.f32 %v10616, %v11415
    %v11546 = vadd.f32 %v10617, %v11417
    %v11547 = vadd.f32 %v10618, %v11419
    %v11548 = vmax.f32 %v11484, 0.0
    %v11549 = vmax.f32 %v11485, 0.0
    %v11550 = vmax.f32 %v11486, 0.0
    %v11551 = vmax.f32 %v11487, 0.0
    %v11552 = vmax.f32 %v11488, 0.0
    %v11553 = vmax.f32 %v11489, 0.0
    %v11554 = vmax.f32 %v11490, 0.0
    %v11555 = vmax.f32 %v11491, 0.0
    %v11556 = vmax.f32 %v11492, 0.0
    %v11557 = vmax.f32 %v11493, 0.0
    %v11558 = vmax.f32 %v11494, 0.0
    %v11559 = vmax.f32 %v11495, 0.0
    %v11560 = vmax.f32 %v11496, 0.0
    %v11561 = vmax.f32 %v11497, 0.0
    %v11562 = vmax.f32 %v11498, 0.0
    %v11563 = vmax.f32 %v11499, 0.0
    %v11564 = vmax.f32 %v11500, 0.0
    %v11565 = vmax.f32 %v11501, 0.0
    %v11566 = vmax.f32 %v11502, 0.0
    %v11567 = vmax.f32 %v11503, 0.0
    %v11568 = vmax.f32 %v11504, 0.0
    %v11569 = vmax.f32 %v11505, 0.0
    %v11570 = vmax.f32 %v11506, 0.0
    %v11571 = vmax.f32 %v11507, 0.0
    %v11572 = vmax.f32 %v11508, 0.0
    %v11573 = vmax.f32 %v11509, 0.0
    %v11574 = vmax.f32 %v11510, 0.0
    %v11575 = vmax.f32 %v11511, 0.0
    %v11576 = vmax.f32 %v11512, 0.0
    %v11577 = vmax.f32 %v11513, 0.0
    %v11578 = vmax.f32 %v11514, 0.0
    %v11579 = vmax.f32 %v11515, 0.0
    %v11580 = vmax.f32 %v11516, 0.0
    %v11581 = vmax.f32 %v11517, 0.0
    %v11582 = vmax.f32 %v11518, 0.0
    %v11583 = vmax.f32 %v11519, 0.0
    %v11584 = vmax.f32 %v11520, 0.0
    %v11585 = vmax.f32 %v11521, 0.0
    %v11586 = vmax.f32 %v11522, 0.0
    %v11587 = vmax.f32 %v11523, 0.0
    %v11588 = vmax.f32 %v11524, 0.0
    %v11589 = vmax.f32 %v11525, 0.0
    %v11590 = vmax.f32 %v11526, 0.0
    %v11591 = vmax.f32 %v11527, 0.0
    %v11592 = vmax.f32 %v11528, 0.0
    %v11593 = vmax.f32 %v11529, 0.0
    %v11594 = vmax.f32 %v11530, 0.0
    %v11595 = vmax.f32 %v11531, 0.0
    %v11596 = vmax.f32 %v11532, 0.0
    %v11597 = vmax.f32 %v11533, 0.0
    %v11598 = vmax.f32 %v11534, 0.0
    %v11599 = vmax.f32 %v11535, 0.0
    %v11600 = vmax.f32 %v11536, 0.0
    %v11601 = vmax.f32 %v11537, 0.0
    %v11602 = vmax.f32 %v11538, 0.0
    %v11603 = vmax.f32 %v11539, 0.0
    %v11604 = vmax.f32 %v11540, 0.0
    %v11605 = vmax.f32 %v11541, 0.0
    %v11606 = vmax.f32 %v11542, 0.0
    %v11607 = vmax.f32 %v11543, 0.0
    %v11608 = vmax.f32 %v11544, 0.0
    %v11609 = vmax.f32 %v11545, 0.0
    %v11610 = vmax.f32 %v11546, 0.0
    %v11611 = vmax.f32 %v11547, 0.0
    %11612 = vst.msk [vmem:[%s16] sm:$0xff] %vm688, %v11548
    %11613 = vst.msk [vmem:[%s16 + $0x8] sm:$0xff] %vm688, %v11549
    %11614 = vst.msk [vmem:[%s16 + $0x10] sm:$0xff] %vm688, %v11550
    %11615 = vst.msk [vmem:[%s16 + $0x18] sm:$0xff] %vm688, %v11551
    %11616 = vst.msk [vmem:[%s16 + $0x20] sm:$0xff] %vm688, %v11552
    %11617 = vst.msk [vmem:[%s16 + $0x28] sm:$0xff] %vm688, %v11553
    %11618 = vst.msk [vmem:[%s16 + $0x30] sm:$0xff] %vm688, %v11554
    %11619 = vst.msk [vmem:[%s16 + $0x38] sm:$0xff] %vm688, %v11555
    %11620 = vst.msk [vmem:[%s16 + $0x40] sm:$0xff] %vm688, %v11556
    %11621 = vst.msk [vmem:[%s16 + $0x48] sm:$0xff] %vm688, %v11557
    %11622 = vst.msk [vmem:[%s16 + $0x50] sm:$0xff] %vm688, %v11558
    %11623 = vst.msk [vmem:[%s16 + $0x58] sm:$0xff] %vm688, %v11559
    %11624 = vst.msk [vmem:[%s16 + $0x60] sm:$0xff] %vm688, %v11560
    %11625 = vst.msk [vmem:[%s16 + $0x68] sm:$0xff] %vm688, %v11561
    %11626 = vst.msk [vmem:[%s16 + $0x70] sm:$0xff] %vm688, %v11562
    %11627 = vst.msk [vmem:[%s16 + $0x78] sm:$0xff] %vm688, %v11563
    %11628 = vst.msk [vmem:[%s16 + $0x80] sm:$0xff] %vm688, %v11564
    %11629 = vst.msk [vmem:[%s16 + $0x88] sm:$0xff] %vm688, %v11565
    %11630 = vst.msk [vmem:[%s16 + $0x90] sm:$0xff] %vm688, %v11566
    %11631 = vst.msk [vmem:[%s16 + $0x98] sm:$0xff] %vm688, %v11567
    %11632 = vst.msk [vmem:[%s16 + $0xa0] sm:$0xff] %vm688, %v11568
    %11633 = vst.msk [vmem:[%s16 + $0xa8] sm:$0xff] %vm688, %v11569
    %11634 = vst.msk [vmem:[%s16 + $0xb0] sm:$0xff] %vm688, %v11570
    %11635 = vst.msk [vmem:[%s16 + $0xb8] sm:$0xff] %vm688, %v11571
    %11636 = vst.msk [vmem:[%s16 + $0xc0] sm:$0xff] %vm688, %v11572
    %11637 = vst.msk [vmem:[%s16 + $0xc8] sm:$0xff] %vm688, %v11573
    %11638 = vst.msk [vmem:[%s16 + $0xd0] sm:$0xff] %vm688, %v11574
    %11639 = vst.msk [vmem:[%s16 + $0xd8] sm:$0xff] %vm688, %v11575
    %11640 = vst.msk [vmem:[%s16 + $0xe0] sm:$0xff] %vm688, %v11576
    %11641 = vst.msk [vmem:[%s16 + $0xe8] sm:$0xff] %vm688, %v11577
    %11642 = vst.msk [vmem:[%s16 + $0xf0] sm:$0xff] %vm688, %v11578
    %11643 = vst.msk [vmem:[%s16 + $0xf8] sm:$0xff] %vm688, %v11579
    %11644 = vst.msk [vmem:[%s16 + $0x100] sm:$0xff] %vm688, %v11580
    %11645 = vst.msk [vmem:[%s16 + $0x108] sm:$0xff] %vm688, %v11581
    %11646 = vst.msk [vmem:[%s16 + $0x110] sm:$0xff] %vm688, %v11582
    %11647 = vst.msk [vmem:[%s16 + $0x118] sm:$0xff] %vm688, %v11583
    %11648 = vst.msk [vmem:[%s16 + $0x120] sm:$0xff] %vm688, %v11584
    %11649 = vst.msk [vmem:[%s16 + $0x128] sm:$0xff] %vm688, %v11585
    %11650 = vst.msk [vmem:[%s16 + $0x130] sm:$0xff] %vm688, %v11586
    %11651 = vst.msk [vmem:[%s16 + $0x138] sm:$0xff] %vm688, %v11587
    %11652 = vst.msk [vmem:[%s16 + $0x140] sm:$0xff] %vm688, %v11588
    %11653 = vst.msk [vmem:[%s16 + $0x148] sm:$0xff] %vm688, %v11589
    %11654 = vst.msk [vmem:[%s16 + $0x150] sm:$0xff] %vm688, %v11590
    %11655 = vst.msk [vmem:[%s16 + $0x158] sm:$0xff] %vm688, %v11591
    %11656 = vst.msk [vmem:[%s16 + $0x160] sm:$0xff] %vm688, %v11592
    %11657 = vst.msk [vmem:[%s16 + $0x168] sm:$0xff] %vm688, %v11593
    %11658 = vst.msk [vmem:[%s16 + $0x170] sm:$0xff] %vm688, %v11594
    %11659 = vst.msk [vmem:[%s16 + $0x178] sm:$0xff] %vm688, %v11595
    %11660 = vst.msk [vmem:[%s16 + $0x180] sm:$0xff] %vm688, %v11596
    %11661 = vst.msk [vmem:[%s16 + $0x188] sm:$0xff] %vm688, %v11597
    %11662 = vst.msk [vmem:[%s16 + $0x190] sm:$0xff] %vm688, %v11598
    %11663 = vst.msk [vmem:[%s16 + $0x198] sm:$0xff] %vm688, %v11599
    %11664 = vst.msk [vmem:[%s16 + $0x1a0] sm:$0xff] %vm688, %v11600
    %11665 = vst.msk [vmem:[%s16 + $0x1a8] sm:$0xff] %vm688, %v11601
    %11666 = vst.msk [vmem:[%s16 + $0x1b0] sm:$0xff] %vm688, %v11602
    %11667 = vst.msk [vmem:[%s16 + $0x1b8] sm:$0xff] %vm688, %v11603
    %11668 = vst.msk [vmem:[%s16 + $0x1c0] sm:$0xff] %vm688, %v11604
    %11669 = vst.msk [vmem:[%s16 + $0x1c8] sm:$0xff] %vm688, %v11605
    %11670 = vst.msk [vmem:[%s16 + $0x1d0] sm:$0xff] %vm688, %v11606
    %11671 = vst.msk [vmem:[%s16 + $0x1d8] sm:$0xff] %vm688, %v11607
    %11672 = vst.msk [vmem:[%s16 + $0x1e0] sm:$0xff] %vm688, %v11608
    %11673 = vst.msk [vmem:[%s16 + $0x1e8] sm:$0xff] %vm688, %v11609
    %11674 = vst.msk [vmem:[%s16 + $0x1f0] sm:$0xff] %vm688, %v11610
    %11675 = vst.msk [vmem:[%s16 + $0x1f8] sm:$0xff] %vm688, %v11611
    // Predicated region
    $region70: #{tpu_custom_call.1} parent=1 // pred_check
      _
    $region71: #{tpu_custom_call.1} parent=1 // pred_check_branch
      %11677 = sbr.rel (0) target = $region73
    $region72: #{tpu_custom_call.1} parent=1 // pred_region
      _
    $region73: #{tpu_custom_call.1} parent=1 // pred_fallthru
      _
    // Predicated region
    $region74: #{tpu_custom_call.1} parent=1 // pred_check
      _
    $region75: #{tpu_custom_call.1} parent=1 // pred_check_branch
      %11679 = sbr.rel (0) target = $region77
    $region76: #{tpu_custom_call.1} parent=1 // pred_region
      _
    $region77: #{tpu_custom_call.1} parent=1 // pred_fallthru
      _
    %11680 = vsyncpa [#allocation4], 1

</llo_original>
